<compile_context>
chip_gen: v5e
topology: v5e:2x2
jax: 0.10.0
libtpu: 0.0.40
codegen_flags: <defaults>
</compile_context>

<pallas_src>
import jax
import jax.numpy as jnp
from jax import lax
from jax.experimental import pallas as pl
from jax.experimental.pallas import tpu as pltpu


def _round_up(x, m):
    return (x + m - 1) // m * m


def _make_basic_block_kernel(H, W):
    """Fused [conv3x3 + bias + ReLU] x 2 on a (C, H*W) flattened-NCHW tile."""
    HW = H * W

    def conv3x3_relu(x, w_mat, b_col):
        # x:     (Cin, H*W)   activation, H*W on lanes
        # w_mat: (Cout, 9*Cin) packed weights, column order (kh, kw, cin)
        # b_col: (Cout, 1)
        c = x.shape[0]
        pos = lax.broadcasted_iota(jnp.int32, (c, HW), 1)
        if (W & (W - 1)) == 0:
            col = jnp.bitwise_and(pos, W - 1)
        else:
            col = pos % W  # TODO(synk): non-power-of-two widths hit a vector modulo

        taps = []
        for kh in range(3):
            for kw in range(3):
                dh, dw = kh - 1, kw - 1
                off = dh * W + dw
                # t[:, p] = x[:, (p + off) mod HW]   (wrap-around handled by masks)
                t = pltpu.roll(x, shift=(-off) % HW, axis=1) if off != 0 else x
                conds = []
                if dh == -1:
                    conds.append(pos >= W)                # needs the row above
                elif dh == 1:
                    conds.append(pos < (H - 1) * W)       # needs the row below
                if dw == -1:
                    conds.append(col >= 1)                # needs the column left
                elif dw == 1:
                    conds.append(col <= W - 2)            # needs the column right
                if conds:
                    m = conds[0]
                    for cnd in conds[1:]:
                        m = jnp.logical_and(m, cnd)
                    t = jnp.where(m, t, 0.0)              # SAME zero padding
                taps.append(t)

        patches = jnp.concatenate(taps, axis=0)           # (9*Cin, H*W)  im2col
        acc = jnp.dot(w_mat, patches, preferred_element_type=jnp.float32)
        return jnp.maximum(acc + b_col, 0.0)              # (Cout, H*W)

    def kernel(x_ref, w1_ref, b1_ref, w2_ref, b2_ref, s_ref):
        x = x_ref[0]                                      # (Cin, H*W)
        # TODO(synk): at realistic widths (C >= 64) cast x / w to bf16 before the dot
        # (keep f32 accumulation) for the bf16-native MXU on v6e/v7x.
        y1 = conv3x3_relu(x, w1_ref[...], b1_ref[...])    # stays in VMEM/vregs
        y2 = conv3x3_relu(y1, w2_ref[...], b2_ref[...])
        s_ref[0] = y2.astype(s_ref.dtype)

    return kernel


def basic_block(x_flat, w1_hwio, b1, w2_hwio, b2, H, W):
    """Fused BasicBlock.  x_flat: (N, Cin, H*W) -> (N, Cout, H*W), flattened NCHW."""
    N, cin, HW = x_flat.shape
    assert HW == H * W
    cout = w1_hwio.shape[-1]
    assert cout % 8 == 0, "cout must be sublane aligned (pick base_dim multiple of 8)"

    # Pad Cin to a multiple of 8 so the im2col concat is sublane-tile aligned
    # (only the first stage, cin=3 -> 8; padded channels get zero weights).
    cin_p = _round_up(cin, 8)
    if cin_p != cin:
        x_flat = jnp.pad(x_flat, ((0, 0), (0, cin_p - cin), (0, 0)))
        w1_hwio = jnp.pad(w1_hwio, ((0, 0), (0, 0), (0, cin_p - cin), (0, 0)))

    # (3, 3, Cin, Cout) HWIO -> (Cout, 9*Cin); column order (kh, kw, cin) matches the
    # patch-row order produced inside the kernel.
    w1_mat = w1_hwio.reshape(9 * cin_p, cout).T
    w2_mat = w2_hwio.reshape(9 * cout, cout).T
    b1_col = b1.reshape(cout, 1)
    b2_col = b2.reshape(cout, 1)

    kernel = _make_basic_block_kernel(H, W)
    return pl.pallas_call(
        kernel,
        out_shape=jax.ShapeDtypeStruct((N, cout, HW), x_flat.dtype),
        grid=(N,),
        in_specs=[
            pl.BlockSpec((1, cin_p, HW), lambda n: (n, 0, 0)),
            pl.BlockSpec((cout, 9 * cin_p), lambda n: (0, 0)),
            pl.BlockSpec((cout, 1), lambda n: (0, 0)),
            pl.BlockSpec((cout, 9 * cout), lambda n: (0, 0)),
            pl.BlockSpec((cout, 1), lambda n: (0, 0)),
        ],
        out_specs=pl.BlockSpec((1, cout, HW), lambda n: (n, 0, 0)),
        compiler_params=pltpu.CompilerParams(
            dimension_semantics=("parallel",),
            vmem_limit_bytes=32 * 1024 * 1024,
        ),
    )(x_flat, w1_mat, b1_col, w2_mat, b2_col)


def encoder_forward(x_nchw, params):
    """UNet Encoder forward.  x_nchw: (N, Cin, H, W); params: list of 5 stage dicts
    with HWIO conv weights.  Returns [s1, ..., s5] in NCHW (PyTorch layout)."""
    N, C, H, W = x_nchw.shape
    feats = []
    h, w = H, W
    x_flat = x_nchw.reshape(N, C, H * W)     # free reshape: flattened NCHW
    n_stages = len(params)
    for i, p in enumerate(params):
        s_flat = basic_block(x_flat, p["w1"], p["b1"], p["w2"], p["b2"], h, w)
        cout = s_flat.shape[1]
        s = s_flat.reshape(N, cout, h, w)    # free reshape back to NCHW
        feats.append(s)
        if i + 1 < n_stages:
            # MaxPool2d(kernel=2, stride=2): layout glue, stays in XLA.
            pooled = s.reshape(N, cout, h // 2, 2, w // 2, 2).max(axis=(3, 5))
            h, w = h // 2, w // 2
            x_flat = pooled.reshape(N, cout, h * w)
    return feats


# ----------------------------- pure-JAX reference -----------------------------

def _ref_conv3x3_relu(x_nchw, w_hwio, b):
    y = lax.conv_general_dilated(
        x_nchw, w_hwio, window_strides=(1, 1), padding="SAME",
        dimension_numbers=("NCHW", "HWIO", "NCHW"))
    return jnp.maximum(y + b.reshape(1, -1, 1, 1), 0.0)


def _ref_encoder(x, params):
    feats = []
    for i, p in enumerate(params):
        s = _ref_conv3x3_relu(x, p["w1"], p["b1"])
        s = _ref_conv3x3_relu(s, p["w2"], p["b2"])
        feats.append(s)
        if i + 1 < len(params):
            n, c, h, w = s.shape
            x = s.reshape(n, c, h // 2, 2, w // 2, 2).max(axis=(3, 5))
    return feats


if __name__ == "__main__":
    key = jax.random.PRNGKey(0)
    N, cin, base_dim, H, W = 2, 3, 8, 32, 32
    kx, kp = jax.random.split(key)
    x = jax.random.normal(kx, (N, cin, H, W), jnp.float32)

    dims = [cin] + [base_dim * (2 ** i) for i in range(5)]   # 3, 8, 16, 32, 64, 128
    params = []
    k = kp
    for i in range(5):
        c_in, c_out = dims[i], dims[i + 1]
        k, kw1, kb1, kw2, kb2 = jax.random.split(k, 5)
        he1 = (2.0 / (9 * c_in)) ** 0.5
        he2 = (2.0 / (9 * c_out)) ** 0.5
        params.append({
            "w1": jax.random.normal(kw1, (3, 3, c_in, c_out), jnp.float32) * he1,
            "b1": jax.random.normal(kb1, (c_out,), jnp.float32) * 0.05,
            "w2": jax.random.normal(kw2, (3, 3, c_out, c_out), jnp.float32) * he2,
            "b2": jax.random.normal(kb2, (c_out,), jnp.float32) * 0.05,
        })

    outs = jax.block_until_ready(jax.jit(encoder_forward)(x, params))
    refs = jax.block_until_ready(jax.jit(_ref_encoder)(x, params))

    assert len(outs) == 5
    hh, ww = H, W
    for i, (o, r) in enumerate(zip(outs, refs)):
        assert o.shape == (N, dims[i + 1], hh, ww), (i, o.shape)
        err = float(jnp.max(jnp.abs(o - r)))
        assert jnp.allclose(o, r, atol=3e-3, rtol=3e-3), (i, err)
        hh, ww = hh // 2, ww // 2

    print("KERNEL_OK")
</pallas_src>

<mosaic_0001>
module attributes {stable_mosaic.version = 11 : i64} {
  func.func @kernel(%arg0: i32, %arg1: memref<1x8x1024xf32, #tpu.memory_space<vmem>>, %arg2: memref<8x72xf32, #tpu.memory_space<vmem>>, %arg3: memref<8x1xf32, #tpu.memory_space<vmem>>, %arg4: memref<8x72xf32, #tpu.memory_space<vmem>>, %arg5: memref<8x1xf32, #tpu.memory_space<vmem>>, %arg6: memref<1x8x1024xf32, #tpu.memory_space<vmem>>) attributes {dimension_semantics = [#tpu.dimension_semantics<parallel>], iteration_bounds = array<i64: 2>, scalar_prefetch = 0 : i64, scratch_operands = 0 : i64, tpu.core_type = #tpu.core_type<tc>, window_params = [{transform_indices = @transform_0, window_bounds = array<i64: 1, 8, 1024>}, {pipeline_mode = #tpu.pipeline_mode<synchronous>, transform_indices = @transform_1, window_bounds = array<i64: 8, 72>}, {pipeline_mode = #tpu.pipeline_mode<synchronous>, transform_indices = @transform_2, window_bounds = array<i64: 8, 1>}, {pipeline_mode = #tpu.pipeline_mode<synchronous>, transform_indices = @transform_3, window_bounds = array<i64: 8, 72>}, {pipeline_mode = #tpu.pipeline_mode<synchronous>, transform_indices = @transform_4, window_bounds = array<i64: 8, 1>}, {transform_indices = @transform_5, window_bounds = array<i64: 1, 8, 1024>}]} {
    %c0 = arith.constant 0 : index
    %c0_0 = arith.constant 0 : index
    %c0_1 = arith.constant 0 : index
    %0 = vector.load %arg1[%c0, %c0_0, %c0_1] : memref<1x8x1024xf32, #tpu.memory_space<vmem>>, vector<1x8x1024xf32>
    %1 = vector.shape_cast %0 : vector<1x8x1024xf32> to vector<8x1024xf32>
    %c0_2 = arith.constant 0 : index
    %c0_3 = arith.constant 0 : index
    %2 = vector.load %arg2[%c0_2, %c0_3] : memref<8x72xf32, #tpu.memory_space<vmem>>, vector<8x72xf32>
    %c0_4 = arith.constant 0 : index
    %c0_5 = arith.constant 0 : index
    %3 = vector.load %arg3[%c0_4, %c0_5] : memref<8x1xf32, #tpu.memory_space<vmem>>, vector<8x1xf32>
    %4 = tpu.iota {dimensions = array<i32: 1>} : vector<8x1024xi32>
    %c31_i32 = arith.constant 31 : i32
    %5 = vector.broadcast %c31_i32 : i32 to vector<8x1024xi32>
    %6 = arith.andi %4, %5 : vector<8x1024xi32>
    %c33_i32 = arith.constant 33 : i32
    %7 = tpu.dynamic_rotate %1 by %c33_i32 dim 1 : vector<8x1024xf32>, i32 -> vector<8x1024xf32>
    %c32_i32 = arith.constant 32 : i32
    %8 = vector.broadcast %c32_i32 : i32 to vector<8x1024xi32>
    %9 = arith.cmpi sge, %4, %8 : vector<8x1024xi32>
    %c1_i32 = arith.constant 1 : i32
    %10 = vector.broadcast %c1_i32 : i32 to vector<8x1024xi32>
    %11 = arith.cmpi sge, %6, %10 : vector<8x1024xi32>
    %12 = arith.andi %9, %11 : vector<8x1024xi1>
    %cst = arith.constant 0.000000e+00 : f32
    %13 = vector.broadcast %cst : f32 to vector<8x1024xf32>
    %14 = arith.select %12, %7, %13 : vector<8x1024xi1>, vector<8x1024xf32>
    %c32_i32_6 = arith.constant 32 : i32
    %15 = tpu.dynamic_rotate %1 by %c32_i32_6 dim 1 : vector<8x1024xf32>, i32 -> vector<8x1024xf32>
    %c32_i32_7 = arith.constant 32 : i32
    %16 = vector.broadcast %c32_i32_7 : i32 to vector<8x1024xi32>
    %17 = arith.cmpi sge, %4, %16 : vector<8x1024xi32>
    %cst_8 = arith.constant 0.000000e+00 : f32
    %18 = vector.broadcast %cst_8 : f32 to vector<8x1024xf32>
    %19 = arith.select %17, %15, %18 : vector<8x1024xi1>, vector<8x1024xf32>
    %c31_i32_9 = arith.constant 31 : i32
    %20 = tpu.dynamic_rotate %1 by %c31_i32_9 dim 1 : vector<8x1024xf32>, i32 -> vector<8x1024xf32>
    %c32_i32_10 = arith.constant 32 : i32
    %21 = vector.broadcast %c32_i32_10 : i32 to vector<8x1024xi32>
    %22 = arith.cmpi sge, %4, %21 : vector<8x1024xi32>
    %c30_i32 = arith.constant 30 : i32
    %23 = vector.broadcast %c30_i32 : i32 to vector<8x1024xi32>
    %24 = arith.cmpi sle, %6, %23 : vector<8x1024xi32>
    %25 = arith.andi %22, %24 : vector<8x1024xi1>
    %cst_11 = arith.constant 0.000000e+00 : f32
    %26 = vector.broadcast %cst_11 : f32 to vector<8x1024xf32>
    %27 = arith.select %25, %20, %26 : vector<8x1024xi1>, vector<8x1024xf32>
    %c1_i32_12 = arith.constant 1 : i32
    %28 = tpu.dynamic_rotate %1 by %c1_i32_12 dim 1 : vector<8x1024xf32>, i32 -> vector<8x1024xf32>
    %c1_i32_13 = arith.constant 1 : i32
    %29 = vector.broadcast %c1_i32_13 : i32 to vector<8x1024xi32>
    %30 = arith.cmpi sge, %6, %29 : vector<8x1024xi32>
    %cst_14 = arith.constant 0.000000e+00 : f32
    %31 = vector.broadcast %cst_14 : f32 to vector<8x1024xf32>
    %32 = arith.select %30, %28, %31 : vector<8x1024xi1>, vector<8x1024xf32>
    %c1023_i32 = arith.constant 1023 : i32
    %33 = tpu.dynamic_rotate %1 by %c1023_i32 dim 1 : vector<8x1024xf32>, i32 -> vector<8x1024xf32>
    %c30_i32_15 = arith.constant 30 : i32
    %34 = vector.broadcast %c30_i32_15 : i32 to vector<8x1024xi32>
    %35 = arith.cmpi sle, %6, %34 : vector<8x1024xi32>
    %cst_16 = arith.constant 0.000000e+00 : f32
    %36 = vector.broadcast %cst_16 : f32 to vector<8x1024xf32>
    %37 = arith.select %35, %33, %36 : vector<8x1024xi1>, vector<8x1024xf32>
    %c993_i32 = arith.constant 993 : i32
    %38 = tpu.dynamic_rotate %1 by %c993_i32 dim 1 : vector<8x1024xf32>, i32 -> vector<8x1024xf32>
    %c992_i32 = arith.constant 992 : i32
    %39 = vector.broadcast %c992_i32 : i32 to vector<8x1024xi32>
    %40 = arith.cmpi slt, %4, %39 : vector<8x1024xi32>
    %c1_i32_17 = arith.constant 1 : i32
    %41 = vector.broadcast %c1_i32_17 : i32 to vector<8x1024xi32>
    %42 = arith.cmpi sge, %6, %41 : vector<8x1024xi32>
    %43 = arith.andi %40, %42 : vector<8x1024xi1>
    %cst_18 = arith.constant 0.000000e+00 : f32
    %44 = vector.broadcast %cst_18 : f32 to vector<8x1024xf32>
    %45 = arith.select %43, %38, %44 : vector<8x1024xi1>, vector<8x1024xf32>
    %c992_i32_19 = arith.constant 992 : i32
    %46 = tpu.dynamic_rotate %1 by %c992_i32_19 dim 1 : vector<8x1024xf32>, i32 -> vector<8x1024xf32>
    %c992_i32_20 = arith.constant 992 : i32
    %47 = vector.broadcast %c992_i32_20 : i32 to vector<8x1024xi32>
    %48 = arith.cmpi slt, %4, %47 : vector<8x1024xi32>
    %cst_21 = arith.constant 0.000000e+00 : f32
    %49 = vector.broadcast %cst_21 : f32 to vector<8x1024xf32>
    %50 = arith.select %48, %46, %49 : vector<8x1024xi1>, vector<8x1024xf32>
    %c991_i32 = arith.constant 991 : i32
    %51 = tpu.dynamic_rotate %1 by %c991_i32 dim 1 : vector<8x1024xf32>, i32 -> vector<8x1024xf32>
    %c992_i32_22 = arith.constant 992 : i32
    %52 = vector.broadcast %c992_i32_22 : i32 to vector<8x1024xi32>
    %53 = arith.cmpi slt, %4, %52 : vector<8x1024xi32>
    %c30_i32_23 = arith.constant 30 : i32
    %54 = vector.broadcast %c30_i32_23 : i32 to vector<8x1024xi32>
    %55 = arith.cmpi sle, %6, %54 : vector<8x1024xi32>
    %56 = arith.andi %53, %55 : vector<8x1024xi1>
    %cst_24 = arith.constant 0.000000e+00 : f32
    %57 = vector.broadcast %cst_24 : f32 to vector<8x1024xf32>
    %58 = arith.select %56, %51, %57 : vector<8x1024xi1>, vector<8x1024xf32>
    %59 = tpu.concatenate %14, %19, %27, %32, %1, %37, %45, %50, %58 in 0 : vector<8x1024xf32>, vector<8x1024xf32>, vector<8x1024xf32>, vector<8x1024xf32>, vector<8x1024xf32>, vector<8x1024xf32>, vector<8x1024xf32>, vector<8x1024xf32>, vector<8x1024xf32> -> vector<72x1024xf32>
    %cst_25 = arith.constant dense<0.000000e+00> : vector<8x1024xf32>
    %60 = tpu.matmul %2, %59, %cst_25 {dimension_numbers = #tpu.dot_dimension_numbers<[1], [0], [0], [1], [0, 0, 1, 1], [], []>} : vector<8x72xf32>, vector<72x1024xf32>, vector<8x1024xf32> -> vector<8x1024xf32>
    %61 = vector.broadcast %3 : vector<8x1xf32> to vector<8x1024xf32>
    %62 = arith.addf %60, %61 : vector<8x1024xf32>
    %cst_26 = arith.constant 0.000000e+00 : f32
    %63 = vector.broadcast %cst_26 : f32 to vector<8x1024xf32>
    %64 = arith.maximumf %62, %63 : vector<8x1024xf32>
    %c0_27 = arith.constant 0 : index
    %c0_28 = arith.constant 0 : index
    %65 = vector.load %arg4[%c0_27, %c0_28] : memref<8x72xf32, #tpu.memory_space<vmem>>, vector<8x72xf32>
    %c0_29 = arith.constant 0 : index
    %c0_30 = arith.constant 0 : index
    %66 = vector.load %arg5[%c0_29, %c0_30] : memref<8x1xf32, #tpu.memory_space<vmem>>, vector<8x1xf32>
    %67 = tpu.iota {dimensions = array<i32: 1>} : vector<8x1024xi32>
    %c31_i32_31 = arith.constant 31 : i32
    %68 = vector.broadcast %c31_i32_31 : i32 to vector<8x1024xi32>
    %69 = arith.andi %67, %68 : vector<8x1024xi32>
    %c33_i32_32 = arith.constant 33 : i32
    %70 = tpu.dynamic_rotate %64 by %c33_i32_32 dim 1 : vector<8x1024xf32>, i32 -> vector<8x1024xf32>
    %c32_i32_33 = arith.constant 32 : i32
    %71 = vector.broadcast %c32_i32_33 : i32 to vector<8x1024xi32>
    %72 = arith.cmpi sge, %67, %71 : vector<8x1024xi32>
    %c1_i32_34 = arith.constant 1 : i32
    %73 = vector.broadcast %c1_i32_34 : i32 to vector<8x1024xi32>
    %74 = arith.cmpi sge, %69, %73 : vector<8x1024xi32>
    %75 = arith.andi %72, %74 : vector<8x1024xi1>
    %cst_35 = arith.constant 0.000000e+00 : f32
    %76 = vector.broadcast %cst_35 : f32 to vector<8x1024xf32>
    %77 = arith.select %75, %70, %76 : vector<8x1024xi1>, vector<8x1024xf32>
    %c32_i32_36 = arith.constant 32 : i32
    %78 = tpu.dynamic_rotate %64 by %c32_i32_36 dim 1 : vector<8x1024xf32>, i32 -> vector<8x1024xf32>
    %c32_i32_37 = arith.constant 32 : i32
    %79 = vector.broadcast %c32_i32_37 : i32 to vector<8x1024xi32>
    %80 = arith.cmpi sge, %67, %79 : vector<8x1024xi32>
    %cst_38 = arith.constant 0.000000e+00 : f32
    %81 = vector.broadcast %cst_38 : f32 to vector<8x1024xf32>
    %82 = arith.select %80, %78, %81 : vector<8x1024xi1>, vector<8x1024xf32>
    %c31_i32_39 = arith.constant 31 : i32
    %83 = tpu.dynamic_rotate %64 by %c31_i32_39 dim 1 : vector<8x1024xf32>, i32 -> vector<8x1024xf32>
    %c32_i32_40 = arith.constant 32 : i32
    %84 = vector.broadcast %c32_i32_40 : i32 to vector<8x1024xi32>
    %85 = arith.cmpi sge, %67, %84 : vector<8x1024xi32>
    %c30_i32_41 = arith.constant 30 : i32
    %86 = vector.broadcast %c30_i32_41 : i32 to vector<8x1024xi32>
    %87 = arith.cmpi sle, %69, %86 : vector<8x1024xi32>
    %88 = arith.andi %85, %87 : vector<8x1024xi1>
    %cst_42 = arith.constant 0.000000e+00 : f32
    %89 = vector.broadcast %cst_42 : f32 to vector<8x1024xf32>
    %90 = arith.select %88, %83, %89 : vector<8x1024xi1>, vector<8x1024xf32>
    %c1_i32_43 = arith.constant 1 : i32
    %91 = tpu.dynamic_rotate %64 by %c1_i32_43 dim 1 : vector<8x1024xf32>, i32 -> vector<8x1024xf32>
    %c1_i32_44 = arith.constant 1 : i32
    %92 = vector.broadcast %c1_i32_44 : i32 to vector<8x1024xi32>
    %93 = arith.cmpi sge, %69, %92 : vector<8x1024xi32>
    %cst_45 = arith.constant 0.000000e+00 : f32
    %94 = vector.broadcast %cst_45 : f32 to vector<8x1024xf32>
    %95 = arith.select %93, %91, %94 : vector<8x1024xi1>, vector<8x1024xf32>
    %c1023_i32_46 = arith.constant 1023 : i32
    %96 = tpu.dynamic_rotate %64 by %c1023_i32_46 dim 1 : vector<8x1024xf32>, i32 -> vector<8x1024xf32>
    %c30_i32_47 = arith.constant 30 : i32
    %97 = vector.broadcast %c30_i32_47 : i32 to vector<8x1024xi32>
    %98 = arith.cmpi sle, %69, %97 : vector<8x1024xi32>
    %cst_48 = arith.constant 0.000000e+00 : f32
    %99 = vector.broadcast %cst_48 : f32 to vector<8x1024xf32>
    %100 = arith.select %98, %96, %99 : vector<8x1024xi1>, vector<8x1024xf32>
    %c993_i32_49 = arith.constant 993 : i32
    %101 = tpu.dynamic_rotate %64 by %c993_i32_49 dim 1 : vector<8x1024xf32>, i32 -> vector<8x1024xf32>
    %c992_i32_50 = arith.constant 992 : i32
    %102 = vector.broadcast %c992_i32_50 : i32 to vector<8x1024xi32>
    %103 = arith.cmpi slt, %67, %102 : vector<8x1024xi32>
    %c1_i32_51 = arith.constant 1 : i32
    %104 = vector.broadcast %c1_i32_51 : i32 to vector<8x1024xi32>
    %105 = arith.cmpi sge, %69, %104 : vector<8x1024xi32>
    %106 = arith.andi %103, %105 : vector<8x1024xi1>
    %cst_52 = arith.constant 0.000000e+00 : f32
    %107 = vector.broadcast %cst_52 : f32 to vector<8x1024xf32>
    %108 = arith.select %106, %101, %107 : vector<8x1024xi1>, vector<8x1024xf32>
    %c992_i32_53 = arith.constant 992 : i32
    %109 = tpu.dynamic_rotate %64 by %c992_i32_53 dim 1 : vector<8x1024xf32>, i32 -> vector<8x1024xf32>
    %c992_i32_54 = arith.constant 992 : i32
    %110 = vector.broadcast %c992_i32_54 : i32 to vector<8x1024xi32>
    %111 = arith.cmpi slt, %67, %110 : vector<8x1024xi32>
    %cst_55 = arith.constant 0.000000e+00 : f32
    %112 = vector.broadcast %cst_55 : f32 to vector<8x1024xf32>
    %113 = arith.select %111, %109, %112 : vector<8x1024xi1>, vector<8x1024xf32>
    %c991_i32_56 = arith.constant 991 : i32
    %114 = tpu.dynamic_rotate %64 by %c991_i32_56 dim 1 : vector<8x1024xf32>, i32 -> vector<8x1024xf32>
    %c992_i32_57 = arith.constant 992 : i32
    %115 = vector.broadcast %c992_i32_57 : i32 to vector<8x1024xi32>
    %116 = arith.cmpi slt, %67, %115 : vector<8x1024xi32>
    %c30_i32_58 = arith.constant 30 : i32
    %117 = vector.broadcast %c30_i32_58 : i32 to vector<8x1024xi32>
    %118 = arith.cmpi sle, %69, %117 : vector<8x1024xi32>
    %119 = arith.andi %116, %118 : vector<8x1024xi1>
    %cst_59 = arith.constant 0.000000e+00 : f32
    %120 = vector.broadcast %cst_59 : f32 to vector<8x1024xf32>
    %121 = arith.select %119, %114, %120 : vector<8x1024xi1>, vector<8x1024xf32>
    %122 = tpu.concatenate %77, %82, %90, %95, %64, %100, %108, %113, %121 in 0 : vector<8x1024xf32>, vector<8x1024xf32>, vector<8x1024xf32>, vector<8x1024xf32>, vector<8x1024xf32>, vector<8x1024xf32>, vector<8x1024xf32>, vector<8x1024xf32>, vector<8x1024xf32> -> vector<72x1024xf32>
    %cst_60 = arith.constant dense<0.000000e+00> : vector<8x1024xf32>
    %123 = tpu.matmul %65, %122, %cst_60 {dimension_numbers = #tpu.dot_dimension_numbers<[1], [0], [0], [1], [0, 0, 1, 1], [], []>} : vector<8x72xf32>, vector<72x1024xf32>, vector<8x1024xf32> -> vector<8x1024xf32>
    %124 = vector.broadcast %66 : vector<8x1xf32> to vector<8x1024xf32>
    %125 = arith.addf %123, %124 : vector<8x1024xf32>
    %cst_61 = arith.constant 0.000000e+00 : f32
    %126 = vector.broadcast %cst_61 : f32 to vector<8x1024xf32>
    %127 = arith.maximumf %125, %126 : vector<8x1024xf32>
    %c0_62 = arith.constant 0 : index
    %c0_63 = arith.constant 0 : index
    %c0_64 = arith.constant 0 : index
    %128 = vector.load %arg6[%c0_62, %c0_63, %c0_64] : memref<1x8x1024xf32, #tpu.memory_space<vmem>>, vector<1x8x1024xf32>
    %129 = vector.shape_cast %128 : vector<1x8x1024xf32> to vector<8x1024xf32>
    %130 = vector.shape_cast %127 : vector<8x1024xf32> to vector<1x8x1024xf32>
    tpu.vector_store %arg6[%c0_62, %c0_63, %c0_64], %130 {strides = array<i32>} : memref<1x8x1024xf32, #tpu.memory_space<vmem>>, vector<1x8x1024xf32>,
    return
  }
  func.func @transform_0(%arg0: i32) -> (i32, i32, i32) {
    %c0_i32 = arith.constant 0 : i32
    %c0_i32_0 = arith.constant 0 : i32
    %c0_i32_1 = arith.constant 0 : i32
    return %arg0, %c0_i32, %c0_i32_0 : i32, i32, i32
  }
  func.func @transform_1(%arg0: i32) -> (i32, i32) {
    %c0_i32 = arith.constant 0 : i32
    %c0_i32_0 = arith.constant 0 : i32
    %c0_i32_1 = arith.constant 0 : i32
    return %c0_i32, %c0_i32_0 : i32, i32
  }
  func.func @transform_2(%arg0: i32) -> (i32, i32) {
    %c0_i32 = arith.constant 0 : i32
    %c0_i32_0 = arith.constant 0 : i32
    %c0_i32_1 = arith.constant 0 : i32
    return %c0_i32, %c0_i32_0 : i32, i32
  }
  func.func @transform_3(%arg0: i32) -> (i32, i32) {
    %c0_i32 = arith.constant 0 : i32
    %c0_i32_0 = arith.constant 0 : i32
    %c0_i32_1 = arith.constant 0 : i32
    return %c0_i32, %c0_i32_0 : i32, i32
  }
  func.func @transform_4(%arg0: i32) -> (i32, i32) {
    %c0_i32 = arith.constant 0 : i32
    %c0_i32_0 = arith.constant 0 : i32
    %c0_i32_1 = arith.constant 0 : i32
    return %c0_i32, %c0_i32_0 : i32, i32
  }
  func.func @transform_5(%arg0: i32) -> (i32, i32, i32) {
    %c0_i32 = arith.constant 0 : i32
    %c0_i32_0 = arith.constant 0 : i32
    %c0_i32_1 = arith.constant 0 : i32
    return %arg0, %c0_i32, %c0_i32_0 : i32, i32, i32
  }
}

module attributes {stable_mosaic.version = 11 : i64} {
  func.func @kernel(%arg0: i32, %arg1: memref<1x8x256xf32, #tpu.memory_space<vmem>>, %arg2: memref<16x72xf32, #tpu.memory_space<vmem>>, %arg3: memref<16x1xf32, #tpu.memory_space<vmem>>, %arg4: memref<16x144xf32, #tpu.memory_space<vmem>>, %arg5: memref<16x1xf32, #tpu.memory_space<vmem>>, %arg6: memref<1x16x256xf32, #tpu.memory_space<vmem>>) attributes {dimension_semantics = [#tpu.dimension_semantics<parallel>], iteration_bounds = array<i64: 2>, scalar_prefetch = 0 : i64, scratch_operands = 0 : i64, tpu.core_type = #tpu.core_type<tc>, window_params = [{transform_indices = @transform_0, window_bounds = array<i64: 1, 8, 256>}, {pipeline_mode = #tpu.pipeline_mode<synchronous>, transform_indices = @transform_1, window_bounds = array<i64: 16, 72>}, {pipeline_mode = #tpu.pipeline_mode<synchronous>, transform_indices = @transform_2, window_bounds = array<i64: 16, 1>}, {pipeline_mode = #tpu.pipeline_mode<synchronous>, transform_indices = @transform_3, window_bounds = array<i64: 16, 144>}, {pipeline_mode = #tpu.pipeline_mode<synchronous>, transform_indices = @transform_4, window_bounds = array<i64: 16, 1>}, {transform_indices = @transform_5, window_bounds = array<i64: 1, 16, 256>}]} {
    %c0 = arith.constant 0 : index
    %c0_0 = arith.constant 0 : index
    %c0_1 = arith.constant 0 : index
    %0 = vector.load %arg1[%c0, %c0_0, %c0_1] : memref<1x8x256xf32, #tpu.memory_space<vmem>>, vector<1x8x256xf32>
    %1 = vector.shape_cast %0 : vector<1x8x256xf32> to vector<8x256xf32>
    %c0_2 = arith.constant 0 : index
    %c0_3 = arith.constant 0 : index
    %2 = vector.load %arg2[%c0_2, %c0_3] : memref<16x72xf32, #tpu.memory_space<vmem>>, vector<16x72xf32>
    %c0_4 = arith.constant 0 : index
    %c0_5 = arith.constant 0 : index
    %3 = vector.load %arg3[%c0_4, %c0_5] : memref<16x1xf32, #tpu.memory_space<vmem>>, vector<16x1xf32>
    %4 = tpu.iota {dimensions = array<i32: 1>} : vector<8x256xi32>
    %c15_i32 = arith.constant 15 : i32
    %5 = vector.broadcast %c15_i32 : i32 to vector<8x256xi32>
    %6 = arith.andi %4, %5 : vector<8x256xi32>
    %c17_i32 = arith.constant 17 : i32
    %7 = tpu.dynamic_rotate %1 by %c17_i32 dim 1 : vector<8x256xf32>, i32 -> vector<8x256xf32>
    %c16_i32 = arith.constant 16 : i32
    %8 = vector.broadcast %c16_i32 : i32 to vector<8x256xi32>
    %9 = arith.cmpi sge, %4, %8 : vector<8x256xi32>
    %c1_i32 = arith.constant 1 : i32
    %10 = vector.broadcast %c1_i32 : i32 to vector<8x256xi32>
    %11 = arith.cmpi sge, %6, %10 : vector<8x256xi32>
    %12 = arith.andi %9, %11 : vector<8x256xi1>
    %cst = arith.constant 0.000000e+00 : f32
    %13 = vector.broadcast %cst : f32 to vector<8x256xf32>
    %14 = arith.select %12, %7, %13 : vector<8x256xi1>, vector<8x256xf32>
    %c16_i32_6 = arith.constant 16 : i32
    %15 = tpu.dynamic_rotate %1 by %c16_i32_6 dim 1 : vector<8x256xf32>, i32 -> vector<8x256xf32>
    %c16_i32_7 = arith.constant 16 : i32
    %16 = vector.broadcast %c16_i32_7 : i32 to vector<8x256xi32>
    %17 = arith.cmpi sge, %4, %16 : vector<8x256xi32>
    %cst_8 = arith.constant 0.000000e+00 : f32
    %18 = vector.broadcast %cst_8 : f32 to vector<8x256xf32>
    %19 = arith.select %17, %15, %18 : vector<8x256xi1>, vector<8x256xf32>
    %c15_i32_9 = arith.constant 15 : i32
    %20 = tpu.dynamic_rotate %1 by %c15_i32_9 dim 1 : vector<8x256xf32>, i32 -> vector<8x256xf32>
    %c16_i32_10 = arith.constant 16 : i32
    %21 = vector.broadcast %c16_i32_10 : i32 to vector<8x256xi32>
    %22 = arith.cmpi sge, %4, %21 : vector<8x256xi32>
    %c14_i32 = arith.constant 14 : i32
    %23 = vector.broadcast %c14_i32 : i32 to vector<8x256xi32>
    %24 = arith.cmpi sle, %6, %23 : vector<8x256xi32>
    %25 = arith.andi %22, %24 : vector<8x256xi1>
    %cst_11 = arith.constant 0.000000e+00 : f32
    %26 = vector.broadcast %cst_11 : f32 to vector<8x256xf32>
    %27 = arith.select %25, %20, %26 : vector<8x256xi1>, vector<8x256xf32>
    %c1_i32_12 = arith.constant 1 : i32
    %28 = tpu.dynamic_rotate %1 by %c1_i32_12 dim 1 : vector<8x256xf32>, i32 -> vector<8x256xf32>
    %c1_i32_13 = arith.constant 1 : i32
    %29 = vector.broadcast %c1_i32_13 : i32 to vector<8x256xi32>
    %30 = arith.cmpi sge, %6, %29 : vector<8x256xi32>
    %cst_14 = arith.constant 0.000000e+00 : f32
    %31 = vector.broadcast %cst_14 : f32 to vector<8x256xf32>
    %32 = arith.select %30, %28, %31 : vector<8x256xi1>, vector<8x256xf32>
    %c255_i32 = arith.constant 255 : i32
    %33 = tpu.dynamic_rotate %1 by %c255_i32 dim 1 : vector<8x256xf32>, i32 -> vector<8x256xf32>
    %c14_i32_15 = arith.constant 14 : i32
    %34 = vector.broadcast %c14_i32_15 : i32 to vector<8x256xi32>
    %35 = arith.cmpi sle, %6, %34 : vector<8x256xi32>
    %cst_16 = arith.constant 0.000000e+00 : f32
    %36 = vector.broadcast %cst_16 : f32 to vector<8x256xf32>
    %37 = arith.select %35, %33, %36 : vector<8x256xi1>, vector<8x256xf32>
    %c241_i32 = arith.constant 241 : i32
    %38 = tpu.dynamic_rotate %1 by %c241_i32 dim 1 : vector<8x256xf32>, i32 -> vector<8x256xf32>
    %c240_i32 = arith.constant 240 : i32
    %39 = vector.broadcast %c240_i32 : i32 to vector<8x256xi32>
    %40 = arith.cmpi slt, %4, %39 : vector<8x256xi32>
    %c1_i32_17 = arith.constant 1 : i32
    %41 = vector.broadcast %c1_i32_17 : i32 to vector<8x256xi32>
    %42 = arith.cmpi sge, %6, %41 : vector<8x256xi32>
    %43 = arith.andi %40, %42 : vector<8x256xi1>
    %cst_18 = arith.constant 0.000000e+00 : f32
    %44 = vector.broadcast %cst_18 : f32 to vector<8x256xf32>
    %45 = arith.select %43, %38, %44 : vector<8x256xi1>, vector<8x256xf32>
    %c240_i32_19 = arith.constant 240 : i32
    %46 = tpu.dynamic_rotate %1 by %c240_i32_19 dim 1 : vector<8x256xf32>, i32 -> vector<8x256xf32>
    %c240_i32_20 = arith.constant 240 : i32
    %47 = vector.broadcast %c240_i32_20 : i32 to vector<8x256xi32>
    %48 = arith.cmpi slt, %4, %47 : vector<8x256xi32>
    %cst_21 = arith.constant 0.000000e+00 : f32
    %49 = vector.broadcast %cst_21 : f32 to vector<8x256xf32>
    %50 = arith.select %48, %46, %49 : vector<8x256xi1>, vector<8x256xf32>
    %c239_i32 = arith.constant 239 : i32
    %51 = tpu.dynamic_rotate %1 by %c239_i32 dim 1 : vector<8x256xf32>, i32 -> vector<8x256xf32>
    %c240_i32_22 = arith.constant 240 : i32
    %52 = vector.broadcast %c240_i32_22 : i32 to vector<8x256xi32>
    %53 = arith.cmpi slt, %4, %52 : vector<8x256xi32>
    %c14_i32_23 = arith.constant 14 : i32
    %54 = vector.broadcast %c14_i32_23 : i32 to vector<8x256xi32>
    %55 = arith.cmpi sle, %6, %54 : vector<8x256xi32>
    %56 = arith.andi %53, %55 : vector<8x256xi1>
    %cst_24 = arith.constant 0.000000e+00 : f32
    %57 = vector.broadcast %cst_24 : f32 to vector<8x256xf32>
    %58 = arith.select %56, %51, %57 : vector<8x256xi1>, vector<8x256xf32>
    %59 = tpu.concatenate %14, %19, %27, %32, %1, %37, %45, %50, %58 in 0 : vector<8x256xf32>, vector<8x256xf32>, vector<8x256xf32>, vector<8x256xf32>, vector<8x256xf32>, vector<8x256xf32>, vector<8x256xf32>, vector<8x256xf32>, vector<8x256xf32> -> vector<72x256xf32>
    %cst_25 = arith.constant dense<0.000000e+00> : vector<16x256xf32>
    %60 = tpu.matmul %2, %59, %cst_25 {dimension_numbers = #tpu.dot_dimension_numbers<[1], [0], [0], [1], [0, 0, 1, 1], [], []>} : vector<16x72xf32>, vector<72x256xf32>, vector<16x256xf32> -> vector<16x256xf32>
    %61 = vector.broadcast %3 : vector<16x1xf32> to vector<16x256xf32>
    %62 = arith.addf %60, %61 : vector<16x256xf32>
    %cst_26 = arith.constant 0.000000e+00 : f32
    %63 = vector.broadcast %cst_26 : f32 to vector<16x256xf32>
    %64 = arith.maximumf %62, %63 : vector<16x256xf32>
    %c0_27 = arith.constant 0 : index
    %c0_28 = arith.constant 0 : index
    %65 = vector.load %arg4[%c0_27, %c0_28] : memref<16x144xf32, #tpu.memory_space<vmem>>, vector<16x144xf32>
    %c0_29 = arith.constant 0 : index
    %c0_30 = arith.constant 0 : index
    %66 = vector.load %arg5[%c0_29, %c0_30] : memref<16x1xf32, #tpu.memory_space<vmem>>, vector<16x1xf32>
    %67 = tpu.iota {dimensions = array<i32: 1>} : vector<16x256xi32>
    %c15_i32_31 = arith.constant 15 : i32
    %68 = vector.broadcast %c15_i32_31 : i32 to vector<16x256xi32>
    %69 = arith.andi %67, %68 : vector<16x256xi32>
    %c17_i32_32 = arith.constant 17 : i32
    %70 = tpu.dynamic_rotate %64 by %c17_i32_32 dim 1 : vector<16x256xf32>, i32 -> vector<16x256xf32>
    %c16_i32_33 = arith.constant 16 : i32
    %71 = vector.broadcast %c16_i32_33 : i32 to vector<16x256xi32>
    %72 = arith.cmpi sge, %67, %71 : vector<16x256xi32>
    %c1_i32_34 = arith.constant 1 : i32
    %73 = vector.broadcast %c1_i32_34 : i32 to vector<16x256xi32>
    %74 = arith.cmpi sge, %69, %73 : vector<16x256xi32>
    %75 = arith.andi %72, %74 : vector<16x256xi1>
    %cst_35 = arith.constant 0.000000e+00 : f32
    %76 = vector.broadcast %cst_35 : f32 to vector<16x256xf32>
    %77 = arith.select %75, %70, %76 : vector<16x256xi1>, vector<16x256xf32>
    %c16_i32_36 = arith.constant 16 : i32
    %78 = tpu.dynamic_rotate %64 by %c16_i32_36 dim 1 : vector<16x256xf32>, i32 -> vector<16x256xf32>
    %c16_i32_37 = arith.constant 16 : i32
    %79 = vector.broadcast %c16_i32_37 : i32 to vector<16x256xi32>
    %80 = arith.cmpi sge, %67, %79 : vector<16x256xi32>
    %cst_38 = arith.constant 0.000000e+00 : f32
    %81 = vector.broadcast %cst_38 : f32 to vector<16x256xf32>
    %82 = arith.select %80, %78, %81 : vector<16x256xi1>, vector<16x256xf32>
    %c15_i32_39 = arith.constant 15 : i32
    %83 = tpu.dynamic_rotate %64 by %c15_i32_39 dim 1 : vector<16x256xf32>, i32 -> vector<16x256xf32>
    %c16_i32_40 = arith.constant 16 : i32
    %84 = vector.broadcast %c16_i32_40 : i32 to vector<16x256xi32>
    %85 = arith.cmpi sge, %67, %84 : vector<16x256xi32>
    %c14_i32_41 = arith.constant 14 : i32
    %86 = vector.broadcast %c14_i32_41 : i32 to vector<16x256xi32>
    %87 = arith.cmpi sle, %69, %86 : vector<16x256xi32>
    %88 = arith.andi %85, %87 : vector<16x256xi1>
    %cst_42 = arith.constant 0.000000e+00 : f32
    %89 = vector.broadcast %cst_42 : f32 to vector<16x256xf32>
    %90 = arith.select %88, %83, %89 : vector<16x256xi1>, vector<16x256xf32>
    %c1_i32_43 = arith.constant 1 : i32
    %91 = tpu.dynamic_rotate %64 by %c1_i32_43 dim 1 : vector<16x256xf32>, i32 -> vector<16x256xf32>
    %c1_i32_44 = arith.constant 1 : i32
    %92 = vector.broadcast %c1_i32_44 : i32 to vector<16x256xi32>
    %93 = arith.cmpi sge, %69, %92 : vector<16x256xi32>
    %cst_45 = arith.constant 0.000000e+00 : f32
    %94 = vector.broadcast %cst_45 : f32 to vector<16x256xf32>
    %95 = arith.select %93, %91, %94 : vector<16x256xi1>, vector<16x256xf32>
    %c255_i32_46 = arith.constant 255 : i32
    %96 = tpu.dynamic_rotate %64 by %c255_i32_46 dim 1 : vector<16x256xf32>, i32 -> vector<16x256xf32>
    %c14_i32_47 = arith.constant 14 : i32
    %97 = vector.broadcast %c14_i32_47 : i32 to vector<16x256xi32>
    %98 = arith.cmpi sle, %69, %97 : vector<16x256xi32>
    %cst_48 = arith.constant 0.000000e+00 : f32
    %99 = vector.broadcast %cst_48 : f32 to vector<16x256xf32>
    %100 = arith.select %98, %96, %99 : vector<16x256xi1>, vector<16x256xf32>
    %c241_i32_49 = arith.constant 241 : i32
    %101 = tpu.dynamic_rotate %64 by %c241_i32_49 dim 1 : vector<16x256xf32>, i32 -> vector<16x256xf32>
    %c240_i32_50 = arith.constant 240 : i32
    %102 = vector.broadcast %c240_i32_50 : i32 to vector<16x256xi32>
    %103 = arith.cmpi slt, %67, %102 : vector<16x256xi32>
    %c1_i32_51 = arith.constant 1 : i32
    %104 = vector.broadcast %c1_i32_51 : i32 to vector<16x256xi32>
    %105 = arith.cmpi sge, %69, %104 : vector<16x256xi32>
    %106 = arith.andi %103, %105 : vector<16x256xi1>
    %cst_52 = arith.constant 0.000000e+00 : f32
    %107 = vector.broadcast %cst_52 : f32 to vector<16x256xf32>
    %108 = arith.select %106, %101, %107 : vector<16x256xi1>, vector<16x256xf32>
    %c240_i32_53 = arith.constant 240 : i32
    %109 = tpu.dynamic_rotate %64 by %c240_i32_53 dim 1 : vector<16x256xf32>, i32 -> vector<16x256xf32>
    %c240_i32_54 = arith.constant 240 : i32
    %110 = vector.broadcast %c240_i32_54 : i32 to vector<16x256xi32>
    %111 = arith.cmpi slt, %67, %110 : vector<16x256xi32>
    %cst_55 = arith.constant 0.000000e+00 : f32
    %112 = vector.broadcast %cst_55 : f32 to vector<16x256xf32>
    %113 = arith.select %111, %109, %112 : vector<16x256xi1>, vector<16x256xf32>
    %c239_i32_56 = arith.constant 239 : i32
    %114 = tpu.dynamic_rotate %64 by %c239_i32_56 dim 1 : vector<16x256xf32>, i32 -> vector<16x256xf32>
    %c240_i32_57 = arith.constant 240 : i32
    %115 = vector.broadcast %c240_i32_57 : i32 to vector<16x256xi32>
    %116 = arith.cmpi slt, %67, %115 : vector<16x256xi32>
    %c14_i32_58 = arith.constant 14 : i32
    %117 = vector.broadcast %c14_i32_58 : i32 to vector<16x256xi32>
    %118 = arith.cmpi sle, %69, %117 : vector<16x256xi32>
    %119 = arith.andi %116, %118 : vector<16x256xi1>
    %cst_59 = arith.constant 0.000000e+00 : f32
    %120 = vector.broadcast %cst_59 : f32 to vector<16x256xf32>
    %121 = arith.select %119, %114, %120 : vector<16x256xi1>, vector<16x256xf32>
    %122 = tpu.concatenate %77, %82, %90, %95, %64, %100, %108, %113, %121 in 0 : vector<16x256xf32>, vector<16x256xf32>, vector<16x256xf32>, vector<16x256xf32>, vector<16x256xf32>, vector<16x256xf32>, vector<16x256xf32>, vector<16x256xf32>, vector<16x256xf32> -> vector<144x256xf32>
    %cst_60 = arith.constant dense<0.000000e+00> : vector<16x256xf32>
    %123 = tpu.matmul %65, %122, %cst_60 {dimension_numbers = #tpu.dot_dimension_numbers<[1], [0], [0], [1], [0, 0, 1, 1], [], []>} : vector<16x144xf32>, vector<144x256xf32>, vector<16x256xf32> -> vector<16x256xf32>
    %124 = vector.broadcast %66 : vector<16x1xf32> to vector<16x256xf32>
    %125 = arith.addf %123, %124 : vector<16x256xf32>
    %cst_61 = arith.constant 0.000000e+00 : f32
    %126 = vector.broadcast %cst_61 : f32 to vector<16x256xf32>
    %127 = arith.maximumf %125, %126 : vector<16x256xf32>
    %c0_62 = arith.constant 0 : index
    %c0_63 = arith.constant 0 : index
    %c0_64 = arith.constant 0 : index
    %128 = vector.load %arg6[%c0_62, %c0_63, %c0_64] : memref<1x16x256xf32, #tpu.memory_space<vmem>>, vector<1x16x256xf32>
    %129 = vector.shape_cast %128 : vector<1x16x256xf32> to vector<16x256xf32>
    %130 = vector.shape_cast %127 : vector<16x256xf32> to vector<1x16x256xf32>
    tpu.vector_store %arg6[%c0_62, %c0_63, %c0_64], %130 {strides = array<i32>} : memref<1x16x256xf32, #tpu.memory_space<vmem>>, vector<1x16x256xf32>,
    return
  }
  func.func @transform_0(%arg0: i32) -> (i32, i32, i32) {
    %c0_i32 = arith.constant 0 : i32
    %c0_i32_0 = arith.constant 0 : i32
    %c0_i32_1 = arith.constant 0 : i32
    return %arg0, %c0_i32, %c0_i32_0 : i32, i32, i32
  }
  func.func @transform_1(%arg0: i32) -> (i32, i32) {
    %c0_i32 = arith.constant 0 : i32
    %c0_i32_0 = arith.constant 0 : i32
    %c0_i32_1 = arith.constant 0 : i32
    return %c0_i32, %c0_i32_0 : i32, i32
  }
  func.func @transform_2(%arg0: i32) -> (i32, i32) {
    %c0_i32 = arith.constant 0 : i32
    %c0_i32_0 = arith.constant 0 : i32
    %c0_i32_1 = arith.constant 0 : i32
    return %c0_i32, %c0_i32_0 : i32, i32
  }
  func.func @transform_3(%arg0: i32) -> (i32, i32) {
    %c0_i32 = arith.constant 0 : i32
    %c0_i32_0 = arith.constant 0 : i32
    %c0_i32_1 = arith.constant 0 : i32
    return %c0_i32, %c0_i32_0 : i32, i32
  }
  func.func @transform_4(%arg0: i32) -> (i32, i32) {
    %c0_i32 = arith.constant 0 : i32
    %c0_i32_0 = arith.constant 0 : i32
    %c0_i32_1 = arith.constant 0 : i32
    return %c0_i32, %c0_i32_0 : i32, i32
  }
  func.func @transform_5(%arg0: i32) -> (i32, i32, i32) {
    %c0_i32 = arith.constant 0 : i32
    %c0_i32_0 = arith.constant 0 : i32
    %c0_i32_1 = arith.constant 0 : i32
    return %arg0, %c0_i32, %c0_i32_0 : i32, i32, i32
  }
}

module attributes {stable_mosaic.version = 11 : i64} {
  func.func @kernel(%arg0: i32, %arg1: memref<1x16x64xf32, #tpu.memory_space<vmem>>, %arg2: memref<32x144xf32, #tpu.memory_space<vmem>>, %arg3: memref<32x1xf32, #tpu.memory_space<vmem>>, %arg4: memref<32x288xf32, #tpu.memory_space<vmem>>, %arg5: memref<32x1xf32, #tpu.memory_space<vmem>>, %arg6: memref<1x32x64xf32, #tpu.memory_space<vmem>>) attributes {dimension_semantics = [#tpu.dimension_semantics<parallel>], iteration_bounds = array<i64: 2>, scalar_prefetch = 0 : i64, scratch_operands = 0 : i64, tpu.core_type = #tpu.core_type<tc>, window_params = [{transform_indices = @transform_0, window_bounds = array<i64: 1, 16, 64>}, {pipeline_mode = #tpu.pipeline_mode<synchronous>, transform_indices = @transform_1, window_bounds = array<i64: 32, 144>}, {pipeline_mode = #tpu.pipeline_mode<synchronous>, transform_indices = @transform_2, window_bounds = array<i64: 32, 1>}, {pipeline_mode = #tpu.pipeline_mode<synchronous>, transform_indices = @transform_3, window_bounds = array<i64: 32, 288>}, {pipeline_mode = #tpu.pipeline_mode<synchronous>, transform_indices = @transform_4, window_bounds = array<i64: 32, 1>}, {transform_indices = @transform_5, window_bounds = array<i64: 1, 32, 64>}]} {
    %c0 = arith.constant 0 : index
    %c0_0 = arith.constant 0 : index
    %c0_1 = arith.constant 0 : index
    %0 = vector.load %arg1[%c0, %c0_0, %c0_1] : memref<1x16x64xf32, #tpu.memory_space<vmem>>, vector<1x16x64xf32>
    %1 = vector.shape_cast %0 : vector<1x16x64xf32> to vector<16x64xf32>
    %c0_2 = arith.constant 0 : index
    %c0_3 = arith.constant 0 : index
    %2 = vector.load %arg2[%c0_2, %c0_3] : memref<32x144xf32, #tpu.memory_space<vmem>>, vector<32x144xf32>
    %c0_4 = arith.constant 0 : index
    %c0_5 = arith.constant 0 : index
    %3 = vector.load %arg3[%c0_4, %c0_5] : memref<32x1xf32, #tpu.memory_space<vmem>>, vector<32x1xf32>
    %4 = tpu.iota {dimensions = array<i32: 1>} : vector<16x64xi32>
    %c7_i32 = arith.constant 7 : i32
    %5 = vector.broadcast %c7_i32 : i32 to vector<16x64xi32>
    %6 = arith.andi %4, %5 : vector<16x64xi32>
    %c9_i32 = arith.constant 9 : i32
    %7 = tpu.dynamic_rotate %1 by %c9_i32 dim 1 : vector<16x64xf32>, i32 -> vector<16x64xf32>
    %c8_i32 = arith.constant 8 : i32
    %8 = vector.broadcast %c8_i32 : i32 to vector<16x64xi32>
    %9 = arith.cmpi sge, %4, %8 : vector<16x64xi32>
    %c1_i32 = arith.constant 1 : i32
    %10 = vector.broadcast %c1_i32 : i32 to vector<16x64xi32>
    %11 = arith.cmpi sge, %6, %10 : vector<16x64xi32>
    %12 = arith.andi %9, %11 : vector<16x64xi1>
    %cst = arith.constant 0.000000e+00 : f32
    %13 = vector.broadcast %cst : f32 to vector<16x64xf32>
    %14 = arith.select %12, %7, %13 : vector<16x64xi1>, vector<16x64xf32>
    %c8_i32_6 = arith.constant 8 : i32
    %15 = tpu.dynamic_rotate %1 by %c8_i32_6 dim 1 : vector<16x64xf32>, i32 -> vector<16x64xf32>
    %c8_i32_7 = arith.constant 8 : i32
    %16 = vector.broadcast %c8_i32_7 : i32 to vector<16x64xi32>
    %17 = arith.cmpi sge, %4, %16 : vector<16x64xi32>
    %cst_8 = arith.constant 0.000000e+00 : f32
    %18 = vector.broadcast %cst_8 : f32 to vector<16x64xf32>
    %19 = arith.select %17, %15, %18 : vector<16x64xi1>, vector<16x64xf32>
    %c7_i32_9 = arith.constant 7 : i32
    %20 = tpu.dynamic_rotate %1 by %c7_i32_9 dim 1 : vector<16x64xf32>, i32 -> vector<16x64xf32>
    %c8_i32_10 = arith.constant 8 : i32
    %21 = vector.broadcast %c8_i32_10 : i32 to vector<16x64xi32>
    %22 = arith.cmpi sge, %4, %21 : vector<16x64xi32>
    %c6_i32 = arith.constant 6 : i32
    %23 = vector.broadcast %c6_i32 : i32 to vector<16x64xi32>
    %24 = arith.cmpi sle, %6, %23 : vector<16x64xi32>
    %25 = arith.andi %22, %24 : vector<16x64xi1>
    %cst_11 = arith.constant 0.000000e+00 : f32
    %26 = vector.broadcast %cst_11 : f32 to vector<16x64xf32>
    %27 = arith.select %25, %20, %26 : vector<16x64xi1>, vector<16x64xf32>
    %c1_i32_12 = arith.constant 1 : i32
    %28 = tpu.dynamic_rotate %1 by %c1_i32_12 dim 1 : vector<16x64xf32>, i32 -> vector<16x64xf32>
    %c1_i32_13 = arith.constant 1 : i32
    %29 = vector.broadcast %c1_i32_13 : i32 to vector<16x64xi32>
    %30 = arith.cmpi sge, %6, %29 : vector<16x64xi32>
    %cst_14 = arith.constant 0.000000e+00 : f32
    %31 = vector.broadcast %cst_14 : f32 to vector<16x64xf32>
    %32 = arith.select %30, %28, %31 : vector<16x64xi1>, vector<16x64xf32>
    %c63_i32 = arith.constant 63 : i32
    %33 = tpu.dynamic_rotate %1 by %c63_i32 dim 1 : vector<16x64xf32>, i32 -> vector<16x64xf32>
    %c6_i32_15 = arith.constant 6 : i32
    %34 = vector.broadcast %c6_i32_15 : i32 to vector<16x64xi32>
    %35 = arith.cmpi sle, %6, %34 : vector<16x64xi32>
    %cst_16 = arith.constant 0.000000e+00 : f32
    %36 = vector.broadcast %cst_16 : f32 to vector<16x64xf32>
    %37 = arith.select %35, %33, %36 : vector<16x64xi1>, vector<16x64xf32>
    %c57_i32 = arith.constant 57 : i32
    %38 = tpu.dynamic_rotate %1 by %c57_i32 dim 1 : vector<16x64xf32>, i32 -> vector<16x64xf32>
    %c56_i32 = arith.constant 56 : i32
    %39 = vector.broadcast %c56_i32 : i32 to vector<16x64xi32>
    %40 = arith.cmpi slt, %4, %39 : vector<16x64xi32>
    %c1_i32_17 = arith.constant 1 : i32
    %41 = vector.broadcast %c1_i32_17 : i32 to vector<16x64xi32>
    %42 = arith.cmpi sge, %6, %41 : vector<16x64xi32>
    %43 = arith.andi %40, %42 : vector<16x64xi1>
    %cst_18 = arith.constant 0.000000e+00 : f32
    %44 = vector.broadcast %cst_18 : f32 to vector<16x64xf32>
    %45 = arith.select %43, %38, %44 : vector<16x64xi1>, vector<16x64xf32>
    %c56_i32_19 = arith.constant 56 : i32
    %46 = tpu.dynamic_rotate %1 by %c56_i32_19 dim 1 : vector<16x64xf32>, i32 -> vector<16x64xf32>
    %c56_i32_20 = arith.constant 56 : i32
    %47 = vector.broadcast %c56_i32_20 : i32 to vector<16x64xi32>
    %48 = arith.cmpi slt, %4, %47 : vector<16x64xi32>
    %cst_21 = arith.constant 0.000000e+00 : f32
    %49 = vector.broadcast %cst_21 : f32 to vector<16x64xf32>
    %50 = arith.select %48, %46, %49 : vector<16x64xi1>, vector<16x64xf32>
    %c55_i32 = arith.constant 55 : i32
    %51 = tpu.dynamic_rotate %1 by %c55_i32 dim 1 : vector<16x64xf32>, i32 -> vector<16x64xf32>
    %c56_i32_22 = arith.constant 56 : i32
    %52 = vector.broadcast %c56_i32_22 : i32 to vector<16x64xi32>
    %53 = arith.cmpi slt, %4, %52 : vector<16x64xi32>
    %c6_i32_23 = arith.constant 6 : i32
    %54 = vector.broadcast %c6_i32_23 : i32 to vector<16x64xi32>
    %55 = arith.cmpi sle, %6, %54 : vector<16x64xi32>
    %56 = arith.andi %53, %55 : vector<16x64xi1>
    %cst_24 = arith.constant 0.000000e+00 : f32
    %57 = vector.broadcast %cst_24 : f32 to vector<16x64xf32>
    %58 = arith.select %56, %51, %57 : vector<16x64xi1>, vector<16x64xf32>
    %59 = tpu.concatenate %14, %19, %27, %32, %1, %37, %45, %50, %58 in 0 : vector<16x64xf32>, vector<16x64xf32>, vector<16x64xf32>, vector<16x64xf32>, vector<16x64xf32>, vector<16x64xf32>, vector<16x64xf32>, vector<16x64xf32>, vector<16x64xf32> -> vector<144x64xf32>
    %cst_25 = arith.constant dense<0.000000e+00> : vector<32x64xf32>
    %60 = tpu.matmul %2, %59, %cst_25 {dimension_numbers = #tpu.dot_dimension_numbers<[1], [0], [0], [1], [0, 0, 1, 1], [], []>} : vector<32x144xf32>, vector<144x64xf32>, vector<32x64xf32> -> vector<32x64xf32>
    %61 = vector.broadcast %3 : vector<32x1xf32> to vector<32x64xf32>
    %62 = arith.addf %60, %61 : vector<32x64xf32>
    %cst_26 = arith.constant 0.000000e+00 : f32
    %63 = vector.broadcast %cst_26 : f32 to vector<32x64xf32>
    %64 = arith.maximumf %62, %63 : vector<32x64xf32>
    %c0_27 = arith.constant 0 : index
    %c0_28 = arith.constant 0 : index
    %65 = vector.load %arg4[%c0_27, %c0_28] : memref<32x288xf32, #tpu.memory_space<vmem>>, vector<32x288xf32>
    %c0_29 = arith.constant 0 : index
    %c0_30 = arith.constant 0 : index
    %66 = vector.load %arg5[%c0_29, %c0_30] : memref<32x1xf32, #tpu.memory_space<vmem>>, vector<32x1xf32>
    %67 = tpu.iota {dimensions = array<i32: 1>} : vector<32x64xi32>
    %c7_i32_31 = arith.constant 7 : i32
    %68 = vector.broadcast %c7_i32_31 : i32 to vector<32x64xi32>
    %69 = arith.andi %67, %68 : vector<32x64xi32>
    %c9_i32_32 = arith.constant 9 : i32
    %70 = tpu.dynamic_rotate %64 by %c9_i32_32 dim 1 : vector<32x64xf32>, i32 -> vector<32x64xf32>
    %c8_i32_33 = arith.constant 8 : i32
    %71 = vector.broadcast %c8_i32_33 : i32 to vector<32x64xi32>
    %72 = arith.cmpi sge, %67, %71 : vector<32x64xi32>
    %c1_i32_34 = arith.constant 1 : i32
    %73 = vector.broadcast %c1_i32_34 : i32 to vector<32x64xi32>
    %74 = arith.cmpi sge, %69, %73 : vector<32x64xi32>
    %75 = arith.andi %72, %74 : vector<32x64xi1>
    %cst_35 = arith.constant 0.000000e+00 : f32
    %76 = vector.broadcast %cst_35 : f32 to vector<32x64xf32>
    %77 = arith.select %75, %70, %76 : vector<32x64xi1>, vector<32x64xf32>
    %c8_i32_36 = arith.constant 8 : i32
    %78 = tpu.dynamic_rotate %64 by %c8_i32_36 dim 1 : vector<32x64xf32>, i32 -> vector<32x64xf32>
    %c8_i32_37 = arith.constant 8 : i32
    %79 = vector.broadcast %c8_i32_37 : i32 to vector<32x64xi32>
    %80 = arith.cmpi sge, %67, %79 : vector<32x64xi32>
    %cst_38 = arith.constant 0.000000e+00 : f32
    %81 = vector.broadcast %cst_38 : f32 to vector<32x64xf32>
    %82 = arith.select %80, %78, %81 : vector<32x64xi1>, vector<32x64xf32>
    %c7_i32_39 = arith.constant 7 : i32
    %83 = tpu.dynamic_rotate %64 by %c7_i32_39 dim 1 : vector<32x64xf32>, i32 -> vector<32x64xf32>
    %c8_i32_40 = arith.constant 8 : i32
    %84 = vector.broadcast %c8_i32_40 : i32 to vector<32x64xi32>
    %85 = arith.cmpi sge, %67, %84 : vector<32x64xi32>
    %c6_i32_41 = arith.constant 6 : i32
    %86 = vector.broadcast %c6_i32_41 : i32 to vector<32x64xi32>
    %87 = arith.cmpi sle, %69, %86 : vector<32x64xi32>
    %88 = arith.andi %85, %87 : vector<32x64xi1>
    %cst_42 = arith.constant 0.000000e+00 : f32
    %89 = vector.broadcast %cst_42 : f32 to vector<32x64xf32>
    %90 = arith.select %88, %83, %89 : vector<32x64xi1>, vector<32x64xf32>
    %c1_i32_43 = arith.constant 1 : i32
    %91 = tpu.dynamic_rotate %64 by %c1_i32_43 dim 1 : vector<32x64xf32>, i32 -> vector<32x64xf32>
    %c1_i32_44 = arith.constant 1 : i32
    %92 = vector.broadcast %c1_i32_44 : i32 to vector<32x64xi32>
    %93 = arith.cmpi sge, %69, %92 : vector<32x64xi32>
    %cst_45 = arith.constant 0.000000e+00 : f32
    %94 = vector.broadcast %cst_45 : f32 to vector<32x64xf32>
    %95 = arith.select %93, %91, %94 : vector<32x64xi1>, vector<32x64xf32>
    %c63_i32_46 = arith.constant 63 : i32
    %96 = tpu.dynamic_rotate %64 by %c63_i32_46 dim 1 : vector<32x64xf32>, i32 -> vector<32x64xf32>
    %c6_i32_47 = arith.constant 6 : i32
    %97 = vector.broadcast %c6_i32_47 : i32 to vector<32x64xi32>
    %98 = arith.cmpi sle, %69, %97 : vector<32x64xi32>
    %cst_48 = arith.constant 0.000000e+00 : f32
    %99 = vector.broadcast %cst_48 : f32 to vector<32x64xf32>
    %100 = arith.select %98, %96, %99 : vector<32x64xi1>, vector<32x64xf32>
    %c57_i32_49 = arith.constant 57 : i32
    %101 = tpu.dynamic_rotate %64 by %c57_i32_49 dim 1 : vector<32x64xf32>, i32 -> vector<32x64xf32>
    %c56_i32_50 = arith.constant 56 : i32
    %102 = vector.broadcast %c56_i32_50 : i32 to vector<32x64xi32>
    %103 = arith.cmpi slt, %67, %102 : vector<32x64xi32>
    %c1_i32_51 = arith.constant 1 : i32
    %104 = vector.broadcast %c1_i32_51 : i32 to vector<32x64xi32>
    %105 = arith.cmpi sge, %69, %104 : vector<32x64xi32>
    %106 = arith.andi %103, %105 : vector<32x64xi1>
    %cst_52 = arith.constant 0.000000e+00 : f32
    %107 = vector.broadcast %cst_52 : f32 to vector<32x64xf32>
    %108 = arith.select %106, %101, %107 : vector<32x64xi1>, vector<32x64xf32>
    %c56_i32_53 = arith.constant 56 : i32
    %109 = tpu.dynamic_rotate %64 by %c56_i32_53 dim 1 : vector<32x64xf32>, i32 -> vector<32x64xf32>
    %c56_i32_54 = arith.constant 56 : i32
    %110 = vector.broadcast %c56_i32_54 : i32 to vector<32x64xi32>
    %111 = arith.cmpi slt, %67, %110 : vector<32x64xi32>
    %cst_55 = arith.constant 0.000000e+00 : f32
    %112 = vector.broadcast %cst_55 : f32 to vector<32x64xf32>
    %113 = arith.select %111, %109, %112 : vector<32x64xi1>, vector<32x64xf32>
    %c55_i32_56 = arith.constant 55 : i32
    %114 = tpu.dynamic_rotate %64 by %c55_i32_56 dim 1 : vector<32x64xf32>, i32 -> vector<32x64xf32>
    %c56_i32_57 = arith.constant 56 : i32
    %115 = vector.broadcast %c56_i32_57 : i32 to vector<32x64xi32>
    %116 = arith.cmpi slt, %67, %115 : vector<32x64xi32>
    %c6_i32_58 = arith.constant 6 : i32
    %117 = vector.broadcast %c6_i32_58 : i32 to vector<32x64xi32>
    %118 = arith.cmpi sle, %69, %117 : vector<32x64xi32>
    %119 = arith.andi %116, %118 : vector<32x64xi1>
    %cst_59 = arith.constant 0.000000e+00 : f32
    %120 = vector.broadcast %cst_59 : f32 to vector<32x64xf32>
    %121 = arith.select %119, %114, %120 : vector<32x64xi1>, vector<32x64xf32>
    %122 = tpu.concatenate %77, %82, %90, %95, %64, %100, %108, %113, %121 in 0 : vector<32x64xf32>, vector<32x64xf32>, vector<32x64xf32>, vector<32x64xf32>, vector<32x64xf32>, vector<32x64xf32>, vector<32x64xf32>, vector<32x64xf32>, vector<32x64xf32> -> vector<288x64xf32>
    %cst_60 = arith.constant dense<0.000000e+00> : vector<32x64xf32>
    %123 = tpu.matmul %65, %122, %cst_60 {dimension_numbers = #tpu.dot_dimension_numbers<[1], [0], [0], [1], [0, 0, 1, 1], [], []>} : vector<32x288xf32>, vector<288x64xf32>, vector<32x64xf32> -> vector<32x64xf32>
    %124 = vector.broadcast %66 : vector<32x1xf32> to vector<32x64xf32>
    %125 = arith.addf %123, %124 : vector<32x64xf32>
    %cst_61 = arith.constant 0.000000e+00 : f32
    %126 = vector.broadcast %cst_61 : f32 to vector<32x64xf32>
    %127 = arith.maximumf %125, %126 : vector<32x64xf32>
    %c0_62 = arith.constant 0 : index
    %c0_63 = arith.constant 0 : index
    %c0_64 = arith.constant 0 : index
    %128 = vector.load %arg6[%c0_62, %c0_63, %c0_64] : memref<1x32x64xf32, #tpu.memory_space<vmem>>, vector<1x32x64xf32>
    %129 = vector.shape_cast %128 : vector<1x32x64xf32> to vector<32x64xf32>
    %130 = vector.shape_cast %127 : vector<32x64xf32> to vector<1x32x64xf32>
    tpu.vector_store %arg6[%c0_62, %c0_63, %c0_64], %130 {strides = array<i32>} : memref<1x32x64xf32, #tpu.memory_space<vmem>>, vector<1x32x64xf32>,
    return
  }
  func.func @transform_0(%arg0: i32) -> (i32, i32, i32) {
    %c0_i32 = arith.constant 0 : i32
    %c0_i32_0 = arith.constant 0 : i32
    %c0_i32_1 = arith.constant 0 : i32
    return %arg0, %c0_i32, %c0_i32_0 : i32, i32, i32
  }
  func.func @transform_1(%arg0: i32) -> (i32, i32) {
    %c0_i32 = arith.constant 0 : i32
    %c0_i32_0 = arith.constant 0 : i32
    %c0_i32_1 = arith.constant 0 : i32
    return %c0_i32, %c0_i32_0 : i32, i32
  }
  func.func @transform_2(%arg0: i32) -> (i32, i32) {
    %c0_i32 = arith.constant 0 : i32
    %c0_i32_0 = arith.constant 0 : i32
    %c0_i32_1 = arith.constant 0 : i32
    return %c0_i32, %c0_i32_0 : i32, i32
  }
  func.func @transform_3(%arg0: i32) -> (i32, i32) {
    %c0_i32 = arith.constant 0 : i32
    %c0_i32_0 = arith.constant 0 : i32
    %c0_i32_1 = arith.constant 0 : i32
    return %c0_i32, %c0_i32_0 : i32, i32
  }
  func.func @transform_4(%arg0: i32) -> (i32, i32) {
    %c0_i32 = arith.constant 0 : i32
    %c0_i32_0 = arith.constant 0 : i32
    %c0_i32_1 = arith.constant 0 : i32
    return %c0_i32, %c0_i32_0 : i32, i32
  }
  func.func @transform_5(%arg0: i32) -> (i32, i32, i32) {
    %c0_i32 = arith.constant 0 : i32
    %c0_i32_0 = arith.constant 0 : i32
    %c0_i32_1 = arith.constant 0 : i32
    return %arg0, %c0_i32, %c0_i32_0 : i32, i32, i32
  }
}

module attributes {stable_mosaic.version = 11 : i64} {
  func.func @kernel(%arg0: i32, %arg1: memref<1x32x16xf32, #tpu.memory_space<vmem>>, %arg2: memref<64x288xf32, #tpu.memory_space<vmem>>, %arg3: memref<64x1xf32, #tpu.memory_space<vmem>>, %arg4: memref<64x576xf32, #tpu.memory_space<vmem>>, %arg5: memref<64x1xf32, #tpu.memory_space<vmem>>, %arg6: memref<1x64x16xf32, #tpu.memory_space<vmem>>) attributes {dimension_semantics = [#tpu.dimension_semantics<parallel>], iteration_bounds = array<i64: 2>, scalar_prefetch = 0 : i64, scratch_operands = 0 : i64, tpu.core_type = #tpu.core_type<tc>, window_params = [{transform_indices = @transform_0, window_bounds = array<i64: 1, 32, 16>}, {pipeline_mode = #tpu.pipeline_mode<synchronous>, transform_indices = @transform_1, window_bounds = array<i64: 64, 288>}, {pipeline_mode = #tpu.pipeline_mode<synchronous>, transform_indices = @transform_2, window_bounds = array<i64: 64, 1>}, {pipeline_mode = #tpu.pipeline_mode<synchronous>, transform_indices = @transform_3, window_bounds = array<i64: 64, 576>}, {pipeline_mode = #tpu.pipeline_mode<synchronous>, transform_indices = @transform_4, window_bounds = array<i64: 64, 1>}, {transform_indices = @transform_5, window_bounds = array<i64: 1, 64, 16>}]} {
    %c0 = arith.constant 0 : index
    %c0_0 = arith.constant 0 : index
    %c0_1 = arith.constant 0 : index
    %0 = vector.load %arg1[%c0, %c0_0, %c0_1] : memref<1x32x16xf32, #tpu.memory_space<vmem>>, vector<1x32x16xf32>
    %1 = vector.shape_cast %0 : vector<1x32x16xf32> to vector<32x16xf32>
    %c0_2 = arith.constant 0 : index
    %c0_3 = arith.constant 0 : index
    %2 = vector.load %arg2[%c0_2, %c0_3] : memref<64x288xf32, #tpu.memory_space<vmem>>, vector<64x288xf32>
    %c0_4 = arith.constant 0 : index
    %c0_5 = arith.constant 0 : index
    %3 = vector.load %arg3[%c0_4, %c0_5] : memref<64x1xf32, #tpu.memory_space<vmem>>, vector<64x1xf32>
    %4 = tpu.iota {dimensions = array<i32: 1>} : vector<32x16xi32>
    %c3_i32 = arith.constant 3 : i32
    %5 = vector.broadcast %c3_i32 : i32 to vector<32x16xi32>
    %6 = arith.andi %4, %5 : vector<32x16xi32>
    %c5_i32 = arith.constant 5 : i32
    %7 = tpu.dynamic_rotate %1 by %c5_i32 dim 1 : vector<32x16xf32>, i32 -> vector<32x16xf32>
    %c4_i32 = arith.constant 4 : i32
    %8 = vector.broadcast %c4_i32 : i32 to vector<32x16xi32>
    %9 = arith.cmpi sge, %4, %8 : vector<32x16xi32>
    %c1_i32 = arith.constant 1 : i32
    %10 = vector.broadcast %c1_i32 : i32 to vector<32x16xi32>
    %11 = arith.cmpi sge, %6, %10 : vector<32x16xi32>
    %12 = arith.andi %9, %11 : vector<32x16xi1>
    %cst = arith.constant 0.000000e+00 : f32
    %13 = vector.broadcast %cst : f32 to vector<32x16xf32>
    %14 = arith.select %12, %7, %13 : vector<32x16xi1>, vector<32x16xf32>
    %c4_i32_6 = arith.constant 4 : i32
    %15 = tpu.dynamic_rotate %1 by %c4_i32_6 dim 1 : vector<32x16xf32>, i32 -> vector<32x16xf32>
    %c4_i32_7 = arith.constant 4 : i32
    %16 = vector.broadcast %c4_i32_7 : i32 to vector<32x16xi32>
    %17 = arith.cmpi sge, %4, %16 : vector<32x16xi32>
    %cst_8 = arith.constant 0.000000e+00 : f32
    %18 = vector.broadcast %cst_8 : f32 to vector<32x16xf32>
    %19 = arith.select %17, %15, %18 : vector<32x16xi1>, vector<32x16xf32>
    %c3_i32_9 = arith.constant 3 : i32
    %20 = tpu.dynamic_rotate %1 by %c3_i32_9 dim 1 : vector<32x16xf32>, i32 -> vector<32x16xf32>
    %c4_i32_10 = arith.constant 4 : i32
    %21 = vector.broadcast %c4_i32_10 : i32 to vector<32x16xi32>
    %22 = arith.cmpi sge, %4, %21 : vector<32x16xi32>
    %c2_i32 = arith.constant 2 : i32
    %23 = vector.broadcast %c2_i32 : i32 to vector<32x16xi32>
    %24 = arith.cmpi sle, %6, %23 : vector<32x16xi32>
    %25 = arith.andi %22, %24 : vector<32x16xi1>
    %cst_11 = arith.constant 0.000000e+00 : f32
    %26 = vector.broadcast %cst_11 : f32 to vector<32x16xf32>
    %27 = arith.select %25, %20, %26 : vector<32x16xi1>, vector<32x16xf32>
    %c1_i32_12 = arith.constant 1 : i32
    %28 = tpu.dynamic_rotate %1 by %c1_i32_12 dim 1 : vector<32x16xf32>, i32 -> vector<32x16xf32>
    %c1_i32_13 = arith.constant 1 : i32
    %29 = vector.broadcast %c1_i32_13 : i32 to vector<32x16xi32>
    %30 = arith.cmpi sge, %6, %29 : vector<32x16xi32>
    %cst_14 = arith.constant 0.000000e+00 : f32
    %31 = vector.broadcast %cst_14 : f32 to vector<32x16xf32>
    %32 = arith.select %30, %28, %31 : vector<32x16xi1>, vector<32x16xf32>
    %c15_i32 = arith.constant 15 : i32
    %33 = tpu.dynamic_rotate %1 by %c15_i32 dim 1 : vector<32x16xf32>, i32 -> vector<32x16xf32>
    %c2_i32_15 = arith.constant 2 : i32
    %34 = vector.broadcast %c2_i32_15 : i32 to vector<32x16xi32>
    %35 = arith.cmpi sle, %6, %34 : vector<32x16xi32>
    %cst_16 = arith.constant 0.000000e+00 : f32
    %36 = vector.broadcast %cst_16 : f32 to vector<32x16xf32>
    %37 = arith.select %35, %33, %36 : vector<32x16xi1>, vector<32x16xf32>
    %c13_i32 = arith.constant 13 : i32
    %38 = tpu.dynamic_rotate %1 by %c13_i32 dim 1 : vector<32x16xf32>, i32 -> vector<32x16xf32>
    %c12_i32 = arith.constant 12 : i32
    %39 = vector.broadcast %c12_i32 : i32 to vector<32x16xi32>
    %40 = arith.cmpi slt, %4, %39 : vector<32x16xi32>
    %c1_i32_17 = arith.constant 1 : i32
    %41 = vector.broadcast %c1_i32_17 : i32 to vector<32x16xi32>
    %42 = arith.cmpi sge, %6, %41 : vector<32x16xi32>
    %43 = arith.andi %40, %42 : vector<32x16xi1>
    %cst_18 = arith.constant 0.000000e+00 : f32
    %44 = vector.broadcast %cst_18 : f32 to vector<32x16xf32>
    %45 = arith.select %43, %38, %44 : vector<32x16xi1>, vector<32x16xf32>
    %c12_i32_19 = arith.constant 12 : i32
    %46 = tpu.dynamic_rotate %1 by %c12_i32_19 dim 1 : vector<32x16xf32>, i32 -> vector<32x16xf32>
    %c12_i32_20 = arith.constant 12 : i32
    %47 = vector.broadcast %c12_i32_20 : i32 to vector<32x16xi32>
    %48 = arith.cmpi slt, %4, %47 : vector<32x16xi32>
    %cst_21 = arith.constant 0.000000e+00 : f32
    %49 = vector.broadcast %cst_21 : f32 to vector<32x16xf32>
    %50 = arith.select %48, %46, %49 : vector<32x16xi1>, vector<32x16xf32>
    %c11_i32 = arith.constant 11 : i32
    %51 = tpu.dynamic_rotate %1 by %c11_i32 dim 1 : vector<32x16xf32>, i32 -> vector<32x16xf32>
    %c12_i32_22 = arith.constant 12 : i32
    %52 = vector.broadcast %c12_i32_22 : i32 to vector<32x16xi32>
    %53 = arith.cmpi slt, %4, %52 : vector<32x16xi32>
    %c2_i32_23 = arith.constant 2 : i32
    %54 = vector.broadcast %c2_i32_23 : i32 to vector<32x16xi32>
    %55 = arith.cmpi sle, %6, %54 : vector<32x16xi32>
    %56 = arith.andi %53, %55 : vector<32x16xi1>
    %cst_24 = arith.constant 0.000000e+00 : f32
    %57 = vector.broadcast %cst_24 : f32 to vector<32x16xf32>
    %58 = arith.select %56, %51, %57 : vector<32x16xi1>, vector<32x16xf32>
    %59 = tpu.concatenate %14, %19, %27, %32, %1, %37, %45, %50, %58 in 0 : vector<32x16xf32>, vector<32x16xf32>, vector<32x16xf32>, vector<32x16xf32>, vector<32x16xf32>, vector<32x16xf32>, vector<32x16xf32>, vector<32x16xf32>, vector<32x16xf32> -> vector<288x16xf32>
    %cst_25 = arith.constant dense<0.000000e+00> : vector<64x16xf32>
    %60 = tpu.matmul %2, %59, %cst_25 {dimension_numbers = #tpu.dot_dimension_numbers<[1], [0], [0], [1], [0, 0, 1, 1], [], []>} : vector<64x288xf32>, vector<288x16xf32>, vector<64x16xf32> -> vector<64x16xf32>
    %61 = vector.broadcast %3 : vector<64x1xf32> to vector<64x16xf32>
    %62 = arith.addf %60, %61 : vector<64x16xf32>
    %cst_26 = arith.constant 0.000000e+00 : f32
    %63 = vector.broadcast %cst_26 : f32 to vector<64x16xf32>
    %64 = arith.maximumf %62, %63 : vector<64x16xf32>
    %c0_27 = arith.constant 0 : index
    %c0_28 = arith.constant 0 : index
    %65 = vector.load %arg4[%c0_27, %c0_28] : memref<64x576xf32, #tpu.memory_space<vmem>>, vector<64x576xf32>
    %c0_29 = arith.constant 0 : index
    %c0_30 = arith.constant 0 : index
    %66 = vector.load %arg5[%c0_29, %c0_30] : memref<64x1xf32, #tpu.memory_space<vmem>>, vector<64x1xf32>
    %67 = tpu.iota {dimensions = array<i32: 1>} : vector<64x16xi32>
    %c3_i32_31 = arith.constant 3 : i32
    %68 = vector.broadcast %c3_i32_31 : i32 to vector<64x16xi32>
    %69 = arith.andi %67, %68 : vector<64x16xi32>
    %c5_i32_32 = arith.constant 5 : i32
    %70 = tpu.dynamic_rotate %64 by %c5_i32_32 dim 1 : vector<64x16xf32>, i32 -> vector<64x16xf32>
    %c4_i32_33 = arith.constant 4 : i32
    %71 = vector.broadcast %c4_i32_33 : i32 to vector<64x16xi32>
    %72 = arith.cmpi sge, %67, %71 : vector<64x16xi32>
    %c1_i32_34 = arith.constant 1 : i32
    %73 = vector.broadcast %c1_i32_34 : i32 to vector<64x16xi32>
    %74 = arith.cmpi sge, %69, %73 : vector<64x16xi32>
    %75 = arith.andi %72, %74 : vector<64x16xi1>
    %cst_35 = arith.constant 0.000000e+00 : f32
    %76 = vector.broadcast %cst_35 : f32 to vector<64x16xf32>
    %77 = arith.select %75, %70, %76 : vector<64x16xi1>, vector<64x16xf32>
    %c4_i32_36 = arith.constant 4 : i32
    %78 = tpu.dynamic_rotate %64 by %c4_i32_36 dim 1 : vector<64x16xf32>, i32 -> vector<64x16xf32>
    %c4_i32_37 = arith.constant 4 : i32
    %79 = vector.broadcast %c4_i32_37 : i32 to vector<64x16xi32>
    %80 = arith.cmpi sge, %67, %79 : vector<64x16xi32>
    %cst_38 = arith.constant 0.000000e+00 : f32
    %81 = vector.broadcast %cst_38 : f32 to vector<64x16xf32>
    %82 = arith.select %80, %78, %81 : vector<64x16xi1>, vector<64x16xf32>
    %c3_i32_39 = arith.constant 3 : i32
    %83 = tpu.dynamic_rotate %64 by %c3_i32_39 dim 1 : vector<64x16xf32>, i32 -> vector<64x16xf32>
    %c4_i32_40 = arith.constant 4 : i32
    %84 = vector.broadcast %c4_i32_40 : i32 to vector<64x16xi32>
    %85 = arith.cmpi sge, %67, %84 : vector<64x16xi32>
    %c2_i32_41 = arith.constant 2 : i32
    %86 = vector.broadcast %c2_i32_41 : i32 to vector<64x16xi32>
    %87 = arith.cmpi sle, %69, %86 : vector<64x16xi32>
    %88 = arith.andi %85, %87 : vector<64x16xi1>
    %cst_42 = arith.constant 0.000000e+00 : f32
    %89 = vector.broadcast %cst_42 : f32 to vector<64x16xf32>
    %90 = arith.select %88, %83, %89 : vector<64x16xi1>, vector<64x16xf32>
    %c1_i32_43 = arith.constant 1 : i32
    %91 = tpu.dynamic_rotate %64 by %c1_i32_43 dim 1 : vector<64x16xf32>, i32 -> vector<64x16xf32>
    %c1_i32_44 = arith.constant 1 : i32
    %92 = vector.broadcast %c1_i32_44 : i32 to vector<64x16xi32>
    %93 = arith.cmpi sge, %69, %92 : vector<64x16xi32>
    %cst_45 = arith.constant 0.000000e+00 : f32
    %94 = vector.broadcast %cst_45 : f32 to vector<64x16xf32>
    %95 = arith.select %93, %91, %94 : vector<64x16xi1>, vector<64x16xf32>
    %c15_i32_46 = arith.constant 15 : i32
    %96 = tpu.dynamic_rotate %64 by %c15_i32_46 dim 1 : vector<64x16xf32>, i32 -> vector<64x16xf32>
    %c2_i32_47 = arith.constant 2 : i32
    %97 = vector.broadcast %c2_i32_47 : i32 to vector<64x16xi32>
    %98 = arith.cmpi sle, %69, %97 : vector<64x16xi32>
    %cst_48 = arith.constant 0.000000e+00 : f32
    %99 = vector.broadcast %cst_48 : f32 to vector<64x16xf32>
    %100 = arith.select %98, %96, %99 : vector<64x16xi1>, vector<64x16xf32>
    %c13_i32_49 = arith.constant 13 : i32
    %101 = tpu.dynamic_rotate %64 by %c13_i32_49 dim 1 : vector<64x16xf32>, i32 -> vector<64x16xf32>
    %c12_i32_50 = arith.constant 12 : i32
    %102 = vector.broadcast %c12_i32_50 : i32 to vector<64x16xi32>
    %103 = arith.cmpi slt, %67, %102 : vector<64x16xi32>
    %c1_i32_51 = arith.constant 1 : i32
    %104 = vector.broadcast %c1_i32_51 : i32 to vector<64x16xi32>
    %105 = arith.cmpi sge, %69, %104 : vector<64x16xi32>
    %106 = arith.andi %103, %105 : vector<64x16xi1>
    %cst_52 = arith.constant 0.000000e+00 : f32
    %107 = vector.broadcast %cst_52 : f32 to vector<64x16xf32>
    %108 = arith.select %106, %101, %107 : vector<64x16xi1>, vector<64x16xf32>
    %c12_i32_53 = arith.constant 12 : i32
    %109 = tpu.dynamic_rotate %64 by %c12_i32_53 dim 1 : vector<64x16xf32>, i32 -> vector<64x16xf32>
    %c12_i32_54 = arith.constant 12 : i32
    %110 = vector.broadcast %c12_i32_54 : i32 to vector<64x16xi32>
    %111 = arith.cmpi slt, %67, %110 : vector<64x16xi32>
    %cst_55 = arith.constant 0.000000e+00 : f32
    %112 = vector.broadcast %cst_55 : f32 to vector<64x16xf32>
    %113 = arith.select %111, %109, %112 : vector<64x16xi1>, vector<64x16xf32>
    %c11_i32_56 = arith.constant 11 : i32
    %114 = tpu.dynamic_rotate %64 by %c11_i32_56 dim 1 : vector<64x16xf32>, i32 -> vector<64x16xf32>
    %c12_i32_57 = arith.constant 12 : i32
    %115 = vector.broadcast %c12_i32_57 : i32 to vector<64x16xi32>
    %116 = arith.cmpi slt, %67, %115 : vector<64x16xi32>
    %c2_i32_58 = arith.constant 2 : i32
    %117 = vector.broadcast %c2_i32_58 : i32 to vector<64x16xi32>
    %118 = arith.cmpi sle, %69, %117 : vector<64x16xi32>
    %119 = arith.andi %116, %118 : vector<64x16xi1>
    %cst_59 = arith.constant 0.000000e+00 : f32
    %120 = vector.broadcast %cst_59 : f32 to vector<64x16xf32>
    %121 = arith.select %119, %114, %120 : vector<64x16xi1>, vector<64x16xf32>
    %122 = tpu.concatenate %77, %82, %90, %95, %64, %100, %108, %113, %121 in 0 : vector<64x16xf32>, vector<64x16xf32>, vector<64x16xf32>, vector<64x16xf32>, vector<64x16xf32>, vector<64x16xf32>, vector<64x16xf32>, vector<64x16xf32>, vector<64x16xf32> -> vector<576x16xf32>
    %cst_60 = arith.constant dense<0.000000e+00> : vector<64x16xf32>
    %123 = tpu.matmul %65, %122, %cst_60 {dimension_numbers = #tpu.dot_dimension_numbers<[1], [0], [0], [1], [0, 0, 1, 1], [], []>} : vector<64x576xf32>, vector<576x16xf32>, vector<64x16xf32> -> vector<64x16xf32>
    %124 = vector.broadcast %66 : vector<64x1xf32> to vector<64x16xf32>
    %125 = arith.addf %123, %124 : vector<64x16xf32>
    %cst_61 = arith.constant 0.000000e+00 : f32
    %126 = vector.broadcast %cst_61 : f32 to vector<64x16xf32>
    %127 = arith.maximumf %125, %126 : vector<64x16xf32>
    %c0_62 = arith.constant 0 : index
    %c0_63 = arith.constant 0 : index
    %c0_64 = arith.constant 0 : index
    %128 = vector.load %arg6[%c0_62, %c0_63, %c0_64] : memref<1x64x16xf32, #tpu.memory_space<vmem>>, vector<1x64x16xf32>
    %129 = vector.shape_cast %128 : vector<1x64x16xf32> to vector<64x16xf32>
    %130 = vector.shape_cast %127 : vector<64x16xf32> to vector<1x64x16xf32>
    tpu.vector_store %arg6[%c0_62, %c0_63, %c0_64], %130 {strides = array<i32>} : memref<1x64x16xf32, #tpu.memory_space<vmem>>, vector<1x64x16xf32>,
    return
  }
  func.func @transform_0(%arg0: i32) -> (i32, i32, i32) {
    %c0_i32 = arith.constant 0 : i32
    %c0_i32_0 = arith.constant 0 : i32
    %c0_i32_1 = arith.constant 0 : i32
    return %arg0, %c0_i32, %c0_i32_0 : i32, i32, i32
  }
  func.func @transform_1(%arg0: i32) -> (i32, i32) {
    %c0_i32 = arith.constant 0 : i32
    %c0_i32_0 = arith.constant 0 : i32
    %c0_i32_1 = arith.constant 0 : i32
    return %c0_i32, %c0_i32_0 : i32, i32
  }
  func.func @transform_2(%arg0: i32) -> (i32, i32) {
    %c0_i32 = arith.constant 0 : i32
    %c0_i32_0 = arith.constant 0 : i32
    %c0_i32_1 = arith.constant 0 : i32
    return %c0_i32, %c0_i32_0 : i32, i32
  }
  func.func @transform_3(%arg0: i32) -> (i32, i32) {
    %c0_i32 = arith.constant 0 : i32
    %c0_i32_0 = arith.constant 0 : i32
    %c0_i32_1 = arith.constant 0 : i32
    return %c0_i32, %c0_i32_0 : i32, i32
  }
  func.func @transform_4(%arg0: i32) -> (i32, i32) {
    %c0_i32 = arith.constant 0 : i32
    %c0_i32_0 = arith.constant 0 : i32
    %c0_i32_1 = arith.constant 0 : i32
    return %c0_i32, %c0_i32_0 : i32, i32
  }
  func.func @transform_5(%arg0: i32) -> (i32, i32, i32) {
    %c0_i32 = arith.constant 0 : i32
    %c0_i32_0 = arith.constant 0 : i32
    %c0_i32_1 = arith.constant 0 : i32
    return %arg0, %c0_i32, %c0_i32_0 : i32, i32, i32
  }
}

module attributes {stable_mosaic.version = 11 : i64} {
  func.func @kernel(%arg0: i32, %arg1: memref<1x64x4xf32, #tpu.memory_space<vmem>>, %arg2: memref<128x576xf32, #tpu.memory_space<vmem>>, %arg3: memref<128x1xf32, #tpu.memory_space<vmem>>, %arg4: memref<128x1152xf32, #tpu.memory_space<vmem>>, %arg5: memref<128x1xf32, #tpu.memory_space<vmem>>, %arg6: memref<1x128x4xf32, #tpu.memory_space<vmem>>) attributes {dimension_semantics = [#tpu.dimension_semantics<parallel>], iteration_bounds = array<i64: 2>, scalar_prefetch = 0 : i64, scratch_operands = 0 : i64, tpu.core_type = #tpu.core_type<tc>, window_params = [{transform_indices = @transform_0, window_bounds = array<i64: 1, 64, 4>}, {pipeline_mode = #tpu.pipeline_mode<synchronous>, transform_indices = @transform_1, window_bounds = array<i64: 128, 576>}, {pipeline_mode = #tpu.pipeline_mode<synchronous>, transform_indices = @transform_2, window_bounds = array<i64: 128, 1>}, {pipeline_mode = #tpu.pipeline_mode<synchronous>, transform_indices = @transform_3, window_bounds = array<i64: 128, 1152>}, {pipeline_mode = #tpu.pipeline_mode<synchronous>, transform_indices = @transform_4, window_bounds = array<i64: 128, 1>}, {transform_indices = @transform_5, window_bounds = array<i64: 1, 128, 4>}]} {
    %c0 = arith.constant 0 : index
    %c0_0 = arith.constant 0 : index
    %c0_1 = arith.constant 0 : index
    %0 = vector.load %arg1[%c0, %c0_0, %c0_1] : memref<1x64x4xf32, #tpu.memory_space<vmem>>, vector<1x64x4xf32>
    %1 = vector.shape_cast %0 : vector<1x64x4xf32> to vector<64x4xf32>
    %c0_2 = arith.constant 0 : index
    %c0_3 = arith.constant 0 : index
    %2 = vector.load %arg2[%c0_2, %c0_3] : memref<128x576xf32, #tpu.memory_space<vmem>>, vector<128x576xf32>
    %c0_4 = arith.constant 0 : index
    %c0_5 = arith.constant 0 : index
    %3 = vector.load %arg3[%c0_4, %c0_5] : memref<128x1xf32, #tpu.memory_space<vmem>>, vector<128x1xf32>
    %4 = tpu.iota {dimensions = array<i32: 1>} : vector<64x4xi32>
    %c1_i32 = arith.constant 1 : i32
    %5 = vector.broadcast %c1_i32 : i32 to vector<64x4xi32>
    %6 = arith.andi %4, %5 : vector<64x4xi32>
    %c3_i32 = arith.constant 3 : i32
    %7 = tpu.dynamic_rotate %1 by %c3_i32 dim 1 : vector<64x4xf32>, i32 -> vector<64x4xf32>
    %c2_i32 = arith.constant 2 : i32
    %8 = vector.broadcast %c2_i32 : i32 to vector<64x4xi32>
    %9 = arith.cmpi sge, %4, %8 : vector<64x4xi32>
    %c1_i32_6 = arith.constant 1 : i32
    %10 = vector.broadcast %c1_i32_6 : i32 to vector<64x4xi32>
    %11 = arith.cmpi sge, %6, %10 : vector<64x4xi32>
    %12 = arith.andi %9, %11 : vector<64x4xi1>
    %cst = arith.constant 0.000000e+00 : f32
    %13 = vector.broadcast %cst : f32 to vector<64x4xf32>
    %14 = arith.select %12, %7, %13 : vector<64x4xi1>, vector<64x4xf32>
    %c2_i32_7 = arith.constant 2 : i32
    %15 = tpu.dynamic_rotate %1 by %c2_i32_7 dim 1 : vector<64x4xf32>, i32 -> vector<64x4xf32>
    %c2_i32_8 = arith.constant 2 : i32
    %16 = vector.broadcast %c2_i32_8 : i32 to vector<64x4xi32>
    %17 = arith.cmpi sge, %4, %16 : vector<64x4xi32>
    %cst_9 = arith.constant 0.000000e+00 : f32
    %18 = vector.broadcast %cst_9 : f32 to vector<64x4xf32>
    %19 = arith.select %17, %15, %18 : vector<64x4xi1>, vector<64x4xf32>
    %c1_i32_10 = arith.constant 1 : i32
    %20 = tpu.dynamic_rotate %1 by %c1_i32_10 dim 1 : vector<64x4xf32>, i32 -> vector<64x4xf32>
    %c2_i32_11 = arith.constant 2 : i32
    %21 = vector.broadcast %c2_i32_11 : i32 to vector<64x4xi32>
    %22 = arith.cmpi sge, %4, %21 : vector<64x4xi32>
    %c0_i32 = arith.constant 0 : i32
    %23 = vector.broadcast %c0_i32 : i32 to vector<64x4xi32>
    %24 = arith.cmpi sle, %6, %23 : vector<64x4xi32>
    %25 = arith.andi %22, %24 : vector<64x4xi1>
    %cst_12 = arith.constant 0.000000e+00 : f32
    %26 = vector.broadcast %cst_12 : f32 to vector<64x4xf32>
    %27 = arith.select %25, %20, %26 : vector<64x4xi1>, vector<64x4xf32>
    %c1_i32_13 = arith.constant 1 : i32
    %28 = tpu.dynamic_rotate %1 by %c1_i32_13 dim 1 : vector<64x4xf32>, i32 -> vector<64x4xf32>
    %c1_i32_14 = arith.constant 1 : i32
    %29 = vector.broadcast %c1_i32_14 : i32 to vector<64x4xi32>
    %30 = arith.cmpi sge, %6, %29 : vector<64x4xi32>
    %cst_15 = arith.constant 0.000000e+00 : f32
    %31 = vector.broadcast %cst_15 : f32 to vector<64x4xf32>
    %32 = arith.select %30, %28, %31 : vector<64x4xi1>, vector<64x4xf32>
    %c3_i32_16 = arith.constant 3 : i32
    %33 = tpu.dynamic_rotate %1 by %c3_i32_16 dim 1 : vector<64x4xf32>, i32 -> vector<64x4xf32>
    %c0_i32_17 = arith.constant 0 : i32
    %34 = vector.broadcast %c0_i32_17 : i32 to vector<64x4xi32>
    %35 = arith.cmpi sle, %6, %34 : vector<64x4xi32>
    %cst_18 = arith.constant 0.000000e+00 : f32
    %36 = vector.broadcast %cst_18 : f32 to vector<64x4xf32>
    %37 = arith.select %35, %33, %36 : vector<64x4xi1>, vector<64x4xf32>
    %c3_i32_19 = arith.constant 3 : i32
    %38 = tpu.dynamic_rotate %1 by %c3_i32_19 dim 1 : vector<64x4xf32>, i32 -> vector<64x4xf32>
    %c2_i32_20 = arith.constant 2 : i32
    %39 = vector.broadcast %c2_i32_20 : i32 to vector<64x4xi32>
    %40 = arith.cmpi slt, %4, %39 : vector<64x4xi32>
    %c1_i32_21 = arith.constant 1 : i32
    %41 = vector.broadcast %c1_i32_21 : i32 to vector<64x4xi32>
    %42 = arith.cmpi sge, %6, %41 : vector<64x4xi32>
    %43 = arith.andi %40, %42 : vector<64x4xi1>
    %cst_22 = arith.constant 0.000000e+00 : f32
    %44 = vector.broadcast %cst_22 : f32 to vector<64x4xf32>
    %45 = arith.select %43, %38, %44 : vector<64x4xi1>, vector<64x4xf32>
    %c2_i32_23 = arith.constant 2 : i32
    %46 = tpu.dynamic_rotate %1 by %c2_i32_23 dim 1 : vector<64x4xf32>, i32 -> vector<64x4xf32>
    %c2_i32_24 = arith.constant 2 : i32
    %47 = vector.broadcast %c2_i32_24 : i32 to vector<64x4xi32>
    %48 = arith.cmpi slt, %4, %47 : vector<64x4xi32>
    %cst_25 = arith.constant 0.000000e+00 : f32
    %49 = vector.broadcast %cst_25 : f32 to vector<64x4xf32>
    %50 = arith.select %48, %46, %49 : vector<64x4xi1>, vector<64x4xf32>
    %c1_i32_26 = arith.constant 1 : i32
    %51 = tpu.dynamic_rotate %1 by %c1_i32_26 dim 1 : vector<64x4xf32>, i32 -> vector<64x4xf32>
    %c2_i32_27 = arith.constant 2 : i32
    %52 = vector.broadcast %c2_i32_27 : i32 to vector<64x4xi32>
    %53 = arith.cmpi slt, %4, %52 : vector<64x4xi32>
    %c0_i32_28 = arith.constant 0 : i32
    %54 = vector.broadcast %c0_i32_28 : i32 to vector<64x4xi32>
    %55 = arith.cmpi sle, %6, %54 : vector<64x4xi32>
    %56 = arith.andi %53, %55 : vector<64x4xi1>
    %cst_29 = arith.constant 0.000000e+00 : f32
    %57 = vector.broadcast %cst_29 : f32 to vector<64x4xf32>
    %58 = arith.select %56, %51, %57 : vector<64x4xi1>, vector<64x4xf32>
    %59 = tpu.concatenate %14, %19, %27, %32, %1, %37, %45, %50, %58 in 0 : vector<64x4xf32>, vector<64x4xf32>, vector<64x4xf32>, vector<64x4xf32>, vector<64x4xf32>, vector<64x4xf32>, vector<64x4xf32>, vector<64x4xf32>, vector<64x4xf32> -> vector<576x4xf32>
    %cst_30 = arith.constant dense<0.000000e+00> : vector<128x4xf32>
    %60 = tpu.matmul %2, %59, %cst_30 {dimension_numbers = #tpu.dot_dimension_numbers<[1], [0], [0], [1], [0, 0, 1, 1], [], []>} : vector<128x576xf32>, vector<576x4xf32>, vector<128x4xf32> -> vector<128x4xf32>
    %61 = vector.broadcast %3 : vector<128x1xf32> to vector<128x4xf32>
    %62 = arith.addf %60, %61 : vector<128x4xf32>
    %cst_31 = arith.constant 0.000000e+00 : f32
    %63 = vector.broadcast %cst_31 : f32 to vector<128x4xf32>
    %64 = arith.maximumf %62, %63 : vector<128x4xf32>
    %c0_32 = arith.constant 0 : index
    %c0_33 = arith.constant 0 : index
    %65 = vector.load %arg4[%c0_32, %c0_33] : memref<128x1152xf32, #tpu.memory_space<vmem>>, vector<128x1152xf32>
    %c0_34 = arith.constant 0 : index
    %c0_35 = arith.constant 0 : index
    %66 = vector.load %arg5[%c0_34, %c0_35] : memref<128x1xf32, #tpu.memory_space<vmem>>, vector<128x1xf32>
    %67 = tpu.iota {dimensions = array<i32: 1>} : vector<128x4xi32>
    %c1_i32_36 = arith.constant 1 : i32
    %68 = vector.broadcast %c1_i32_36 : i32 to vector<128x4xi32>
    %69 = arith.andi %67, %68 : vector<128x4xi32>
    %c3_i32_37 = arith.constant 3 : i32
    %70 = tpu.dynamic_rotate %64 by %c3_i32_37 dim 1 : vector<128x4xf32>, i32 -> vector<128x4xf32>
    %c2_i32_38 = arith.constant 2 : i32
    %71 = vector.broadcast %c2_i32_38 : i32 to vector<128x4xi32>
    %72 = arith.cmpi sge, %67, %71 : vector<128x4xi32>
    %c1_i32_39 = arith.constant 1 : i32
    %73 = vector.broadcast %c1_i32_39 : i32 to vector<128x4xi32>
    %74 = arith.cmpi sge, %69, %73 : vector<128x4xi32>
    %75 = arith.andi %72, %74 : vector<128x4xi1>
    %cst_40 = arith.constant 0.000000e+00 : f32
    %76 = vector.broadcast %cst_40 : f32 to vector<128x4xf32>
    %77 = arith.select %75, %70, %76 : vector<128x4xi1>, vector<128x4xf32>
    %c2_i32_41 = arith.constant 2 : i32
    %78 = tpu.dynamic_rotate %64 by %c2_i32_41 dim 1 : vector<128x4xf32>, i32 -> vector<128x4xf32>
    %c2_i32_42 = arith.constant 2 : i32
    %79 = vector.broadcast %c2_i32_42 : i32 to vector<128x4xi32>
    %80 = arith.cmpi sge, %67, %79 : vector<128x4xi32>
    %cst_43 = arith.constant 0.000000e+00 : f32
    %81 = vector.broadcast %cst_43 : f32 to vector<128x4xf32>
    %82 = arith.select %80, %78, %81 : vector<128x4xi1>, vector<128x4xf32>
    %c1_i32_44 = arith.constant 1 : i32
    %83 = tpu.dynamic_rotate %64 by %c1_i32_44 dim 1 : vector<128x4xf32>, i32 -> vector<128x4xf32>
    %c2_i32_45 = arith.constant 2 : i32
    %84 = vector.broadcast %c2_i32_45 : i32 to vector<128x4xi32>
    %85 = arith.cmpi sge, %67, %84 : vector<128x4xi32>
    %c0_i32_46 = arith.constant 0 : i32
    %86 = vector.broadcast %c0_i32_46 : i32 to vector<128x4xi32>
    %87 = arith.cmpi sle, %69, %86 : vector<128x4xi32>
    %88 = arith.andi %85, %87 : vector<128x4xi1>
    %cst_47 = arith.constant 0.000000e+00 : f32
    %89 = vector.broadcast %cst_47 : f32 to vector<128x4xf32>
    %90 = arith.select %88, %83, %89 : vector<128x4xi1>, vector<128x4xf32>
    %c1_i32_48 = arith.constant 1 : i32
    %91 = tpu.dynamic_rotate %64 by %c1_i32_48 dim 1 : vector<128x4xf32>, i32 -> vector<128x4xf32>
    %c1_i32_49 = arith.constant 1 : i32
    %92 = vector.broadcast %c1_i32_49 : i32 to vector<128x4xi32>
    %93 = arith.cmpi sge, %69, %92 : vector<128x4xi32>
    %cst_50 = arith.constant 0.000000e+00 : f32
    %94 = vector.broadcast %cst_50 : f32 to vector<128x4xf32>
    %95 = arith.select %93, %91, %94 : vector<128x4xi1>, vector<128x4xf32>
    %c3_i32_51 = arith.constant 3 : i32
    %96 = tpu.dynamic_rotate %64 by %c3_i32_51 dim 1 : vector<128x4xf32>, i32 -> vector<128x4xf32>
    %c0_i32_52 = arith.constant 0 : i32
    %97 = vector.broadcast %c0_i32_52 : i32 to vector<128x4xi32>
    %98 = arith.cmpi sle, %69, %97 : vector<128x4xi32>
    %cst_53 = arith.constant 0.000000e+00 : f32
    %99 = vector.broadcast %cst_53 : f32 to vector<128x4xf32>
    %100 = arith.select %98, %96, %99 : vector<128x4xi1>, vector<128x4xf32>
    %c3_i32_54 = arith.constant 3 : i32
    %101 = tpu.dynamic_rotate %64 by %c3_i32_54 dim 1 : vector<128x4xf32>, i32 -> vector<128x4xf32>
    %c2_i32_55 = arith.constant 2 : i32
    %102 = vector.broadcast %c2_i32_55 : i32 to vector<128x4xi32>
    %103 = arith.cmpi slt, %67, %102 : vector<128x4xi32>
    %c1_i32_56 = arith.constant 1 : i32
    %104 = vector.broadcast %c1_i32_56 : i32 to vector<128x4xi32>
    %105 = arith.cmpi sge, %69, %104 : vector<128x4xi32>
    %106 = arith.andi %103, %105 : vector<128x4xi1>
    %cst_57 = arith.constant 0.000000e+00 : f32
    %107 = vector.broadcast %cst_57 : f32 to vector<128x4xf32>
    %108 = arith.select %106, %101, %107 : vector<128x4xi1>, vector<128x4xf32>
    %c2_i32_58 = arith.constant 2 : i32
    %109 = tpu.dynamic_rotate %64 by %c2_i32_58 dim 1 : vector<128x4xf32>, i32 -> vector<128x4xf32>
    %c2_i32_59 = arith.constant 2 : i32
    %110 = vector.broadcast %c2_i32_59 : i32 to vector<128x4xi32>
    %111 = arith.cmpi slt, %67, %110 : vector<128x4xi32>
    %cst_60 = arith.constant 0.000000e+00 : f32
    %112 = vector.broadcast %cst_60 : f32 to vector<128x4xf32>
    %113 = arith.select %111, %109, %112 : vector<128x4xi1>, vector<128x4xf32>
    %c1_i32_61 = arith.constant 1 : i32
    %114 = tpu.dynamic_rotate %64 by %c1_i32_61 dim 1 : vector<128x4xf32>, i32 -> vector<128x4xf32>
    %c2_i32_62 = arith.constant 2 : i32
    %115 = vector.broadcast %c2_i32_62 : i32 to vector<128x4xi32>
    %116 = arith.cmpi slt, %67, %115 : vector<128x4xi32>
    %c0_i32_63 = arith.constant 0 : i32
    %117 = vector.broadcast %c0_i32_63 : i32 to vector<128x4xi32>
    %118 = arith.cmpi sle, %69, %117 : vector<128x4xi32>
    %119 = arith.andi %116, %118 : vector<128x4xi1>
    %cst_64 = arith.constant 0.000000e+00 : f32
    %120 = vector.broadcast %cst_64 : f32 to vector<128x4xf32>
    %121 = arith.select %119, %114, %120 : vector<128x4xi1>, vector<128x4xf32>
    %122 = tpu.concatenate %77, %82, %90, %95, %64, %100, %108, %113, %121 in 0 : vector<128x4xf32>, vector<128x4xf32>, vector<128x4xf32>, vector<128x4xf32>, vector<128x4xf32>, vector<128x4xf32>, vector<128x4xf32>, vector<128x4xf32>, vector<128x4xf32> -> vector<1152x4xf32>
    %cst_65 = arith.constant dense<0.000000e+00> : vector<128x4xf32>
    %123 = tpu.matmul %65, %122, %cst_65 {dimension_numbers = #tpu.dot_dimension_numbers<[1], [0], [0], [1], [0, 0, 1, 1], [], []>} : vector<128x1152xf32>, vector<1152x4xf32>, vector<128x4xf32> -> vector<128x4xf32>
    %124 = vector.broadcast %66 : vector<128x1xf32> to vector<128x4xf32>
    %125 = arith.addf %123, %124 : vector<128x4xf32>
    %cst_66 = arith.constant 0.000000e+00 : f32
    %126 = vector.broadcast %cst_66 : f32 to vector<128x4xf32>
    %127 = arith.maximumf %125, %126 : vector<128x4xf32>
    %c0_67 = arith.constant 0 : index
    %c0_68 = arith.constant 0 : index
    %c0_69 = arith.constant 0 : index
    %128 = vector.load %arg6[%c0_67, %c0_68, %c0_69] : memref<1x128x4xf32, #tpu.memory_space<vmem>>, vector<1x128x4xf32>
    %129 = vector.shape_cast %128 : vector<1x128x4xf32> to vector<128x4xf32>
    %130 = vector.shape_cast %127 : vector<128x4xf32> to vector<1x128x4xf32>
    tpu.vector_store %arg6[%c0_67, %c0_68, %c0_69], %130 {strides = array<i32>} : memref<1x128x4xf32, #tpu.memory_space<vmem>>, vector<1x128x4xf32>,
    return
  }
  func.func @transform_0(%arg0: i32) -> (i32, i32, i32) {
    %c0_i32 = arith.constant 0 : i32
    %c0_i32_0 = arith.constant 0 : i32
    %c0_i32_1 = arith.constant 0 : i32
    return %arg0, %c0_i32, %c0_i32_0 : i32, i32, i32
  }
  func.func @transform_1(%arg0: i32) -> (i32, i32) {
    %c0_i32 = arith.constant 0 : i32
    %c0_i32_0 = arith.constant 0 : i32
    %c0_i32_1 = arith.constant 0 : i32
    return %c0_i32, %c0_i32_0 : i32, i32
  }
  func.func @transform_2(%arg0: i32) -> (i32, i32) {
    %c0_i32 = arith.constant 0 : i32
    %c0_i32_0 = arith.constant 0 : i32
    %c0_i32_1 = arith.constant 0 : i32
    return %c0_i32, %c0_i32_0 : i32, i32
  }
  func.func @transform_3(%arg0: i32) -> (i32, i32) {
    %c0_i32 = arith.constant 0 : i32
    %c0_i32_0 = arith.constant 0 : i32
    %c0_i32_1 = arith.constant 0 : i32
    return %c0_i32, %c0_i32_0 : i32, i32
  }
  func.func @transform_4(%arg0: i32) -> (i32, i32) {
    %c0_i32 = arith.constant 0 : i32
    %c0_i32_0 = arith.constant 0 : i32
    %c0_i32_1 = arith.constant 0 : i32
    return %c0_i32, %c0_i32_0 : i32, i32
  }
  func.func @transform_5(%arg0: i32) -> (i32, i32, i32) {
    %c0_i32 = arith.constant 0 : i32
    %c0_i32_0 = arith.constant 0 : i32
    %c0_i32_1 = arith.constant 0 : i32
    return %arg0, %c0_i32, %c0_i32_0 : i32, i32, i32
  }
}

</mosaic_0001>

<llo_original>
// kernel: encoder_forward.6
$region0: #{encoder_forward.6}
  #allocation0 [shape = 'u32[]', space=smem, size = 0x4, offset = 0x4, fixed_abs, tag = 'smem constant byte address 0x4 - core index']
  #allocation1 [shape = 'u32[72,128]{1,0:T(1,128)}', space=vmem, size = 0x9000, scoped, tag = 'internal scratch']
  %s0 = inlined_call_operand.vmem [shape: f32[2,8,256], index: 0, kind: input, shape index: {}]
  %s1 = inlined_call_operand.vmem [shape: f32[16,72], index: 1, kind: input, shape index: {}]
  %s2 = inlined_call_operand.vmem [shape: f32[16,1], index: 2, kind: input, shape index: {}]
  %s3 = inlined_call_operand.vmem [shape: f32[16,144], index: 3, kind: input, shape index: {}]
  %s4 = inlined_call_operand.vmem [shape: f32[16,1], index: 4, kind: input, shape index: {}]
  %s5 = inlined_call_operand.vmem [shape: f32[2,16,256], index: 5, kind: output, shape index: {}]
  %s6 = sld [smem:[#allocation0]]
  $region53: #{encoder_forward.6} parent=0
    _
  %s8 = ssub.s32 1, %s6
  %s9 = scalar_select 0, %s8, %s6
  loop: start=0, step=1, limit=4
  $region2: #{encoder_forward.6} parent=0 // loop_pre_header
    _
  $region3: #{encoder_forward.6} parent=0 // loop_header
    %s11 = sphi 0, %s15
    %p12 = scmp.ge.s32.totalorder %s11, 4
    %s21 = sphi 0, %s23
    %s24 = sphi 0, %s21
    %s25 = sphi 0, %s24
    %s41 = sphi 0, %s25
    %s45 = sphi 0, %s45
    %s47 = sphi 0, %s45
    %s48 = sphi 0, %s47
    %s62 = sphi 0, %s48
    %s66 = sphi 0, %s66
    %s68 = sphi 0, %s66
    %s69 = sphi 0, %s68
    %s83 = sphi 0, %s69
    %s87 = sphi 0, %s87
    %s89 = sphi 0, %s87
    %s90 = sphi 0, %s89
    %s104 = sphi 0, %s90
    %s108 = sphi 0, %s108
    %s110 = sphi 0, %s108
    %s111 = sphi 0, %s110
    %s125 = sphi 0, %s111
    %s131 = sphi 0, %s133
    %s134 = sphi 0, %s131
    %s135 = sphi 0, %s134
    %s151 = sphi 0, %s135
  $region4: #{encoder_forward.6} parent=0 // loop_header_branch
    %14 = sbr.rel (%p12) target = $region8
  $region5: #{encoder_forward.6} parent=0 // loop_body
    %s16 = ssub.s32 %s11, 1
    %s17 = ssub.s32 %s11, 2
    %s18 = sadd.s32 %s11, 1
    %s19 = ssub.s32 %s11, %s18
    %p20 = scmp.eq.s32.totalorder %s19, 0
    %s22 = sadd.s32 %s21, 1
    %s23 = scalar_select %p20, %s21, %s22
    %p26 = pneg %p20
    %p27 = scmp.eq.s32.totalorder %s11, 1
    %p28 = por %p26, %p27
    %p29 = scmp.ne.s32.totalorder %s21, %s24
    %p30 = scmp.eq.s32.totalorder %s11, 0
    %p31 = por %p29, %p30
    %p32 = scmp.ne.s32.totalorder %s21, %s24
    %p33 = scmp.eq.s32.totalorder %s16, 1
    %p34 = por %p32, %p33
    %p35 = scmp.ne.s32.totalorder %s24, %s25
    %p36 = scmp.eq.s32.totalorder %s16, 0
    %p37 = por %p35, %p36
    %p38 = scmp.ne.s32.totalorder %s24, %s25
    %p39 = scmp.eq.s32.totalorder %s17, 1
    %p40 = por %p38, %p39
    %p42 = scmp.ne.s32.totalorder %s25, %s41
    %p43 = scmp.eq.s32.totalorder %s17, 0
    %p44 = por %p42, %p43
    %s46 = sadd.s32 %s45, 1
    %p49 = scmp.eq.s32.totalorder %s11, 1
    %p50 = scmp.ne.s32.totalorder %s45, %s47
    %p51 = scmp.eq.s32.totalorder %s11, 0
    %p52 = por %p50, %p51
    %p53 = scmp.ne.s32.totalorder %s45, %s47
    %p54 = scmp.eq.s32.totalorder %s16, 1
    %p55 = por %p53, %p54
    %p56 = scmp.ne.s32.totalorder %s47, %s48
    %p57 = scmp.eq.s32.totalorder %s16, 0
    %p58 = por %p56, %p57
    %p59 = scmp.ne.s32.totalorder %s47, %s48
    %p60 = scmp.eq.s32.totalorder %s17, 1
    %p61 = por %p59, %p60
    %p63 = scmp.ne.s32.totalorder %s48, %s62
    %p64 = scmp.eq.s32.totalorder %s17, 0
    %p65 = por %p63, %p64
    %s67 = sadd.s32 %s66, 1
    %p70 = scmp.eq.s32.totalorder %s11, 1
    %p71 = scmp.ne.s32.totalorder %s66, %s68
    %p72 = scmp.eq.s32.totalorder %s11, 0
    %p73 = por %p71, %p72
    %p74 = scmp.ne.s32.totalorder %s66, %s68
    %p75 = scmp.eq.s32.totalorder %s16, 1
    %p76 = por %p74, %p75
    %p77 = scmp.ne.s32.totalorder %s68, %s69
    %p78 = scmp.eq.s32.totalorder %s16, 0
    %p79 = por %p77, %p78
    %p80 = scmp.ne.s32.totalorder %s68, %s69
    %p81 = scmp.eq.s32.totalorder %s17, 1
    %p82 = por %p80, %p81
    %p84 = scmp.ne.s32.totalorder %s69, %s83
    %p85 = scmp.eq.s32.totalorder %s17, 0
    %p86 = por %p84, %p85
    %s88 = sadd.s32 %s87, 1
    %p91 = scmp.eq.s32.totalorder %s11, 1
    %p92 = scmp.ne.s32.totalorder %s87, %s89
    %p93 = scmp.eq.s32.totalorder %s11, 0
    %p94 = por %p92, %p93
    %p95 = scmp.ne.s32.totalorder %s87, %s89
    %p96 = scmp.eq.s32.totalorder %s16, 1
    %p97 = por %p95, %p96
    %p98 = scmp.ne.s32.totalorder %s89, %s90
    %p99 = scmp.eq.s32.totalorder %s16, 0
    %p100 = por %p98, %p99
    %p101 = scmp.ne.s32.totalorder %s89, %s90
    %p102 = scmp.eq.s32.totalorder %s17, 1
    %p103 = por %p101, %p102
    %p105 = scmp.ne.s32.totalorder %s90, %s104
    %p106 = scmp.eq.s32.totalorder %s17, 0
    %p107 = por %p105, %p106
    %s109 = sadd.s32 %s108, 1
    %p112 = scmp.eq.s32.totalorder %s11, 1
    %p113 = scmp.ne.s32.totalorder %s108, %s110
    %p114 = scmp.eq.s32.totalorder %s11, 0
    %p115 = por %p113, %p114
    %p116 = scmp.ne.s32.totalorder %s108, %s110
    %p117 = scmp.eq.s32.totalorder %s16, 1
    %p118 = por %p116, %p117
    %p119 = scmp.ne.s32.totalorder %s110, %s111
    %p120 = scmp.eq.s32.totalorder %s16, 0
    %p121 = por %p119, %p120
    %p122 = scmp.ne.s32.totalorder %s110, %s111
    %p123 = scmp.eq.s32.totalorder %s17, 1
    %p124 = por %p122, %p123
    %p126 = scmp.ne.s32.totalorder %s111, %s125
    %p127 = scmp.eq.s32.totalorder %s17, 0
    %p128 = por %p126, %p127
    %s129 = ssub.s32 %s11, %s18
    %p130 = scmp.eq.s32.totalorder %s129, 0
    %s132 = sadd.s32 %s131, 1
    %s133 = scalar_select %p130, %s131, %s132
    %p136 = pneg %p130
    %p137 = scmp.eq.s32.totalorder %s11, 1
    %p138 = por %p136, %p137
    %p139 = scmp.ne.s32.totalorder %s131, %s134
    %p140 = scmp.eq.s32.totalorder %s11, 0
    %p141 = por %p139, %p140
    %p142 = scmp.ne.s32.totalorder %s131, %s134
    %p143 = scmp.eq.s32.totalorder %s16, 1
    %p144 = por %p142, %p143
    %p145 = scmp.ne.s32.totalorder %s134, %s135
    %p146 = scmp.eq.s32.totalorder %s16, 0
    %p147 = por %p145, %p146
    %p148 = scmp.ne.s32.totalorder %s134, %s135
    %p149 = scmp.eq.s32.totalorder %s17, 1
    %p150 = por %p148, %p149
    %p152 = scmp.ne.s32.totalorder %s135, %s151
    %p153 = scmp.eq.s32.totalorder %s17, 0
    %p154 = por %p152, %p153
    %p155 = scmp.le.s32.totalorder 1, %s11
    %p156 = scmp.lt.s32.totalorder %s11, 3
    %p157 = pnand %p155, %p156
    %p158 = pneg %p157
    // Predicated region
    $region9: #{encoder_forward.6} parent=5 // pred_check
      _
    $region10: #{encoder_forward.6} parent=5 // pred_check_branch
      %160 = sbr.rel (%p157) target = $region12
    $region11: #{encoder_forward.6} parent=5 // pred_region
      %s161 = ssub.s32 %s11, 1
      // Predicated region
      $region13: #{encoder_forward.6} parent=11 // pred_check
        %p162 = pneg %p58
      $region14: #{encoder_forward.6} parent=11 // pred_check_branch
        %164 = sbr.rel (%p162) target = $region16
      $region15: #{encoder_forward.6} parent=11 // pred_region
        _
      $region16: #{encoder_forward.6} parent=11 // pred_fallthru
        _
      // Predicated region
      $region17: #{encoder_forward.6} parent=11 // pred_check
        %p165 = pneg %p79
      $region18: #{encoder_forward.6} parent=11 // pred_check_branch
        %167 = sbr.rel (%p165) target = $region20
      $region19: #{encoder_forward.6} parent=11 // pred_region
        _
      $region20: #{encoder_forward.6} parent=11 // pred_fallthru
        _
      // Predicated region
      $region21: #{encoder_forward.6} parent=11 // pred_check
        %p168 = pneg %p100
      $region22: #{encoder_forward.6} parent=11 // pred_check_branch
        %170 = sbr.rel (%p168) target = $region24
      $region23: #{encoder_forward.6} parent=11 // pred_region
        _
      $region24: #{encoder_forward.6} parent=11 // pred_fallthru
        _
      // Predicated region
      $region25: #{encoder_forward.6} parent=11 // pred_check
        %p171 = pneg %p121
      $region26: #{encoder_forward.6} parent=11 // pred_check_branch
        %173 = sbr.rel (%p171) target = $region28
      $region27: #{encoder_forward.6} parent=11 // pred_region
        _
      $region28: #{encoder_forward.6} parent=11 // pred_fallthru
        _
    $region12: #{encoder_forward.6} parent=5 // pred_fallthru
      _
    %p174 = scmp.lt.s32.totalorder %s11, 2
    // Predicated region
    $region29: #{encoder_forward.6} parent=5 // pred_check
      %p175 = pneg %p174
    $region30: #{encoder_forward.6} parent=5 // pred_check_branch
      %177 = sbr.rel (%p175) target = $region32
    $region31: #{encoder_forward.6} parent=5 // pred_region
      // Predicated region
      $region33: #{encoder_forward.6} parent=31 // pred_check
        %p178 = pneg %p31
      $region34: #{encoder_forward.6} parent=31 // pred_check_branch
        %180 = sbr.rel (%p178) target = $region36
      $region35: #{encoder_forward.6} parent=31 // pred_region
        %p181 = scmp.lt.s32.totalorder %s11, 1
        %s182 = scalar_select %p181, %s11, 1
        %s183 = smul.addr %s182, 2
        %s184 = smul.addr %s183, 8
        %s185 = scalar_lea.vmem %s0, %s184
      $region36: #{encoder_forward.6} parent=31 // pred_fallthru
        _
    $region32: #{encoder_forward.6} parent=5 // pred_fallthru
      _
    %p186 = scmp.le.s32.totalorder 1, %s11
    %p187 = scmp.lt.s32.totalorder %s11, 3
    %p188 = pnand %p186, %p187
    %p189 = pneg %p188
    // Predicated region
    $region37: #{encoder_forward.6} parent=5 // pred_check
      _
    $region38: #{encoder_forward.6} parent=5 // pred_check_branch
      %191 = sbr.rel (%p188) target = $region40
    $region39: #{encoder_forward.6} parent=5 // pred_region
      %s192 = ssub.s32 %s11, 1
      %p193 = scmp.lt.s32.totalorder %s16, 1
      %s194 = scalar_select %p193, %s16, 1
      %s195 = smul.addr %s194, 2
      %s196 = smul.addr %s195, 8
      %s197 = scalar_lea.vmem %s0, %s196
      %p198 = pneg %p37
      %p199 = pneg %p34
      %p200 = pneg %p58
      %p201 = pneg %p55
      %p202 = pneg %p79
      %p203 = pneg %p76
      %p204 = pneg %p100
      %p205 = pneg %p97
      %p206 = pneg %p121
      %p207 = pneg %p118
      %p208 = pneg %p147
      %p209 = pneg %p144
      %p210 = scmp.lt.s32.totalorder %s16, 1
      %s211 = scalar_select %p210, %s16, 1
      %s212 = smul.addr %s211, 4
      %s213 = smul.addr %s212, 8
      %s214 = scalar_lea.vmem %s5, %s213
      %p215 = scmp.lt.s32.totalorder %s16, 1
      %s216 = scalar_select %p215, %s16, 1
      %s217 = smul.addr %s216, 2
      %s218 = smul.addr %s217, 8
      %s219 = scalar_lea.vmem %s0, %s218
      %p220 = scmp.lt.s32.totalorder %s16, 1
      %s221 = scalar_select %p220, %s16, 1
      %s222 = smul.addr %s221, 4
      %s223 = smul.addr %s222, 8
      %s224 = scalar_lea.vmem %s5, %s223
      %v225 = vld [vmem:[%s219] sm:$0xff]
      %v226 = vld [vmem:[%s219 + $0x8] sm:$0xff]
      %v227 = vld [vmem:[%s1] sm:$0xff]
      %v228 = vld [vmem:[%s1 + $0x8] sm:$0xff]
      %v229 = vld [vmem:[%s2] sm:$0xff]
      %v230 = vld [vmem:[%s2 + $0x8] sm:$0xff]
      %v231 = vlaneseq
      %v232 = vand.u32 %v231, 127
      %v233 = vadd.s32 %v232, 128
      %v234 = vand.u32 %v232, 15
      %v235 = vand.u32 %v233, 15
      %236 = vrot.lane.b32.xlu0 %v225, 17
      %v237 = vpop.permute.xlu0 %236
      %238 = vrot.lane.b32.xlu0 %v226, 17
      %v239 = vpop.permute.xlu0 %238
      %vm240 = vcmp.lt.s32.totalorder %v232, 17
      %v241 = vsel %vm240, %v237, %v239
      %v242 = vsel %vm240, %v239, %v237
      %vm243 = vcmp.ge.s32.totalorder %v232, 16
      %vm244 = vcmp.ge.s32.totalorder %v233, 16
      %vm245 = vcmp.ge.s32.totalorder %v234, 1
      %vm246 = vcmp.ge.s32.totalorder %v235, 1
      %vm247 = vmand %vm243, %vm245
      %vm248 = vmand %vm244, %vm246
      %v249 = vsel %vm247, %v242, 0.0
      %v250 = vsel %vm248, %v241, 0.0
      %251 = vrot.lane.b32.xlu0 %v225, 16
      %v252 = vpop.permute.xlu0 %251
      %253 = vrot.lane.b32.xlu0 %v226, 16
      %v254 = vpop.permute.xlu0 %253
      %vm255 = vcmp.lt.s32.totalorder %v232, 16
      %v256 = vsel %vm255, %v252, %v254
      %v257 = vsel %vm255, %v254, %v252
      %v258 = vsel %vm243, %v257, 0.0
      %v259 = vsel %vm244, %v256, 0.0
      %260 = vrot.lane.b32.xlu0 %v225, 15
      %v261 = vpop.permute.xlu0 %260
      %262 = vrot.lane.b32.xlu0 %v226, 15
      %v263 = vpop.permute.xlu0 %262
      %vm264 = vcmp.lt.s32.totalorder %v232, 15
      %v265 = vsel %vm264, %v261, %v263
      %v266 = vsel %vm264, %v263, %v261
      %vm267 = vcmp.le.s32.totalorder %v234, 14
      %vm268 = vcmp.le.s32.totalorder %v235, 14
      %vm269 = vmand %vm243, %vm267
      %vm270 = vmand %vm244, %vm268
      %v271 = vsel %vm269, %v266, 0.0
      %v272 = vsel %vm270, %v265, 0.0
      %273 = vrot.lane.b32.xlu0 %v225, 1
      %v274 = vpop.permute.xlu0 %273
      %275 = vrot.lane.b32.xlu0 %v226, 1
      %v276 = vpop.permute.xlu0 %275
      %vm277 = vcmp.lt.s32.totalorder %v232, 1
      %v278 = vsel %vm277, %v274, %v276
      %v279 = vsel %vm277, %v276, %v274
      %v280 = vsel %vm245, %v279, 0.0
      %v281 = vsel %vm246, %v278, 0.0
      %282 = vrot.lane.b32.xlu0 %v225, 127
      %v283 = vpop.permute.xlu0 %282
      %284 = vrot.lane.b32.xlu0 %v226, 127
      %v285 = vpop.permute.xlu0 %284
      %vm286 = vcmp.lt.s32.totalorder %v232, 127
      %v287 = vsel %vm286, %v283, %v285
      %v288 = vsel %vm286, %v285, %v283
      %v289 = vsel %vm267, %v287, 0.0
      %v290 = vsel %vm268, %v288, 0.0
      %291 = vrot.lane.b32.xlu0 %v225, 113
      %v292 = vpop.permute.xlu0 %291
      %293 = vrot.lane.b32.xlu0 %v226, 113
      %v294 = vpop.permute.xlu0 %293
      %vm295 = vcmp.lt.s32.totalorder %v232, 113
      %v296 = vsel %vm295, %v292, %v294
      %v297 = vsel %vm295, %v294, %v292
      %vm298 = vcmp.lt.s32.totalorder %v232, 240
      %vm299 = vcmp.lt.s32.totalorder %v233, 240
      %vm300 = vmand %vm298, %vm245
      %vm301 = vmand %vm299, %vm246
      %v302 = vsel %vm300, %v296, 0.0
      %v303 = vsel %vm301, %v297, 0.0
      %304 = vrot.lane.b32.xlu0 %v225, 112
      %v305 = vpop.permute.xlu0 %304
      %306 = vrot.lane.b32.xlu0 %v226, 112
      %v307 = vpop.permute.xlu0 %306
      %vm308 = vcmp.lt.s32.totalorder %v232, 112
      %v309 = vsel %vm308, %v305, %v307
      %v310 = vsel %vm308, %v307, %v305
      %v311 = vsel %vm298, %v309, 0.0
      %v312 = vsel %vm299, %v310, 0.0
      %313 = vrot.lane.b32.xlu0 %v225, 111
      %v314 = vpop.permute.xlu0 %313
      %315 = vrot.lane.b32.xlu0 %v226, 111
      %v316 = vpop.permute.xlu0 %315
      %vm317 = vcmp.lt.s32.totalorder %v232, 111
      %v318 = vsel %vm317, %v314, %v316
      %v319 = vsel %vm317, %v316, %v314
      %vm320 = vmand %vm298, %vm267
      %vm321 = vmand %vm299, %vm268
      %v322 = vsel %vm320, %v318, 0.0
      %v323 = vsel %vm321, %v319, 0.0
      %325 = vset.pattern.permute.xlu0 0
      %326 = vperm.xlu0 %325, %v229
      %v327 = vpop.permute.xlu0 %326
      %330 = vset.pattern.permute.xlu0 0
      %331 = vperm.xlu0 %330, %v230
      %v332 = vpop.permute.xlu0 %331
      %vm334 = vcmask 588800
      %v336 = vsel %vm334, %v227, 0
      %v339 = vsel %vm334, %v228, 0
      %341 = vmatpush.msra.mxu0 0.0
      %342 = vmatpush.msra.mxu0 0.0
      %343 = vmatpush.msra.mxu0 0.0
      %344 = vmatpush.msra.mxu0 0.0
      %345 = vmatpush.msra.mxu0 0.0
      %346 = vmatpush.msra.mxu0 0.0
      %347 = vmatpush.msra.mxu0 0.0
      %348 = vmatpush.msra.mxu0 %v322
      %349 = vmatpush.msra.mxu0 %v311
      %350 = vmatpush.msra.mxu0 %v302
      %351 = vmatpush.msra.mxu0 %v289
      %352 = vmatpush.msra.mxu0 %v225
      %353 = vmatpush.msra.mxu0 %v280
      %354 = vmatpush.msra.mxu0 %v271
      %355 = vmatpush.msra.mxu0 %v258
      %356 = vmatpush.msra.mxu0 %v249
      %357 = vmatmul.f32.gmra.mxu0 %v336
      %v358 = vpop.f32.mrf.mxu0
      %v359 = vadd.f32 %v327, %v358
      %360 = vmatmul.f32.gmra.mxu0 %v339
      %v361 = vpop.f32.mrf.mxu0
      %v362 = vadd.f32 %v332, %v361
      %363 = vdwg.mxu0
      %364 = vmatpush.msra.mxu0 0.0
      %365 = vmatpush.msra.mxu0 0.0
      %366 = vmatpush.msra.mxu0 0.0
      %367 = vmatpush.msra.mxu0 0.0
      %368 = vmatpush.msra.mxu0 0.0
      %369 = vmatpush.msra.mxu0 0.0
      %370 = vmatpush.msra.mxu0 0.0
      %371 = vmatpush.msra.mxu0 %v323
      %372 = vmatpush.msra.mxu0 %v312
      %373 = vmatpush.msra.mxu0 %v303
      %374 = vmatpush.msra.mxu0 %v290
      %375 = vmatpush.msra.mxu0 %v226
      %376 = vmatpush.msra.mxu0 %v281
      %377 = vmatpush.msra.mxu0 %v272
      %378 = vmatpush.msra.mxu0 %v259
      %379 = vmatpush.msra.mxu0 %v250
      %380 = vmatmul.f32.gmra.mxu0 %v336
      %v381 = vpop.f32.mrf.mxu0
      %v382 = vadd.f32 %v327, %v381
      %383 = vmatmul.f32.gmra.mxu0 %v339
      %v384 = vpop.f32.mrf.mxu0
      %v385 = vadd.f32 %v332, %v384
      %386 = vdwg.mxu0
      %v387 = vmax.f32 %v359, 0.0
      %v388 = vmax.f32 %v382, 0.0
      %v389 = vmax.f32 %v362, 0.0
      %v390 = vmax.f32 %v385, 0.0
      %v391 = vld [vmem:[%s3] sm:$0xff]
      %v392 = vld [vmem:[%s3 + $0x8] sm:$0xff]
      %v393 = vld [vmem:[%s3 + $0x10] sm:$0xff]
      %v394 = vld [vmem:[%s3 + $0x18] sm:$0xff]
      %v395 = vld [vmem:[%s4] sm:$0xff]
      %v396 = vld [vmem:[%s4 + $0x8] sm:$0xff]
      %397 = vrot.lane.b32.xlu0 %v387, 17
      %v398 = vpop.permute.xlu0 %397
      %399 = vrot.lane.b32.xlu0 %v389, 17
      %v400 = vpop.permute.xlu0 %399
      %401 = vrot.lane.b32.xlu0 %v388, 17
      %v402 = vpop.permute.xlu0 %401
      %403 = vrot.lane.b32.xlu0 %v390, 17
      %v404 = vpop.permute.xlu0 %403
      %v405 = vsel %vm240, %v398, %v402
      %v406 = vsel %vm240, %v400, %v404
      %v407 = vsel %vm240, %v402, %v398
      %v408 = vsel %vm240, %v404, %v400
      %v409 = vsel %vm247, %v407, 0.0
      %v410 = vsel %vm248, %v405, 0.0
      %v411 = vsel %vm247, %v408, 0.0
      %v412 = vsel %vm248, %v406, 0.0
      %413 = vrot.lane.b32.xlu0 %v387, 16
      %v414 = vpop.permute.xlu0 %413
      %415 = vrot.lane.b32.xlu0 %v389, 16
      %v416 = vpop.permute.xlu0 %415
      %417 = vrot.lane.b32.xlu0 %v388, 16
      %v418 = vpop.permute.xlu0 %417
      %419 = vrot.lane.b32.xlu0 %v390, 16
      %v420 = vpop.permute.xlu0 %419
      %v421 = vsel %vm255, %v414, %v418
      %v422 = vsel %vm255, %v416, %v420
      %v423 = vsel %vm255, %v418, %v414
      %v424 = vsel %vm255, %v420, %v416
      %v425 = vsel %vm243, %v423, 0.0
      %v426 = vsel %vm244, %v421, 0.0
      %v427 = vsel %vm243, %v424, 0.0
      %v428 = vsel %vm244, %v422, 0.0
      %429 = vrot.lane.b32.xlu0 %v387, 15
      %v430 = vpop.permute.xlu0 %429
      %431 = vrot.lane.b32.xlu0 %v389, 15
      %v432 = vpop.permute.xlu0 %431
      %433 = vrot.lane.b32.xlu0 %v388, 15
      %v434 = vpop.permute.xlu0 %433
      %435 = vrot.lane.b32.xlu0 %v390, 15
      %v436 = vpop.permute.xlu0 %435
      %v437 = vsel %vm264, %v430, %v434
      %v438 = vsel %vm264, %v432, %v436
      %v439 = vsel %vm264, %v434, %v430
      %v440 = vsel %vm264, %v436, %v432
      %v441 = vsel %vm269, %v439, 0.0
      %v442 = vsel %vm270, %v437, 0.0
      %v443 = vsel %vm269, %v440, 0.0
      %v444 = vsel %vm270, %v438, 0.0
      %445 = vrot.lane.b32.xlu0 %v387, 1
      %v446 = vpop.permute.xlu0 %445
      %447 = vrot.lane.b32.xlu0 %v389, 1
      %v448 = vpop.permute.xlu0 %447
      %449 = vrot.lane.b32.xlu0 %v388, 1
      %v450 = vpop.permute.xlu0 %449
      %451 = vrot.lane.b32.xlu0 %v390, 1
      %v452 = vpop.permute.xlu0 %451
      %v453 = vsel %vm277, %v446, %v450
      %v454 = vsel %vm277, %v448, %v452
      %v455 = vsel %vm277, %v450, %v446
      %v456 = vsel %vm277, %v452, %v448
      %v457 = vsel %vm245, %v455, 0.0
      %v458 = vsel %vm246, %v453, 0.0
      %v459 = vsel %vm245, %v456, 0.0
      %v460 = vsel %vm246, %v454, 0.0
      %461 = vrot.lane.b32.xlu0 %v387, 127
      %v462 = vpop.permute.xlu0 %461
      %463 = vrot.lane.b32.xlu0 %v389, 127
      %v464 = vpop.permute.xlu0 %463
      %465 = vrot.lane.b32.xlu0 %v388, 127
      %v466 = vpop.permute.xlu0 %465
      %467 = vrot.lane.b32.xlu0 %v390, 127
      %v468 = vpop.permute.xlu0 %467
      %v469 = vsel %vm286, %v462, %v466
      %v470 = vsel %vm286, %v464, %v468
      %v471 = vsel %vm286, %v466, %v462
      %v472 = vsel %vm286, %v468, %v464
      %v473 = vsel %vm267, %v469, 0.0
      %v474 = vsel %vm268, %v471, 0.0
      %v475 = vsel %vm267, %v470, 0.0
      %v476 = vsel %vm268, %v472, 0.0
      %477 = vrot.lane.b32.xlu0 %v387, 113
      %v478 = vpop.permute.xlu0 %477
      %479 = vrot.lane.b32.xlu0 %v389, 113
      %v480 = vpop.permute.xlu0 %479
      %481 = vrot.lane.b32.xlu0 %v388, 113
      %v482 = vpop.permute.xlu0 %481
      %483 = vrot.lane.b32.xlu0 %v390, 113
      %v484 = vpop.permute.xlu0 %483
      %v485 = vsel %vm295, %v478, %v482
      %v486 = vsel %vm295, %v480, %v484
      %v487 = vsel %vm295, %v482, %v478
      %v488 = vsel %vm295, %v484, %v480
      %v489 = vsel %vm300, %v485, 0.0
      %v490 = vsel %vm301, %v487, 0.0
      %v491 = vsel %vm300, %v486, 0.0
      %v492 = vsel %vm301, %v488, 0.0
      %493 = vrot.lane.b32.xlu0 %v387, 112
      %v494 = vpop.permute.xlu0 %493
      %495 = vrot.lane.b32.xlu0 %v389, 112
      %v496 = vpop.permute.xlu0 %495
      %497 = vrot.lane.b32.xlu0 %v388, 112
      %v498 = vpop.permute.xlu0 %497
      %499 = vrot.lane.b32.xlu0 %v390, 112
      %v500 = vpop.permute.xlu0 %499
      %v501 = vsel %vm308, %v494, %v498
      %v502 = vsel %vm308, %v496, %v500
      %v503 = vsel %vm308, %v498, %v494
      %v504 = vsel %vm308, %v500, %v496
      %v505 = vsel %vm298, %v501, 0.0
      %v506 = vsel %vm299, %v503, 0.0
      %v507 = vsel %vm298, %v502, 0.0
      %v508 = vsel %vm299, %v504, 0.0
      %509 = vrot.lane.b32.xlu0 %v387, 111
      %v510 = vpop.permute.xlu0 %509
      %511 = vrot.lane.b32.xlu0 %v389, 111
      %v512 = vpop.permute.xlu0 %511
      %513 = vrot.lane.b32.xlu0 %v388, 111
      %v514 = vpop.permute.xlu0 %513
      %515 = vrot.lane.b32.xlu0 %v390, 111
      %v516 = vpop.permute.xlu0 %515
      %v517 = vsel %vm317, %v510, %v514
      %v518 = vsel %vm317, %v512, %v516
      %v519 = vsel %vm317, %v514, %v510
      %v520 = vsel %vm317, %v516, %v512
      %v521 = vsel %vm320, %v517, 0.0
      %v522 = vsel %vm321, %v519, 0.0
      %v523 = vsel %vm320, %v518, 0.0
      %v524 = vsel %vm321, %v520, 0.0
      %526 = vset.pattern.permute.xlu0 0
      %527 = vperm.xlu0 %526, %v395
      %v528 = vpop.permute.xlu0 %527
      %531 = vset.pattern.permute.xlu0 0
      %532 = vperm.xlu0 %531, %v396
      %v533 = vpop.permute.xlu0 %532
      %vm535 = vcmask 130048
      %v537 = vsel %vm535, %v392, 0
      %v540 = vsel %vm535, %v394, 0
      %542 = vmatpush.msra.mxu0 %v507
      %543 = vmatpush.msra.mxu0 %v505
      %544 = vmatpush.msra.mxu0 %v491
      %545 = vmatpush.msra.mxu0 %v489
      %546 = vmatpush.msra.mxu0 %v475
      %547 = vmatpush.msra.mxu0 %v473
      %548 = vmatpush.msra.mxu0 %v389
      %549 = vmatpush.msra.mxu0 %v387
      %550 = vmatpush.msra.mxu0 %v459
      %551 = vmatpush.msra.mxu0 %v457
      %552 = vmatpush.msra.mxu0 %v443
      %553 = vmatpush.msra.mxu0 %v441
      %554 = vmatpush.msra.mxu0 %v427
      %555 = vmatpush.msra.mxu0 %v425
      %556 = vmatpush.msra.mxu0 %v411
      %557 = vmatpush.msra.mxu0 %v409
      %558 = vmatmul.f32.gmra.mxu0 %v391
      %v559 = vpop.f32.mrf.mxu0
      %v560 = vadd.f32 %v528, %v559
      %561 = vmatmul.f32.gmra.mxu0 %v393
      %v562 = vpop.f32.mrf.mxu0
      %v563 = vadd.f32 %v533, %v562
      %564 = vdwg.mxu0
      %565 = vmatpush.msra.mxu0 0.0
      %566 = vmatpush.msra.mxu0 0.0
      %567 = vmatpush.msra.mxu0 0.0
      %568 = vmatpush.msra.mxu0 0.0
      %569 = vmatpush.msra.mxu0 0.0
      %570 = vmatpush.msra.mxu0 0.0
      %571 = vmatpush.msra.mxu0 0.0
      %572 = vmatpush.msra.mxu0 0.0
      %573 = vmatpush.msra.mxu0 0.0
      %574 = vmatpush.msra.mxu0 0.0
      %575 = vmatpush.msra.mxu0 0.0
      %576 = vmatpush.msra.mxu0 0.0
      %577 = vmatpush.msra.mxu0 0.0
      %578 = vmatpush.msra.mxu0 0.0
      %579 = vmatpush.msra.mxu0 %v523
      %580 = vmatpush.msra.mxu0 %v521
      %581 = vmatmul.f32.gmra.mxu0 %v537
      %v582 = vpop.f32.mrf.mxu0
      %v583 = vadd.f32 %v560, %v582
      %584 = vmatmul.f32.gmra.mxu0 %v540
      %v585 = vpop.f32.mrf.mxu0
      %v586 = vadd.f32 %v563, %v585
      %587 = vdwg.mxu0
      %588 = vmatpush.msra.mxu0 %v508
      %589 = vmatpush.msra.mxu0 %v506
      %590 = vmatpush.msra.mxu0 %v492
      %591 = vmatpush.msra.mxu0 %v490
      %592 = vmatpush.msra.mxu0 %v476
      %593 = vmatpush.msra.mxu0 %v474
      %594 = vmatpush.msra.mxu0 %v390
      %595 = vmatpush.msra.mxu0 %v388
      %596 = vmatpush.msra.mxu0 %v460
      %597 = vmatpush.msra.mxu0 %v458
      %598 = vmatpush.msra.mxu0 %v444
      %599 = vmatpush.msra.mxu0 %v442
      %600 = vmatpush.msra.mxu0 %v428
      %601 = vmatpush.msra.mxu0 %v426
      %602 = vmatpush.msra.mxu0 %v412
      %603 = vmatpush.msra.mxu0 %v410
      %604 = vmatmul.f32.gmra.mxu0 %v391
      %v605 = vpop.f32.mrf.mxu0
      %v606 = vadd.f32 %v528, %v605
      %607 = vmatmul.f32.gmra.mxu0 %v393
      %v608 = vpop.f32.mrf.mxu0
      %v609 = vadd.f32 %v533, %v608
      %610 = vdwg.mxu0
      %611 = vmatpush.msra.mxu0 0.0
      %612 = vmatpush.msra.mxu0 0.0
      %613 = vmatpush.msra.mxu0 0.0
      %614 = vmatpush.msra.mxu0 0.0
      %615 = vmatpush.msra.mxu0 0.0
      %616 = vmatpush.msra.mxu0 0.0
      %617 = vmatpush.msra.mxu0 0.0
      %618 = vmatpush.msra.mxu0 0.0
      %619 = vmatpush.msra.mxu0 0.0
      %620 = vmatpush.msra.mxu0 0.0
      %621 = vmatpush.msra.mxu0 0.0
      %622 = vmatpush.msra.mxu0 0.0
      %623 = vmatpush.msra.mxu0 0.0
      %624 = vmatpush.msra.mxu0 0.0
      %625 = vmatpush.msra.mxu0 %v524
      %626 = vmatpush.msra.mxu0 %v522
      %627 = vmatmul.f32.gmra.mxu0 %v537
      %v628 = vpop.f32.mrf.mxu0
      %v629 = vadd.f32 %v606, %v628
      %630 = vmatmul.f32.gmra.mxu0 %v540
      %v631 = vpop.f32.mrf.mxu0
      %v632 = vadd.f32 %v609, %v631
      %633 = vdwg.mxu0
      %v634 = vmax.f32 %v583, 0.0
      %v635 = vmax.f32 %v629, 0.0
      %v636 = vmax.f32 %v586, 0.0
      %v637 = vmax.f32 %v632, 0.0
      %638 = vst [vmem:[%s224] sm:$0xff] %v634
      %639 = vst [vmem:[%s224 + $0x8] sm:$0xff] %v635
      %640 = vst [vmem:[%s224 + $0x10] sm:$0xff] %v636
      %641 = vst [vmem:[%s224 + $0x18] sm:$0xff] %v637
      %p642 = scmp.lt.s32.totalorder %s16, 1
      %s643 = scalar_select %p642, %s16, 1
      %s644 = smul.addr %s643, 4
      %s645 = smul.addr %s644, 8
      %s646 = scalar_lea.vmem %s5, %s645
      // Predicated region
      $region41: #{encoder_forward.6} parent=39 // pred_check
        %p647 = pneg %p144
      $region42: #{encoder_forward.6} parent=39 // pred_check_branch
        %649 = sbr.rel (%p647) target = $region44
      $region43: #{encoder_forward.6} parent=39 // pred_region
        _
      $region44: #{encoder_forward.6} parent=39 // pred_fallthru
        _
    $region40: #{encoder_forward.6} parent=5 // pred_fallthru
      _
    %p650 = scmp.le.s32.totalorder 2, %s11
    // Predicated region
    $region45: #{encoder_forward.6} parent=5 // pred_check
      %p651 = pneg %p650
    $region46: #{encoder_forward.6} parent=5 // pred_check_branch
      %653 = sbr.rel (%p651) target = $region48
    $region47: #{encoder_forward.6} parent=5 // pred_region
      %s654 = ssub.s32 %s11, 2
      // Predicated region
      $region49: #{encoder_forward.6} parent=47 // pred_check
        %p655 = pneg %p150
      $region50: #{encoder_forward.6} parent=47 // pred_check_branch
        %657 = sbr.rel (%p655) target = $region52
      $region51: #{encoder_forward.6} parent=47 // pred_region
        %p658 = scmp.lt.s32.totalorder %s17, 1
        %s659 = scalar_select %p658, %s17, 1
        %s660 = smul.addr %s659, 4
        %s661 = smul.addr %s660, 8
        %s662 = scalar_lea.vmem %s5, %s661
      $region52: #{encoder_forward.6} parent=47 // pred_fallthru
        _
    $region48: #{encoder_forward.6} parent=5 // pred_fallthru
      _
  $region6: #{encoder_forward.6} parent=0 // loop_footer
    %s15 = sadd.s32 1, %s11
  $region7: #{encoder_forward.6} parent=0 // loop_footer_branch
    %10 = sbr.rel target = $region3
  $region8: #{encoder_forward.6} parent=0 // loop_exit
    _

// kernel: encoder_forward.5
$region0: #{encoder_forward.5}
  #allocation0 [shape = 'u32[]', space=smem, size = 0x4, offset = 0x4, fixed_abs, tag = 'smem constant byte address 0x4 - core index']
  #allocation1 [shape = 'u32[72,128]{1,0:T(1,128)}', space=vmem, size = 0x9000, scoped, tag = 'internal scratch']
  %s0 = inlined_call_operand.vmem [shape: f32[2,8,1024], index: 0, kind: input, shape index: {}]
  %s1 = inlined_call_operand.vmem [shape: f32[8,72], index: 1, kind: input, shape index: {}]
  %s2 = inlined_call_operand.vmem [shape: f32[8,1], index: 2, kind: input, shape index: {}]
  %s3 = inlined_call_operand.vmem [shape: f32[8,72], index: 3, kind: input, shape index: {}]
  %s4 = inlined_call_operand.vmem [shape: f32[8,1], index: 4, kind: input, shape index: {}]
  %s5 = inlined_call_operand.vmem [shape: f32[2,8,1024], index: 5, kind: output, shape index: {}]
  %s6 = sld [smem:[#allocation0]]
  $region53: #{encoder_forward.5} parent=0
    _
  %s8 = ssub.s32 1, %s6
  %s9 = scalar_select 0, %s8, %s6
  loop: start=0, step=1, limit=4
  $region2: #{encoder_forward.5} parent=0 // loop_pre_header
    _
  $region3: #{encoder_forward.5} parent=0 // loop_header
    %s11 = sphi 0, %s15
    %p12 = scmp.ge.s32.totalorder %s11, 4
    %s21 = sphi 0, %s23
    %s24 = sphi 0, %s21
    %s25 = sphi 0, %s24
    %s41 = sphi 0, %s25
    %s45 = sphi 0, %s45
    %s47 = sphi 0, %s45
    %s48 = sphi 0, %s47
    %s62 = sphi 0, %s48
    %s66 = sphi 0, %s66
    %s68 = sphi 0, %s66
    %s69 = sphi 0, %s68
    %s83 = sphi 0, %s69
    %s87 = sphi 0, %s87
    %s89 = sphi 0, %s87
    %s90 = sphi 0, %s89
    %s104 = sphi 0, %s90
    %s108 = sphi 0, %s108
    %s110 = sphi 0, %s108
    %s111 = sphi 0, %s110
    %s125 = sphi 0, %s111
    %s131 = sphi 0, %s133
    %s134 = sphi 0, %s131
    %s135 = sphi 0, %s134
    %s151 = sphi 0, %s135
  $region4: #{encoder_forward.5} parent=0 // loop_header_branch
    %14 = sbr.rel (%p12) target = $region8
  $region5: #{encoder_forward.5} parent=0 // loop_body
    %s16 = ssub.s32 %s11, 1
    %s17 = ssub.s32 %s11, 2
    %s18 = sadd.s32 %s11, 1
    %s19 = ssub.s32 %s11, %s18
    %p20 = scmp.eq.s32.totalorder %s19, 0
    %s22 = sadd.s32 %s21, 1
    %s23 = scalar_select %p20, %s21, %s22
    %p26 = pneg %p20
    %p27 = scmp.eq.s32.totalorder %s11, 1
    %p28 = por %p26, %p27
    %p29 = scmp.ne.s32.totalorder %s21, %s24
    %p30 = scmp.eq.s32.totalorder %s11, 0
    %p31 = por %p29, %p30
    %p32 = scmp.ne.s32.totalorder %s21, %s24
    %p33 = scmp.eq.s32.totalorder %s16, 1
    %p34 = por %p32, %p33
    %p35 = scmp.ne.s32.totalorder %s24, %s25
    %p36 = scmp.eq.s32.totalorder %s16, 0
    %p37 = por %p35, %p36
    %p38 = scmp.ne.s32.totalorder %s24, %s25
    %p39 = scmp.eq.s32.totalorder %s17, 1
    %p40 = por %p38, %p39
    %p42 = scmp.ne.s32.totalorder %s25, %s41
    %p43 = scmp.eq.s32.totalorder %s17, 0
    %p44 = por %p42, %p43
    %s46 = sadd.s32 %s45, 1
    %p49 = scmp.eq.s32.totalorder %s11, 1
    %p50 = scmp.ne.s32.totalorder %s45, %s47
    %p51 = scmp.eq.s32.totalorder %s11, 0
    %p52 = por %p50, %p51
    %p53 = scmp.ne.s32.totalorder %s45, %s47
    %p54 = scmp.eq.s32.totalorder %s16, 1
    %p55 = por %p53, %p54
    %p56 = scmp.ne.s32.totalorder %s47, %s48
    %p57 = scmp.eq.s32.totalorder %s16, 0
    %p58 = por %p56, %p57
    %p59 = scmp.ne.s32.totalorder %s47, %s48
    %p60 = scmp.eq.s32.totalorder %s17, 1
    %p61 = por %p59, %p60
    %p63 = scmp.ne.s32.totalorder %s48, %s62
    %p64 = scmp.eq.s32.totalorder %s17, 0
    %p65 = por %p63, %p64
    %s67 = sadd.s32 %s66, 1
    %p70 = scmp.eq.s32.totalorder %s11, 1
    %p71 = scmp.ne.s32.totalorder %s66, %s68
    %p72 = scmp.eq.s32.totalorder %s11, 0
    %p73 = por %p71, %p72
    %p74 = scmp.ne.s32.totalorder %s66, %s68
    %p75 = scmp.eq.s32.totalorder %s16, 1
    %p76 = por %p74, %p75
    %p77 = scmp.ne.s32.totalorder %s68, %s69
    %p78 = scmp.eq.s32.totalorder %s16, 0
    %p79 = por %p77, %p78
    %p80 = scmp.ne.s32.totalorder %s68, %s69
    %p81 = scmp.eq.s32.totalorder %s17, 1
    %p82 = por %p80, %p81
    %p84 = scmp.ne.s32.totalorder %s69, %s83
    %p85 = scmp.eq.s32.totalorder %s17, 0
    %p86 = por %p84, %p85
    %s88 = sadd.s32 %s87, 1
    %p91 = scmp.eq.s32.totalorder %s11, 1
    %p92 = scmp.ne.s32.totalorder %s87, %s89
    %p93 = scmp.eq.s32.totalorder %s11, 0
    %p94 = por %p92, %p93
    %p95 = scmp.ne.s32.totalorder %s87, %s89
    %p96 = scmp.eq.s32.totalorder %s16, 1
    %p97 = por %p95, %p96
    %p98 = scmp.ne.s32.totalorder %s89, %s90
    %p99 = scmp.eq.s32.totalorder %s16, 0
    %p100 = por %p98, %p99
    %p101 = scmp.ne.s32.totalorder %s89, %s90
    %p102 = scmp.eq.s32.totalorder %s17, 1
    %p103 = por %p101, %p102
    %p105 = scmp.ne.s32.totalorder %s90, %s104
    %p106 = scmp.eq.s32.totalorder %s17, 0
    %p107 = por %p105, %p106
    %s109 = sadd.s32 %s108, 1
    %p112 = scmp.eq.s32.totalorder %s11, 1
    %p113 = scmp.ne.s32.totalorder %s108, %s110
    %p114 = scmp.eq.s32.totalorder %s11, 0
    %p115 = por %p113, %p114
    %p116 = scmp.ne.s32.totalorder %s108, %s110
    %p117 = scmp.eq.s32.totalorder %s16, 1
    %p118 = por %p116, %p117
    %p119 = scmp.ne.s32.totalorder %s110, %s111
    %p120 = scmp.eq.s32.totalorder %s16, 0
    %p121 = por %p119, %p120
    %p122 = scmp.ne.s32.totalorder %s110, %s111
    %p123 = scmp.eq.s32.totalorder %s17, 1
    %p124 = por %p122, %p123
    %p126 = scmp.ne.s32.totalorder %s111, %s125
    %p127 = scmp.eq.s32.totalorder %s17, 0
    %p128 = por %p126, %p127
    %s129 = ssub.s32 %s11, %s18
    %p130 = scmp.eq.s32.totalorder %s129, 0
    %s132 = sadd.s32 %s131, 1
    %s133 = scalar_select %p130, %s131, %s132
    %p136 = pneg %p130
    %p137 = scmp.eq.s32.totalorder %s11, 1
    %p138 = por %p136, %p137
    %p139 = scmp.ne.s32.totalorder %s131, %s134
    %p140 = scmp.eq.s32.totalorder %s11, 0
    %p141 = por %p139, %p140
    %p142 = scmp.ne.s32.totalorder %s131, %s134
    %p143 = scmp.eq.s32.totalorder %s16, 1
    %p144 = por %p142, %p143
    %p145 = scmp.ne.s32.totalorder %s134, %s135
    %p146 = scmp.eq.s32.totalorder %s16, 0
    %p147 = por %p145, %p146
    %p148 = scmp.ne.s32.totalorder %s134, %s135
    %p149 = scmp.eq.s32.totalorder %s17, 1
    %p150 = por %p148, %p149
    %p152 = scmp.ne.s32.totalorder %s135, %s151
    %p153 = scmp.eq.s32.totalorder %s17, 0
    %p154 = por %p152, %p153
    %p155 = scmp.le.s32.totalorder 1, %s11
    %p156 = scmp.lt.s32.totalorder %s11, 3
    %p157 = pnand %p155, %p156
    %p158 = pneg %p157
    // Predicated region
    $region9: #{encoder_forward.5} parent=5 // pred_check
      _
    $region10: #{encoder_forward.5} parent=5 // pred_check_branch
      %160 = sbr.rel (%p157) target = $region12
    $region11: #{encoder_forward.5} parent=5 // pred_region
      %s161 = ssub.s32 %s11, 1
      // Predicated region
      $region13: #{encoder_forward.5} parent=11 // pred_check
        %p162 = pneg %p58
      $region14: #{encoder_forward.5} parent=11 // pred_check_branch
        %164 = sbr.rel (%p162) target = $region16
      $region15: #{encoder_forward.5} parent=11 // pred_region
        _
      $region16: #{encoder_forward.5} parent=11 // pred_fallthru
        _
      // Predicated region
      $region17: #{encoder_forward.5} parent=11 // pred_check
        %p165 = pneg %p79
      $region18: #{encoder_forward.5} parent=11 // pred_check_branch
        %167 = sbr.rel (%p165) target = $region20
      $region19: #{encoder_forward.5} parent=11 // pred_region
        _
      $region20: #{encoder_forward.5} parent=11 // pred_fallthru
        _
      // Predicated region
      $region21: #{encoder_forward.5} parent=11 // pred_check
        %p168 = pneg %p100
      $region22: #{encoder_forward.5} parent=11 // pred_check_branch
        %170 = sbr.rel (%p168) target = $region24
      $region23: #{encoder_forward.5} parent=11 // pred_region
        _
      $region24: #{encoder_forward.5} parent=11 // pred_fallthru
        _
      // Predicated region
      $region25: #{encoder_forward.5} parent=11 // pred_check
        %p171 = pneg %p121
      $region26: #{encoder_forward.5} parent=11 // pred_check_branch
        %173 = sbr.rel (%p171) target = $region28
      $region27: #{encoder_forward.5} parent=11 // pred_region
        _
      $region28: #{encoder_forward.5} parent=11 // pred_fallthru
        _
    $region12: #{encoder_forward.5} parent=5 // pred_fallthru
      _
    %p174 = scmp.lt.s32.totalorder %s11, 2
    // Predicated region
    $region29: #{encoder_forward.5} parent=5 // pred_check
      %p175 = pneg %p174
    $region30: #{encoder_forward.5} parent=5 // pred_check_branch
      %177 = sbr.rel (%p175) target = $region32
    $region31: #{encoder_forward.5} parent=5 // pred_region
      // Predicated region
      $region33: #{encoder_forward.5} parent=31 // pred_check
        %p178 = pneg %p31
      $region34: #{encoder_forward.5} parent=31 // pred_check_branch
        %180 = sbr.rel (%p178) target = $region36
      $region35: #{encoder_forward.5} parent=31 // pred_region
        %p181 = scmp.lt.s32.totalorder %s11, 1
        %s182 = scalar_select %p181, %s11, 1
        %s183 = smul.addr %s182, 8
        %s184 = smul.addr %s183, 8
        %s185 = scalar_lea.vmem %s0, %s184
      $region36: #{encoder_forward.5} parent=31 // pred_fallthru
        _
    $region32: #{encoder_forward.5} parent=5 // pred_fallthru
      _
    %p186 = scmp.le.s32.totalorder 1, %s11
    %p187 = scmp.lt.s32.totalorder %s11, 3
    %p188 = pnand %p186, %p187
    %p189 = pneg %p188
    // Predicated region
    $region37: #{encoder_forward.5} parent=5 // pred_check
      _
    $region38: #{encoder_forward.5} parent=5 // pred_check_branch
      %191 = sbr.rel (%p188) target = $region40
    $region39: #{encoder_forward.5} parent=5 // pred_region
      %s192 = ssub.s32 %s11, 1
      %p193 = scmp.lt.s32.totalorder %s16, 1
      %s194 = scalar_select %p193, %s16, 1
      %s195 = smul.addr %s194, 8
      %s196 = smul.addr %s195, 8
      %s197 = scalar_lea.vmem %s0, %s196
      %p198 = pneg %p37
      %p199 = pneg %p34
      %p200 = pneg %p58
      %p201 = pneg %p55
      %p202 = pneg %p79
      %p203 = pneg %p76
      %p204 = pneg %p100
      %p205 = pneg %p97
      %p206 = pneg %p121
      %p207 = pneg %p118
      %p208 = pneg %p147
      %p209 = pneg %p144
      %p210 = scmp.lt.s32.totalorder %s16, 1
      %s211 = scalar_select %p210, %s16, 1
      %s212 = smul.addr %s211, 8
      %s213 = smul.addr %s212, 8
      %s214 = scalar_lea.vmem %s5, %s213
      %p215 = scmp.lt.s32.totalorder %s16, 1
      %s216 = scalar_select %p215, %s16, 1
      %s217 = smul.addr %s216, 8
      %s218 = smul.addr %s217, 8
      %s219 = scalar_lea.vmem %s0, %s218
      %p220 = scmp.lt.s32.totalorder %s16, 1
      %s221 = scalar_select %p220, %s16, 1
      %s222 = smul.addr %s221, 8
      %s223 = smul.addr %s222, 8
      %s224 = scalar_lea.vmem %s5, %s223
      %v225 = vld [vmem:[%s219] sm:$0xff]
      %v226 = vld [vmem:[%s219 + $0x8] sm:$0xff]
      %v227 = vld [vmem:[%s219 + $0x10] sm:$0xff]
      %v228 = vld [vmem:[%s219 + $0x18] sm:$0xff]
      %v229 = vld [vmem:[%s219 + $0x20] sm:$0xff]
      %v230 = vld [vmem:[%s219 + $0x28] sm:$0xff]
      %v231 = vld [vmem:[%s219 + $0x30] sm:$0xff]
      %v232 = vld [vmem:[%s219 + $0x38] sm:$0xff]
      %v233 = vld [vmem:[%s1] sm:$0xff]
      %v234 = vld [vmem:[%s2] sm:$0xff]
      %v235 = vlaneseq
      %v236 = vand.u32 %v235, 127
      %v237 = vadd.s32 %v236, 128
      %v238 = vadd.s32 %v236, 256
      %v239 = vadd.s32 %v236, 384
      %v240 = vadd.s32 %v236, 512
      %v241 = vadd.s32 %v236, 640
      %v242 = vadd.s32 %v236, 768
      %v243 = vadd.s32 %v236, 896
      %v244 = vand.u32 %v236, 31
      %v245 = vand.u32 %v237, 31
      %v246 = vand.u32 %v238, 31
      %v247 = vand.u32 %v239, 31
      %v248 = vand.u32 %v240, 31
      %v249 = vand.u32 %v241, 31
      %v250 = vand.u32 %v242, 31
      %v251 = vand.u32 %v243, 31
      %252 = vrot.lane.b32.xlu0 %v225, 33
      %v253 = vpop.permute.xlu0 %252
      %254 = vrot.lane.b32.xlu0 %v226, 33
      %v255 = vpop.permute.xlu0 %254
      %256 = vrot.lane.b32.xlu0 %v227, 33
      %v257 = vpop.permute.xlu0 %256
      %258 = vrot.lane.b32.xlu0 %v228, 33
      %v259 = vpop.permute.xlu0 %258
      %260 = vrot.lane.b32.xlu0 %v229, 33
      %v261 = vpop.permute.xlu0 %260
      %262 = vrot.lane.b32.xlu0 %v230, 33
      %v263 = vpop.permute.xlu0 %262
      %264 = vrot.lane.b32.xlu0 %v231, 33
      %v265 = vpop.permute.xlu0 %264
      %266 = vrot.lane.b32.xlu0 %v232, 33
      %v267 = vpop.permute.xlu0 %266
      %vm268 = vcmp.lt.s32.totalorder %v236, 33
      %v269 = vsel %vm268, %v265, %v267
      %v270 = vsel %vm268, %v263, %v265
      %v271 = vsel %vm268, %v261, %v263
      %v272 = vsel %vm268, %v259, %v261
      %v273 = vsel %vm268, %v257, %v259
      %v274 = vsel %vm268, %v255, %v257
      %v275 = vsel %vm268, %v253, %v255
      %v276 = vsel %vm268, %v267, %v253
      %vm277 = vcmp.ge.s32.totalorder %v236, 32
      %vm278 = vcmp.ge.s32.totalorder %v237, 32
      %vm279 = vcmp.ge.s32.totalorder %v238, 32
      %vm280 = vcmp.ge.s32.totalorder %v239, 32
      %vm281 = vcmp.ge.s32.totalorder %v240, 32
      %vm282 = vcmp.ge.s32.totalorder %v241, 32
      %vm283 = vcmp.ge.s32.totalorder %v242, 32
      %vm284 = vcmp.ge.s32.totalorder %v243, 32
      %vm285 = vcmp.ge.s32.totalorder %v244, 1
      %vm286 = vcmp.ge.s32.totalorder %v245, 1
      %vm287 = vcmp.ge.s32.totalorder %v246, 1
      %vm288 = vcmp.ge.s32.totalorder %v247, 1
      %vm289 = vcmp.ge.s32.totalorder %v248, 1
      %vm290 = vcmp.ge.s32.totalorder %v249, 1
      %vm291 = vcmp.ge.s32.totalorder %v250, 1
      %vm292 = vcmp.ge.s32.totalorder %v251, 1
      %vm293 = vmand %vm277, %vm285
      %vm294 = vmand %vm278, %vm286
      %vm295 = vmand %vm279, %vm287
      %vm296 = vmand %vm280, %vm288
      %vm297 = vmand %vm281, %vm289
      %vm298 = vmand %vm282, %vm290
      %vm299 = vmand %vm283, %vm291
      %vm300 = vmand %vm284, %vm292
      %v301 = vsel %vm293, %v276, 0.0
      %v302 = vsel %vm294, %v275, 0.0
      %v303 = vsel %vm295, %v274, 0.0
      %v304 = vsel %vm296, %v273, 0.0
      %v305 = vsel %vm297, %v272, 0.0
      %v306 = vsel %vm298, %v271, 0.0
      %v307 = vsel %vm299, %v270, 0.0
      %v308 = vsel %vm300, %v269, 0.0
      %309 = vrot.lane.b32.xlu0 %v225, 32
      %v310 = vpop.permute.xlu0 %309
      %311 = vrot.lane.b32.xlu0 %v226, 32
      %v312 = vpop.permute.xlu0 %311
      %313 = vrot.lane.b32.xlu0 %v227, 32
      %v314 = vpop.permute.xlu0 %313
      %315 = vrot.lane.b32.xlu0 %v228, 32
      %v316 = vpop.permute.xlu0 %315
      %317 = vrot.lane.b32.xlu0 %v229, 32
      %v318 = vpop.permute.xlu0 %317
      %319 = vrot.lane.b32.xlu0 %v230, 32
      %v320 = vpop.permute.xlu0 %319
      %321 = vrot.lane.b32.xlu0 %v231, 32
      %v322 = vpop.permute.xlu0 %321
      %323 = vrot.lane.b32.xlu0 %v232, 32
      %v324 = vpop.permute.xlu0 %323
      %vm325 = vcmp.lt.s32.totalorder %v236, 32
      %v326 = vsel %vm325, %v322, %v324
      %v327 = vsel %vm325, %v320, %v322
      %v328 = vsel %vm325, %v318, %v320
      %v329 = vsel %vm325, %v316, %v318
      %v330 = vsel %vm325, %v314, %v316
      %v331 = vsel %vm325, %v312, %v314
      %v332 = vsel %vm325, %v310, %v312
      %v333 = vsel %vm325, %v324, %v310
      %v334 = vsel %vm277, %v333, 0.0
      %v335 = vsel %vm278, %v332, 0.0
      %v336 = vsel %vm279, %v331, 0.0
      %v337 = vsel %vm280, %v330, 0.0
      %v338 = vsel %vm281, %v329, 0.0
      %v339 = vsel %vm282, %v328, 0.0
      %v340 = vsel %vm283, %v327, 0.0
      %v341 = vsel %vm284, %v326, 0.0
      %342 = vrot.lane.b32.xlu0 %v225, 31
      %v343 = vpop.permute.xlu0 %342
      %344 = vrot.lane.b32.xlu0 %v226, 31
      %v345 = vpop.permute.xlu0 %344
      %346 = vrot.lane.b32.xlu0 %v227, 31
      %v347 = vpop.permute.xlu0 %346
      %348 = vrot.lane.b32.xlu0 %v228, 31
      %v349 = vpop.permute.xlu0 %348
      %350 = vrot.lane.b32.xlu0 %v229, 31
      %v351 = vpop.permute.xlu0 %350
      %352 = vrot.lane.b32.xlu0 %v230, 31
      %v353 = vpop.permute.xlu0 %352
      %354 = vrot.lane.b32.xlu0 %v231, 31
      %v355 = vpop.permute.xlu0 %354
      %356 = vrot.lane.b32.xlu0 %v232, 31
      %v357 = vpop.permute.xlu0 %356
      %vm358 = vcmp.lt.s32.totalorder %v236, 31
      %v359 = vsel %vm358, %v355, %v357
      %v360 = vsel %vm358, %v353, %v355
      %v361 = vsel %vm358, %v351, %v353
      %v362 = vsel %vm358, %v349, %v351
      %v363 = vsel %vm358, %v347, %v349
      %v364 = vsel %vm358, %v345, %v347
      %v365 = vsel %vm358, %v343, %v345
      %v366 = vsel %vm358, %v357, %v343
      %vm367 = vcmp.le.s32.totalorder %v244, 30
      %vm368 = vcmp.le.s32.totalorder %v245, 30
      %vm369 = vcmp.le.s32.totalorder %v246, 30
      %vm370 = vcmp.le.s32.totalorder %v247, 30
      %vm371 = vcmp.le.s32.totalorder %v248, 30
      %vm372 = vcmp.le.s32.totalorder %v249, 30
      %vm373 = vcmp.le.s32.totalorder %v250, 30
      %vm374 = vcmp.le.s32.totalorder %v251, 30
      %vm375 = vmand %vm277, %vm367
      %vm376 = vmand %vm278, %vm368
      %vm377 = vmand %vm279, %vm369
      %vm378 = vmand %vm280, %vm370
      %vm379 = vmand %vm281, %vm371
      %vm380 = vmand %vm282, %vm372
      %vm381 = vmand %vm283, %vm373
      %vm382 = vmand %vm284, %vm374
      %v383 = vsel %vm375, %v366, 0.0
      %v384 = vsel %vm376, %v365, 0.0
      %v385 = vsel %vm377, %v364, 0.0
      %v386 = vsel %vm378, %v363, 0.0
      %v387 = vsel %vm379, %v362, 0.0
      %v388 = vsel %vm380, %v361, 0.0
      %v389 = vsel %vm381, %v360, 0.0
      %v390 = vsel %vm382, %v359, 0.0
      %391 = vrot.lane.b32.xlu0 %v225, 1
      %v392 = vpop.permute.xlu0 %391
      %393 = vrot.lane.b32.xlu0 %v226, 1
      %v394 = vpop.permute.xlu0 %393
      %395 = vrot.lane.b32.xlu0 %v227, 1
      %v396 = vpop.permute.xlu0 %395
      %397 = vrot.lane.b32.xlu0 %v228, 1
      %v398 = vpop.permute.xlu0 %397
      %399 = vrot.lane.b32.xlu0 %v229, 1
      %v400 = vpop.permute.xlu0 %399
      %401 = vrot.lane.b32.xlu0 %v230, 1
      %v402 = vpop.permute.xlu0 %401
      %403 = vrot.lane.b32.xlu0 %v231, 1
      %v404 = vpop.permute.xlu0 %403
      %405 = vrot.lane.b32.xlu0 %v232, 1
      %v406 = vpop.permute.xlu0 %405
      %vm407 = vcmp.lt.s32.totalorder %v236, 1
      %v408 = vsel %vm407, %v404, %v406
      %v409 = vsel %vm407, %v402, %v404
      %v410 = vsel %vm407, %v400, %v402
      %v411 = vsel %vm407, %v398, %v400
      %v412 = vsel %vm407, %v396, %v398
      %v413 = vsel %vm407, %v394, %v396
      %v414 = vsel %vm407, %v392, %v394
      %v415 = vsel %vm407, %v406, %v392
      %v416 = vsel %vm285, %v415, 0.0
      %v417 = vsel %vm286, %v414, 0.0
      %v418 = vsel %vm287, %v413, 0.0
      %v419 = vsel %vm288, %v412, 0.0
      %v420 = vsel %vm289, %v411, 0.0
      %v421 = vsel %vm290, %v410, 0.0
      %v422 = vsel %vm291, %v409, 0.0
      %v423 = vsel %vm292, %v408, 0.0
      %424 = vrot.lane.b32.xlu0 %v225, 127
      %v425 = vpop.permute.xlu0 %424
      %426 = vrot.lane.b32.xlu0 %v226, 127
      %v427 = vpop.permute.xlu0 %426
      %428 = vrot.lane.b32.xlu0 %v227, 127
      %v429 = vpop.permute.xlu0 %428
      %430 = vrot.lane.b32.xlu0 %v228, 127
      %v431 = vpop.permute.xlu0 %430
      %432 = vrot.lane.b32.xlu0 %v229, 127
      %v433 = vpop.permute.xlu0 %432
      %434 = vrot.lane.b32.xlu0 %v230, 127
      %v435 = vpop.permute.xlu0 %434
      %436 = vrot.lane.b32.xlu0 %v231, 127
      %v437 = vpop.permute.xlu0 %436
      %438 = vrot.lane.b32.xlu0 %v232, 127
      %v439 = vpop.permute.xlu0 %438
      %vm440 = vcmp.lt.s32.totalorder %v236, 127
      %v441 = vsel %vm440, %v437, %v439
      %v442 = vsel %vm440, %v435, %v437
      %v443 = vsel %vm440, %v433, %v435
      %v444 = vsel %vm440, %v431, %v433
      %v445 = vsel %vm440, %v429, %v431
      %v446 = vsel %vm440, %v427, %v429
      %v447 = vsel %vm440, %v425, %v427
      %v448 = vsel %vm440, %v439, %v425
      %v449 = vsel %vm367, %v447, 0.0
      %v450 = vsel %vm368, %v446, 0.0
      %v451 = vsel %vm369, %v445, 0.0
      %v452 = vsel %vm370, %v444, 0.0
      %v453 = vsel %vm371, %v443, 0.0
      %v454 = vsel %vm372, %v442, 0.0
      %v455 = vsel %vm373, %v441, 0.0
      %v456 = vsel %vm374, %v448, 0.0
      %457 = vrot.lane.b32.xlu0 %v225, 97
      %v458 = vpop.permute.xlu0 %457
      %459 = vrot.lane.b32.xlu0 %v226, 97
      %v460 = vpop.permute.xlu0 %459
      %461 = vrot.lane.b32.xlu0 %v227, 97
      %v462 = vpop.permute.xlu0 %461
      %463 = vrot.lane.b32.xlu0 %v228, 97
      %v464 = vpop.permute.xlu0 %463
      %465 = vrot.lane.b32.xlu0 %v229, 97
      %v466 = vpop.permute.xlu0 %465
      %467 = vrot.lane.b32.xlu0 %v230, 97
      %v468 = vpop.permute.xlu0 %467
      %469 = vrot.lane.b32.xlu0 %v231, 97
      %v470 = vpop.permute.xlu0 %469
      %471 = vrot.lane.b32.xlu0 %v232, 97
      %v472 = vpop.permute.xlu0 %471
      %vm473 = vcmp.lt.s32.totalorder %v236, 97
      %v474 = vsel %vm473, %v470, %v472
      %v475 = vsel %vm473, %v468, %v470
      %v476 = vsel %vm473, %v466, %v468
      %v477 = vsel %vm473, %v464, %v466
      %v478 = vsel %vm473, %v462, %v464
      %v479 = vsel %vm473, %v460, %v462
      %v480 = vsel %vm473, %v458, %v460
      %v481 = vsel %vm473, %v472, %v458
      %vm482 = vcmp.lt.s32.totalorder %v236, 992
      %vm483 = vcmp.lt.s32.totalorder %v237, 992
      %vm484 = vcmp.lt.s32.totalorder %v238, 992
      %vm485 = vcmp.lt.s32.totalorder %v239, 992
      %vm486 = vcmp.lt.s32.totalorder %v240, 992
      %vm487 = vcmp.lt.s32.totalorder %v241, 992
      %vm488 = vcmp.lt.s32.totalorder %v242, 992
      %vm489 = vcmp.lt.s32.totalorder %v243, 992
      %vm490 = vmand %vm482, %vm285
      %vm491 = vmand %vm483, %vm286
      %vm492 = vmand %vm484, %vm287
      %vm493 = vmand %vm485, %vm288
      %vm494 = vmand %vm486, %vm289
      %vm495 = vmand %vm487, %vm290
      %vm496 = vmand %vm488, %vm291
      %vm497 = vmand %vm489, %vm292
      %v498 = vsel %vm490, %v480, 0.0
      %v499 = vsel %vm491, %v479, 0.0
      %v500 = vsel %vm492, %v478, 0.0
      %v501 = vsel %vm493, %v477, 0.0
      %v502 = vsel %vm494, %v476, 0.0
      %v503 = vsel %vm495, %v475, 0.0
      %v504 = vsel %vm496, %v474, 0.0
      %v505 = vsel %vm497, %v481, 0.0
      %506 = vrot.lane.b32.xlu0 %v225, 96
      %v507 = vpop.permute.xlu0 %506
      %508 = vrot.lane.b32.xlu0 %v226, 96
      %v509 = vpop.permute.xlu0 %508
      %510 = vrot.lane.b32.xlu0 %v227, 96
      %v511 = vpop.permute.xlu0 %510
      %512 = vrot.lane.b32.xlu0 %v228, 96
      %v513 = vpop.permute.xlu0 %512
      %514 = vrot.lane.b32.xlu0 %v229, 96
      %v515 = vpop.permute.xlu0 %514
      %516 = vrot.lane.b32.xlu0 %v230, 96
      %v517 = vpop.permute.xlu0 %516
      %518 = vrot.lane.b32.xlu0 %v231, 96
      %v519 = vpop.permute.xlu0 %518
      %520 = vrot.lane.b32.xlu0 %v232, 96
      %v521 = vpop.permute.xlu0 %520
      %vm522 = vcmp.lt.s32.totalorder %v236, 96
      %v523 = vsel %vm522, %v519, %v521
      %v524 = vsel %vm522, %v517, %v519
      %v525 = vsel %vm522, %v515, %v517
      %v526 = vsel %vm522, %v513, %v515
      %v527 = vsel %vm522, %v511, %v513
      %v528 = vsel %vm522, %v509, %v511
      %v529 = vsel %vm522, %v507, %v509
      %v530 = vsel %vm522, %v521, %v507
      %v531 = vsel %vm482, %v529, 0.0
      %v532 = vsel %vm483, %v528, 0.0
      %v533 = vsel %vm484, %v527, 0.0
      %v534 = vsel %vm485, %v526, 0.0
      %v535 = vsel %vm486, %v525, 0.0
      %v536 = vsel %vm487, %v524, 0.0
      %v537 = vsel %vm488, %v523, 0.0
      %v538 = vsel %vm489, %v530, 0.0
      %539 = vrot.lane.b32.xlu0 %v225, 95
      %v540 = vpop.permute.xlu0 %539
      %541 = vrot.lane.b32.xlu0 %v226, 95
      %v542 = vpop.permute.xlu0 %541
      %543 = vrot.lane.b32.xlu0 %v227, 95
      %v544 = vpop.permute.xlu0 %543
      %545 = vrot.lane.b32.xlu0 %v228, 95
      %v546 = vpop.permute.xlu0 %545
      %547 = vrot.lane.b32.xlu0 %v229, 95
      %v548 = vpop.permute.xlu0 %547
      %549 = vrot.lane.b32.xlu0 %v230, 95
      %v550 = vpop.permute.xlu0 %549
      %551 = vrot.lane.b32.xlu0 %v231, 95
      %v552 = vpop.permute.xlu0 %551
      %553 = vrot.lane.b32.xlu0 %v232, 95
      %v554 = vpop.permute.xlu0 %553
      %vm555 = vcmp.lt.s32.totalorder %v236, 95
      %v556 = vsel %vm555, %v552, %v554
      %v557 = vsel %vm555, %v550, %v552
      %v558 = vsel %vm555, %v548, %v550
      %v559 = vsel %vm555, %v546, %v548
      %v560 = vsel %vm555, %v544, %v546
      %v561 = vsel %vm555, %v542, %v544
      %v562 = vsel %vm555, %v540, %v542
      %v563 = vsel %vm555, %v554, %v540
      %vm564 = vmand %vm482, %vm367
      %vm565 = vmand %vm483, %vm368
      %vm566 = vmand %vm484, %vm369
      %vm567 = vmand %vm485, %vm370
      %vm568 = vmand %vm486, %vm371
      %vm569 = vmand %vm487, %vm372
      %vm570 = vmand %vm488, %vm373
      %vm571 = vmand %vm489, %vm374
      %v572 = vsel %vm564, %v562, 0.0
      %v573 = vsel %vm565, %v561, 0.0
      %v574 = vsel %vm566, %v560, 0.0
      %v575 = vsel %vm567, %v559, 0.0
      %v576 = vsel %vm568, %v558, 0.0
      %v577 = vsel %vm569, %v557, 0.0
      %v578 = vsel %vm570, %v556, 0.0
      %v579 = vsel %vm571, %v563, 0.0
      %581 = vset.pattern.permute.xlu0 0
      %582 = vperm.xlu0 %581, %v234
      %v583 = vpop.permute.xlu0 %582
      %vm585 = vcmask 588800
      %v587 = vsel %vm585, %v233, 0
      %589 = vmatpush.msra.mxu0 0.0
      %590 = vmatpush.msra.mxu0 0.0
      %591 = vmatpush.msra.mxu0 0.0
      %592 = vmatpush.msra.mxu0 0.0
      %593 = vmatpush.msra.mxu0 0.0
      %594 = vmatpush.msra.mxu0 0.0
      %595 = vmatpush.msra.mxu0 0.0
      %596 = vmatpush.msra.mxu0 %v572
      %597 = vmatpush.msra.mxu0 %v531
      %598 = vmatpush.msra.mxu0 %v498
      %599 = vmatpush.msra.mxu0 %v449
      %600 = vmatpush.msra.mxu0 %v225
      %601 = vmatpush.msra.mxu0 %v416
      %602 = vmatpush.msra.mxu0 %v383
      %603 = vmatpush.msra.mxu0 %v334
      %604 = vmatpush.msra.mxu0 %v301
      %605 = vmatmul.f32.gmra.mxu0 %v587
      %v606 = vpop.f32.mrf.mxu0
      %v607 = vadd.f32 %v583, %v606
      %608 = vdwg.mxu0
      %609 = vmatpush.msra.mxu0 0.0
      %610 = vmatpush.msra.mxu0 0.0
      %611 = vmatpush.msra.mxu0 0.0
      %612 = vmatpush.msra.mxu0 0.0
      %613 = vmatpush.msra.mxu0 0.0
      %614 = vmatpush.msra.mxu0 0.0
      %615 = vmatpush.msra.mxu0 0.0
      %616 = vmatpush.msra.mxu0 %v573
      %617 = vmatpush.msra.mxu0 %v532
      %618 = vmatpush.msra.mxu0 %v499
      %619 = vmatpush.msra.mxu0 %v450
      %620 = vmatpush.msra.mxu0 %v226
      %621 = vmatpush.msra.mxu0 %v417
      %622 = vmatpush.msra.mxu0 %v384
      %623 = vmatpush.msra.mxu0 %v335
      %624 = vmatpush.msra.mxu0 %v302
      %625 = vmatmul.f32.gmra.mxu0 %v587
      %v626 = vpop.f32.mrf.mxu0
      %v627 = vadd.f32 %v583, %v626
      %628 = vdwg.mxu0
      %629 = vmatpush.msra.mxu0 0.0
      %630 = vmatpush.msra.mxu0 0.0
      %631 = vmatpush.msra.mxu0 0.0
      %632 = vmatpush.msra.mxu0 0.0
      %633 = vmatpush.msra.mxu0 0.0
      %634 = vmatpush.msra.mxu0 0.0
      %635 = vmatpush.msra.mxu0 0.0
      %636 = vmatpush.msra.mxu0 %v574
      %637 = vmatpush.msra.mxu0 %v533
      %638 = vmatpush.msra.mxu0 %v500
      %639 = vmatpush.msra.mxu0 %v451
      %640 = vmatpush.msra.mxu0 %v227
      %641 = vmatpush.msra.mxu0 %v418
      %642 = vmatpush.msra.mxu0 %v385
      %643 = vmatpush.msra.mxu0 %v336
      %644 = vmatpush.msra.mxu0 %v303
      %645 = vmatmul.f32.gmra.mxu0 %v587
      %v646 = vpop.f32.mrf.mxu0
      %v647 = vadd.f32 %v583, %v646
      %648 = vdwg.mxu0
      %649 = vmatpush.msra.mxu0 0.0
      %650 = vmatpush.msra.mxu0 0.0
      %651 = vmatpush.msra.mxu0 0.0
      %652 = vmatpush.msra.mxu0 0.0
      %653 = vmatpush.msra.mxu0 0.0
      %654 = vmatpush.msra.mxu0 0.0
      %655 = vmatpush.msra.mxu0 0.0
      %656 = vmatpush.msra.mxu0 %v575
      %657 = vmatpush.msra.mxu0 %v534
      %658 = vmatpush.msra.mxu0 %v501
      %659 = vmatpush.msra.mxu0 %v452
      %660 = vmatpush.msra.mxu0 %v228
      %661 = vmatpush.msra.mxu0 %v419
      %662 = vmatpush.msra.mxu0 %v386
      %663 = vmatpush.msra.mxu0 %v337
      %664 = vmatpush.msra.mxu0 %v304
      %665 = vmatmul.f32.gmra.mxu0 %v587
      %v666 = vpop.f32.mrf.mxu0
      %v667 = vadd.f32 %v583, %v666
      %668 = vdwg.mxu0
      %669 = vmatpush.msra.mxu0 0.0
      %670 = vmatpush.msra.mxu0 0.0
      %671 = vmatpush.msra.mxu0 0.0
      %672 = vmatpush.msra.mxu0 0.0
      %673 = vmatpush.msra.mxu0 0.0
      %674 = vmatpush.msra.mxu0 0.0
      %675 = vmatpush.msra.mxu0 0.0
      %676 = vmatpush.msra.mxu0 %v576
      %677 = vmatpush.msra.mxu0 %v535
      %678 = vmatpush.msra.mxu0 %v502
      %679 = vmatpush.msra.mxu0 %v453
      %680 = vmatpush.msra.mxu0 %v229
      %681 = vmatpush.msra.mxu0 %v420
      %682 = vmatpush.msra.mxu0 %v387
      %683 = vmatpush.msra.mxu0 %v338
      %684 = vmatpush.msra.mxu0 %v305
      %685 = vmatmul.f32.gmra.mxu0 %v587
      %v686 = vpop.f32.mrf.mxu0
      %v687 = vadd.f32 %v583, %v686
      %688 = vdwg.mxu0
      %689 = vmatpush.msra.mxu0 0.0
      %690 = vmatpush.msra.mxu0 0.0
      %691 = vmatpush.msra.mxu0 0.0
      %692 = vmatpush.msra.mxu0 0.0
      %693 = vmatpush.msra.mxu0 0.0
      %694 = vmatpush.msra.mxu0 0.0
      %695 = vmatpush.msra.mxu0 0.0
      %696 = vmatpush.msra.mxu0 %v577
      %697 = vmatpush.msra.mxu0 %v536
      %698 = vmatpush.msra.mxu0 %v503
      %699 = vmatpush.msra.mxu0 %v454
      %700 = vmatpush.msra.mxu0 %v230
      %701 = vmatpush.msra.mxu0 %v421
      %702 = vmatpush.msra.mxu0 %v388
      %703 = vmatpush.msra.mxu0 %v339
      %704 = vmatpush.msra.mxu0 %v306
      %705 = vmatmul.f32.gmra.mxu0 %v587
      %v706 = vpop.f32.mrf.mxu0
      %v707 = vadd.f32 %v583, %v706
      %708 = vdwg.mxu0
      %709 = vmatpush.msra.mxu0 0.0
      %710 = vmatpush.msra.mxu0 0.0
      %711 = vmatpush.msra.mxu0 0.0
      %712 = vmatpush.msra.mxu0 0.0
      %713 = vmatpush.msra.mxu0 0.0
      %714 = vmatpush.msra.mxu0 0.0
      %715 = vmatpush.msra.mxu0 0.0
      %716 = vmatpush.msra.mxu0 %v578
      %717 = vmatpush.msra.mxu0 %v537
      %718 = vmatpush.msra.mxu0 %v504
      %719 = vmatpush.msra.mxu0 %v455
      %720 = vmatpush.msra.mxu0 %v231
      %721 = vmatpush.msra.mxu0 %v422
      %722 = vmatpush.msra.mxu0 %v389
      %723 = vmatpush.msra.mxu0 %v340
      %724 = vmatpush.msra.mxu0 %v307
      %725 = vmatmul.f32.gmra.mxu0 %v587
      %v726 = vpop.f32.mrf.mxu0
      %v727 = vadd.f32 %v583, %v726
      %728 = vdwg.mxu0
      %729 = vmatpush.msra.mxu0 0.0
      %730 = vmatpush.msra.mxu0 0.0
      %731 = vmatpush.msra.mxu0 0.0
      %732 = vmatpush.msra.mxu0 0.0
      %733 = vmatpush.msra.mxu0 0.0
      %734 = vmatpush.msra.mxu0 0.0
      %735 = vmatpush.msra.mxu0 0.0
      %736 = vmatpush.msra.mxu0 %v579
      %737 = vmatpush.msra.mxu0 %v538
      %738 = vmatpush.msra.mxu0 %v505
      %739 = vmatpush.msra.mxu0 %v456
      %740 = vmatpush.msra.mxu0 %v232
      %741 = vmatpush.msra.mxu0 %v423
      %742 = vmatpush.msra.mxu0 %v390
      %743 = vmatpush.msra.mxu0 %v341
      %744 = vmatpush.msra.mxu0 %v308
      %745 = vmatmul.f32.gmra.mxu0 %v587
      %v746 = vpop.f32.mrf.mxu0
      %v747 = vadd.f32 %v583, %v746
      %748 = vdwg.mxu0
      %v749 = vmax.f32 %v607, 0.0
      %v750 = vmax.f32 %v627, 0.0
      %v751 = vmax.f32 %v647, 0.0
      %v752 = vmax.f32 %v667, 0.0
      %v753 = vmax.f32 %v687, 0.0
      %v754 = vmax.f32 %v707, 0.0
      %v755 = vmax.f32 %v727, 0.0
      %v756 = vmax.f32 %v747, 0.0
      %v757 = vld [vmem:[%s3] sm:$0xff]
      %v758 = vld [vmem:[%s4] sm:$0xff]
      %759 = vrot.lane.b32.xlu0 %v749, 33
      %v760 = vpop.permute.xlu0 %759
      %761 = vrot.lane.b32.xlu0 %v750, 33
      %v762 = vpop.permute.xlu0 %761
      %763 = vrot.lane.b32.xlu0 %v751, 33
      %v764 = vpop.permute.xlu0 %763
      %765 = vrot.lane.b32.xlu0 %v752, 33
      %v766 = vpop.permute.xlu0 %765
      %767 = vrot.lane.b32.xlu0 %v753, 33
      %v768 = vpop.permute.xlu0 %767
      %769 = vrot.lane.b32.xlu0 %v754, 33
      %v770 = vpop.permute.xlu0 %769
      %771 = vrot.lane.b32.xlu0 %v755, 33
      %v772 = vpop.permute.xlu0 %771
      %773 = vrot.lane.b32.xlu0 %v756, 33
      %v774 = vpop.permute.xlu0 %773
      %v775 = vsel %vm268, %v772, %v774
      %v776 = vsel %vm268, %v770, %v772
      %v777 = vsel %vm268, %v768, %v770
      %v778 = vsel %vm268, %v766, %v768
      %v779 = vsel %vm268, %v764, %v766
      %v780 = vsel %vm268, %v762, %v764
      %v781 = vsel %vm268, %v760, %v762
      %v782 = vsel %vm268, %v774, %v760
      %v783 = vsel %vm293, %v782, 0.0
      %v784 = vsel %vm294, %v781, 0.0
      %v785 = vsel %vm295, %v780, 0.0
      %v786 = vsel %vm296, %v779, 0.0
      %v787 = vsel %vm297, %v778, 0.0
      %v788 = vsel %vm298, %v777, 0.0
      %v789 = vsel %vm299, %v776, 0.0
      %v790 = vsel %vm300, %v775, 0.0
      %791 = vrot.lane.b32.xlu0 %v749, 32
      %v792 = vpop.permute.xlu0 %791
      %793 = vrot.lane.b32.xlu0 %v750, 32
      %v794 = vpop.permute.xlu0 %793
      %795 = vrot.lane.b32.xlu0 %v751, 32
      %v796 = vpop.permute.xlu0 %795
      %797 = vrot.lane.b32.xlu0 %v752, 32
      %v798 = vpop.permute.xlu0 %797
      %799 = vrot.lane.b32.xlu0 %v753, 32
      %v800 = vpop.permute.xlu0 %799
      %801 = vrot.lane.b32.xlu0 %v754, 32
      %v802 = vpop.permute.xlu0 %801
      %803 = vrot.lane.b32.xlu0 %v755, 32
      %v804 = vpop.permute.xlu0 %803
      %805 = vrot.lane.b32.xlu0 %v756, 32
      %v806 = vpop.permute.xlu0 %805
      %v807 = vsel %vm325, %v804, %v806
      %v808 = vsel %vm325, %v802, %v804
      %v809 = vsel %vm325, %v800, %v802
      %v810 = vsel %vm325, %v798, %v800
      %v811 = vsel %vm325, %v796, %v798
      %v812 = vsel %vm325, %v794, %v796
      %v813 = vsel %vm325, %v792, %v794
      %v814 = vsel %vm325, %v806, %v792
      %v815 = vsel %vm277, %v814, 0.0
      %v816 = vsel %vm278, %v813, 0.0
      %v817 = vsel %vm279, %v812, 0.0
      %v818 = vsel %vm280, %v811, 0.0
      %v819 = vsel %vm281, %v810, 0.0
      %v820 = vsel %vm282, %v809, 0.0
      %v821 = vsel %vm283, %v808, 0.0
      %v822 = vsel %vm284, %v807, 0.0
      %823 = vrot.lane.b32.xlu0 %v749, 31
      %v824 = vpop.permute.xlu0 %823
      %825 = vrot.lane.b32.xlu0 %v750, 31
      %v826 = vpop.permute.xlu0 %825
      %827 = vrot.lane.b32.xlu0 %v751, 31
      %v828 = vpop.permute.xlu0 %827
      %829 = vrot.lane.b32.xlu0 %v752, 31
      %v830 = vpop.permute.xlu0 %829
      %831 = vrot.lane.b32.xlu0 %v753, 31
      %v832 = vpop.permute.xlu0 %831
      %833 = vrot.lane.b32.xlu0 %v754, 31
      %v834 = vpop.permute.xlu0 %833
      %835 = vrot.lane.b32.xlu0 %v755, 31
      %v836 = vpop.permute.xlu0 %835
      %837 = vrot.lane.b32.xlu0 %v756, 31
      %v838 = vpop.permute.xlu0 %837
      %v839 = vsel %vm358, %v836, %v838
      %v840 = vsel %vm358, %v834, %v836
      %v841 = vsel %vm358, %v832, %v834
      %v842 = vsel %vm358, %v830, %v832
      %v843 = vsel %vm358, %v828, %v830
      %v844 = vsel %vm358, %v826, %v828
      %v845 = vsel %vm358, %v824, %v826
      %v846 = vsel %vm358, %v838, %v824
      %v847 = vsel %vm375, %v846, 0.0
      %v848 = vsel %vm376, %v845, 0.0
      %v849 = vsel %vm377, %v844, 0.0
      %v850 = vsel %vm378, %v843, 0.0
      %v851 = vsel %vm379, %v842, 0.0
      %v852 = vsel %vm380, %v841, 0.0
      %v853 = vsel %vm381, %v840, 0.0
      %v854 = vsel %vm382, %v839, 0.0
      %855 = vrot.lane.b32.xlu0 %v749, 1
      %v856 = vpop.permute.xlu0 %855
      %857 = vrot.lane.b32.xlu0 %v750, 1
      %v858 = vpop.permute.xlu0 %857
      %859 = vrot.lane.b32.xlu0 %v751, 1
      %v860 = vpop.permute.xlu0 %859
      %861 = vrot.lane.b32.xlu0 %v752, 1
      %v862 = vpop.permute.xlu0 %861
      %863 = vrot.lane.b32.xlu0 %v753, 1
      %v864 = vpop.permute.xlu0 %863
      %865 = vrot.lane.b32.xlu0 %v754, 1
      %v866 = vpop.permute.xlu0 %865
      %867 = vrot.lane.b32.xlu0 %v755, 1
      %v868 = vpop.permute.xlu0 %867
      %869 = vrot.lane.b32.xlu0 %v756, 1
      %v870 = vpop.permute.xlu0 %869
      %v871 = vsel %vm407, %v868, %v870
      %v872 = vsel %vm407, %v866, %v868
      %v873 = vsel %vm407, %v864, %v866
      %v874 = vsel %vm407, %v862, %v864
      %v875 = vsel %vm407, %v860, %v862
      %v876 = vsel %vm407, %v858, %v860
      %v877 = vsel %vm407, %v856, %v858
      %v878 = vsel %vm407, %v870, %v856
      %v879 = vsel %vm285, %v878, 0.0
      %v880 = vsel %vm286, %v877, 0.0
      %v881 = vsel %vm287, %v876, 0.0
      %v882 = vsel %vm288, %v875, 0.0
      %v883 = vsel %vm289, %v874, 0.0
      %v884 = vsel %vm290, %v873, 0.0
      %v885 = vsel %vm291, %v872, 0.0
      %v886 = vsel %vm292, %v871, 0.0
      %887 = vrot.lane.b32.xlu0 %v749, 127
      %v888 = vpop.permute.xlu0 %887
      %889 = vrot.lane.b32.xlu0 %v750, 127
      %v890 = vpop.permute.xlu0 %889
      %891 = vrot.lane.b32.xlu0 %v751, 127
      %v892 = vpop.permute.xlu0 %891
      %893 = vrot.lane.b32.xlu0 %v752, 127
      %v894 = vpop.permute.xlu0 %893
      %895 = vrot.lane.b32.xlu0 %v753, 127
      %v896 = vpop.permute.xlu0 %895
      %897 = vrot.lane.b32.xlu0 %v754, 127
      %v898 = vpop.permute.xlu0 %897
      %899 = vrot.lane.b32.xlu0 %v755, 127
      %v900 = vpop.permute.xlu0 %899
      %901 = vrot.lane.b32.xlu0 %v756, 127
      %v902 = vpop.permute.xlu0 %901
      %v903 = vsel %vm440, %v900, %v902
      %v904 = vsel %vm440, %v898, %v900
      %v905 = vsel %vm440, %v896, %v898
      %v906 = vsel %vm440, %v894, %v896
      %v907 = vsel %vm440, %v892, %v894
      %v908 = vsel %vm440, %v890, %v892
      %v909 = vsel %vm440, %v888, %v890
      %v910 = vsel %vm440, %v902, %v888
      %v911 = vsel %vm367, %v909, 0.0
      %v912 = vsel %vm368, %v908, 0.0
      %v913 = vsel %vm369, %v907, 0.0
      %v914 = vsel %vm370, %v906, 0.0
      %v915 = vsel %vm371, %v905, 0.0
      %v916 = vsel %vm372, %v904, 0.0
      %v917 = vsel %vm373, %v903, 0.0
      %v918 = vsel %vm374, %v910, 0.0
      %919 = vrot.lane.b32.xlu0 %v749, 97
      %v920 = vpop.permute.xlu0 %919
      %921 = vrot.lane.b32.xlu0 %v750, 97
      %v922 = vpop.permute.xlu0 %921
      %923 = vrot.lane.b32.xlu0 %v751, 97
      %v924 = vpop.permute.xlu0 %923
      %925 = vrot.lane.b32.xlu0 %v752, 97
      %v926 = vpop.permute.xlu0 %925
      %927 = vrot.lane.b32.xlu0 %v753, 97
      %v928 = vpop.permute.xlu0 %927
      %929 = vrot.lane.b32.xlu0 %v754, 97
      %v930 = vpop.permute.xlu0 %929
      %931 = vrot.lane.b32.xlu0 %v755, 97
      %v932 = vpop.permute.xlu0 %931
      %933 = vrot.lane.b32.xlu0 %v756, 97
      %v934 = vpop.permute.xlu0 %933
      %v935 = vsel %vm473, %v932, %v934
      %v936 = vsel %vm473, %v930, %v932
      %v937 = vsel %vm473, %v928, %v930
      %v938 = vsel %vm473, %v926, %v928
      %v939 = vsel %vm473, %v924, %v926
      %v940 = vsel %vm473, %v922, %v924
      %v941 = vsel %vm473, %v920, %v922
      %v942 = vsel %vm473, %v934, %v920
      %v943 = vsel %vm490, %v941, 0.0
      %v944 = vsel %vm491, %v940, 0.0
      %v945 = vsel %vm492, %v939, 0.0
      %v946 = vsel %vm493, %v938, 0.0
      %v947 = vsel %vm494, %v937, 0.0
      %v948 = vsel %vm495, %v936, 0.0
      %v949 = vsel %vm496, %v935, 0.0
      %v950 = vsel %vm497, %v942, 0.0
      %951 = vrot.lane.b32.xlu0 %v749, 96
      %v952 = vpop.permute.xlu0 %951
      %953 = vrot.lane.b32.xlu0 %v750, 96
      %v954 = vpop.permute.xlu0 %953
      %955 = vrot.lane.b32.xlu0 %v751, 96
      %v956 = vpop.permute.xlu0 %955
      %957 = vrot.lane.b32.xlu0 %v752, 96
      %v958 = vpop.permute.xlu0 %957
      %959 = vrot.lane.b32.xlu0 %v753, 96
      %v960 = vpop.permute.xlu0 %959
      %961 = vrot.lane.b32.xlu0 %v754, 96
      %v962 = vpop.permute.xlu0 %961
      %963 = vrot.lane.b32.xlu0 %v755, 96
      %v964 = vpop.permute.xlu0 %963
      %965 = vrot.lane.b32.xlu0 %v756, 96
      %v966 = vpop.permute.xlu0 %965
      %v967 = vsel %vm522, %v964, %v966
      %v968 = vsel %vm522, %v962, %v964
      %v969 = vsel %vm522, %v960, %v962
      %v970 = vsel %vm522, %v958, %v960
      %v971 = vsel %vm522, %v956, %v958
      %v972 = vsel %vm522, %v954, %v956
      %v973 = vsel %vm522, %v952, %v954
      %v974 = vsel %vm522, %v966, %v952
      %v975 = vsel %vm482, %v973, 0.0
      %v976 = vsel %vm483, %v972, 0.0
      %v977 = vsel %vm484, %v971, 0.0
      %v978 = vsel %vm485, %v970, 0.0
      %v979 = vsel %vm486, %v969, 0.0
      %v980 = vsel %vm487, %v968, 0.0
      %v981 = vsel %vm488, %v967, 0.0
      %v982 = vsel %vm489, %v974, 0.0
      %983 = vrot.lane.b32.xlu0 %v749, 95
      %v984 = vpop.permute.xlu0 %983
      %985 = vrot.lane.b32.xlu0 %v750, 95
      %v986 = vpop.permute.xlu0 %985
      %987 = vrot.lane.b32.xlu0 %v751, 95
      %v988 = vpop.permute.xlu0 %987
      %989 = vrot.lane.b32.xlu0 %v752, 95
      %v990 = vpop.permute.xlu0 %989
      %991 = vrot.lane.b32.xlu0 %v753, 95
      %v992 = vpop.permute.xlu0 %991
      %993 = vrot.lane.b32.xlu0 %v754, 95
      %v994 = vpop.permute.xlu0 %993
      %995 = vrot.lane.b32.xlu0 %v755, 95
      %v996 = vpop.permute.xlu0 %995
      %997 = vrot.lane.b32.xlu0 %v756, 95
      %v998 = vpop.permute.xlu0 %997
      %v999 = vsel %vm555, %v996, %v998
      %v1000 = vsel %vm555, %v994, %v996
      %v1001 = vsel %vm555, %v992, %v994
      %v1002 = vsel %vm555, %v990, %v992
      %v1003 = vsel %vm555, %v988, %v990
      %v1004 = vsel %vm555, %v986, %v988
      %v1005 = vsel %vm555, %v984, %v986
      %v1006 = vsel %vm555, %v998, %v984
      %v1007 = vsel %vm564, %v1005, 0.0
      %v1008 = vsel %vm565, %v1004, 0.0
      %v1009 = vsel %vm566, %v1003, 0.0
      %v1010 = vsel %vm567, %v1002, 0.0
      %v1011 = vsel %vm568, %v1001, 0.0
      %v1012 = vsel %vm569, %v1000, 0.0
      %v1013 = vsel %vm570, %v999, 0.0
      %v1014 = vsel %vm571, %v1006, 0.0
      %1016 = vset.pattern.permute.xlu0 0
      %1017 = vperm.xlu0 %1016, %v758
      %v1018 = vpop.permute.xlu0 %1017
      %v1021 = vsel %vm585, %v757, 0
      %1023 = vmatpush.msra.mxu0 0.0
      %1024 = vmatpush.msra.mxu0 0.0
      %1025 = vmatpush.msra.mxu0 0.0
      %1026 = vmatpush.msra.mxu0 0.0
      %1027 = vmatpush.msra.mxu0 0.0
      %1028 = vmatpush.msra.mxu0 0.0
      %1029 = vmatpush.msra.mxu0 0.0
      %1030 = vmatpush.msra.mxu0 %v1007
      %1031 = vmatpush.msra.mxu0 %v975
      %1032 = vmatpush.msra.mxu0 %v943
      %1033 = vmatpush.msra.mxu0 %v911
      %1034 = vmatpush.msra.mxu0 %v749
      %1035 = vmatpush.msra.mxu0 %v879
      %1036 = vmatpush.msra.mxu0 %v847
      %1037 = vmatpush.msra.mxu0 %v815
      %1038 = vmatpush.msra.mxu0 %v783
      %1039 = vmatmul.f32.gmra.mxu0 %v1021
      %v1040 = vpop.f32.mrf.mxu0
      %v1041 = vadd.f32 %v1018, %v1040
      %1042 = vdwg.mxu0
      %1043 = vmatpush.msra.mxu0 0.0
      %1044 = vmatpush.msra.mxu0 0.0
      %1045 = vmatpush.msra.mxu0 0.0
      %1046 = vmatpush.msra.mxu0 0.0
      %1047 = vmatpush.msra.mxu0 0.0
      %1048 = vmatpush.msra.mxu0 0.0
      %1049 = vmatpush.msra.mxu0 0.0
      %1050 = vmatpush.msra.mxu0 %v1008
      %1051 = vmatpush.msra.mxu0 %v976
      %1052 = vmatpush.msra.mxu0 %v944
      %1053 = vmatpush.msra.mxu0 %v912
      %1054 = vmatpush.msra.mxu0 %v750
      %1055 = vmatpush.msra.mxu0 %v880
      %1056 = vmatpush.msra.mxu0 %v848
      %1057 = vmatpush.msra.mxu0 %v816
      %1058 = vmatpush.msra.mxu0 %v784
      %1059 = vmatmul.f32.gmra.mxu0 %v1021
      %v1060 = vpop.f32.mrf.mxu0
      %v1061 = vadd.f32 %v1018, %v1060
      %1062 = vdwg.mxu0
      %1063 = vmatpush.msra.mxu0 0.0
      %1064 = vmatpush.msra.mxu0 0.0
      %1065 = vmatpush.msra.mxu0 0.0
      %1066 = vmatpush.msra.mxu0 0.0
      %1067 = vmatpush.msra.mxu0 0.0
      %1068 = vmatpush.msra.mxu0 0.0
      %1069 = vmatpush.msra.mxu0 0.0
      %1070 = vmatpush.msra.mxu0 %v1009
      %1071 = vmatpush.msra.mxu0 %v977
      %1072 = vmatpush.msra.mxu0 %v945
      %1073 = vmatpush.msra.mxu0 %v913
      %1074 = vmatpush.msra.mxu0 %v751
      %1075 = vmatpush.msra.mxu0 %v881
      %1076 = vmatpush.msra.mxu0 %v849
      %1077 = vmatpush.msra.mxu0 %v817
      %1078 = vmatpush.msra.mxu0 %v785
      %1079 = vmatmul.f32.gmra.mxu0 %v1021
      %v1080 = vpop.f32.mrf.mxu0
      %v1081 = vadd.f32 %v1018, %v1080
      %1082 = vdwg.mxu0
      %1083 = vmatpush.msra.mxu0 0.0
      %1084 = vmatpush.msra.mxu0 0.0
      %1085 = vmatpush.msra.mxu0 0.0
      %1086 = vmatpush.msra.mxu0 0.0
      %1087 = vmatpush.msra.mxu0 0.0
      %1088 = vmatpush.msra.mxu0 0.0
      %1089 = vmatpush.msra.mxu0 0.0
      %1090 = vmatpush.msra.mxu0 %v1010
      %1091 = vmatpush.msra.mxu0 %v978
      %1092 = vmatpush.msra.mxu0 %v946
      %1093 = vmatpush.msra.mxu0 %v914
      %1094 = vmatpush.msra.mxu0 %v752
      %1095 = vmatpush.msra.mxu0 %v882
      %1096 = vmatpush.msra.mxu0 %v850
      %1097 = vmatpush.msra.mxu0 %v818
      %1098 = vmatpush.msra.mxu0 %v786
      %1099 = vmatmul.f32.gmra.mxu0 %v1021
      %v1100 = vpop.f32.mrf.mxu0
      %v1101 = vadd.f32 %v1018, %v1100
      %1102 = vdwg.mxu0
      %1103 = vmatpush.msra.mxu0 0.0
      %1104 = vmatpush.msra.mxu0 0.0
      %1105 = vmatpush.msra.mxu0 0.0
      %1106 = vmatpush.msra.mxu0 0.0
      %1107 = vmatpush.msra.mxu0 0.0
      %1108 = vmatpush.msra.mxu0 0.0
      %1109 = vmatpush.msra.mxu0 0.0
      %1110 = vmatpush.msra.mxu0 %v1011
      %1111 = vmatpush.msra.mxu0 %v979
      %1112 = vmatpush.msra.mxu0 %v947
      %1113 = vmatpush.msra.mxu0 %v915
      %1114 = vmatpush.msra.mxu0 %v753
      %1115 = vmatpush.msra.mxu0 %v883
      %1116 = vmatpush.msra.mxu0 %v851
      %1117 = vmatpush.msra.mxu0 %v819
      %1118 = vmatpush.msra.mxu0 %v787
      %1119 = vmatmul.f32.gmra.mxu0 %v1021
      %v1120 = vpop.f32.mrf.mxu0
      %v1121 = vadd.f32 %v1018, %v1120
      %1122 = vdwg.mxu0
      %1123 = vmatpush.msra.mxu0 0.0
      %1124 = vmatpush.msra.mxu0 0.0
      %1125 = vmatpush.msra.mxu0 0.0
      %1126 = vmatpush.msra.mxu0 0.0
      %1127 = vmatpush.msra.mxu0 0.0
      %1128 = vmatpush.msra.mxu0 0.0
      %1129 = vmatpush.msra.mxu0 0.0
      %1130 = vmatpush.msra.mxu0 %v1012
      %1131 = vmatpush.msra.mxu0 %v980
      %1132 = vmatpush.msra.mxu0 %v948
      %1133 = vmatpush.msra.mxu0 %v916
      %1134 = vmatpush.msra.mxu0 %v754
      %1135 = vmatpush.msra.mxu0 %v884
      %1136 = vmatpush.msra.mxu0 %v852
      %1137 = vmatpush.msra.mxu0 %v820
      %1138 = vmatpush.msra.mxu0 %v788
      %1139 = vmatmul.f32.gmra.mxu0 %v1021
      %v1140 = vpop.f32.mrf.mxu0
      %v1141 = vadd.f32 %v1018, %v1140
      %1142 = vdwg.mxu0
      %1143 = vmatpush.msra.mxu0 0.0
      %1144 = vmatpush.msra.mxu0 0.0
      %1145 = vmatpush.msra.mxu0 0.0
      %1146 = vmatpush.msra.mxu0 0.0
      %1147 = vmatpush.msra.mxu0 0.0
      %1148 = vmatpush.msra.mxu0 0.0
      %1149 = vmatpush.msra.mxu0 0.0
      %1150 = vmatpush.msra.mxu0 %v1013
      %1151 = vmatpush.msra.mxu0 %v981
      %1152 = vmatpush.msra.mxu0 %v949
      %1153 = vmatpush.msra.mxu0 %v917
      %1154 = vmatpush.msra.mxu0 %v755
      %1155 = vmatpush.msra.mxu0 %v885
      %1156 = vmatpush.msra.mxu0 %v853
      %1157 = vmatpush.msra.mxu0 %v821
      %1158 = vmatpush.msra.mxu0 %v789
      %1159 = vmatmul.f32.gmra.mxu0 %v1021
      %v1160 = vpop.f32.mrf.mxu0
      %v1161 = vadd.f32 %v1018, %v1160
      %1162 = vdwg.mxu0
      %1163 = vmatpush.msra.mxu0 0.0
      %1164 = vmatpush.msra.mxu0 0.0
      %1165 = vmatpush.msra.mxu0 0.0
      %1166 = vmatpush.msra.mxu0 0.0
      %1167 = vmatpush.msra.mxu0 0.0
      %1168 = vmatpush.msra.mxu0 0.0
      %1169 = vmatpush.msra.mxu0 0.0
      %1170 = vmatpush.msra.mxu0 %v1014
      %1171 = vmatpush.msra.mxu0 %v982
      %1172 = vmatpush.msra.mxu0 %v950
      %1173 = vmatpush.msra.mxu0 %v918
      %1174 = vmatpush.msra.mxu0 %v756
      %1175 = vmatpush.msra.mxu0 %v886
      %1176 = vmatpush.msra.mxu0 %v854
      %1177 = vmatpush.msra.mxu0 %v822
      %1178 = vmatpush.msra.mxu0 %v790
      %1179 = vmatmul.f32.gmra.mxu0 %v1021
      %v1180 = vpop.f32.mrf.mxu0
      %v1181 = vadd.f32 %v1018, %v1180
      %1182 = vdwg.mxu0
      %v1183 = vmax.f32 %v1041, 0.0
      %v1184 = vmax.f32 %v1061, 0.0
      %v1185 = vmax.f32 %v1081, 0.0
      %v1186 = vmax.f32 %v1101, 0.0
      %v1187 = vmax.f32 %v1121, 0.0
      %v1188 = vmax.f32 %v1141, 0.0
      %v1189 = vmax.f32 %v1161, 0.0
      %v1190 = vmax.f32 %v1181, 0.0
      %1191 = vst [vmem:[%s224] sm:$0xff] %v1183
      %1192 = vst [vmem:[%s224 + $0x8] sm:$0xff] %v1184
      %1193 = vst [vmem:[%s224 + $0x10] sm:$0xff] %v1185
      %1194 = vst [vmem:[%s224 + $0x18] sm:$0xff] %v1186
      %1195 = vst [vmem:[%s224 + $0x20] sm:$0xff] %v1187
      %1196 = vst [vmem:[%s224 + $0x28] sm:$0xff] %v1188
      %1197 = vst [vmem:[%s224 + $0x30] sm:$0xff] %v1189
      %1198 = vst [vmem:[%s224 + $0x38] sm:$0xff] %v1190
      %p1199 = scmp.lt.s32.totalorder %s16, 1
      %s1200 = scalar_select %p1199, %s16, 1
      %s1201 = smul.addr %s1200, 8
      %s1202 = smul.addr %s1201, 8
      %s1203 = scalar_lea.vmem %s5, %s1202
      // Predicated region
      $region41: #{encoder_forward.5} parent=39 // pred_check
        %p1204 = pneg %p144
      $region42: #{encoder_forward.5} parent=39 // pred_check_branch
        %1206 = sbr.rel (%p1204) target = $region44
      $region43: #{encoder_forward.5} parent=39 // pred_region
        _
      $region44: #{encoder_forward.5} parent=39 // pred_fallthru
        _
    $region40: #{encoder_forward.5} parent=5 // pred_fallthru
      _
    %p1207 = scmp.le.s32.totalorder 2, %s11
    // Predicated region
    $region45: #{encoder_forward.5} parent=5 // pred_check
      %p1208 = pneg %p1207
    $region46: #{encoder_forward.5} parent=5 // pred_check_branch
      %1210 = sbr.rel (%p1208) target = $region48
    $region47: #{encoder_forward.5} parent=5 // pred_region
      %s1211 = ssub.s32 %s11, 2
      // Predicated region
      $region49: #{encoder_forward.5} parent=47 // pred_check
        %p1212 = pneg %p150
      $region50: #{encoder_forward.5} parent=47 // pred_check_branch
        %1214 = sbr.rel (%p1212) target = $region52
      $region51: #{encoder_forward.5} parent=47 // pred_region
        %p1215 = scmp.lt.s32.totalorder %s17, 1
        %s1216 = scalar_select %p1215, %s17, 1
        %s1217 = smul.addr %s1216, 8
        %s1218 = smul.addr %s1217, 8
        %s1219 = scalar_lea.vmem %s5, %s1218
      $region52: #{encoder_forward.5} parent=47 // pred_fallthru
        _
    $region48: #{encoder_forward.5} parent=5 // pred_fallthru
      _
  $region6: #{encoder_forward.5} parent=0 // loop_footer
    %s15 = sadd.s32 1, %s11
  $region7: #{encoder_forward.5} parent=0 // loop_footer_branch
    %10 = sbr.rel target = $region3
  $region8: #{encoder_forward.5} parent=0 // loop_exit
    _

// kernel: encoder_forward.7
$region0: #{encoder_forward.7}
  #allocation0 [shape = 'u32[]', space=smem, size = 0x4, offset = 0x4, fixed_abs, tag = 'smem constant byte address 0x4 - core index']
  #allocation1 [shape = 'u32[72,128]{1,0:T(1,128)}', space=vmem, size = 0x9000, scoped, tag = 'internal scratch']
  %s0 = inlined_call_operand.vmem [shape: f32[2,16,64], index: 0, kind: input, shape index: {}]
  %s1 = inlined_call_operand.vmem [shape: f32[32,144], index: 1, kind: input, shape index: {}]
  %s2 = inlined_call_operand.vmem [shape: f32[32,1], index: 2, kind: input, shape index: {}]
  %s3 = inlined_call_operand.vmem [shape: f32[32,288], index: 3, kind: input, shape index: {}]
  %s4 = inlined_call_operand.vmem [shape: f32[32,1], index: 4, kind: input, shape index: {}]
  %s5 = inlined_call_operand.vmem [shape: f32[2,32,64], index: 5, kind: output, shape index: {}]
  %s6 = sld [smem:[#allocation0]]
  $region53: #{encoder_forward.7} parent=0
    _
  %s8 = ssub.s32 1, %s6
  %s9 = scalar_select 0, %s8, %s6
  loop: start=0, step=1, limit=4
  $region2: #{encoder_forward.7} parent=0 // loop_pre_header
    _
  $region3: #{encoder_forward.7} parent=0 // loop_header
    %s11 = sphi 0, %s15
    %p12 = scmp.ge.s32.totalorder %s11, 4
    %s21 = sphi 0, %s23
    %s24 = sphi 0, %s21
    %s25 = sphi 0, %s24
    %s41 = sphi 0, %s25
    %s45 = sphi 0, %s45
    %s47 = sphi 0, %s45
    %s48 = sphi 0, %s47
    %s62 = sphi 0, %s48
    %s66 = sphi 0, %s66
    %s68 = sphi 0, %s66
    %s69 = sphi 0, %s68
    %s83 = sphi 0, %s69
    %s87 = sphi 0, %s87
    %s89 = sphi 0, %s87
    %s90 = sphi 0, %s89
    %s104 = sphi 0, %s90
    %s108 = sphi 0, %s108
    %s110 = sphi 0, %s108
    %s111 = sphi 0, %s110
    %s125 = sphi 0, %s111
    %s131 = sphi 0, %s133
    %s134 = sphi 0, %s131
    %s135 = sphi 0, %s134
    %s151 = sphi 0, %s135
  $region4: #{encoder_forward.7} parent=0 // loop_header_branch
    %14 = sbr.rel (%p12) target = $region8
  $region5: #{encoder_forward.7} parent=0 // loop_body
    %s16 = ssub.s32 %s11, 1
    %s17 = ssub.s32 %s11, 2
    %s18 = sadd.s32 %s11, 1
    %s19 = ssub.s32 %s11, %s18
    %p20 = scmp.eq.s32.totalorder %s19, 0
    %s22 = sadd.s32 %s21, 1
    %s23 = scalar_select %p20, %s21, %s22
    %p26 = pneg %p20
    %p27 = scmp.eq.s32.totalorder %s11, 1
    %p28 = por %p26, %p27
    %p29 = scmp.ne.s32.totalorder %s21, %s24
    %p30 = scmp.eq.s32.totalorder %s11, 0
    %p31 = por %p29, %p30
    %p32 = scmp.ne.s32.totalorder %s21, %s24
    %p33 = scmp.eq.s32.totalorder %s16, 1
    %p34 = por %p32, %p33
    %p35 = scmp.ne.s32.totalorder %s24, %s25
    %p36 = scmp.eq.s32.totalorder %s16, 0
    %p37 = por %p35, %p36
    %p38 = scmp.ne.s32.totalorder %s24, %s25
    %p39 = scmp.eq.s32.totalorder %s17, 1
    %p40 = por %p38, %p39
    %p42 = scmp.ne.s32.totalorder %s25, %s41
    %p43 = scmp.eq.s32.totalorder %s17, 0
    %p44 = por %p42, %p43
    %s46 = sadd.s32 %s45, 1
    %p49 = scmp.eq.s32.totalorder %s11, 1
    %p50 = scmp.ne.s32.totalorder %s45, %s47
    %p51 = scmp.eq.s32.totalorder %s11, 0
    %p52 = por %p50, %p51
    %p53 = scmp.ne.s32.totalorder %s45, %s47
    %p54 = scmp.eq.s32.totalorder %s16, 1
    %p55 = por %p53, %p54
    %p56 = scmp.ne.s32.totalorder %s47, %s48
    %p57 = scmp.eq.s32.totalorder %s16, 0
    %p58 = por %p56, %p57
    %p59 = scmp.ne.s32.totalorder %s47, %s48
    %p60 = scmp.eq.s32.totalorder %s17, 1
    %p61 = por %p59, %p60
    %p63 = scmp.ne.s32.totalorder %s48, %s62
    %p64 = scmp.eq.s32.totalorder %s17, 0
    %p65 = por %p63, %p64
    %s67 = sadd.s32 %s66, 1
    %p70 = scmp.eq.s32.totalorder %s11, 1
    %p71 = scmp.ne.s32.totalorder %s66, %s68
    %p72 = scmp.eq.s32.totalorder %s11, 0
    %p73 = por %p71, %p72
    %p74 = scmp.ne.s32.totalorder %s66, %s68
    %p75 = scmp.eq.s32.totalorder %s16, 1
    %p76 = por %p74, %p75
    %p77 = scmp.ne.s32.totalorder %s68, %s69
    %p78 = scmp.eq.s32.totalorder %s16, 0
    %p79 = por %p77, %p78
    %p80 = scmp.ne.s32.totalorder %s68, %s69
    %p81 = scmp.eq.s32.totalorder %s17, 1
    %p82 = por %p80, %p81
    %p84 = scmp.ne.s32.totalorder %s69, %s83
    %p85 = scmp.eq.s32.totalorder %s17, 0
    %p86 = por %p84, %p85
    %s88 = sadd.s32 %s87, 1
    %p91 = scmp.eq.s32.totalorder %s11, 1
    %p92 = scmp.ne.s32.totalorder %s87, %s89
    %p93 = scmp.eq.s32.totalorder %s11, 0
    %p94 = por %p92, %p93
    %p95 = scmp.ne.s32.totalorder %s87, %s89
    %p96 = scmp.eq.s32.totalorder %s16, 1
    %p97 = por %p95, %p96
    %p98 = scmp.ne.s32.totalorder %s89, %s90
    %p99 = scmp.eq.s32.totalorder %s16, 0
    %p100 = por %p98, %p99
    %p101 = scmp.ne.s32.totalorder %s89, %s90
    %p102 = scmp.eq.s32.totalorder %s17, 1
    %p103 = por %p101, %p102
    %p105 = scmp.ne.s32.totalorder %s90, %s104
    %p106 = scmp.eq.s32.totalorder %s17, 0
    %p107 = por %p105, %p106
    %s109 = sadd.s32 %s108, 1
    %p112 = scmp.eq.s32.totalorder %s11, 1
    %p113 = scmp.ne.s32.totalorder %s108, %s110
    %p114 = scmp.eq.s32.totalorder %s11, 0
    %p115 = por %p113, %p114
    %p116 = scmp.ne.s32.totalorder %s108, %s110
    %p117 = scmp.eq.s32.totalorder %s16, 1
    %p118 = por %p116, %p117
    %p119 = scmp.ne.s32.totalorder %s110, %s111
    %p120 = scmp.eq.s32.totalorder %s16, 0
    %p121 = por %p119, %p120
    %p122 = scmp.ne.s32.totalorder %s110, %s111
    %p123 = scmp.eq.s32.totalorder %s17, 1
    %p124 = por %p122, %p123
    %p126 = scmp.ne.s32.totalorder %s111, %s125
    %p127 = scmp.eq.s32.totalorder %s17, 0
    %p128 = por %p126, %p127
    %s129 = ssub.s32 %s11, %s18
    %p130 = scmp.eq.s32.totalorder %s129, 0
    %s132 = sadd.s32 %s131, 1
    %s133 = scalar_select %p130, %s131, %s132
    %p136 = pneg %p130
    %p137 = scmp.eq.s32.totalorder %s11, 1
    %p138 = por %p136, %p137
    %p139 = scmp.ne.s32.totalorder %s131, %s134
    %p140 = scmp.eq.s32.totalorder %s11, 0
    %p141 = por %p139, %p140
    %p142 = scmp.ne.s32.totalorder %s131, %s134
    %p143 = scmp.eq.s32.totalorder %s16, 1
    %p144 = por %p142, %p143
    %p145 = scmp.ne.s32.totalorder %s134, %s135
    %p146 = scmp.eq.s32.totalorder %s16, 0
    %p147 = por %p145, %p146
    %p148 = scmp.ne.s32.totalorder %s134, %s135
    %p149 = scmp.eq.s32.totalorder %s17, 1
    %p150 = por %p148, %p149
    %p152 = scmp.ne.s32.totalorder %s135, %s151
    %p153 = scmp.eq.s32.totalorder %s17, 0
    %p154 = por %p152, %p153
    %p155 = scmp.le.s32.totalorder 1, %s11
    %p156 = scmp.lt.s32.totalorder %s11, 3
    %p157 = pnand %p155, %p156
    %p158 = pneg %p157
    // Predicated region
    $region9: #{encoder_forward.7} parent=5 // pred_check
      _
    $region10: #{encoder_forward.7} parent=5 // pred_check_branch
      %160 = sbr.rel (%p157) target = $region12
    $region11: #{encoder_forward.7} parent=5 // pred_region
      %s161 = ssub.s32 %s11, 1
      // Predicated region
      $region13: #{encoder_forward.7} parent=11 // pred_check
        %p162 = pneg %p58
      $region14: #{encoder_forward.7} parent=11 // pred_check_branch
        %164 = sbr.rel (%p162) target = $region16
      $region15: #{encoder_forward.7} parent=11 // pred_region
        _
      $region16: #{encoder_forward.7} parent=11 // pred_fallthru
        _
      // Predicated region
      $region17: #{encoder_forward.7} parent=11 // pred_check
        %p165 = pneg %p79
      $region18: #{encoder_forward.7} parent=11 // pred_check_branch
        %167 = sbr.rel (%p165) target = $region20
      $region19: #{encoder_forward.7} parent=11 // pred_region
        _
      $region20: #{encoder_forward.7} parent=11 // pred_fallthru
        _
      // Predicated region
      $region21: #{encoder_forward.7} parent=11 // pred_check
        %p168 = pneg %p100
      $region22: #{encoder_forward.7} parent=11 // pred_check_branch
        %170 = sbr.rel (%p168) target = $region24
      $region23: #{encoder_forward.7} parent=11 // pred_region
        _
      $region24: #{encoder_forward.7} parent=11 // pred_fallthru
        _
      // Predicated region
      $region25: #{encoder_forward.7} parent=11 // pred_check
        %p171 = pneg %p121
      $region26: #{encoder_forward.7} parent=11 // pred_check_branch
        %173 = sbr.rel (%p171) target = $region28
      $region27: #{encoder_forward.7} parent=11 // pred_region
        _
      $region28: #{encoder_forward.7} parent=11 // pred_fallthru
        _
    $region12: #{encoder_forward.7} parent=5 // pred_fallthru
      _
    %p174 = scmp.lt.s32.totalorder %s11, 2
    // Predicated region
    $region29: #{encoder_forward.7} parent=5 // pred_check
      %p175 = pneg %p174
    $region30: #{encoder_forward.7} parent=5 // pred_check_branch
      %177 = sbr.rel (%p175) target = $region32
    $region31: #{encoder_forward.7} parent=5 // pred_region
      // Predicated region
      $region33: #{encoder_forward.7} parent=31 // pred_check
        %p178 = pneg %p31
      $region34: #{encoder_forward.7} parent=31 // pred_check_branch
        %180 = sbr.rel (%p178) target = $region36
      $region35: #{encoder_forward.7} parent=31 // pred_region
        %p181 = scmp.lt.s32.totalorder %s11, 1
        %s182 = scalar_select %p181, %s11, 1
        %s183 = smul.addr %s182, 2
        %s184 = smul.addr %s183, 8
        %s185 = scalar_lea.vmem %s0, %s184
      $region36: #{encoder_forward.7} parent=31 // pred_fallthru
        _
    $region32: #{encoder_forward.7} parent=5 // pred_fallthru
      _
    %p186 = scmp.le.s32.totalorder 1, %s11
    %p187 = scmp.lt.s32.totalorder %s11, 3
    %p188 = pnand %p186, %p187
    %p189 = pneg %p188
    // Predicated region
    $region37: #{encoder_forward.7} parent=5 // pred_check
      _
    $region38: #{encoder_forward.7} parent=5 // pred_check_branch
      %191 = sbr.rel (%p188) target = $region40
    $region39: #{encoder_forward.7} parent=5 // pred_region
      %s192 = ssub.s32 %s11, 1
      %p193 = scmp.lt.s32.totalorder %s16, 1
      %s194 = scalar_select %p193, %s16, 1
      %s195 = smul.addr %s194, 2
      %s196 = smul.addr %s195, 8
      %s197 = scalar_lea.vmem %s0, %s196
      %p198 = pneg %p37
      %p199 = pneg %p34
      %p200 = pneg %p58
      %p201 = pneg %p55
      %p202 = pneg %p79
      %p203 = pneg %p76
      %p204 = pneg %p100
      %p205 = pneg %p97
      %p206 = pneg %p121
      %p207 = pneg %p118
      %p208 = pneg %p147
      %p209 = pneg %p144
      %p210 = scmp.lt.s32.totalorder %s16, 1
      %s211 = scalar_select %p210, %s16, 1
      %s212 = smul.addr %s211, 4
      %s213 = smul.addr %s212, 8
      %s214 = scalar_lea.vmem %s5, %s213
      %p215 = scmp.lt.s32.totalorder %s16, 1
      %s216 = scalar_select %p215, %s16, 1
      %s217 = smul.addr %s216, 2
      %s218 = smul.addr %s217, 8
      %s219 = scalar_lea.vmem %s0, %s218
      %p220 = scmp.lt.s32.totalorder %s16, 1
      %s221 = scalar_select %p220, %s16, 1
      %s222 = smul.addr %s221, 4
      %s223 = smul.addr %s222, 8
      %s224 = scalar_lea.vmem %s5, %s223
      %v225 = vld [vmem:[%s219] sm:$0xff]
      %v226 = vld [vmem:[%s219 + $0x8] sm:$0xff]
      %v227 = vld [vmem:[%s1] sm:$0xff]
      %v228 = vld [vmem:[%s1 + $0x8] sm:$0xff]
      %v229 = vld [vmem:[%s1 + $0x10] sm:$0xff]
      %v230 = vld [vmem:[%s1 + $0x18] sm:$0xff]
      %v231 = vld [vmem:[%s1 + $0x20] sm:$0xff]
      %v232 = vld [vmem:[%s1 + $0x28] sm:$0xff]
      %v233 = vld [vmem:[%s1 + $0x30] sm:$0xff]
      %v234 = vld [vmem:[%s1 + $0x38] sm:$0xff]
      %v235 = vld [vmem:[%s2] sm:$0xff]
      %v236 = vld [vmem:[%s2 + $0x8] sm:$0xff]
      %v237 = vld [vmem:[%s2 + $0x10] sm:$0xff]
      %v238 = vld [vmem:[%s2 + $0x18] sm:$0xff]
      %v239 = vlaneseq
      %v240 = vand.u32 %v239, 127
      %v241 = vand.u32 %v240, 7
      %vm242 = vcmask 1048064
      %243 = vrot.lane.b32.xlu0 %v225, 64
      %v244 = vpop.permute.xlu0 %243
      %v245 = vsel %vm242, %v244, %v225
      %246 = vrot.lane.b32.xlu0 %v226, 64
      %v247 = vpop.permute.xlu0 %246
      %v248 = vsel %vm242, %v247, %v226
      %249 = vrot.lane.b32.xlu0 %v245, 64
      %v250 = vpop.permute.xlu0 %249
      %251 = vrot.lane.b32.xlu0 %v248, 64
      %v252 = vpop.permute.xlu0 %251
      %v253 = vsel %vm242, %v250, %v225
      %v254 = vsel %vm242, %v252, %v226
      %vm255 = vcmp.ge.s32.totalorder %v240, 8
      %vm256 = vcmp.ge.s32.totalorder %v241, 1
      %vm257 = vmand %vm255, %vm256
      %260 = vrot.lane.b32.xlu0 %v253, 73
      %v261 = vpop.permute.xlu0 %260
      %262 = vrot.lane.b32.xlu0 %v254, 73
      %v263 = vpop.permute.xlu0 %262
      %v266 = vsel %vm257, %v261, 0.0
      %v267 = vsel %vm257, %v263, 0.0
      %268 = vrot.lane.b32.xlu0 %v253, 72
      %v269 = vpop.permute.xlu0 %268
      %270 = vrot.lane.b32.xlu0 %v254, 72
      %v271 = vpop.permute.xlu0 %270
      %v274 = vsel %vm255, %v269, 0.0
      %v275 = vsel %vm255, %v271, 0.0
      %vm276 = vcmp.le.s32.totalorder %v241, 6
      %vm277 = vmand %vm255, %vm276
      %278 = vrot.lane.b32.xlu0 %v253, 71
      %v279 = vpop.permute.xlu0 %278
      %280 = vrot.lane.b32.xlu0 %v254, 71
      %v281 = vpop.permute.xlu0 %280
      %v284 = vsel %vm277, %v279, 0.0
      %v285 = vsel %vm277, %v281, 0.0
      %286 = vrot.lane.b32.xlu0 %v253, 65
      %v287 = vpop.permute.xlu0 %286
      %288 = vrot.lane.b32.xlu0 %v254, 65
      %v289 = vpop.permute.xlu0 %288
      %v292 = vsel %vm256, %v287, 0.0
      %v293 = vsel %vm256, %v289, 0.0
      %294 = vrot.lane.b32.xlu0 %v253, 127
      %v295 = vpop.permute.xlu0 %294
      %296 = vrot.lane.b32.xlu0 %v254, 127
      %v297 = vpop.permute.xlu0 %296
      %v300 = vsel %vm276, %v295, 0.0
      %v301 = vsel %vm276, %v297, 0.0
      %vm302 = vcmp.lt.s32.totalorder %v240, 56
      %vm303 = vmand %vm302, %vm256
      %304 = vrot.lane.b32.xlu0 %v253, 121
      %v305 = vpop.permute.xlu0 %304
      %306 = vrot.lane.b32.xlu0 %v254, 121
      %v307 = vpop.permute.xlu0 %306
      %v310 = vsel %vm303, %v305, 0.0
      %v311 = vsel %vm303, %v307, 0.0
      %312 = vrot.lane.b32.xlu0 %v253, 120
      %v313 = vpop.permute.xlu0 %312
      %314 = vrot.lane.b32.xlu0 %v254, 120
      %v315 = vpop.permute.xlu0 %314
      %v318 = vsel %vm302, %v313, 0.0
      %v319 = vsel %vm302, %v315, 0.0
      %vm320 = vmand %vm302, %vm276
      %321 = vrot.lane.b32.xlu0 %v253, 119
      %v322 = vpop.permute.xlu0 %321
      %323 = vrot.lane.b32.xlu0 %v254, 119
      %v324 = vpop.permute.xlu0 %323
      %v327 = vsel %vm320, %v322, 0.0
      %v328 = vsel %vm320, %v324, 0.0
      %330 = vset.pattern.permute.xlu0 0
      %331 = vperm.xlu0 %330, %v235
      %v332 = vpop.permute.xlu0 %331
      %335 = vset.pattern.permute.xlu0 0
      %336 = vperm.xlu0 %335, %v236
      %v337 = vpop.permute.xlu0 %336
      %340 = vset.pattern.permute.xlu0 0
      %341 = vperm.xlu0 %340, %v237
      %v342 = vpop.permute.xlu0 %341
      %345 = vset.pattern.permute.xlu0 0
      %346 = vperm.xlu0 %345, %v238
      %v347 = vpop.permute.xlu0 %346
      %vm349 = vcmask 130048
      %v351 = vsel %vm349, %v228, 0
      %v354 = vsel %vm349, %v230, 0
      %v357 = vsel %vm349, %v232, 0
      %v360 = vsel %vm349, %v234, 0
      %362 = vmatpush.msra.mxu0 %v319
      %363 = vmatpush.msra.mxu0 %v318
      %364 = vmatpush.msra.mxu0 %v311
      %365 = vmatpush.msra.mxu0 %v310
      %366 = vmatpush.msra.mxu0 %v301
      %367 = vmatpush.msra.mxu0 %v300
      %368 = vmatpush.msra.mxu0 %v226
      %369 = vmatpush.msra.mxu0 %v225
      %370 = vmatpush.msra.mxu0 %v293
      %371 = vmatpush.msra.mxu0 %v292
      %372 = vmatpush.msra.mxu0 %v285
      %373 = vmatpush.msra.mxu0 %v284
      %374 = vmatpush.msra.mxu0 %v275
      %375 = vmatpush.msra.mxu0 %v274
      %376 = vmatpush.msra.mxu0 %v267
      %377 = vmatpush.msra.mxu0 %v266
      %378 = vmatmul.f32.gmra.mxu0 %v227
      %v379 = vpop.f32.mrf.mxu0
      %v380 = vadd.f32 %v332, %v379
      %381 = vmatmul.f32.gmra.mxu0 %v229
      %v382 = vpop.f32.mrf.mxu0
      %v383 = vadd.f32 %v337, %v382
      %384 = vmatmul.f32.gmra.mxu0 %v231
      %v385 = vpop.f32.mrf.mxu0
      %v386 = vadd.f32 %v342, %v385
      %387 = vmatmul.f32.gmra.mxu0 %v233
      %v388 = vpop.f32.mrf.mxu0
      %v389 = vadd.f32 %v347, %v388
      %390 = vdwg.mxu0
      %391 = vmatpush.msra.mxu0 0.0
      %392 = vmatpush.msra.mxu0 0.0
      %393 = vmatpush.msra.mxu0 0.0
      %394 = vmatpush.msra.mxu0 0.0
      %395 = vmatpush.msra.mxu0 0.0
      %396 = vmatpush.msra.mxu0 0.0
      %397 = vmatpush.msra.mxu0 0.0
      %398 = vmatpush.msra.mxu0 0.0
      %399 = vmatpush.msra.mxu0 0.0
      %400 = vmatpush.msra.mxu0 0.0
      %401 = vmatpush.msra.mxu0 0.0
      %402 = vmatpush.msra.mxu0 0.0
      %403 = vmatpush.msra.mxu0 0.0
      %404 = vmatpush.msra.mxu0 0.0
      %405 = vmatpush.msra.mxu0 %v328
      %406 = vmatpush.msra.mxu0 %v327
      %407 = vmatmul.f32.gmra.mxu0 %v351
      %v408 = vpop.f32.mrf.mxu0
      %v409 = vadd.f32 %v380, %v408
      %410 = vmatmul.f32.gmra.mxu0 %v354
      %v411 = vpop.f32.mrf.mxu0
      %v412 = vadd.f32 %v383, %v411
      %413 = vmatmul.f32.gmra.mxu0 %v357
      %v414 = vpop.f32.mrf.mxu0
      %v415 = vadd.f32 %v386, %v414
      %416 = vmatmul.f32.gmra.mxu0 %v360
      %v417 = vpop.f32.mrf.mxu0
      %v418 = vadd.f32 %v389, %v417
      %419 = vdwg.mxu0
      %v420 = vmax.f32 %v409, 0.0
      %v421 = vmax.f32 %v412, 0.0
      %v422 = vmax.f32 %v415, 0.0
      %v423 = vmax.f32 %v418, 0.0
      %v424 = vld [vmem:[%s3] sm:$0xff]
      %v425 = vld [vmem:[%s3 + $0x8] sm:$0xff]
      %v426 = vld [vmem:[%s3 + $0x10] sm:$0xff]
      %v427 = vld [vmem:[%s3 + $0x18] sm:$0xff]
      %v428 = vld [vmem:[%s3 + $0x20] sm:$0xff]
      %v429 = vld [vmem:[%s3 + $0x28] sm:$0xff]
      %v430 = vld [vmem:[%s3 + $0x30] sm:$0xff]
      %v431 = vld [vmem:[%s3 + $0x38] sm:$0xff]
      %v432 = vld [vmem:[%s3 + $0x40] sm:$0xff]
      %v433 = vld [vmem:[%s3 + $0x48] sm:$0xff]
      %v434 = vld [vmem:[%s3 + $0x50] sm:$0xff]
      %v435 = vld [vmem:[%s3 + $0x58] sm:$0xff]
      %v436 = vld [vmem:[%s4] sm:$0xff]
      %v437 = vld [vmem:[%s4 + $0x8] sm:$0xff]
      %v438 = vld [vmem:[%s4 + $0x10] sm:$0xff]
      %v439 = vld [vmem:[%s4 + $0x18] sm:$0xff]
      %440 = vrot.lane.b32.xlu0 %v420, 64
      %v441 = vpop.permute.xlu0 %440
      %v442 = vsel %vm242, %v441, %v420
      %443 = vrot.lane.b32.xlu0 %v421, 64
      %v444 = vpop.permute.xlu0 %443
      %v445 = vsel %vm242, %v444, %v421
      %446 = vrot.lane.b32.xlu0 %v422, 64
      %v447 = vpop.permute.xlu0 %446
      %v448 = vsel %vm242, %v447, %v422
      %449 = vrot.lane.b32.xlu0 %v423, 64
      %v450 = vpop.permute.xlu0 %449
      %v451 = vsel %vm242, %v450, %v423
      %452 = vrot.lane.b32.xlu0 %v442, 64
      %v453 = vpop.permute.xlu0 %452
      %454 = vrot.lane.b32.xlu0 %v445, 64
      %v455 = vpop.permute.xlu0 %454
      %456 = vrot.lane.b32.xlu0 %v448, 64
      %v457 = vpop.permute.xlu0 %456
      %458 = vrot.lane.b32.xlu0 %v451, 64
      %v459 = vpop.permute.xlu0 %458
      %v460 = vsel %vm242, %v453, %v420
      %v461 = vsel %vm242, %v455, %v421
      %v462 = vsel %vm242, %v457, %v422
      %v463 = vsel %vm242, %v459, %v423
      %468 = vrot.lane.b32.xlu0 %v460, 73
      %v469 = vpop.permute.xlu0 %468
      %470 = vrot.lane.b32.xlu0 %v461, 73
      %v471 = vpop.permute.xlu0 %470
      %472 = vrot.lane.b32.xlu0 %v462, 73
      %v473 = vpop.permute.xlu0 %472
      %474 = vrot.lane.b32.xlu0 %v463, 73
      %v475 = vpop.permute.xlu0 %474
      %v480 = vsel %vm257, %v469, 0.0
      %v481 = vsel %vm257, %v471, 0.0
      %v482 = vsel %vm257, %v473, 0.0
      %v483 = vsel %vm257, %v475, 0.0
      %484 = vrot.lane.b32.xlu0 %v460, 72
      %v485 = vpop.permute.xlu0 %484
      %486 = vrot.lane.b32.xlu0 %v461, 72
      %v487 = vpop.permute.xlu0 %486
      %488 = vrot.lane.b32.xlu0 %v462, 72
      %v489 = vpop.permute.xlu0 %488
      %490 = vrot.lane.b32.xlu0 %v463, 72
      %v491 = vpop.permute.xlu0 %490
      %v496 = vsel %vm255, %v485, 0.0
      %v497 = vsel %vm255, %v487, 0.0
      %v498 = vsel %vm255, %v489, 0.0
      %v499 = vsel %vm255, %v491, 0.0
      %500 = vrot.lane.b32.xlu0 %v460, 71
      %v501 = vpop.permute.xlu0 %500
      %502 = vrot.lane.b32.xlu0 %v461, 71
      %v503 = vpop.permute.xlu0 %502
      %504 = vrot.lane.b32.xlu0 %v462, 71
      %v505 = vpop.permute.xlu0 %504
      %506 = vrot.lane.b32.xlu0 %v463, 71
      %v507 = vpop.permute.xlu0 %506
      %v512 = vsel %vm277, %v501, 0.0
      %v513 = vsel %vm277, %v503, 0.0
      %v514 = vsel %vm277, %v505, 0.0
      %v515 = vsel %vm277, %v507, 0.0
      %516 = vrot.lane.b32.xlu0 %v460, 65
      %v517 = vpop.permute.xlu0 %516
      %518 = vrot.lane.b32.xlu0 %v461, 65
      %v519 = vpop.permute.xlu0 %518
      %520 = vrot.lane.b32.xlu0 %v462, 65
      %v521 = vpop.permute.xlu0 %520
      %522 = vrot.lane.b32.xlu0 %v463, 65
      %v523 = vpop.permute.xlu0 %522
      %v528 = vsel %vm256, %v517, 0.0
      %v529 = vsel %vm256, %v519, 0.0
      %v530 = vsel %vm256, %v521, 0.0
      %v531 = vsel %vm256, %v523, 0.0
      %532 = vrot.lane.b32.xlu0 %v460, 127
      %v533 = vpop.permute.xlu0 %532
      %534 = vrot.lane.b32.xlu0 %v461, 127
      %v535 = vpop.permute.xlu0 %534
      %536 = vrot.lane.b32.xlu0 %v462, 127
      %v537 = vpop.permute.xlu0 %536
      %538 = vrot.lane.b32.xlu0 %v463, 127
      %v539 = vpop.permute.xlu0 %538
      %v544 = vsel %vm276, %v533, 0.0
      %v545 = vsel %vm276, %v535, 0.0
      %v546 = vsel %vm276, %v537, 0.0
      %v547 = vsel %vm276, %v539, 0.0
      %548 = vrot.lane.b32.xlu0 %v460, 121
      %v549 = vpop.permute.xlu0 %548
      %550 = vrot.lane.b32.xlu0 %v461, 121
      %v551 = vpop.permute.xlu0 %550
      %552 = vrot.lane.b32.xlu0 %v462, 121
      %v553 = vpop.permute.xlu0 %552
      %554 = vrot.lane.b32.xlu0 %v463, 121
      %v555 = vpop.permute.xlu0 %554
      %v560 = vsel %vm303, %v549, 0.0
      %v561 = vsel %vm303, %v551, 0.0
      %v562 = vsel %vm303, %v553, 0.0
      %v563 = vsel %vm303, %v555, 0.0
      %564 = vrot.lane.b32.xlu0 %v460, 120
      %v565 = vpop.permute.xlu0 %564
      %566 = vrot.lane.b32.xlu0 %v461, 120
      %v567 = vpop.permute.xlu0 %566
      %568 = vrot.lane.b32.xlu0 %v462, 120
      %v569 = vpop.permute.xlu0 %568
      %570 = vrot.lane.b32.xlu0 %v463, 120
      %v571 = vpop.permute.xlu0 %570
      %v576 = vsel %vm302, %v565, 0.0
      %v577 = vsel %vm302, %v567, 0.0
      %v578 = vsel %vm302, %v569, 0.0
      %v579 = vsel %vm302, %v571, 0.0
      %580 = vrot.lane.b32.xlu0 %v460, 119
      %v581 = vpop.permute.xlu0 %580
      %582 = vrot.lane.b32.xlu0 %v461, 119
      %v583 = vpop.permute.xlu0 %582
      %584 = vrot.lane.b32.xlu0 %v462, 119
      %v585 = vpop.permute.xlu0 %584
      %586 = vrot.lane.b32.xlu0 %v463, 119
      %v587 = vpop.permute.xlu0 %586
      %v592 = vsel %vm320, %v581, 0.0
      %v593 = vsel %vm320, %v583, 0.0
      %v594 = vsel %vm320, %v585, 0.0
      %v595 = vsel %vm320, %v587, 0.0
      %597 = vset.pattern.permute.xlu0 0
      %598 = vperm.xlu0 %597, %v436
      %v599 = vpop.permute.xlu0 %598
      %602 = vset.pattern.permute.xlu0 0
      %603 = vperm.xlu0 %602, %v437
      %v604 = vpop.permute.xlu0 %603
      %607 = vset.pattern.permute.xlu0 0
      %608 = vperm.xlu0 %607, %v438
      %v609 = vpop.permute.xlu0 %608
      %612 = vset.pattern.permute.xlu0 0
      %613 = vperm.xlu0 %612, %v439
      %v614 = vpop.permute.xlu0 %613
      %vm616 = vcmask 261120
      %v618 = vsel %vm616, %v426, 0
      %v621 = vsel %vm616, %v429, 0
      %v624 = vsel %vm616, %v432, 0
      %v627 = vsel %vm616, %v435, 0
      %629 = vmatpush.msra.mxu0 %v531
      %630 = vmatpush.msra.mxu0 %v530
      %631 = vmatpush.msra.mxu0 %v529
      %632 = vmatpush.msra.mxu0 %v528
      %633 = vmatpush.msra.mxu0 %v515
      %634 = vmatpush.msra.mxu0 %v514
      %635 = vmatpush.msra.mxu0 %v513
      %636 = vmatpush.msra.mxu0 %v512
      %637 = vmatpush.msra.mxu0 %v499
      %638 = vmatpush.msra.mxu0 %v498
      %639 = vmatpush.msra.mxu0 %v497
      %640 = vmatpush.msra.mxu0 %v496
      %641 = vmatpush.msra.mxu0 %v483
      %642 = vmatpush.msra.mxu0 %v482
      %643 = vmatpush.msra.mxu0 %v481
      %644 = vmatpush.msra.mxu0 %v480
      %645 = vmatmul.f32.gmra.mxu0 %v424
      %v646 = vpop.f32.mrf.mxu0
      %v647 = vadd.f32 %v599, %v646
      %648 = vmatmul.f32.gmra.mxu0 %v427
      %v649 = vpop.f32.mrf.mxu0
      %v650 = vadd.f32 %v604, %v649
      %651 = vmatmul.f32.gmra.mxu0 %v430
      %v652 = vpop.f32.mrf.mxu0
      %v653 = vadd.f32 %v609, %v652
      %654 = vmatmul.f32.gmra.mxu0 %v433
      %v655 = vpop.f32.mrf.mxu0
      %v656 = vadd.f32 %v614, %v655
      %657 = vdwg.mxu0
      %658 = vmatpush.msra.mxu0 %v579
      %659 = vmatpush.msra.mxu0 %v578
      %660 = vmatpush.msra.mxu0 %v577
      %661 = vmatpush.msra.mxu0 %v576
      %662 = vmatpush.msra.mxu0 %v563
      %663 = vmatpush.msra.mxu0 %v562
      %664 = vmatpush.msra.mxu0 %v561
      %665 = vmatpush.msra.mxu0 %v560
      %666 = vmatpush.msra.mxu0 %v547
      %667 = vmatpush.msra.mxu0 %v546
      %668 = vmatpush.msra.mxu0 %v545
      %669 = vmatpush.msra.mxu0 %v544
      %670 = vmatpush.msra.mxu0 %v423
      %671 = vmatpush.msra.mxu0 %v422
      %672 = vmatpush.msra.mxu0 %v421
      %673 = vmatpush.msra.mxu0 %v420
      %674 = vmatmul.f32.gmra.mxu0 %v425
      %v675 = vpop.f32.mrf.mxu0
      %v676 = vadd.f32 %v647, %v675
      %677 = vmatmul.f32.gmra.mxu0 %v428
      %v678 = vpop.f32.mrf.mxu0
      %v679 = vadd.f32 %v650, %v678
      %680 = vmatmul.f32.gmra.mxu0 %v431
      %v681 = vpop.f32.mrf.mxu0
      %v682 = vadd.f32 %v653, %v681
      %683 = vmatmul.f32.gmra.mxu0 %v434
      %v684 = vpop.f32.mrf.mxu0
      %v685 = vadd.f32 %v656, %v684
      %686 = vdwg.mxu0
      %687 = vmatpush.msra.mxu0 0.0
      %688 = vmatpush.msra.mxu0 0.0
      %689 = vmatpush.msra.mxu0 0.0
      %690 = vmatpush.msra.mxu0 0.0
      %691 = vmatpush.msra.mxu0 0.0
      %692 = vmatpush.msra.mxu0 0.0
      %693 = vmatpush.msra.mxu0 0.0
      %694 = vmatpush.msra.mxu0 0.0
      %695 = vmatpush.msra.mxu0 0.0
      %696 = vmatpush.msra.mxu0 0.0
      %697 = vmatpush.msra.mxu0 0.0
      %698 = vmatpush.msra.mxu0 0.0
      %699 = vmatpush.msra.mxu0 %v595
      %700 = vmatpush.msra.mxu0 %v594
      %701 = vmatpush.msra.mxu0 %v593
      %702 = vmatpush.msra.mxu0 %v592
      %703 = vmatmul.f32.gmra.mxu0 %v618
      %v704 = vpop.f32.mrf.mxu0
      %v705 = vadd.f32 %v676, %v704
      %706 = vmatmul.f32.gmra.mxu0 %v621
      %v707 = vpop.f32.mrf.mxu0
      %v708 = vadd.f32 %v679, %v707
      %709 = vmatmul.f32.gmra.mxu0 %v624
      %v710 = vpop.f32.mrf.mxu0
      %v711 = vadd.f32 %v682, %v710
      %712 = vmatmul.f32.gmra.mxu0 %v627
      %v713 = vpop.f32.mrf.mxu0
      %v714 = vadd.f32 %v685, %v713
      %715 = vdwg.mxu0
      %v716 = vmax.f32 %v705, 0.0
      %v717 = vmax.f32 %v708, 0.0
      %v718 = vmax.f32 %v711, 0.0
      %v719 = vmax.f32 %v714, 0.0
      %vm720 = vcmask 523264
      %721 = vst.msk [vmem:[%s224] sm:$0xff] %vm720, %v716
      %722 = vst.msk [vmem:[%s224 + $0x8] sm:$0xff] %vm720, %v717
      %723 = vst.msk [vmem:[%s224 + $0x10] sm:$0xff] %vm720, %v718
      %724 = vst.msk [vmem:[%s224 + $0x18] sm:$0xff] %vm720, %v719
      %p725 = scmp.lt.s32.totalorder %s16, 1
      %s726 = scalar_select %p725, %s16, 1
      %s727 = smul.addr %s726, 4
      %s728 = smul.addr %s727, 8
      %s729 = scalar_lea.vmem %s5, %s728
      // Predicated region
      $region41: #{encoder_forward.7} parent=39 // pred_check
        %p730 = pneg %p144
      $region42: #{encoder_forward.7} parent=39 // pred_check_branch
        %732 = sbr.rel (%p730) target = $region44
      $region43: #{encoder_forward.7} parent=39 // pred_region
        _
      $region44: #{encoder_forward.7} parent=39 // pred_fallthru
        _
    $region40: #{encoder_forward.7} parent=5 // pred_fallthru
      _
    %p733 = scmp.le.s32.totalorder 2, %s11
    // Predicated region
    $region45: #{encoder_forward.7} parent=5 // pred_check
      %p734 = pneg %p733
    $region46: #{encoder_forward.7} parent=5 // pred_check_branch
      %736 = sbr.rel (%p734) target = $region48
    $region47: #{encoder_forward.7} parent=5 // pred_region
      %s737 = ssub.s32 %s11, 2
      // Predicated region
      $region49: #{encoder_forward.7} parent=47 // pred_check
        %p738 = pneg %p150
      $region50: #{encoder_forward.7} parent=47 // pred_check_branch
        %740 = sbr.rel (%p738) target = $region52
      $region51: #{encoder_forward.7} parent=47 // pred_region
        %p741 = scmp.lt.s32.totalorder %s17, 1
        %s742 = scalar_select %p741, %s17, 1
        %s743 = smul.addr %s742, 4
        %s744 = smul.addr %s743, 8
        %s745 = scalar_lea.vmem %s5, %s744
      $region52: #{encoder_forward.7} parent=47 // pred_fallthru
        _
    $region48: #{encoder_forward.7} parent=5 // pred_fallthru
      _
  $region6: #{encoder_forward.7} parent=0 // loop_footer
    %s15 = sadd.s32 1, %s11
  $region7: #{encoder_forward.7} parent=0 // loop_footer_branch
    %10 = sbr.rel target = $region3
  $region8: #{encoder_forward.7} parent=0 // loop_exit
    _

// kernel: encoder_forward.8
$region0: #{encoder_forward.8}
  #allocation0 [shape = 'u32[]', space=smem, size = 0x4, offset = 0x4, fixed_abs, tag = 'smem constant byte address 0x4 - core index']
  #allocation1 [shape = 'u32[72,128]{1,0:T(1,128)}', space=vmem, size = 0x9000, scoped, tag = 'internal scratch']
  %s0 = inlined_call_operand.vmem [shape: f32[2,32,16], index: 0, kind: input, shape index: {}]
  %s1 = inlined_call_operand.vmem [shape: f32[64,288], index: 1, kind: input, shape index: {}]
  %s2 = inlined_call_operand.vmem [shape: f32[64,1], index: 2, kind: input, shape index: {}]
  %s3 = inlined_call_operand.vmem [shape: f32[64,576], index: 3, kind: input, shape index: {}]
  %s4 = inlined_call_operand.vmem [shape: f32[64,1], index: 4, kind: input, shape index: {}]
  %s5 = inlined_call_operand.vmem [shape: f32[2,64,16], index: 5, kind: output, shape index: {}]
  %s6 = sld [smem:[#allocation0]]
  $region53: #{encoder_forward.8} parent=0
    _
  %s8 = ssub.s32 1, %s6
  %s9 = scalar_select 0, %s8, %s6
  loop: start=0, step=1, limit=4
  $region2: #{encoder_forward.8} parent=0 // loop_pre_header
    _
  $region3: #{encoder_forward.8} parent=0 // loop_header
    %s11 = sphi 0, %s15
    %p12 = scmp.ge.s32.totalorder %s11, 4
    %s21 = sphi 0, %s23
    %s24 = sphi 0, %s21
    %s25 = sphi 0, %s24
    %s41 = sphi 0, %s25
    %s45 = sphi 0, %s45
    %s47 = sphi 0, %s45
    %s48 = sphi 0, %s47
    %s62 = sphi 0, %s48
    %s66 = sphi 0, %s66
    %s68 = sphi 0, %s66
    %s69 = sphi 0, %s68
    %s83 = sphi 0, %s69
    %s87 = sphi 0, %s87
    %s89 = sphi 0, %s87
    %s90 = sphi 0, %s89
    %s104 = sphi 0, %s90
    %s108 = sphi 0, %s108
    %s110 = sphi 0, %s108
    %s111 = sphi 0, %s110
    %s125 = sphi 0, %s111
    %s131 = sphi 0, %s133
    %s134 = sphi 0, %s131
    %s135 = sphi 0, %s134
    %s151 = sphi 0, %s135
  $region4: #{encoder_forward.8} parent=0 // loop_header_branch
    %14 = sbr.rel (%p12) target = $region8
  $region5: #{encoder_forward.8} parent=0 // loop_body
    %s16 = ssub.s32 %s11, 1
    %s17 = ssub.s32 %s11, 2
    %s18 = sadd.s32 %s11, 1
    %s19 = ssub.s32 %s11, %s18
    %p20 = scmp.eq.s32.totalorder %s19, 0
    %s22 = sadd.s32 %s21, 1
    %s23 = scalar_select %p20, %s21, %s22
    %p26 = pneg %p20
    %p27 = scmp.eq.s32.totalorder %s11, 1
    %p28 = por %p26, %p27
    %p29 = scmp.ne.s32.totalorder %s21, %s24
    %p30 = scmp.eq.s32.totalorder %s11, 0
    %p31 = por %p29, %p30
    %p32 = scmp.ne.s32.totalorder %s21, %s24
    %p33 = scmp.eq.s32.totalorder %s16, 1
    %p34 = por %p32, %p33
    %p35 = scmp.ne.s32.totalorder %s24, %s25
    %p36 = scmp.eq.s32.totalorder %s16, 0
    %p37 = por %p35, %p36
    %p38 = scmp.ne.s32.totalorder %s24, %s25
    %p39 = scmp.eq.s32.totalorder %s17, 1
    %p40 = por %p38, %p39
    %p42 = scmp.ne.s32.totalorder %s25, %s41
    %p43 = scmp.eq.s32.totalorder %s17, 0
    %p44 = por %p42, %p43
    %s46 = sadd.s32 %s45, 1
    %p49 = scmp.eq.s32.totalorder %s11, 1
    %p50 = scmp.ne.s32.totalorder %s45, %s47
    %p51 = scmp.eq.s32.totalorder %s11, 0
    %p52 = por %p50, %p51
    %p53 = scmp.ne.s32.totalorder %s45, %s47
    %p54 = scmp.eq.s32.totalorder %s16, 1
    %p55 = por %p53, %p54
    %p56 = scmp.ne.s32.totalorder %s47, %s48
    %p57 = scmp.eq.s32.totalorder %s16, 0
    %p58 = por %p56, %p57
    %p59 = scmp.ne.s32.totalorder %s47, %s48
    %p60 = scmp.eq.s32.totalorder %s17, 1
    %p61 = por %p59, %p60
    %p63 = scmp.ne.s32.totalorder %s48, %s62
    %p64 = scmp.eq.s32.totalorder %s17, 0
    %p65 = por %p63, %p64
    %s67 = sadd.s32 %s66, 1
    %p70 = scmp.eq.s32.totalorder %s11, 1
    %p71 = scmp.ne.s32.totalorder %s66, %s68
    %p72 = scmp.eq.s32.totalorder %s11, 0
    %p73 = por %p71, %p72
    %p74 = scmp.ne.s32.totalorder %s66, %s68
    %p75 = scmp.eq.s32.totalorder %s16, 1
    %p76 = por %p74, %p75
    %p77 = scmp.ne.s32.totalorder %s68, %s69
    %p78 = scmp.eq.s32.totalorder %s16, 0
    %p79 = por %p77, %p78
    %p80 = scmp.ne.s32.totalorder %s68, %s69
    %p81 = scmp.eq.s32.totalorder %s17, 1
    %p82 = por %p80, %p81
    %p84 = scmp.ne.s32.totalorder %s69, %s83
    %p85 = scmp.eq.s32.totalorder %s17, 0
    %p86 = por %p84, %p85
    %s88 = sadd.s32 %s87, 1
    %p91 = scmp.eq.s32.totalorder %s11, 1
    %p92 = scmp.ne.s32.totalorder %s87, %s89
    %p93 = scmp.eq.s32.totalorder %s11, 0
    %p94 = por %p92, %p93
    %p95 = scmp.ne.s32.totalorder %s87, %s89
    %p96 = scmp.eq.s32.totalorder %s16, 1
    %p97 = por %p95, %p96
    %p98 = scmp.ne.s32.totalorder %s89, %s90
    %p99 = scmp.eq.s32.totalorder %s16, 0
    %p100 = por %p98, %p99
    %p101 = scmp.ne.s32.totalorder %s89, %s90
    %p102 = scmp.eq.s32.totalorder %s17, 1
    %p103 = por %p101, %p102
    %p105 = scmp.ne.s32.totalorder %s90, %s104
    %p106 = scmp.eq.s32.totalorder %s17, 0
    %p107 = por %p105, %p106
    %s109 = sadd.s32 %s108, 1
    %p112 = scmp.eq.s32.totalorder %s11, 1
    %p113 = scmp.ne.s32.totalorder %s108, %s110
    %p114 = scmp.eq.s32.totalorder %s11, 0
    %p115 = por %p113, %p114
    %p116 = scmp.ne.s32.totalorder %s108, %s110
    %p117 = scmp.eq.s32.totalorder %s16, 1
    %p118 = por %p116, %p117
    %p119 = scmp.ne.s32.totalorder %s110, %s111
    %p120 = scmp.eq.s32.totalorder %s16, 0
    %p121 = por %p119, %p120
    %p122 = scmp.ne.s32.totalorder %s110, %s111
    %p123 = scmp.eq.s32.totalorder %s17, 1
    %p124 = por %p122, %p123
    %p126 = scmp.ne.s32.totalorder %s111, %s125
    %p127 = scmp.eq.s32.totalorder %s17, 0
    %p128 = por %p126, %p127
    %s129 = ssub.s32 %s11, %s18
    %p130 = scmp.eq.s32.totalorder %s129, 0
    %s132 = sadd.s32 %s131, 1
    %s133 = scalar_select %p130, %s131, %s132
    %p136 = pneg %p130
    %p137 = scmp.eq.s32.totalorder %s11, 1
    %p138 = por %p136, %p137
    %p139 = scmp.ne.s32.totalorder %s131, %s134
    %p140 = scmp.eq.s32.totalorder %s11, 0
    %p141 = por %p139, %p140
    %p142 = scmp.ne.s32.totalorder %s131, %s134
    %p143 = scmp.eq.s32.totalorder %s16, 1
    %p144 = por %p142, %p143
    %p145 = scmp.ne.s32.totalorder %s134, %s135
    %p146 = scmp.eq.s32.totalorder %s16, 0
    %p147 = por %p145, %p146
    %p148 = scmp.ne.s32.totalorder %s134, %s135
    %p149 = scmp.eq.s32.totalorder %s17, 1
    %p150 = por %p148, %p149
    %p152 = scmp.ne.s32.totalorder %s135, %s151
    %p153 = scmp.eq.s32.totalorder %s17, 0
    %p154 = por %p152, %p153
    %p155 = scmp.le.s32.totalorder 1, %s11
    %p156 = scmp.lt.s32.totalorder %s11, 3
    %p157 = pnand %p155, %p156
    %p158 = pneg %p157
    // Predicated region
    $region9: #{encoder_forward.8} parent=5 // pred_check
      _
    $region10: #{encoder_forward.8} parent=5 // pred_check_branch
      %160 = sbr.rel (%p157) target = $region12
    $region11: #{encoder_forward.8} parent=5 // pred_region
      %s161 = ssub.s32 %s11, 1
      // Predicated region
      $region13: #{encoder_forward.8} parent=11 // pred_check
        %p162 = pneg %p58
      $region14: #{encoder_forward.8} parent=11 // pred_check_branch
        %164 = sbr.rel (%p162) target = $region16
      $region15: #{encoder_forward.8} parent=11 // pred_region
        _
      $region16: #{encoder_forward.8} parent=11 // pred_fallthru
        _
      // Predicated region
      $region17: #{encoder_forward.8} parent=11 // pred_check
        %p165 = pneg %p79
      $region18: #{encoder_forward.8} parent=11 // pred_check_branch
        %167 = sbr.rel (%p165) target = $region20
      $region19: #{encoder_forward.8} parent=11 // pred_region
        _
      $region20: #{encoder_forward.8} parent=11 // pred_fallthru
        _
      // Predicated region
      $region21: #{encoder_forward.8} parent=11 // pred_check
        %p168 = pneg %p100
      $region22: #{encoder_forward.8} parent=11 // pred_check_branch
        %170 = sbr.rel (%p168) target = $region24
      $region23: #{encoder_forward.8} parent=11 // pred_region
        _
      $region24: #{encoder_forward.8} parent=11 // pred_fallthru
        _
      // Predicated region
      $region25: #{encoder_forward.8} parent=11 // pred_check
        %p171 = pneg %p121
      $region26: #{encoder_forward.8} parent=11 // pred_check_branch
        %173 = sbr.rel (%p171) target = $region28
      $region27: #{encoder_forward.8} parent=11 // pred_region
        _
      $region28: #{encoder_forward.8} parent=11 // pred_fallthru
        _
    $region12: #{encoder_forward.8} parent=5 // pred_fallthru
      _
    %p174 = scmp.lt.s32.totalorder %s11, 2
    // Predicated region
    $region29: #{encoder_forward.8} parent=5 // pred_check
      %p175 = pneg %p174
    $region30: #{encoder_forward.8} parent=5 // pred_check_branch
      %177 = sbr.rel (%p175) target = $region32
    $region31: #{encoder_forward.8} parent=5 // pred_region
      // Predicated region
      $region33: #{encoder_forward.8} parent=31 // pred_check
        %p178 = pneg %p31
      $region34: #{encoder_forward.8} parent=31 // pred_check_branch
        %180 = sbr.rel (%p178) target = $region36
      $region35: #{encoder_forward.8} parent=31 // pred_region
        %p181 = scmp.lt.s32.totalorder %s11, 1
        %s182 = scalar_select %p181, %s11, 1
        %s183 = smul.addr %s182, 4
        %s184 = smul.addr %s183, 8
        %s185 = scalar_lea.vmem %s0, %s184
      $region36: #{encoder_forward.8} parent=31 // pred_fallthru
        _
    $region32: #{encoder_forward.8} parent=5 // pred_fallthru
      _
    %p186 = scmp.le.s32.totalorder 1, %s11
    %p187 = scmp.lt.s32.totalorder %s11, 3
    %p188 = pnand %p186, %p187
    %p189 = pneg %p188
    // Predicated region
    $region37: #{encoder_forward.8} parent=5 // pred_check
      _
    $region38: #{encoder_forward.8} parent=5 // pred_check_branch
      %191 = sbr.rel (%p188) target = $region40
    $region39: #{encoder_forward.8} parent=5 // pred_region
      %s192 = ssub.s32 %s11, 1
      %p193 = scmp.lt.s32.totalorder %s16, 1
      %s194 = scalar_select %p193, %s16, 1
      %s195 = smul.addr %s194, 4
      %s196 = smul.addr %s195, 8
      %s197 = scalar_lea.vmem %s0, %s196
      %p198 = pneg %p37
      %p199 = pneg %p34
      %p200 = pneg %p58
      %p201 = pneg %p55
      %p202 = pneg %p79
      %p203 = pneg %p76
      %p204 = pneg %p100
      %p205 = pneg %p97
      %p206 = pneg %p121
      %p207 = pneg %p118
      %p208 = pneg %p147
      %p209 = pneg %p144
      %p210 = scmp.lt.s32.totalorder %s16, 1
      %s211 = scalar_select %p210, %s16, 1
      %s212 = smul.addr %s211, 8
      %s213 = smul.addr %s212, 8
      %s214 = scalar_lea.vmem %s5, %s213
      %p215 = scmp.lt.s32.totalorder %s16, 1
      %s216 = scalar_select %p215, %s16, 1
      %s217 = smul.addr %s216, 4
      %s218 = smul.addr %s217, 8
      %s219 = scalar_lea.vmem %s0, %s218
      %p220 = scmp.lt.s32.totalorder %s16, 1
      %s221 = scalar_select %p220, %s16, 1
      %s222 = smul.addr %s221, 8
      %s223 = smul.addr %s222, 8
      %s224 = scalar_lea.vmem %s5, %s223
      %v225 = vld [vmem:[%s219] sm:$0xff]
      %v226 = vld [vmem:[%s219 + $0x8] sm:$0xff]
      %v227 = vld [vmem:[%s219 + $0x10] sm:$0xff]
      %v228 = vld [vmem:[%s219 + $0x18] sm:$0xff]
      %v229 = vld [vmem:[%s1] sm:$0xff]
      %v230 = vld [vmem:[%s1 + $0x8] sm:$0xff]
      %v231 = vld [vmem:[%s1 + $0x10] sm:$0xff]
      %v232 = vld [vmem:[%s1 + $0x18] sm:$0xff]
      %v233 = vld [vmem:[%s1 + $0x20] sm:$0xff]
      %v234 = vld [vmem:[%s1 + $0x28] sm:$0xff]
      %v235 = vld [vmem:[%s1 + $0x30] sm:$0xff]
      %v236 = vld [vmem:[%s1 + $0x38] sm:$0xff]
      %v237 = vld [vmem:[%s1 + $0x40] sm:$0xff]
      %v238 = vld [vmem:[%s1 + $0x48] sm:$0xff]
      %v239 = vld [vmem:[%s1 + $0x50] sm:$0xff]
      %v240 = vld [vmem:[%s1 + $0x58] sm:$0xff]
      %v241 = vld [vmem:[%s1 + $0x60] sm:$0xff]
      %v242 = vld [vmem:[%s1 + $0x68] sm:$0xff]
      %v243 = vld [vmem:[%s1 + $0x70] sm:$0xff]
      %v244 = vld [vmem:[%s1 + $0x78] sm:$0xff]
      %v245 = vld [vmem:[%s1 + $0x80] sm:$0xff]
      %v246 = vld [vmem:[%s1 + $0x88] sm:$0xff]
      %v247 = vld [vmem:[%s1 + $0x90] sm:$0xff]
      %v248 = vld [vmem:[%s1 + $0x98] sm:$0xff]
      %v249 = vld [vmem:[%s1 + $0xa0] sm:$0xff]
      %v250 = vld [vmem:[%s1 + $0xa8] sm:$0xff]
      %v251 = vld [vmem:[%s1 + $0xb0] sm:$0xff]
      %v252 = vld [vmem:[%s1 + $0xb8] sm:$0xff]
      %v253 = vld [vmem:[%s2] sm:$0xff]
      %v254 = vld [vmem:[%s2 + $0x8] sm:$0xff]
      %v255 = vld [vmem:[%s2 + $0x10] sm:$0xff]
      %v256 = vld [vmem:[%s2 + $0x18] sm:$0xff]
      %v257 = vld [vmem:[%s2 + $0x20] sm:$0xff]
      %v258 = vld [vmem:[%s2 + $0x28] sm:$0xff]
      %v259 = vld [vmem:[%s2 + $0x30] sm:$0xff]
      %v260 = vld [vmem:[%s2 + $0x38] sm:$0xff]
      %v261 = vlaneseq
      %v262 = vand.u32 %v261, 127
      %v263 = vand.u32 %v262, 3
      %vm264 = vcmask 1047680
      %265 = vrot.lane.b32.xlu0 %v225, 16
      %v266 = vpop.permute.xlu0 %265
      %v267 = vsel %vm264, %v266, %v225
      %268 = vrot.lane.b32.xlu0 %v226, 16
      %v269 = vpop.permute.xlu0 %268
      %v270 = vsel %vm264, %v269, %v226
      %271 = vrot.lane.b32.xlu0 %v227, 16
      %v272 = vpop.permute.xlu0 %271
      %v273 = vsel %vm264, %v272, %v227
      %274 = vrot.lane.b32.xlu0 %v228, 16
      %v275 = vpop.permute.xlu0 %274
      %v276 = vsel %vm264, %v275, %v228
      %277 = vrot.lane.b32.xlu0 %v267, 16
      %v278 = vpop.permute.xlu0 %277
      %279 = vrot.lane.b32.xlu0 %v270, 16
      %v280 = vpop.permute.xlu0 %279
      %281 = vrot.lane.b32.xlu0 %v273, 16
      %v282 = vpop.permute.xlu0 %281
      %283 = vrot.lane.b32.xlu0 %v276, 16
      %v284 = vpop.permute.xlu0 %283
      %v285 = vsel %vm264, %v278, %v225
      %v286 = vsel %vm264, %v280, %v226
      %v287 = vsel %vm264, %v282, %v227
      %v288 = vsel %vm264, %v284, %v228
      %vm289 = vcmp.ge.s32.totalorder %v262, 4
      %vm290 = vcmp.ge.s32.totalorder %v263, 1
      %vm291 = vmand %vm289, %vm290
      %296 = vrot.lane.b32.xlu0 %v285, 117
      %v297 = vpop.permute.xlu0 %296
      %298 = vrot.lane.b32.xlu0 %v286, 117
      %v299 = vpop.permute.xlu0 %298
      %300 = vrot.lane.b32.xlu0 %v287, 117
      %v301 = vpop.permute.xlu0 %300
      %302 = vrot.lane.b32.xlu0 %v288, 117
      %v303 = vpop.permute.xlu0 %302
      %v308 = vsel %vm291, %v297, 0.0
      %v309 = vsel %vm291, %v299, 0.0
      %v310 = vsel %vm291, %v301, 0.0
      %v311 = vsel %vm291, %v303, 0.0
      %312 = vrot.lane.b32.xlu0 %v285, 116
      %v313 = vpop.permute.xlu0 %312
      %314 = vrot.lane.b32.xlu0 %v286, 116
      %v315 = vpop.permute.xlu0 %314
      %316 = vrot.lane.b32.xlu0 %v287, 116
      %v317 = vpop.permute.xlu0 %316
      %318 = vrot.lane.b32.xlu0 %v288, 116
      %v319 = vpop.permute.xlu0 %318
      %v324 = vsel %vm289, %v313, 0.0
      %v325 = vsel %vm289, %v315, 0.0
      %v326 = vsel %vm289, %v317, 0.0
      %v327 = vsel %vm289, %v319, 0.0
      %vm328 = vcmp.le.s32.totalorder %v263, 2
      %vm329 = vmand %vm289, %vm328
      %330 = vrot.lane.b32.xlu0 %v285, 115
      %v331 = vpop.permute.xlu0 %330
      %332 = vrot.lane.b32.xlu0 %v286, 115
      %v333 = vpop.permute.xlu0 %332
      %334 = vrot.lane.b32.xlu0 %v287, 115
      %v335 = vpop.permute.xlu0 %334
      %336 = vrot.lane.b32.xlu0 %v288, 115
      %v337 = vpop.permute.xlu0 %336
      %v342 = vsel %vm329, %v331, 0.0
      %v343 = vsel %vm329, %v333, 0.0
      %v344 = vsel %vm329, %v335, 0.0
      %v345 = vsel %vm329, %v337, 0.0
      %346 = vrot.lane.b32.xlu0 %v285, 113
      %v347 = vpop.permute.xlu0 %346
      %348 = vrot.lane.b32.xlu0 %v286, 113
      %v349 = vpop.permute.xlu0 %348
      %350 = vrot.lane.b32.xlu0 %v287, 113
      %v351 = vpop.permute.xlu0 %350
      %352 = vrot.lane.b32.xlu0 %v288, 113
      %v353 = vpop.permute.xlu0 %352
      %v358 = vsel %vm290, %v347, 0.0
      %v359 = vsel %vm290, %v349, 0.0
      %v360 = vsel %vm290, %v351, 0.0
      %v361 = vsel %vm290, %v353, 0.0
      %362 = vrot.lane.b32.xlu0 %v285, 127
      %v363 = vpop.permute.xlu0 %362
      %364 = vrot.lane.b32.xlu0 %v286, 127
      %v365 = vpop.permute.xlu0 %364
      %366 = vrot.lane.b32.xlu0 %v287, 127
      %v367 = vpop.permute.xlu0 %366
      %368 = vrot.lane.b32.xlu0 %v288, 127
      %v369 = vpop.permute.xlu0 %368
      %v374 = vsel %vm328, %v363, 0.0
      %v375 = vsel %vm328, %v365, 0.0
      %v376 = vsel %vm328, %v367, 0.0
      %v377 = vsel %vm328, %v369, 0.0
      %vm378 = vcmp.lt.s32.totalorder %v262, 12
      %vm379 = vmand %vm378, %vm290
      %380 = vrot.lane.b32.xlu0 %v285, 125
      %v381 = vpop.permute.xlu0 %380
      %382 = vrot.lane.b32.xlu0 %v286, 125
      %v383 = vpop.permute.xlu0 %382
      %384 = vrot.lane.b32.xlu0 %v287, 125
      %v385 = vpop.permute.xlu0 %384
      %386 = vrot.lane.b32.xlu0 %v288, 125
      %v387 = vpop.permute.xlu0 %386
      %v392 = vsel %vm379, %v381, 0.0
      %v393 = vsel %vm379, %v383, 0.0
      %v394 = vsel %vm379, %v385, 0.0
      %v395 = vsel %vm379, %v387, 0.0
      %396 = vrot.lane.b32.xlu0 %v285, 124
      %v397 = vpop.permute.xlu0 %396
      %398 = vrot.lane.b32.xlu0 %v286, 124
      %v399 = vpop.permute.xlu0 %398
      %400 = vrot.lane.b32.xlu0 %v287, 124
      %v401 = vpop.permute.xlu0 %400
      %402 = vrot.lane.b32.xlu0 %v288, 124
      %v403 = vpop.permute.xlu0 %402
      %v408 = vsel %vm378, %v397, 0.0
      %v409 = vsel %vm378, %v399, 0.0
      %v410 = vsel %vm378, %v401, 0.0
      %v411 = vsel %vm378, %v403, 0.0
      %vm412 = vmand %vm378, %vm328
      %413 = vrot.lane.b32.xlu0 %v285, 123
      %v414 = vpop.permute.xlu0 %413
      %415 = vrot.lane.b32.xlu0 %v286, 123
      %v416 = vpop.permute.xlu0 %415
      %417 = vrot.lane.b32.xlu0 %v287, 123
      %v418 = vpop.permute.xlu0 %417
      %419 = vrot.lane.b32.xlu0 %v288, 123
      %v420 = vpop.permute.xlu0 %419
      %v425 = vsel %vm412, %v414, 0.0
      %v426 = vsel %vm412, %v416, 0.0
      %v427 = vsel %vm412, %v418, 0.0
      %v428 = vsel %vm412, %v420, 0.0
      %430 = vset.pattern.permute.xlu0 0
      %431 = vperm.xlu0 %430, %v253
      %v432 = vpop.permute.xlu0 %431
      %435 = vset.pattern.permute.xlu0 0
      %436 = vperm.xlu0 %435, %v254
      %v437 = vpop.permute.xlu0 %436
      %440 = vset.pattern.permute.xlu0 0
      %441 = vperm.xlu0 %440, %v255
      %v442 = vpop.permute.xlu0 %441
      %445 = vset.pattern.permute.xlu0 0
      %446 = vperm.xlu0 %445, %v256
      %v447 = vpop.permute.xlu0 %446
      %450 = vset.pattern.permute.xlu0 0
      %451 = vperm.xlu0 %450, %v257
      %v452 = vpop.permute.xlu0 %451
      %455 = vset.pattern.permute.xlu0 0
      %456 = vperm.xlu0 %455, %v258
      %v457 = vpop.permute.xlu0 %456
      %460 = vset.pattern.permute.xlu0 0
      %461 = vperm.xlu0 %460, %v259
      %v462 = vpop.permute.xlu0 %461
      %465 = vset.pattern.permute.xlu0 0
      %466 = vperm.xlu0 %465, %v260
      %v467 = vpop.permute.xlu0 %466
      %vm469 = vcmask 261120
      %v471 = vsel %vm469, %v231, 0
      %v474 = vsel %vm469, %v234, 0
      %v477 = vsel %vm469, %v237, 0
      %v480 = vsel %vm469, %v240, 0
      %v483 = vsel %vm469, %v243, 0
      %v486 = vsel %vm469, %v246, 0
      %v489 = vsel %vm469, %v249, 0
      %v492 = vsel %vm469, %v252, 0
      %494 = vmatpush.msra.mxu0 %v361
      %495 = vmatpush.msra.mxu0 %v360
      %496 = vmatpush.msra.mxu0 %v359
      %497 = vmatpush.msra.mxu0 %v358
      %498 = vmatpush.msra.mxu0 %v345
      %499 = vmatpush.msra.mxu0 %v344
      %500 = vmatpush.msra.mxu0 %v343
      %501 = vmatpush.msra.mxu0 %v342
      %502 = vmatpush.msra.mxu0 %v327
      %503 = vmatpush.msra.mxu0 %v326
      %504 = vmatpush.msra.mxu0 %v325
      %505 = vmatpush.msra.mxu0 %v324
      %506 = vmatpush.msra.mxu0 %v311
      %507 = vmatpush.msra.mxu0 %v310
      %508 = vmatpush.msra.mxu0 %v309
      %509 = vmatpush.msra.mxu0 %v308
      %510 = vmatmul.f32.gmra.mxu0 %v229
      %v511 = vpop.f32.mrf.mxu0
      %v512 = vadd.f32 %v432, %v511
      %513 = vmatmul.f32.gmra.mxu0 %v232
      %v514 = vpop.f32.mrf.mxu0
      %v515 = vadd.f32 %v437, %v514
      %516 = vmatmul.f32.gmra.mxu0 %v235
      %v517 = vpop.f32.mrf.mxu0
      %v518 = vadd.f32 %v442, %v517
      %519 = vmatmul.f32.gmra.mxu0 %v238
      %v520 = vpop.f32.mrf.mxu0
      %v521 = vadd.f32 %v447, %v520
      %522 = vmatmul.f32.gmra.mxu0 %v241
      %v523 = vpop.f32.mrf.mxu0
      %v524 = vadd.f32 %v452, %v523
      %525 = vmatmul.f32.gmra.mxu0 %v244
      %v526 = vpop.f32.mrf.mxu0
      %v527 = vadd.f32 %v457, %v526
      %528 = vmatmul.f32.gmra.mxu0 %v247
      %v529 = vpop.f32.mrf.mxu0
      %v530 = vadd.f32 %v462, %v529
      %531 = vmatmul.f32.gmra.mxu0 %v250
      %v532 = vpop.f32.mrf.mxu0
      %v533 = vadd.f32 %v467, %v532
      %534 = vdwg.mxu0
      %535 = vmatpush.msra.mxu0 %v411
      %536 = vmatpush.msra.mxu0 %v410
      %537 = vmatpush.msra.mxu0 %v409
      %538 = vmatpush.msra.mxu0 %v408
      %539 = vmatpush.msra.mxu0 %v395
      %540 = vmatpush.msra.mxu0 %v394
      %541 = vmatpush.msra.mxu0 %v393
      %542 = vmatpush.msra.mxu0 %v392
      %543 = vmatpush.msra.mxu0 %v377
      %544 = vmatpush.msra.mxu0 %v376
      %545 = vmatpush.msra.mxu0 %v375
      %546 = vmatpush.msra.mxu0 %v374
      %547 = vmatpush.msra.mxu0 %v228
      %548 = vmatpush.msra.mxu0 %v227
      %549 = vmatpush.msra.mxu0 %v226
      %550 = vmatpush.msra.mxu0 %v225
      %551 = vmatmul.f32.gmra.mxu0 %v230
      %v552 = vpop.f32.mrf.mxu0
      %v553 = vadd.f32 %v512, %v552
      %554 = vmatmul.f32.gmra.mxu0 %v233
      %v555 = vpop.f32.mrf.mxu0
      %v556 = vadd.f32 %v515, %v555
      %557 = vmatmul.f32.gmra.mxu0 %v236
      %v558 = vpop.f32.mrf.mxu0
      %v559 = vadd.f32 %v518, %v558
      %560 = vmatmul.f32.gmra.mxu0 %v239
      %v561 = vpop.f32.mrf.mxu0
      %v562 = vadd.f32 %v521, %v561
      %563 = vmatmul.f32.gmra.mxu0 %v242
      %v564 = vpop.f32.mrf.mxu0
      %v565 = vadd.f32 %v524, %v564
      %566 = vmatmul.f32.gmra.mxu0 %v245
      %v567 = vpop.f32.mrf.mxu0
      %v568 = vadd.f32 %v527, %v567
      %569 = vmatmul.f32.gmra.mxu0 %v248
      %v570 = vpop.f32.mrf.mxu0
      %v571 = vadd.f32 %v530, %v570
      %572 = vmatmul.f32.gmra.mxu0 %v251
      %v573 = vpop.f32.mrf.mxu0
      %v574 = vadd.f32 %v533, %v573
      %575 = vdwg.mxu0
      %576 = vmatpush.msra.mxu0 0.0
      %577 = vmatpush.msra.mxu0 0.0
      %578 = vmatpush.msra.mxu0 0.0
      %579 = vmatpush.msra.mxu0 0.0
      %580 = vmatpush.msra.mxu0 0.0
      %581 = vmatpush.msra.mxu0 0.0
      %582 = vmatpush.msra.mxu0 0.0
      %583 = vmatpush.msra.mxu0 0.0
      %584 = vmatpush.msra.mxu0 0.0
      %585 = vmatpush.msra.mxu0 0.0
      %586 = vmatpush.msra.mxu0 0.0
      %587 = vmatpush.msra.mxu0 0.0
      %588 = vmatpush.msra.mxu0 %v428
      %589 = vmatpush.msra.mxu0 %v427
      %590 = vmatpush.msra.mxu0 %v426
      %591 = vmatpush.msra.mxu0 %v425
      %592 = vmatmul.f32.gmra.mxu0 %v471
      %v593 = vpop.f32.mrf.mxu0
      %v594 = vadd.f32 %v553, %v593
      %595 = vmatmul.f32.gmra.mxu0 %v474
      %v596 = vpop.f32.mrf.mxu0
      %v597 = vadd.f32 %v556, %v596
      %598 = vmatmul.f32.gmra.mxu0 %v477
      %v599 = vpop.f32.mrf.mxu0
      %v600 = vadd.f32 %v559, %v599
      %601 = vmatmul.f32.gmra.mxu0 %v480
      %v602 = vpop.f32.mrf.mxu0
      %v603 = vadd.f32 %v562, %v602
      %604 = vmatmul.f32.gmra.mxu0 %v483
      %v605 = vpop.f32.mrf.mxu0
      %v606 = vadd.f32 %v565, %v605
      %607 = vmatmul.f32.gmra.mxu0 %v486
      %v608 = vpop.f32.mrf.mxu0
      %v609 = vadd.f32 %v568, %v608
      %610 = vmatmul.f32.gmra.mxu0 %v489
      %v611 = vpop.f32.mrf.mxu0
      %v612 = vadd.f32 %v571, %v611
      %613 = vmatmul.f32.gmra.mxu0 %v492
      %v614 = vpop.f32.mrf.mxu0
      %v615 = vadd.f32 %v574, %v614
      %616 = vdwg.mxu0
      %v617 = vmax.f32 %v594, 0.0
      %v618 = vmax.f32 %v597, 0.0
      %v619 = vmax.f32 %v600, 0.0
      %v620 = vmax.f32 %v603, 0.0
      %v621 = vmax.f32 %v606, 0.0
      %v622 = vmax.f32 %v609, 0.0
      %v623 = vmax.f32 %v612, 0.0
      %v624 = vmax.f32 %v615, 0.0
      %v625 = vld [vmem:[%s3] sm:$0xff]
      %v626 = vld [vmem:[%s3 + $0x8] sm:$0xff]
      %v627 = vld [vmem:[%s3 + $0x10] sm:$0xff]
      %v628 = vld [vmem:[%s3 + $0x18] sm:$0xff]
      %v629 = vld [vmem:[%s3 + $0x20] sm:$0xff]
      %v630 = vld [vmem:[%s3 + $0x28] sm:$0xff]
      %v631 = vld [vmem:[%s3 + $0x30] sm:$0xff]
      %v632 = vld [vmem:[%s3 + $0x38] sm:$0xff]
      %v633 = vld [vmem:[%s3 + $0x40] sm:$0xff]
      %v634 = vld [vmem:[%s3 + $0x48] sm:$0xff]
      %v635 = vld [vmem:[%s3 + $0x50] sm:$0xff]
      %v636 = vld [vmem:[%s3 + $0x58] sm:$0xff]
      %v637 = vld [vmem:[%s3 + $0x60] sm:$0xff]
      %v638 = vld [vmem:[%s3 + $0x68] sm:$0xff]
      %v639 = vld [vmem:[%s3 + $0x70] sm:$0xff]
      %v640 = vld [vmem:[%s3 + $0x78] sm:$0xff]
      %v641 = vld [vmem:[%s3 + $0x80] sm:$0xff]
      %v642 = vld [vmem:[%s3 + $0x88] sm:$0xff]
      %v643 = vld [vmem:[%s3 + $0x90] sm:$0xff]
      %v644 = vld [vmem:[%s3 + $0x98] sm:$0xff]
      %v645 = vld [vmem:[%s3 + $0xa0] sm:$0xff]
      %v646 = vld [vmem:[%s3 + $0xa8] sm:$0xff]
      %v647 = vld [vmem:[%s3 + $0xb0] sm:$0xff]
      %v648 = vld [vmem:[%s3 + $0xb8] sm:$0xff]
      %v649 = vld [vmem:[%s3 + $0xc0] sm:$0xff]
      %v650 = vld [vmem:[%s3 + $0xc8] sm:$0xff]
      %v651 = vld [vmem:[%s3 + $0xd0] sm:$0xff]
      %v652 = vld [vmem:[%s3 + $0xd8] sm:$0xff]
      %v653 = vld [vmem:[%s3 + $0xe0] sm:$0xff]
      %v654 = vld [vmem:[%s3 + $0xe8] sm:$0xff]
      %v655 = vld [vmem:[%s3 + $0xf0] sm:$0xff]
      %v656 = vld [vmem:[%s3 + $0xf8] sm:$0xff]
      %v657 = vld [vmem:[%s3 + $0x100] sm:$0xff]
      %v658 = vld [vmem:[%s3 + $0x108] sm:$0xff]
      %v659 = vld [vmem:[%s3 + $0x110] sm:$0xff]
      %v660 = vld [vmem:[%s3 + $0x118] sm:$0xff]
      %v661 = vld [vmem:[%s3 + $0x120] sm:$0xff]
      %v662 = vld [vmem:[%s3 + $0x128] sm:$0xff]
      %v663 = vld [vmem:[%s3 + $0x130] sm:$0xff]
      %v664 = vld [vmem:[%s3 + $0x138] sm:$0xff]
      %v665 = vld [vmem:[%s4] sm:$0xff]
      %v666 = vld [vmem:[%s4 + $0x8] sm:$0xff]
      %v667 = vld [vmem:[%s4 + $0x10] sm:$0xff]
      %v668 = vld [vmem:[%s4 + $0x18] sm:$0xff]
      %v669 = vld [vmem:[%s4 + $0x20] sm:$0xff]
      %v670 = vld [vmem:[%s4 + $0x28] sm:$0xff]
      %v671 = vld [vmem:[%s4 + $0x30] sm:$0xff]
      %v672 = vld [vmem:[%s4 + $0x38] sm:$0xff]
      %673 = vrot.lane.b32.xlu0 %v617, 16
      %v674 = vpop.permute.xlu0 %673
      %v675 = vsel %vm264, %v674, %v617
      %676 = vrot.lane.b32.xlu0 %v618, 16
      %v677 = vpop.permute.xlu0 %676
      %v678 = vsel %vm264, %v677, %v618
      %679 = vrot.lane.b32.xlu0 %v619, 16
      %v680 = vpop.permute.xlu0 %679
      %v681 = vsel %vm264, %v680, %v619
      %682 = vrot.lane.b32.xlu0 %v620, 16
      %v683 = vpop.permute.xlu0 %682
      %v684 = vsel %vm264, %v683, %v620
      %685 = vrot.lane.b32.xlu0 %v621, 16
      %v686 = vpop.permute.xlu0 %685
      %v687 = vsel %vm264, %v686, %v621
      %688 = vrot.lane.b32.xlu0 %v622, 16
      %v689 = vpop.permute.xlu0 %688
      %v690 = vsel %vm264, %v689, %v622
      %691 = vrot.lane.b32.xlu0 %v623, 16
      %v692 = vpop.permute.xlu0 %691
      %v693 = vsel %vm264, %v692, %v623
      %694 = vrot.lane.b32.xlu0 %v624, 16
      %v695 = vpop.permute.xlu0 %694
      %v696 = vsel %vm264, %v695, %v624
      %697 = vrot.lane.b32.xlu0 %v675, 16
      %v698 = vpop.permute.xlu0 %697
      %699 = vrot.lane.b32.xlu0 %v678, 16
      %v700 = vpop.permute.xlu0 %699
      %701 = vrot.lane.b32.xlu0 %v681, 16
      %v702 = vpop.permute.xlu0 %701
      %703 = vrot.lane.b32.xlu0 %v684, 16
      %v704 = vpop.permute.xlu0 %703
      %705 = vrot.lane.b32.xlu0 %v687, 16
      %v706 = vpop.permute.xlu0 %705
      %707 = vrot.lane.b32.xlu0 %v690, 16
      %v708 = vpop.permute.xlu0 %707
      %709 = vrot.lane.b32.xlu0 %v693, 16
      %v710 = vpop.permute.xlu0 %709
      %711 = vrot.lane.b32.xlu0 %v696, 16
      %v712 = vpop.permute.xlu0 %711
      %v713 = vsel %vm264, %v698, %v617
      %v714 = vsel %vm264, %v700, %v618
      %v715 = vsel %vm264, %v702, %v619
      %v716 = vsel %vm264, %v704, %v620
      %v717 = vsel %vm264, %v706, %v621
      %v718 = vsel %vm264, %v708, %v622
      %v719 = vsel %vm264, %v710, %v623
      %v720 = vsel %vm264, %v712, %v624
      %729 = vrot.lane.b32.xlu0 %v713, 117
      %v730 = vpop.permute.xlu0 %729
      %731 = vrot.lane.b32.xlu0 %v714, 117
      %v732 = vpop.permute.xlu0 %731
      %733 = vrot.lane.b32.xlu0 %v715, 117
      %v734 = vpop.permute.xlu0 %733
      %735 = vrot.lane.b32.xlu0 %v716, 117
      %v736 = vpop.permute.xlu0 %735
      %737 = vrot.lane.b32.xlu0 %v717, 117
      %v738 = vpop.permute.xlu0 %737
      %739 = vrot.lane.b32.xlu0 %v718, 117
      %v740 = vpop.permute.xlu0 %739
      %741 = vrot.lane.b32.xlu0 %v719, 117
      %v742 = vpop.permute.xlu0 %741
      %743 = vrot.lane.b32.xlu0 %v720, 117
      %v744 = vpop.permute.xlu0 %743
      %v753 = vsel %vm291, %v730, 0.0
      %v754 = vsel %vm291, %v732, 0.0
      %v755 = vsel %vm291, %v734, 0.0
      %v756 = vsel %vm291, %v736, 0.0
      %v757 = vsel %vm291, %v738, 0.0
      %v758 = vsel %vm291, %v740, 0.0
      %v759 = vsel %vm291, %v742, 0.0
      %v760 = vsel %vm291, %v744, 0.0
      %761 = vrot.lane.b32.xlu0 %v713, 116
      %v762 = vpop.permute.xlu0 %761
      %763 = vrot.lane.b32.xlu0 %v714, 116
      %v764 = vpop.permute.xlu0 %763
      %765 = vrot.lane.b32.xlu0 %v715, 116
      %v766 = vpop.permute.xlu0 %765
      %767 = vrot.lane.b32.xlu0 %v716, 116
      %v768 = vpop.permute.xlu0 %767
      %769 = vrot.lane.b32.xlu0 %v717, 116
      %v770 = vpop.permute.xlu0 %769
      %771 = vrot.lane.b32.xlu0 %v718, 116
      %v772 = vpop.permute.xlu0 %771
      %773 = vrot.lane.b32.xlu0 %v719, 116
      %v774 = vpop.permute.xlu0 %773
      %775 = vrot.lane.b32.xlu0 %v720, 116
      %v776 = vpop.permute.xlu0 %775
      %v785 = vsel %vm289, %v762, 0.0
      %v786 = vsel %vm289, %v764, 0.0
      %v787 = vsel %vm289, %v766, 0.0
      %v788 = vsel %vm289, %v768, 0.0
      %v789 = vsel %vm289, %v770, 0.0
      %v790 = vsel %vm289, %v772, 0.0
      %v791 = vsel %vm289, %v774, 0.0
      %v792 = vsel %vm289, %v776, 0.0
      %793 = vrot.lane.b32.xlu0 %v713, 115
      %v794 = vpop.permute.xlu0 %793
      %795 = vrot.lane.b32.xlu0 %v714, 115
      %v796 = vpop.permute.xlu0 %795
      %797 = vrot.lane.b32.xlu0 %v715, 115
      %v798 = vpop.permute.xlu0 %797
      %799 = vrot.lane.b32.xlu0 %v716, 115
      %v800 = vpop.permute.xlu0 %799
      %801 = vrot.lane.b32.xlu0 %v717, 115
      %v802 = vpop.permute.xlu0 %801
      %803 = vrot.lane.b32.xlu0 %v718, 115
      %v804 = vpop.permute.xlu0 %803
      %805 = vrot.lane.b32.xlu0 %v719, 115
      %v806 = vpop.permute.xlu0 %805
      %807 = vrot.lane.b32.xlu0 %v720, 115
      %v808 = vpop.permute.xlu0 %807
      %v817 = vsel %vm329, %v794, 0.0
      %v818 = vsel %vm329, %v796, 0.0
      %v819 = vsel %vm329, %v798, 0.0
      %v820 = vsel %vm329, %v800, 0.0
      %v821 = vsel %vm329, %v802, 0.0
      %v822 = vsel %vm329, %v804, 0.0
      %v823 = vsel %vm329, %v806, 0.0
      %v824 = vsel %vm329, %v808, 0.0
      %825 = vrot.lane.b32.xlu0 %v713, 113
      %v826 = vpop.permute.xlu0 %825
      %827 = vrot.lane.b32.xlu0 %v714, 113
      %v828 = vpop.permute.xlu0 %827
      %829 = vrot.lane.b32.xlu0 %v715, 113
      %v830 = vpop.permute.xlu0 %829
      %831 = vrot.lane.b32.xlu0 %v716, 113
      %v832 = vpop.permute.xlu0 %831
      %833 = vrot.lane.b32.xlu0 %v717, 113
      %v834 = vpop.permute.xlu0 %833
      %835 = vrot.lane.b32.xlu0 %v718, 113
      %v836 = vpop.permute.xlu0 %835
      %837 = vrot.lane.b32.xlu0 %v719, 113
      %v838 = vpop.permute.xlu0 %837
      %839 = vrot.lane.b32.xlu0 %v720, 113
      %v840 = vpop.permute.xlu0 %839
      %v849 = vsel %vm290, %v826, 0.0
      %v850 = vsel %vm290, %v828, 0.0
      %v851 = vsel %vm290, %v830, 0.0
      %v852 = vsel %vm290, %v832, 0.0
      %v853 = vsel %vm290, %v834, 0.0
      %v854 = vsel %vm290, %v836, 0.0
      %v855 = vsel %vm290, %v838, 0.0
      %v856 = vsel %vm290, %v840, 0.0
      %857 = vrot.lane.b32.xlu0 %v713, 127
      %v858 = vpop.permute.xlu0 %857
      %859 = vrot.lane.b32.xlu0 %v714, 127
      %v860 = vpop.permute.xlu0 %859
      %861 = vrot.lane.b32.xlu0 %v715, 127
      %v862 = vpop.permute.xlu0 %861
      %863 = vrot.lane.b32.xlu0 %v716, 127
      %v864 = vpop.permute.xlu0 %863
      %865 = vrot.lane.b32.xlu0 %v717, 127
      %v866 = vpop.permute.xlu0 %865
      %867 = vrot.lane.b32.xlu0 %v718, 127
      %v868 = vpop.permute.xlu0 %867
      %869 = vrot.lane.b32.xlu0 %v719, 127
      %v870 = vpop.permute.xlu0 %869
      %871 = vrot.lane.b32.xlu0 %v720, 127
      %v872 = vpop.permute.xlu0 %871
      %v881 = vsel %vm328, %v858, 0.0
      %v882 = vsel %vm328, %v860, 0.0
      %v883 = vsel %vm328, %v862, 0.0
      %v884 = vsel %vm328, %v864, 0.0
      %v885 = vsel %vm328, %v866, 0.0
      %v886 = vsel %vm328, %v868, 0.0
      %v887 = vsel %vm328, %v870, 0.0
      %v888 = vsel %vm328, %v872, 0.0
      %889 = vrot.lane.b32.xlu0 %v713, 125
      %v890 = vpop.permute.xlu0 %889
      %891 = vrot.lane.b32.xlu0 %v714, 125
      %v892 = vpop.permute.xlu0 %891
      %893 = vrot.lane.b32.xlu0 %v715, 125
      %v894 = vpop.permute.xlu0 %893
      %895 = vrot.lane.b32.xlu0 %v716, 125
      %v896 = vpop.permute.xlu0 %895
      %897 = vrot.lane.b32.xlu0 %v717, 125
      %v898 = vpop.permute.xlu0 %897
      %899 = vrot.lane.b32.xlu0 %v718, 125
      %v900 = vpop.permute.xlu0 %899
      %901 = vrot.lane.b32.xlu0 %v719, 125
      %v902 = vpop.permute.xlu0 %901
      %903 = vrot.lane.b32.xlu0 %v720, 125
      %v904 = vpop.permute.xlu0 %903
      %v913 = vsel %vm379, %v890, 0.0
      %v914 = vsel %vm379, %v892, 0.0
      %v915 = vsel %vm379, %v894, 0.0
      %v916 = vsel %vm379, %v896, 0.0
      %v917 = vsel %vm379, %v898, 0.0
      %v918 = vsel %vm379, %v900, 0.0
      %v919 = vsel %vm379, %v902, 0.0
      %v920 = vsel %vm379, %v904, 0.0
      %921 = vrot.lane.b32.xlu0 %v713, 124
      %v922 = vpop.permute.xlu0 %921
      %923 = vrot.lane.b32.xlu0 %v714, 124
      %v924 = vpop.permute.xlu0 %923
      %925 = vrot.lane.b32.xlu0 %v715, 124
      %v926 = vpop.permute.xlu0 %925
      %927 = vrot.lane.b32.xlu0 %v716, 124
      %v928 = vpop.permute.xlu0 %927
      %929 = vrot.lane.b32.xlu0 %v717, 124
      %v930 = vpop.permute.xlu0 %929
      %931 = vrot.lane.b32.xlu0 %v718, 124
      %v932 = vpop.permute.xlu0 %931
      %933 = vrot.lane.b32.xlu0 %v719, 124
      %v934 = vpop.permute.xlu0 %933
      %935 = vrot.lane.b32.xlu0 %v720, 124
      %v936 = vpop.permute.xlu0 %935
      %v945 = vsel %vm378, %v922, 0.0
      %v946 = vsel %vm378, %v924, 0.0
      %v947 = vsel %vm378, %v926, 0.0
      %v948 = vsel %vm378, %v928, 0.0
      %v949 = vsel %vm378, %v930, 0.0
      %v950 = vsel %vm378, %v932, 0.0
      %v951 = vsel %vm378, %v934, 0.0
      %v952 = vsel %vm378, %v936, 0.0
      %953 = vrot.lane.b32.xlu0 %v713, 123
      %v954 = vpop.permute.xlu0 %953
      %955 = vrot.lane.b32.xlu0 %v714, 123
      %v956 = vpop.permute.xlu0 %955
      %957 = vrot.lane.b32.xlu0 %v715, 123
      %v958 = vpop.permute.xlu0 %957
      %959 = vrot.lane.b32.xlu0 %v716, 123
      %v960 = vpop.permute.xlu0 %959
      %961 = vrot.lane.b32.xlu0 %v717, 123
      %v962 = vpop.permute.xlu0 %961
      %963 = vrot.lane.b32.xlu0 %v718, 123
      %v964 = vpop.permute.xlu0 %963
      %965 = vrot.lane.b32.xlu0 %v719, 123
      %v966 = vpop.permute.xlu0 %965
      %967 = vrot.lane.b32.xlu0 %v720, 123
      %v968 = vpop.permute.xlu0 %967
      %v977 = vsel %vm412, %v954, 0.0
      %v978 = vsel %vm412, %v956, 0.0
      %v979 = vsel %vm412, %v958, 0.0
      %v980 = vsel %vm412, %v960, 0.0
      %v981 = vsel %vm412, %v962, 0.0
      %v982 = vsel %vm412, %v964, 0.0
      %v983 = vsel %vm412, %v966, 0.0
      %v984 = vsel %vm412, %v968, 0.0
      %986 = vset.pattern.permute.xlu0 0
      %987 = vperm.xlu0 %986, %v665
      %v988 = vpop.permute.xlu0 %987
      %991 = vset.pattern.permute.xlu0 0
      %992 = vperm.xlu0 %991, %v666
      %v993 = vpop.permute.xlu0 %992
      %996 = vset.pattern.permute.xlu0 0
      %997 = vperm.xlu0 %996, %v667
      %v998 = vpop.permute.xlu0 %997
      %1001 = vset.pattern.permute.xlu0 0
      %1002 = vperm.xlu0 %1001, %v668
      %v1003 = vpop.permute.xlu0 %1002
      %1006 = vset.pattern.permute.xlu0 0
      %1007 = vperm.xlu0 %1006, %v669
      %v1008 = vpop.permute.xlu0 %1007
      %1011 = vset.pattern.permute.xlu0 0
      %1012 = vperm.xlu0 %1011, %v670
      %v1013 = vpop.permute.xlu0 %1012
      %1016 = vset.pattern.permute.xlu0 0
      %1017 = vperm.xlu0 %1016, %v671
      %v1018 = vpop.permute.xlu0 %1017
      %1021 = vset.pattern.permute.xlu0 0
      %1022 = vperm.xlu0 %1021, %v672
      %v1023 = vpop.permute.xlu0 %1022
      %vm1025 = vcmask 523264
      %v1027 = vsel %vm1025, %v629, 0
      %v1030 = vsel %vm1025, %v634, 0
      %v1033 = vsel %vm1025, %v639, 0
      %v1036 = vsel %vm1025, %v644, 0
      %v1039 = vsel %vm1025, %v649, 0
      %v1042 = vsel %vm1025, %v654, 0
      %v1045 = vsel %vm1025, %v659, 0
      %v1048 = vsel %vm1025, %v664, 0
      %1050 = vmatpush.msra.mxu0 %v792
      %1051 = vmatpush.msra.mxu0 %v791
      %1052 = vmatpush.msra.mxu0 %v790
      %1053 = vmatpush.msra.mxu0 %v789
      %1054 = vmatpush.msra.mxu0 %v788
      %1055 = vmatpush.msra.mxu0 %v787
      %1056 = vmatpush.msra.mxu0 %v786
      %1057 = vmatpush.msra.mxu0 %v785
      %1058 = vmatpush.msra.mxu0 %v760
      %1059 = vmatpush.msra.mxu0 %v759
      %1060 = vmatpush.msra.mxu0 %v758
      %1061 = vmatpush.msra.mxu0 %v757
      %1062 = vmatpush.msra.mxu0 %v756
      %1063 = vmatpush.msra.mxu0 %v755
      %1064 = vmatpush.msra.mxu0 %v754
      %1065 = vmatpush.msra.mxu0 %v753
      %1066 = vmatmul.f32.gmra.mxu0 %v625
      %v1067 = vpop.f32.mrf.mxu0
      %v1068 = vadd.f32 %v988, %v1067
      %1069 = vmatmul.f32.gmra.mxu0 %v630
      %v1070 = vpop.f32.mrf.mxu0
      %v1071 = vadd.f32 %v993, %v1070
      %1072 = vmatmul.f32.gmra.mxu0 %v635
      %v1073 = vpop.f32.mrf.mxu0
      %v1074 = vadd.f32 %v998, %v1073
      %1075 = vmatmul.f32.gmra.mxu0 %v640
      %v1076 = vpop.f32.mrf.mxu0
      %v1077 = vadd.f32 %v1003, %v1076
      %1078 = vmatmul.f32.gmra.mxu0 %v645
      %v1079 = vpop.f32.mrf.mxu0
      %v1080 = vadd.f32 %v1008, %v1079
      %1081 = vmatmul.f32.gmra.mxu0 %v650
      %v1082 = vpop.f32.mrf.mxu0
      %v1083 = vadd.f32 %v1013, %v1082
      %1084 = vmatmul.f32.gmra.mxu0 %v655
      %v1085 = vpop.f32.mrf.mxu0
      %v1086 = vadd.f32 %v1018, %v1085
      %1087 = vmatmul.f32.gmra.mxu0 %v660
      %v1088 = vpop.f32.mrf.mxu0
      %v1089 = vadd.f32 %v1023, %v1088
      %1090 = vdwg.mxu0
      %1091 = vmatpush.msra.mxu0 %v856
      %1092 = vmatpush.msra.mxu0 %v855
      %1093 = vmatpush.msra.mxu0 %v854
      %1094 = vmatpush.msra.mxu0 %v853
      %1095 = vmatpush.msra.mxu0 %v852
      %1096 = vmatpush.msra.mxu0 %v851
      %1097 = vmatpush.msra.mxu0 %v850
      %1098 = vmatpush.msra.mxu0 %v849
      %1099 = vmatpush.msra.mxu0 %v824
      %1100 = vmatpush.msra.mxu0 %v823
      %1101 = vmatpush.msra.mxu0 %v822
      %1102 = vmatpush.msra.mxu0 %v821
      %1103 = vmatpush.msra.mxu0 %v820
      %1104 = vmatpush.msra.mxu0 %v819
      %1105 = vmatpush.msra.mxu0 %v818
      %1106 = vmatpush.msra.mxu0 %v817
      %1107 = vmatmul.f32.gmra.mxu0 %v626
      %v1108 = vpop.f32.mrf.mxu0
      %v1109 = vadd.f32 %v1068, %v1108
      %1110 = vmatmul.f32.gmra.mxu0 %v631
      %v1111 = vpop.f32.mrf.mxu0
      %v1112 = vadd.f32 %v1071, %v1111
      %1113 = vmatmul.f32.gmra.mxu0 %v636
      %v1114 = vpop.f32.mrf.mxu0
      %v1115 = vadd.f32 %v1074, %v1114
      %1116 = vmatmul.f32.gmra.mxu0 %v641
      %v1117 = vpop.f32.mrf.mxu0
      %v1118 = vadd.f32 %v1077, %v1117
      %1119 = vmatmul.f32.gmra.mxu0 %v646
      %v1120 = vpop.f32.mrf.mxu0
      %v1121 = vadd.f32 %v1080, %v1120
      %1122 = vmatmul.f32.gmra.mxu0 %v651
      %v1123 = vpop.f32.mrf.mxu0
      %v1124 = vadd.f32 %v1083, %v1123
      %1125 = vmatmul.f32.gmra.mxu0 %v656
      %v1126 = vpop.f32.mrf.mxu0
      %v1127 = vadd.f32 %v1086, %v1126
      %1128 = vmatmul.f32.gmra.mxu0 %v661
      %v1129 = vpop.f32.mrf.mxu0
      %v1130 = vadd.f32 %v1089, %v1129
      %1131 = vdwg.mxu0
      %1132 = vmatpush.msra.mxu0 %v888
      %1133 = vmatpush.msra.mxu0 %v887
      %1134 = vmatpush.msra.mxu0 %v886
      %1135 = vmatpush.msra.mxu0 %v885
      %1136 = vmatpush.msra.mxu0 %v884
      %1137 = vmatpush.msra.mxu0 %v883
      %1138 = vmatpush.msra.mxu0 %v882
      %1139 = vmatpush.msra.mxu0 %v881
      %1140 = vmatpush.msra.mxu0 %v624
      %1141 = vmatpush.msra.mxu0 %v623
      %1142 = vmatpush.msra.mxu0 %v622
      %1143 = vmatpush.msra.mxu0 %v621
      %1144 = vmatpush.msra.mxu0 %v620
      %1145 = vmatpush.msra.mxu0 %v619
      %1146 = vmatpush.msra.mxu0 %v618
      %1147 = vmatpush.msra.mxu0 %v617
      %1148 = vmatmul.f32.gmra.mxu0 %v627
      %v1149 = vpop.f32.mrf.mxu0
      %v1150 = vadd.f32 %v1109, %v1149
      %1151 = vmatmul.f32.gmra.mxu0 %v632
      %v1152 = vpop.f32.mrf.mxu0
      %v1153 = vadd.f32 %v1112, %v1152
      %1154 = vmatmul.f32.gmra.mxu0 %v637
      %v1155 = vpop.f32.mrf.mxu0
      %v1156 = vadd.f32 %v1115, %v1155
      %1157 = vmatmul.f32.gmra.mxu0 %v642
      %v1158 = vpop.f32.mrf.mxu0
      %v1159 = vadd.f32 %v1118, %v1158
      %1160 = vmatmul.f32.gmra.mxu0 %v647
      %v1161 = vpop.f32.mrf.mxu0
      %v1162 = vadd.f32 %v1121, %v1161
      %1163 = vmatmul.f32.gmra.mxu0 %v652
      %v1164 = vpop.f32.mrf.mxu0
      %v1165 = vadd.f32 %v1124, %v1164
      %1166 = vmatmul.f32.gmra.mxu0 %v657
      %v1167 = vpop.f32.mrf.mxu0
      %v1168 = vadd.f32 %v1127, %v1167
      %1169 = vmatmul.f32.gmra.mxu0 %v662
      %v1170 = vpop.f32.mrf.mxu0
      %v1171 = vadd.f32 %v1130, %v1170
      %1172 = vdwg.mxu0
      %1173 = vmatpush.msra.mxu0 %v952
      %1174 = vmatpush.msra.mxu0 %v951
      %1175 = vmatpush.msra.mxu0 %v950
      %1176 = vmatpush.msra.mxu0 %v949
      %1177 = vmatpush.msra.mxu0 %v948
      %1178 = vmatpush.msra.mxu0 %v947
      %1179 = vmatpush.msra.mxu0 %v946
      %1180 = vmatpush.msra.mxu0 %v945
      %1181 = vmatpush.msra.mxu0 %v920
      %1182 = vmatpush.msra.mxu0 %v919
      %1183 = vmatpush.msra.mxu0 %v918
      %1184 = vmatpush.msra.mxu0 %v917
      %1185 = vmatpush.msra.mxu0 %v916
      %1186 = vmatpush.msra.mxu0 %v915
      %1187 = vmatpush.msra.mxu0 %v914
      %1188 = vmatpush.msra.mxu0 %v913
      %1189 = vmatmul.f32.gmra.mxu0 %v628
      %v1190 = vpop.f32.mrf.mxu0
      %v1191 = vadd.f32 %v1150, %v1190
      %1192 = vmatmul.f32.gmra.mxu0 %v633
      %v1193 = vpop.f32.mrf.mxu0
      %v1194 = vadd.f32 %v1153, %v1193
      %1195 = vmatmul.f32.gmra.mxu0 %v638
      %v1196 = vpop.f32.mrf.mxu0
      %v1197 = vadd.f32 %v1156, %v1196
      %1198 = vmatmul.f32.gmra.mxu0 %v643
      %v1199 = vpop.f32.mrf.mxu0
      %v1200 = vadd.f32 %v1159, %v1199
      %1201 = vmatmul.f32.gmra.mxu0 %v648
      %v1202 = vpop.f32.mrf.mxu0
      %v1203 = vadd.f32 %v1162, %v1202
      %1204 = vmatmul.f32.gmra.mxu0 %v653
      %v1205 = vpop.f32.mrf.mxu0
      %v1206 = vadd.f32 %v1165, %v1205
      %1207 = vmatmul.f32.gmra.mxu0 %v658
      %v1208 = vpop.f32.mrf.mxu0
      %v1209 = vadd.f32 %v1168, %v1208
      %1210 = vmatmul.f32.gmra.mxu0 %v663
      %v1211 = vpop.f32.mrf.mxu0
      %v1212 = vadd.f32 %v1171, %v1211
      %1213 = vdwg.mxu0
      %1214 = vmatpush.msra.mxu0 0.0
      %1215 = vmatpush.msra.mxu0 0.0
      %1216 = vmatpush.msra.mxu0 0.0
      %1217 = vmatpush.msra.mxu0 0.0
      %1218 = vmatpush.msra.mxu0 0.0
      %1219 = vmatpush.msra.mxu0 0.0
      %1220 = vmatpush.msra.mxu0 0.0
      %1221 = vmatpush.msra.mxu0 0.0
      %1222 = vmatpush.msra.mxu0 %v984
      %1223 = vmatpush.msra.mxu0 %v983
      %1224 = vmatpush.msra.mxu0 %v982
      %1225 = vmatpush.msra.mxu0 %v981
      %1226 = vmatpush.msra.mxu0 %v980
      %1227 = vmatpush.msra.mxu0 %v979
      %1228 = vmatpush.msra.mxu0 %v978
      %1229 = vmatpush.msra.mxu0 %v977
      %1230 = vmatmul.f32.gmra.mxu0 %v1027
      %v1231 = vpop.f32.mrf.mxu0
      %v1232 = vadd.f32 %v1191, %v1231
      %1233 = vmatmul.f32.gmra.mxu0 %v1030
      %v1234 = vpop.f32.mrf.mxu0
      %v1235 = vadd.f32 %v1194, %v1234
      %1236 = vmatmul.f32.gmra.mxu0 %v1033
      %v1237 = vpop.f32.mrf.mxu0
      %v1238 = vadd.f32 %v1197, %v1237
      %1239 = vmatmul.f32.gmra.mxu0 %v1036
      %v1240 = vpop.f32.mrf.mxu0
      %v1241 = vadd.f32 %v1200, %v1240
      %1242 = vmatmul.f32.gmra.mxu0 %v1039
      %v1243 = vpop.f32.mrf.mxu0
      %v1244 = vadd.f32 %v1203, %v1243
      %1245 = vmatmul.f32.gmra.mxu0 %v1042
      %v1246 = vpop.f32.mrf.mxu0
      %v1247 = vadd.f32 %v1206, %v1246
      %1248 = vmatmul.f32.gmra.mxu0 %v1045
      %v1249 = vpop.f32.mrf.mxu0
      %v1250 = vadd.f32 %v1209, %v1249
      %1251 = vmatmul.f32.gmra.mxu0 %v1048
      %v1252 = vpop.f32.mrf.mxu0
      %v1253 = vadd.f32 %v1212, %v1252
      %1254 = vdwg.mxu0
      %v1255 = vmax.f32 %v1232, 0.0
      %v1256 = vmax.f32 %v1235, 0.0
      %v1257 = vmax.f32 %v1238, 0.0
      %v1258 = vmax.f32 %v1241, 0.0
      %v1259 = vmax.f32 %v1244, 0.0
      %v1260 = vmax.f32 %v1247, 0.0
      %v1261 = vmax.f32 %v1250, 0.0
      %v1262 = vmax.f32 %v1253, 0.0
      %vm1263 = vcmask 130048
      %1264 = vst.msk [vmem:[%s224] sm:$0xff] %vm1263, %v1255
      %1265 = vst.msk [vmem:[%s224 + $0x8] sm:$0xff] %vm1263, %v1256
      %1266 = vst.msk [vmem:[%s224 + $0x10] sm:$0xff] %vm1263, %v1257
      %1267 = vst.msk [vmem:[%s224 + $0x18] sm:$0xff] %vm1263, %v1258
      %1268 = vst.msk [vmem:[%s224 + $0x20] sm:$0xff] %vm1263, %v1259
      %1269 = vst.msk [vmem:[%s224 + $0x28] sm:$0xff] %vm1263, %v1260
      %1270 = vst.msk [vmem:[%s224 + $0x30] sm:$0xff] %vm1263, %v1261
      %1271 = vst.msk [vmem:[%s224 + $0x38] sm:$0xff] %vm1263, %v1262
      %p1272 = scmp.lt.s32.totalorder %s16, 1
      %s1273 = scalar_select %p1272, %s16, 1
      %s1274 = smul.addr %s1273, 8
      %s1275 = smul.addr %s1274, 8
      %s1276 = scalar_lea.vmem %s5, %s1275
      // Predicated region
      $region41: #{encoder_forward.8} parent=39 // pred_check
        %p1277 = pneg %p144
      $region42: #{encoder_forward.8} parent=39 // pred_check_branch
        %1279 = sbr.rel (%p1277) target = $region44
      $region43: #{encoder_forward.8} parent=39 // pred_region
        _
      $region44: #{encoder_forward.8} parent=39 // pred_fallthru
        _
    $region40: #{encoder_forward.8} parent=5 // pred_fallthru
      _
    %p1280 = scmp.le.s32.totalorder 2, %s11
    // Predicated region
    $region45: #{encoder_forward.8} parent=5 // pred_check
      %p1281 = pneg %p1280
    $region46: #{encoder_forward.8} parent=5 // pred_check_branch
      %1283 = sbr.rel (%p1281) target = $region48
    $region47: #{encoder_forward.8} parent=5 // pred_region
      %s1284 = ssub.s32 %s11, 2
      // Predicated region
      $region49: #{encoder_forward.8} parent=47 // pred_check
        %p1285 = pneg %p150
      $region50: #{encoder_forward.8} parent=47 // pred_check_branch
        %1287 = sbr.rel (%p1285) target = $region52
      $region51: #{encoder_forward.8} parent=47 // pred_region
        %p1288 = scmp.lt.s32.totalorder %s17, 1
        %s1289 = scalar_select %p1288, %s17, 1
        %s1290 = smul.addr %s1289, 8
        %s1291 = smul.addr %s1290, 8
        %s1292 = scalar_lea.vmem %s5, %s1291
      $region52: #{encoder_forward.8} parent=47 // pred_fallthru
        _
    $region48: #{encoder_forward.8} parent=5 // pred_fallthru
      _
  $region6: #{encoder_forward.8} parent=0 // loop_footer
    %s15 = sadd.s32 1, %s11
  $region7: #{encoder_forward.8} parent=0 // loop_footer_branch
    %10 = sbr.rel target = $region3
  $region8: #{encoder_forward.8} parent=0 // loop_exit
    _

// kernel: encoder_forward.9
$region0: #{encoder_forward.9}
  #allocation0 [shape = 'u32[]', space=smem, size = 0x4, offset = 0x4, fixed_abs, tag = 'smem constant byte address 0x4 - core index']
  #allocation1 [shape = 'u32[72,128]{1,0:T(1,128)}', space=vmem, size = 0x9000, scoped, tag = 'internal scratch']
  %s0 = inlined_call_operand.vmem [shape: f32[2,64,4], index: 0, kind: input, shape index: {}]
  %s1 = inlined_call_operand.vmem [shape: f32[128,576], index: 1, kind: input, shape index: {}]
  %s2 = inlined_call_operand.vmem [shape: f32[128,1], index: 2, kind: input, shape index: {}]
  %s3 = inlined_call_operand.vmem [shape: f32[128,1152], index: 3, kind: input, shape index: {}]
  %s4 = inlined_call_operand.vmem [shape: f32[128,1], index: 4, kind: input, shape index: {}]
  %s5 = inlined_call_operand.vmem [shape: f32[2,128,4], index: 5, kind: output, shape index: {}]
  %s6 = sld [smem:[#allocation0]]
  $region53: #{encoder_forward.9} parent=0
    _
  %s8 = ssub.s32 1, %s6
  %s9 = scalar_select 0, %s8, %s6
  loop: start=0, step=1, limit=4
  $region2: #{encoder_forward.9} parent=0 // loop_pre_header
    _
  $region3: #{encoder_forward.9} parent=0 // loop_header
    %s11 = sphi 0, %s15
    %p12 = scmp.ge.s32.totalorder %s11, 4
    %s21 = sphi 0, %s23
    %s24 = sphi 0, %s21
    %s25 = sphi 0, %s24
    %s41 = sphi 0, %s25
    %s45 = sphi 0, %s45
    %s47 = sphi 0, %s45
    %s48 = sphi 0, %s47
    %s62 = sphi 0, %s48
    %s66 = sphi 0, %s66
    %s68 = sphi 0, %s66
    %s69 = sphi 0, %s68
    %s83 = sphi 0, %s69
    %s87 = sphi 0, %s87
    %s89 = sphi 0, %s87
    %s90 = sphi 0, %s89
    %s104 = sphi 0, %s90
    %s108 = sphi 0, %s108
    %s110 = sphi 0, %s108
    %s111 = sphi 0, %s110
    %s125 = sphi 0, %s111
    %s131 = sphi 0, %s133
    %s134 = sphi 0, %s131
    %s135 = sphi 0, %s134
    %s151 = sphi 0, %s135
  $region4: #{encoder_forward.9} parent=0 // loop_header_branch
    %14 = sbr.rel (%p12) target = $region8
  $region5: #{encoder_forward.9} parent=0 // loop_body
    %s16 = ssub.s32 %s11, 1
    %s17 = ssub.s32 %s11, 2
    %s18 = sadd.s32 %s11, 1
    %s19 = ssub.s32 %s11, %s18
    %p20 = scmp.eq.s32.totalorder %s19, 0
    %s22 = sadd.s32 %s21, 1
    %s23 = scalar_select %p20, %s21, %s22
    %p26 = pneg %p20
    %p27 = scmp.eq.s32.totalorder %s11, 1
    %p28 = por %p26, %p27
    %p29 = scmp.ne.s32.totalorder %s21, %s24
    %p30 = scmp.eq.s32.totalorder %s11, 0
    %p31 = por %p29, %p30
    %p32 = scmp.ne.s32.totalorder %s21, %s24
    %p33 = scmp.eq.s32.totalorder %s16, 1
    %p34 = por %p32, %p33
    %p35 = scmp.ne.s32.totalorder %s24, %s25
    %p36 = scmp.eq.s32.totalorder %s16, 0
    %p37 = por %p35, %p36
    %p38 = scmp.ne.s32.totalorder %s24, %s25
    %p39 = scmp.eq.s32.totalorder %s17, 1
    %p40 = por %p38, %p39
    %p42 = scmp.ne.s32.totalorder %s25, %s41
    %p43 = scmp.eq.s32.totalorder %s17, 0
    %p44 = por %p42, %p43
    %s46 = sadd.s32 %s45, 1
    %p49 = scmp.eq.s32.totalorder %s11, 1
    %p50 = scmp.ne.s32.totalorder %s45, %s47
    %p51 = scmp.eq.s32.totalorder %s11, 0
    %p52 = por %p50, %p51
    %p53 = scmp.ne.s32.totalorder %s45, %s47
    %p54 = scmp.eq.s32.totalorder %s16, 1
    %p55 = por %p53, %p54
    %p56 = scmp.ne.s32.totalorder %s47, %s48
    %p57 = scmp.eq.s32.totalorder %s16, 0
    %p58 = por %p56, %p57
    %p59 = scmp.ne.s32.totalorder %s47, %s48
    %p60 = scmp.eq.s32.totalorder %s17, 1
    %p61 = por %p59, %p60
    %p63 = scmp.ne.s32.totalorder %s48, %s62
    %p64 = scmp.eq.s32.totalorder %s17, 0
    %p65 = por %p63, %p64
    %s67 = sadd.s32 %s66, 1
    %p70 = scmp.eq.s32.totalorder %s11, 1
    %p71 = scmp.ne.s32.totalorder %s66, %s68
    %p72 = scmp.eq.s32.totalorder %s11, 0
    %p73 = por %p71, %p72
    %p74 = scmp.ne.s32.totalorder %s66, %s68
    %p75 = scmp.eq.s32.totalorder %s16, 1
    %p76 = por %p74, %p75
    %p77 = scmp.ne.s32.totalorder %s68, %s69
    %p78 = scmp.eq.s32.totalorder %s16, 0
    %p79 = por %p77, %p78
    %p80 = scmp.ne.s32.totalorder %s68, %s69
    %p81 = scmp.eq.s32.totalorder %s17, 1
    %p82 = por %p80, %p81
    %p84 = scmp.ne.s32.totalorder %s69, %s83
    %p85 = scmp.eq.s32.totalorder %s17, 0
    %p86 = por %p84, %p85
    %s88 = sadd.s32 %s87, 1
    %p91 = scmp.eq.s32.totalorder %s11, 1
    %p92 = scmp.ne.s32.totalorder %s87, %s89
    %p93 = scmp.eq.s32.totalorder %s11, 0
    %p94 = por %p92, %p93
    %p95 = scmp.ne.s32.totalorder %s87, %s89
    %p96 = scmp.eq.s32.totalorder %s16, 1
    %p97 = por %p95, %p96
    %p98 = scmp.ne.s32.totalorder %s89, %s90
    %p99 = scmp.eq.s32.totalorder %s16, 0
    %p100 = por %p98, %p99
    %p101 = scmp.ne.s32.totalorder %s89, %s90
    %p102 = scmp.eq.s32.totalorder %s17, 1
    %p103 = por %p101, %p102
    %p105 = scmp.ne.s32.totalorder %s90, %s104
    %p106 = scmp.eq.s32.totalorder %s17, 0
    %p107 = por %p105, %p106
    %s109 = sadd.s32 %s108, 1
    %p112 = scmp.eq.s32.totalorder %s11, 1
    %p113 = scmp.ne.s32.totalorder %s108, %s110
    %p114 = scmp.eq.s32.totalorder %s11, 0
    %p115 = por %p113, %p114
    %p116 = scmp.ne.s32.totalorder %s108, %s110
    %p117 = scmp.eq.s32.totalorder %s16, 1
    %p118 = por %p116, %p117
    %p119 = scmp.ne.s32.totalorder %s110, %s111
    %p120 = scmp.eq.s32.totalorder %s16, 0
    %p121 = por %p119, %p120
    %p122 = scmp.ne.s32.totalorder %s110, %s111
    %p123 = scmp.eq.s32.totalorder %s17, 1
    %p124 = por %p122, %p123
    %p126 = scmp.ne.s32.totalorder %s111, %s125
    %p127 = scmp.eq.s32.totalorder %s17, 0
    %p128 = por %p126, %p127
    %s129 = ssub.s32 %s11, %s18
    %p130 = scmp.eq.s32.totalorder %s129, 0
    %s132 = sadd.s32 %s131, 1
    %s133 = scalar_select %p130, %s131, %s132
    %p136 = pneg %p130
    %p137 = scmp.eq.s32.totalorder %s11, 1
    %p138 = por %p136, %p137
    %p139 = scmp.ne.s32.totalorder %s131, %s134
    %p140 = scmp.eq.s32.totalorder %s11, 0
    %p141 = por %p139, %p140
    %p142 = scmp.ne.s32.totalorder %s131, %s134
    %p143 = scmp.eq.s32.totalorder %s16, 1
    %p144 = por %p142, %p143
    %p145 = scmp.ne.s32.totalorder %s134, %s135
    %p146 = scmp.eq.s32.totalorder %s16, 0
    %p147 = por %p145, %p146
    %p148 = scmp.ne.s32.totalorder %s134, %s135
    %p149 = scmp.eq.s32.totalorder %s17, 1
    %p150 = por %p148, %p149
    %p152 = scmp.ne.s32.totalorder %s135, %s151
    %p153 = scmp.eq.s32.totalorder %s17, 0
    %p154 = por %p152, %p153
    %p155 = scmp.le.s32.totalorder 1, %s11
    %p156 = scmp.lt.s32.totalorder %s11, 3
    %p157 = pnand %p155, %p156
    %p158 = pneg %p157
    // Predicated region
    $region9: #{encoder_forward.9} parent=5 // pred_check
      _
    $region10: #{encoder_forward.9} parent=5 // pred_check_branch
      %160 = sbr.rel (%p157) target = $region12
    $region11: #{encoder_forward.9} parent=5 // pred_region
      %s161 = ssub.s32 %s11, 1
      // Predicated region
      $region13: #{encoder_forward.9} parent=11 // pred_check
        %p162 = pneg %p58
      $region14: #{encoder_forward.9} parent=11 // pred_check_branch
        %164 = sbr.rel (%p162) target = $region16
      $region15: #{encoder_forward.9} parent=11 // pred_region
        _
      $region16: #{encoder_forward.9} parent=11 // pred_fallthru
        _
      // Predicated region
      $region17: #{encoder_forward.9} parent=11 // pred_check
        %p165 = pneg %p79
      $region18: #{encoder_forward.9} parent=11 // pred_check_branch
        %167 = sbr.rel (%p165) target = $region20
      $region19: #{encoder_forward.9} parent=11 // pred_region
        _
      $region20: #{encoder_forward.9} parent=11 // pred_fallthru
        _
      // Predicated region
      $region21: #{encoder_forward.9} parent=11 // pred_check
        %p168 = pneg %p100
      $region22: #{encoder_forward.9} parent=11 // pred_check_branch
        %170 = sbr.rel (%p168) target = $region24
      $region23: #{encoder_forward.9} parent=11 // pred_region
        _
      $region24: #{encoder_forward.9} parent=11 // pred_fallthru
        _
      // Predicated region
      $region25: #{encoder_forward.9} parent=11 // pred_check
        %p171 = pneg %p121
      $region26: #{encoder_forward.9} parent=11 // pred_check_branch
        %173 = sbr.rel (%p171) target = $region28
      $region27: #{encoder_forward.9} parent=11 // pred_region
        _
      $region28: #{encoder_forward.9} parent=11 // pred_fallthru
        _
    $region12: #{encoder_forward.9} parent=5 // pred_fallthru
      _
    %p174 = scmp.lt.s32.totalorder %s11, 2
    // Predicated region
    $region29: #{encoder_forward.9} parent=5 // pred_check
      %p175 = pneg %p174
    $region30: #{encoder_forward.9} parent=5 // pred_check_branch
      %177 = sbr.rel (%p175) target = $region32
    $region31: #{encoder_forward.9} parent=5 // pred_region
      // Predicated region
      $region33: #{encoder_forward.9} parent=31 // pred_check
        %p178 = pneg %p31
      $region34: #{encoder_forward.9} parent=31 // pred_check_branch
        %180 = sbr.rel (%p178) target = $region36
      $region35: #{encoder_forward.9} parent=31 // pred_region
        %p181 = scmp.lt.s32.totalorder %s11, 1
        %s182 = scalar_select %p181, %s11, 1
        %s183 = smul.addr %s182, 8
        %s184 = smul.addr %s183, 8
        %s185 = scalar_lea.vmem %s0, %s184
      $region36: #{encoder_forward.9} parent=31 // pred_fallthru
        _
    $region32: #{encoder_forward.9} parent=5 // pred_fallthru
      _
    %p186 = scmp.le.s32.totalorder 1, %s11
    %p187 = scmp.lt.s32.totalorder %s11, 3
    %p188 = pnand %p186, %p187
    %p189 = pneg %p188
    // Predicated region
    $region37: #{encoder_forward.9} parent=5 // pred_check
      _
    $region38: #{encoder_forward.9} parent=5 // pred_check_branch
      %191 = sbr.rel (%p188) target = $region40
    $region39: #{encoder_forward.9} parent=5 // pred_region
      %s192 = ssub.s32 %s11, 1
      %p193 = scmp.lt.s32.totalorder %s16, 1
      %s194 = scalar_select %p193, %s16, 1
      %s195 = smul.addr %s194, 8
      %s196 = smul.addr %s195, 8
      %s197 = scalar_lea.vmem %s0, %s196
      %p198 = pneg %p37
      %p199 = pneg %p34
      %p200 = pneg %p58
      %p201 = pneg %p55
      %p202 = pneg %p79
      %p203 = pneg %p76
      %p204 = pneg %p100
      %p205 = pneg %p97
      %p206 = pneg %p121
      %p207 = pneg %p118
      %p208 = pneg %p147
      %p209 = pneg %p144
      %p210 = scmp.lt.s32.totalorder %s16, 1
      %s211 = scalar_select %p210, %s16, 1
      %s212 = smul.addr %s211, 16
      %s213 = smul.addr %s212, 8
      %s214 = scalar_lea.vmem %s5, %s213
      %p215 = scmp.lt.s32.totalorder %s16, 1
      %s216 = scalar_select %p215, %s16, 1
      %s217 = smul.addr %s216, 8
      %s218 = smul.addr %s217, 8
      %s219 = scalar_lea.vmem %s0, %s218
      %p220 = scmp.lt.s32.totalorder %s16, 1
      %s221 = scalar_select %p220, %s16, 1
      %s222 = smul.addr %s221, 16
      %s223 = smul.addr %s222, 8
      %s224 = scalar_lea.vmem %s5, %s223
      %v225 = vld [vmem:[%s219] sm:$0xff]
      %v226 = vld [vmem:[%s219 + $0x8] sm:$0xff]
      %v227 = vld [vmem:[%s219 + $0x10] sm:$0xff]
      %v228 = vld [vmem:[%s219 + $0x18] sm:$0xff]
      %v229 = vld [vmem:[%s219 + $0x20] sm:$0xff]
      %v230 = vld [vmem:[%s219 + $0x28] sm:$0xff]
      %v231 = vld [vmem:[%s219 + $0x30] sm:$0xff]
      %v232 = vld [vmem:[%s219 + $0x38] sm:$0xff]
      %v233 = vld [vmem:[%s1] sm:$0xff]
      %v234 = vld [vmem:[%s1 + $0x8] sm:$0xff]
      %v235 = vld [vmem:[%s1 + $0x10] sm:$0xff]
      %v236 = vld [vmem:[%s1 + $0x18] sm:$0xff]
      %v237 = vld [vmem:[%s1 + $0x20] sm:$0xff]
      %v238 = vld [vmem:[%s1 + $0x28] sm:$0xff]
      %v239 = vld [vmem:[%s1 + $0x30] sm:$0xff]
      %v240 = vld [vmem:[%s1 + $0x38] sm:$0xff]
      %v241 = vld [vmem:[%s1 + $0x40] sm:$0xff]
      %v242 = vld [vmem:[%s1 + $0x48] sm:$0xff]
      %v243 = vld [vmem:[%s1 + $0x50] sm:$0xff]
      %v244 = vld [vmem:[%s1 + $0x58] sm:$0xff]
      %v245 = vld [vmem:[%s1 + $0x60] sm:$0xff]
      %v246 = vld [vmem:[%s1 + $0x68] sm:$0xff]
      %v247 = vld [vmem:[%s1 + $0x70] sm:$0xff]
      %v248 = vld [vmem:[%s1 + $0x78] sm:$0xff]
      %v249 = vld [vmem:[%s1 + $0x80] sm:$0xff]
      %v250 = vld [vmem:[%s1 + $0x88] sm:$0xff]
      %v251 = vld [vmem:[%s1 + $0x90] sm:$0xff]
      %v252 = vld [vmem:[%s1 + $0x98] sm:$0xff]
      %v253 = vld [vmem:[%s1 + $0xa0] sm:$0xff]
      %v254 = vld [vmem:[%s1 + $0xa8] sm:$0xff]
      %v255 = vld [vmem:[%s1 + $0xb0] sm:$0xff]
      %v256 = vld [vmem:[%s1 + $0xb8] sm:$0xff]
      %v257 = vld [vmem:[%s1 + $0xc0] sm:$0xff]
      %v258 = vld [vmem:[%s1 + $0xc8] sm:$0xff]
      %v259 = vld [vmem:[%s1 + $0xd0] sm:$0xff]
      %v260 = vld [vmem:[%s1 + $0xd8] sm:$0xff]
      %v261 = vld [vmem:[%s1 + $0xe0] sm:$0xff]
      %v262 = vld [vmem:[%s1 + $0xe8] sm:$0xff]
      %v263 = vld [vmem:[%s1 + $0xf0] sm:$0xff]
      %v264 = vld [vmem:[%s1 + $0xf8] sm:$0xff]
      %v265 = vld [vmem:[%s1 + $0x100] sm:$0xff]
      %v266 = vld [vmem:[%s1 + $0x108] sm:$0xff]
      %v267 = vld [vmem:[%s1 + $0x110] sm:$0xff]
      %v268 = vld [vmem:[%s1 + $0x118] sm:$0xff]
      %v269 = vld [vmem:[%s1 + $0x120] sm:$0xff]
      %v270 = vld [vmem:[%s1 + $0x128] sm:$0xff]
      %v271 = vld [vmem:[%s1 + $0x130] sm:$0xff]
      %v272 = vld [vmem:[%s1 + $0x138] sm:$0xff]
      %v273 = vld [vmem:[%s1 + $0x140] sm:$0xff]
      %v274 = vld [vmem:[%s1 + $0x148] sm:$0xff]
      %v275 = vld [vmem:[%s1 + $0x150] sm:$0xff]
      %v276 = vld [vmem:[%s1 + $0x158] sm:$0xff]
      %v277 = vld [vmem:[%s1 + $0x160] sm:$0xff]
      %v278 = vld [vmem:[%s1 + $0x168] sm:$0xff]
      %v279 = vld [vmem:[%s1 + $0x170] sm:$0xff]
      %v280 = vld [vmem:[%s1 + $0x178] sm:$0xff]
      %v281 = vld [vmem:[%s1 + $0x180] sm:$0xff]
      %v282 = vld [vmem:[%s1 + $0x188] sm:$0xff]
      %v283 = vld [vmem:[%s1 + $0x190] sm:$0xff]
      %v284 = vld [vmem:[%s1 + $0x198] sm:$0xff]
      %v285 = vld [vmem:[%s1 + $0x1a0] sm:$0xff]
      %v286 = vld [vmem:[%s1 + $0x1a8] sm:$0xff]
      %v287 = vld [vmem:[%s1 + $0x1b0] sm:$0xff]
      %v288 = vld [vmem:[%s1 + $0x1b8] sm:$0xff]
      %v289 = vld [vmem:[%s1 + $0x1c0] sm:$0xff]
      %v290 = vld [vmem:[%s1 + $0x1c8] sm:$0xff]
      %v291 = vld [vmem:[%s1 + $0x1d0] sm:$0xff]
      %v292 = vld [vmem:[%s1 + $0x1d8] sm:$0xff]
      %v293 = vld [vmem:[%s1 + $0x1e0] sm:$0xff]
      %v294 = vld [vmem:[%s1 + $0x1e8] sm:$0xff]
      %v295 = vld [vmem:[%s1 + $0x1f0] sm:$0xff]
      %v296 = vld [vmem:[%s1 + $0x1f8] sm:$0xff]
      %v297 = vld [vmem:[%s1 + $0x200] sm:$0xff]
      %v298 = vld [vmem:[%s1 + $0x208] sm:$0xff]
      %v299 = vld [vmem:[%s1 + $0x210] sm:$0xff]
      %v300 = vld [vmem:[%s1 + $0x218] sm:$0xff]
      %v301 = vld [vmem:[%s1 + $0x220] sm:$0xff]
      %v302 = vld [vmem:[%s1 + $0x228] sm:$0xff]
      %v303 = vld [vmem:[%s1 + $0x230] sm:$0xff]
      %v304 = vld [vmem:[%s1 + $0x238] sm:$0xff]
      %v305 = vld [vmem:[%s1 + $0x240] sm:$0xff]
      %v306 = vld [vmem:[%s1 + $0x248] sm:$0xff]
      %v307 = vld [vmem:[%s1 + $0x250] sm:$0xff]
      %v308 = vld [vmem:[%s1 + $0x258] sm:$0xff]
      %v309 = vld [vmem:[%s1 + $0x260] sm:$0xff]
      %v310 = vld [vmem:[%s1 + $0x268] sm:$0xff]
      %v311 = vld [vmem:[%s1 + $0x270] sm:$0xff]
      %v312 = vld [vmem:[%s1 + $0x278] sm:$0xff]
      %v313 = vld [vmem:[%s2] sm:$0xff]
      %v314 = vld [vmem:[%s2 + $0x8] sm:$0xff]
      %v315 = vld [vmem:[%s2 + $0x10] sm:$0xff]
      %v316 = vld [vmem:[%s2 + $0x18] sm:$0xff]
      %v317 = vld [vmem:[%s2 + $0x20] sm:$0xff]
      %v318 = vld [vmem:[%s2 + $0x28] sm:$0xff]
      %v319 = vld [vmem:[%s2 + $0x30] sm:$0xff]
      %v320 = vld [vmem:[%s2 + $0x38] sm:$0xff]
      %v321 = vld [vmem:[%s2 + $0x40] sm:$0xff]
      %v322 = vld [vmem:[%s2 + $0x48] sm:$0xff]
      %v323 = vld [vmem:[%s2 + $0x50] sm:$0xff]
      %v324 = vld [vmem:[%s2 + $0x58] sm:$0xff]
      %v325 = vld [vmem:[%s2 + $0x60] sm:$0xff]
      %v326 = vld [vmem:[%s2 + $0x68] sm:$0xff]
      %v327 = vld [vmem:[%s2 + $0x70] sm:$0xff]
      %v328 = vld [vmem:[%s2 + $0x78] sm:$0xff]
      %v329 = vlaneseq
      %v330 = vand.u32 %v329, 127
      %v331 = vand.u32 %v330, 1
      %vm332 = vcmask 1047584
      %333 = vrot.lane.b32.xlu0 %v225, 4
      %v334 = vpop.permute.xlu0 %333
      %v335 = vsel %vm332, %v334, %v225
      %336 = vrot.lane.b32.xlu0 %v226, 4
      %v337 = vpop.permute.xlu0 %336
      %v338 = vsel %vm332, %v337, %v226
      %339 = vrot.lane.b32.xlu0 %v227, 4
      %v340 = vpop.permute.xlu0 %339
      %v341 = vsel %vm332, %v340, %v227
      %342 = vrot.lane.b32.xlu0 %v228, 4
      %v343 = vpop.permute.xlu0 %342
      %v344 = vsel %vm332, %v343, %v228
      %345 = vrot.lane.b32.xlu0 %v229, 4
      %v346 = vpop.permute.xlu0 %345
      %v347 = vsel %vm332, %v346, %v229
      %348 = vrot.lane.b32.xlu0 %v230, 4
      %v349 = vpop.permute.xlu0 %348
      %v350 = vsel %vm332, %v349, %v230
      %351 = vrot.lane.b32.xlu0 %v231, 4
      %v352 = vpop.permute.xlu0 %351
      %v353 = vsel %vm332, %v352, %v231
      %354 = vrot.lane.b32.xlu0 %v232, 4
      %v355 = vpop.permute.xlu0 %354
      %v356 = vsel %vm332, %v355, %v232
      %357 = vrot.lane.b32.xlu0 %v335, 4
      %v358 = vpop.permute.xlu0 %357
      %359 = vrot.lane.b32.xlu0 %v338, 4
      %v360 = vpop.permute.xlu0 %359
      %361 = vrot.lane.b32.xlu0 %v341, 4
      %v362 = vpop.permute.xlu0 %361
      %363 = vrot.lane.b32.xlu0 %v344, 4
      %v364 = vpop.permute.xlu0 %363
      %365 = vrot.lane.b32.xlu0 %v347, 4
      %v366 = vpop.permute.xlu0 %365
      %367 = vrot.lane.b32.xlu0 %v350, 4
      %v368 = vpop.permute.xlu0 %367
      %369 = vrot.lane.b32.xlu0 %v353, 4
      %v370 = vpop.permute.xlu0 %369
      %371 = vrot.lane.b32.xlu0 %v356, 4
      %v372 = vpop.permute.xlu0 %371
      %v373 = vsel %vm332, %v358, %v225
      %v374 = vsel %vm332, %v360, %v226
      %v375 = vsel %vm332, %v362, %v227
      %v376 = vsel %vm332, %v364, %v228
      %v377 = vsel %vm332, %v366, %v229
      %v378 = vsel %vm332, %v368, %v230
      %v379 = vsel %vm332, %v370, %v231
      %v380 = vsel %vm332, %v372, %v232
      %vm381 = vcmp.ge.s32.totalorder %v330, 2
      %vm382 = vcmp.ge.s32.totalorder %v331, 1
      %vm383 = vmand %vm381, %vm382
      %392 = vrot.lane.b32.xlu0 %v373, 127
      %v393 = vpop.permute.xlu0 %392
      %394 = vrot.lane.b32.xlu0 %v374, 127
      %v395 = vpop.permute.xlu0 %394
      %396 = vrot.lane.b32.xlu0 %v375, 127
      %v397 = vpop.permute.xlu0 %396
      %398 = vrot.lane.b32.xlu0 %v376, 127
      %v399 = vpop.permute.xlu0 %398
      %400 = vrot.lane.b32.xlu0 %v377, 127
      %v401 = vpop.permute.xlu0 %400
      %402 = vrot.lane.b32.xlu0 %v378, 127
      %v403 = vpop.permute.xlu0 %402
      %404 = vrot.lane.b32.xlu0 %v379, 127
      %v405 = vpop.permute.xlu0 %404
      %406 = vrot.lane.b32.xlu0 %v380, 127
      %v407 = vpop.permute.xlu0 %406
      %v416 = vsel %vm383, %v393, 0.0
      %v417 = vsel %vm383, %v395, 0.0
      %v418 = vsel %vm383, %v397, 0.0
      %v419 = vsel %vm383, %v399, 0.0
      %v420 = vsel %vm383, %v401, 0.0
      %v421 = vsel %vm383, %v403, 0.0
      %v422 = vsel %vm383, %v405, 0.0
      %v423 = vsel %vm383, %v407, 0.0
      %424 = vrot.lane.b32.xlu0 %v373, 126
      %v425 = vpop.permute.xlu0 %424
      %426 = vrot.lane.b32.xlu0 %v374, 126
      %v427 = vpop.permute.xlu0 %426
      %428 = vrot.lane.b32.xlu0 %v375, 126
      %v429 = vpop.permute.xlu0 %428
      %430 = vrot.lane.b32.xlu0 %v376, 126
      %v431 = vpop.permute.xlu0 %430
      %432 = vrot.lane.b32.xlu0 %v377, 126
      %v433 = vpop.permute.xlu0 %432
      %434 = vrot.lane.b32.xlu0 %v378, 126
      %v435 = vpop.permute.xlu0 %434
      %436 = vrot.lane.b32.xlu0 %v379, 126
      %v437 = vpop.permute.xlu0 %436
      %438 = vrot.lane.b32.xlu0 %v380, 126
      %v439 = vpop.permute.xlu0 %438
      %v448 = vsel %vm381, %v425, 0.0
      %v449 = vsel %vm381, %v427, 0.0
      %v450 = vsel %vm381, %v429, 0.0
      %v451 = vsel %vm381, %v431, 0.0
      %v452 = vsel %vm381, %v433, 0.0
      %v453 = vsel %vm381, %v435, 0.0
      %v454 = vsel %vm381, %v437, 0.0
      %v455 = vsel %vm381, %v439, 0.0
      %vm456 = vcmp.le.s32.totalorder %v331, 0
      %vm457 = vmand %vm381, %vm456
      %458 = vrot.lane.b32.xlu0 %v373, 125
      %v459 = vpop.permute.xlu0 %458
      %460 = vrot.lane.b32.xlu0 %v374, 125
      %v461 = vpop.permute.xlu0 %460
      %462 = vrot.lane.b32.xlu0 %v375, 125
      %v463 = vpop.permute.xlu0 %462
      %464 = vrot.lane.b32.xlu0 %v376, 125
      %v465 = vpop.permute.xlu0 %464
      %466 = vrot.lane.b32.xlu0 %v377, 125
      %v467 = vpop.permute.xlu0 %466
      %468 = vrot.lane.b32.xlu0 %v378, 125
      %v469 = vpop.permute.xlu0 %468
      %470 = vrot.lane.b32.xlu0 %v379, 125
      %v471 = vpop.permute.xlu0 %470
      %472 = vrot.lane.b32.xlu0 %v380, 125
      %v473 = vpop.permute.xlu0 %472
      %v482 = vsel %vm457, %v459, 0.0
      %v483 = vsel %vm457, %v461, 0.0
      %v484 = vsel %vm457, %v463, 0.0
      %v485 = vsel %vm457, %v465, 0.0
      %v486 = vsel %vm457, %v467, 0.0
      %v487 = vsel %vm457, %v469, 0.0
      %v488 = vsel %vm457, %v471, 0.0
      %v489 = vsel %vm457, %v473, 0.0
      %v490 = vsel %vm382, %v459, 0.0
      %v491 = vsel %vm382, %v461, 0.0
      %v492 = vsel %vm382, %v463, 0.0
      %v493 = vsel %vm382, %v465, 0.0
      %v494 = vsel %vm382, %v467, 0.0
      %v495 = vsel %vm382, %v469, 0.0
      %v496 = vsel %vm382, %v471, 0.0
      %v497 = vsel %vm382, %v473, 0.0
      %v498 = vsel %vm456, %v393, 0.0
      %v499 = vsel %vm456, %v395, 0.0
      %v500 = vsel %vm456, %v397, 0.0
      %v501 = vsel %vm456, %v399, 0.0
      %v502 = vsel %vm456, %v401, 0.0
      %v503 = vsel %vm456, %v403, 0.0
      %v504 = vsel %vm456, %v405, 0.0
      %v505 = vsel %vm456, %v407, 0.0
      %vm506 = vcmp.lt.s32.totalorder %v330, 2
      %vm507 = vmand %vm506, %vm382
      %v508 = vsel %vm507, %v393, 0.0
      %v509 = vsel %vm507, %v395, 0.0
      %v510 = vsel %vm507, %v397, 0.0
      %v511 = vsel %vm507, %v399, 0.0
      %v512 = vsel %vm507, %v401, 0.0
      %v513 = vsel %vm507, %v403, 0.0
      %v514 = vsel %vm507, %v405, 0.0
      %v515 = vsel %vm507, %v407, 0.0
      %v516 = vsel %vm506, %v425, 0.0
      %v517 = vsel %vm506, %v427, 0.0
      %v518 = vsel %vm506, %v429, 0.0
      %v519 = vsel %vm506, %v431, 0.0
      %v520 = vsel %vm506, %v433, 0.0
      %v521 = vsel %vm506, %v435, 0.0
      %v522 = vsel %vm506, %v437, 0.0
      %v523 = vsel %vm506, %v439, 0.0
      %vm524 = vmand %vm506, %vm456
      %v525 = vsel %vm524, %v459, 0.0
      %v526 = vsel %vm524, %v461, 0.0
      %v527 = vsel %vm524, %v463, 0.0
      %v528 = vsel %vm524, %v465, 0.0
      %v529 = vsel %vm524, %v467, 0.0
      %v530 = vsel %vm524, %v469, 0.0
      %v531 = vsel %vm524, %v471, 0.0
      %v532 = vsel %vm524, %v473, 0.0
      %534 = vset.pattern.permute.xlu0 0
      %535 = vperm.xlu0 %534, %v313
      %v536 = vpop.permute.xlu0 %535
      %539 = vset.pattern.permute.xlu0 0
      %540 = vperm.xlu0 %539, %v314
      %v541 = vpop.permute.xlu0 %540
      %544 = vset.pattern.permute.xlu0 0
      %545 = vperm.xlu0 %544, %v315
      %v546 = vpop.permute.xlu0 %545
      %549 = vset.pattern.permute.xlu0 0
      %550 = vperm.xlu0 %549, %v316
      %v551 = vpop.permute.xlu0 %550
      %554 = vset.pattern.permute.xlu0 0
      %555 = vperm.xlu0 %554, %v317
      %v556 = vpop.permute.xlu0 %555
      %559 = vset.pattern.permute.xlu0 0
      %560 = vperm.xlu0 %559, %v318
      %v561 = vpop.permute.xlu0 %560
      %564 = vset.pattern.permute.xlu0 0
      %565 = vperm.xlu0 %564, %v319
      %v566 = vpop.permute.xlu0 %565
      %569 = vset.pattern.permute.xlu0 0
      %570 = vperm.xlu0 %569, %v320
      %v571 = vpop.permute.xlu0 %570
      %574 = vset.pattern.permute.xlu0 0
      %575 = vperm.xlu0 %574, %v321
      %v576 = vpop.permute.xlu0 %575
      %579 = vset.pattern.permute.xlu0 0
      %580 = vperm.xlu0 %579, %v322
      %v581 = vpop.permute.xlu0 %580
      %584 = vset.pattern.permute.xlu0 0
      %585 = vperm.xlu0 %584, %v323
      %v586 = vpop.permute.xlu0 %585
      %589 = vset.pattern.permute.xlu0 0
      %590 = vperm.xlu0 %589, %v324
      %v591 = vpop.permute.xlu0 %590
      %594 = vset.pattern.permute.xlu0 0
      %595 = vperm.xlu0 %594, %v325
      %v596 = vpop.permute.xlu0 %595
      %599 = vset.pattern.permute.xlu0 0
      %600 = vperm.xlu0 %599, %v326
      %v601 = vpop.permute.xlu0 %600
      %604 = vset.pattern.permute.xlu0 0
      %605 = vperm.xlu0 %604, %v327
      %v606 = vpop.permute.xlu0 %605
      %609 = vset.pattern.permute.xlu0 0
      %610 = vperm.xlu0 %609, %v328
      %v611 = vpop.permute.xlu0 %610
      %vm613 = vcmask 523264
      %v615 = vsel %vm613, %v237, 0
      %v618 = vsel %vm613, %v242, 0
      %v621 = vsel %vm613, %v247, 0
      %v624 = vsel %vm613, %v252, 0
      %v627 = vsel %vm613, %v257, 0
      %v630 = vsel %vm613, %v262, 0
      %v633 = vsel %vm613, %v267, 0
      %v636 = vsel %vm613, %v272, 0
      %v639 = vsel %vm613, %v277, 0
      %v642 = vsel %vm613, %v282, 0
      %v645 = vsel %vm613, %v287, 0
      %v648 = vsel %vm613, %v292, 0
      %v651 = vsel %vm613, %v297, 0
      %v654 = vsel %vm613, %v302, 0
      %v657 = vsel %vm613, %v307, 0
      %v660 = vsel %vm613, %v312, 0
      %662 = vmatpush.msra.mxu0 %v455
      %663 = vmatpush.msra.mxu0 %v454
      %664 = vmatpush.msra.mxu0 %v453
      %665 = vmatpush.msra.mxu0 %v452
      %666 = vmatpush.msra.mxu0 %v451
      %667 = vmatpush.msra.mxu0 %v450
      %668 = vmatpush.msra.mxu0 %v449
      %669 = vmatpush.msra.mxu0 %v448
      %670 = vmatpush.msra.mxu0 %v423
      %671 = vmatpush.msra.mxu0 %v422
      %672 = vmatpush.msra.mxu0 %v421
      %673 = vmatpush.msra.mxu0 %v420
      %674 = vmatpush.msra.mxu0 %v419
      %675 = vmatpush.msra.mxu0 %v418
      %676 = vmatpush.msra.mxu0 %v417
      %677 = vmatpush.msra.mxu0 %v416
      %678 = vmatmul.f32.gmra.mxu0 %v233
      %v679 = vpop.f32.mrf.mxu0
      %v680 = vadd.f32 %v536, %v679
      %681 = vmatmul.f32.gmra.mxu0 %v238
      %v682 = vpop.f32.mrf.mxu0
      %v683 = vadd.f32 %v541, %v682
      %684 = vmatmul.f32.gmra.mxu0 %v243
      %v685 = vpop.f32.mrf.mxu0
      %v686 = vadd.f32 %v546, %v685
      %687 = vmatmul.f32.gmra.mxu0 %v248
      %v688 = vpop.f32.mrf.mxu0
      %v689 = vadd.f32 %v551, %v688
      %690 = vmatmul.f32.gmra.mxu0 %v253
      %v691 = vpop.f32.mrf.mxu0
      %v692 = vadd.f32 %v556, %v691
      %693 = vmatmul.f32.gmra.mxu0 %v258
      %v694 = vpop.f32.mrf.mxu0
      %v695 = vadd.f32 %v561, %v694
      %696 = vmatmul.f32.gmra.mxu0 %v263
      %v697 = vpop.f32.mrf.mxu0
      %v698 = vadd.f32 %v566, %v697
      %699 = vmatmul.f32.gmra.mxu0 %v268
      %v700 = vpop.f32.mrf.mxu0
      %v701 = vadd.f32 %v571, %v700
      %702 = vmatmul.f32.gmra.mxu0 %v273
      %v703 = vpop.f32.mrf.mxu0
      %v704 = vadd.f32 %v576, %v703
      %705 = vmatmul.f32.gmra.mxu0 %v278
      %v706 = vpop.f32.mrf.mxu0
      %v707 = vadd.f32 %v581, %v706
      %708 = vmatmul.f32.gmra.mxu0 %v283
      %v709 = vpop.f32.mrf.mxu0
      %v710 = vadd.f32 %v586, %v709
      %711 = vmatmul.f32.gmra.mxu0 %v288
      %v712 = vpop.f32.mrf.mxu0
      %v713 = vadd.f32 %v591, %v712
      %714 = vmatmul.f32.gmra.mxu0 %v293
      %v715 = vpop.f32.mrf.mxu0
      %v716 = vadd.f32 %v596, %v715
      %717 = vmatmul.f32.gmra.mxu0 %v298
      %v718 = vpop.f32.mrf.mxu0
      %v719 = vadd.f32 %v601, %v718
      %720 = vmatmul.f32.gmra.mxu0 %v303
      %v721 = vpop.f32.mrf.mxu0
      %v722 = vadd.f32 %v606, %v721
      %723 = vmatmul.f32.gmra.mxu0 %v308
      %v724 = vpop.f32.mrf.mxu0
      %v725 = vadd.f32 %v611, %v724
      %726 = vdwg.mxu0
      %727 = vmatpush.msra.mxu0 %v497
      %728 = vmatpush.msra.mxu0 %v496
      %729 = vmatpush.msra.mxu0 %v495
      %730 = vmatpush.msra.mxu0 %v494
      %731 = vmatpush.msra.mxu0 %v493
      %732 = vmatpush.msra.mxu0 %v492
      %733 = vmatpush.msra.mxu0 %v491
      %734 = vmatpush.msra.mxu0 %v490
      %735 = vmatpush.msra.mxu0 %v489
      %736 = vmatpush.msra.mxu0 %v488
      %737 = vmatpush.msra.mxu0 %v487
      %738 = vmatpush.msra.mxu0 %v486
      %739 = vmatpush.msra.mxu0 %v485
      %740 = vmatpush.msra.mxu0 %v484
      %741 = vmatpush.msra.mxu0 %v483
      %742 = vmatpush.msra.mxu0 %v482
      %743 = vmatmul.f32.gmra.mxu0 %v234
      %v744 = vpop.f32.mrf.mxu0
      %v745 = vadd.f32 %v680, %v744
      %746 = vmatmul.f32.gmra.mxu0 %v239
      %v747 = vpop.f32.mrf.mxu0
      %v748 = vadd.f32 %v683, %v747
      %749 = vmatmul.f32.gmra.mxu0 %v244
      %v750 = vpop.f32.mrf.mxu0
      %v751 = vadd.f32 %v686, %v750
      %752 = vmatmul.f32.gmra.mxu0 %v249
      %v753 = vpop.f32.mrf.mxu0
      %v754 = vadd.f32 %v689, %v753
      %755 = vmatmul.f32.gmra.mxu0 %v254
      %v756 = vpop.f32.mrf.mxu0
      %v757 = vadd.f32 %v692, %v756
      %758 = vmatmul.f32.gmra.mxu0 %v259
      %v759 = vpop.f32.mrf.mxu0
      %v760 = vadd.f32 %v695, %v759
      %761 = vmatmul.f32.gmra.mxu0 %v264
      %v762 = vpop.f32.mrf.mxu0
      %v763 = vadd.f32 %v698, %v762
      %764 = vmatmul.f32.gmra.mxu0 %v269
      %v765 = vpop.f32.mrf.mxu0
      %v766 = vadd.f32 %v701, %v765
      %767 = vmatmul.f32.gmra.mxu0 %v274
      %v768 = vpop.f32.mrf.mxu0
      %v769 = vadd.f32 %v704, %v768
      %770 = vmatmul.f32.gmra.mxu0 %v279
      %v771 = vpop.f32.mrf.mxu0
      %v772 = vadd.f32 %v707, %v771
      %773 = vmatmul.f32.gmra.mxu0 %v284
      %v774 = vpop.f32.mrf.mxu0
      %v775 = vadd.f32 %v710, %v774
      %776 = vmatmul.f32.gmra.mxu0 %v289
      %v777 = vpop.f32.mrf.mxu0
      %v778 = vadd.f32 %v713, %v777
      %779 = vmatmul.f32.gmra.mxu0 %v294
      %v780 = vpop.f32.mrf.mxu0
      %v781 = vadd.f32 %v716, %v780
      %782 = vmatmul.f32.gmra.mxu0 %v299
      %v783 = vpop.f32.mrf.mxu0
      %v784 = vadd.f32 %v719, %v783
      %785 = vmatmul.f32.gmra.mxu0 %v304
      %v786 = vpop.f32.mrf.mxu0
      %v787 = vadd.f32 %v722, %v786
      %788 = vmatmul.f32.gmra.mxu0 %v309
      %v789 = vpop.f32.mrf.mxu0
      %v790 = vadd.f32 %v725, %v789
      %791 = vdwg.mxu0
      %792 = vmatpush.msra.mxu0 %v505
      %793 = vmatpush.msra.mxu0 %v504
      %794 = vmatpush.msra.mxu0 %v503
      %795 = vmatpush.msra.mxu0 %v502
      %796 = vmatpush.msra.mxu0 %v501
      %797 = vmatpush.msra.mxu0 %v500
      %798 = vmatpush.msra.mxu0 %v499
      %799 = vmatpush.msra.mxu0 %v498
      %800 = vmatpush.msra.mxu0 %v232
      %801 = vmatpush.msra.mxu0 %v231
      %802 = vmatpush.msra.mxu0 %v230
      %803 = vmatpush.msra.mxu0 %v229
      %804 = vmatpush.msra.mxu0 %v228
      %805 = vmatpush.msra.mxu0 %v227
      %806 = vmatpush.msra.mxu0 %v226
      %807 = vmatpush.msra.mxu0 %v225
      %808 = vmatmul.f32.gmra.mxu0 %v235
      %v809 = vpop.f32.mrf.mxu0
      %v810 = vadd.f32 %v745, %v809
      %811 = vmatmul.f32.gmra.mxu0 %v240
      %v812 = vpop.f32.mrf.mxu0
      %v813 = vadd.f32 %v748, %v812
      %814 = vmatmul.f32.gmra.mxu0 %v245
      %v815 = vpop.f32.mrf.mxu0
      %v816 = vadd.f32 %v751, %v815
      %817 = vmatmul.f32.gmra.mxu0 %v250
      %v818 = vpop.f32.mrf.mxu0
      %v819 = vadd.f32 %v754, %v818
      %820 = vmatmul.f32.gmra.mxu0 %v255
      %v821 = vpop.f32.mrf.mxu0
      %v822 = vadd.f32 %v757, %v821
      %823 = vmatmul.f32.gmra.mxu0 %v260
      %v824 = vpop.f32.mrf.mxu0
      %v825 = vadd.f32 %v760, %v824
      %826 = vmatmul.f32.gmra.mxu0 %v265
      %v827 = vpop.f32.mrf.mxu0
      %v828 = vadd.f32 %v763, %v827
      %829 = vmatmul.f32.gmra.mxu0 %v270
      %v830 = vpop.f32.mrf.mxu0
      %v831 = vadd.f32 %v766, %v830
      %832 = vmatmul.f32.gmra.mxu0 %v275
      %v833 = vpop.f32.mrf.mxu0
      %v834 = vadd.f32 %v769, %v833
      %835 = vmatmul.f32.gmra.mxu0 %v280
      %v836 = vpop.f32.mrf.mxu0
      %v837 = vadd.f32 %v772, %v836
      %838 = vmatmul.f32.gmra.mxu0 %v285
      %v839 = vpop.f32.mrf.mxu0
      %v840 = vadd.f32 %v775, %v839
      %841 = vmatmul.f32.gmra.mxu0 %v290
      %v842 = vpop.f32.mrf.mxu0
      %v843 = vadd.f32 %v778, %v842
      %844 = vmatmul.f32.gmra.mxu0 %v295
      %v845 = vpop.f32.mrf.mxu0
      %v846 = vadd.f32 %v781, %v845
      %847 = vmatmul.f32.gmra.mxu0 %v300
      %v848 = vpop.f32.mrf.mxu0
      %v849 = vadd.f32 %v784, %v848
      %850 = vmatmul.f32.gmra.mxu0 %v305
      %v851 = vpop.f32.mrf.mxu0
      %v852 = vadd.f32 %v787, %v851
      %853 = vmatmul.f32.gmra.mxu0 %v310
      %v854 = vpop.f32.mrf.mxu0
      %v855 = vadd.f32 %v790, %v854
      %856 = vdwg.mxu0
      %857 = vmatpush.msra.mxu0 %v523
      %858 = vmatpush.msra.mxu0 %v522
      %859 = vmatpush.msra.mxu0 %v521
      %860 = vmatpush.msra.mxu0 %v520
      %861 = vmatpush.msra.mxu0 %v519
      %862 = vmatpush.msra.mxu0 %v518
      %863 = vmatpush.msra.mxu0 %v517
      %864 = vmatpush.msra.mxu0 %v516
      %865 = vmatpush.msra.mxu0 %v515
      %866 = vmatpush.msra.mxu0 %v514
      %867 = vmatpush.msra.mxu0 %v513
      %868 = vmatpush.msra.mxu0 %v512
      %869 = vmatpush.msra.mxu0 %v511
      %870 = vmatpush.msra.mxu0 %v510
      %871 = vmatpush.msra.mxu0 %v509
      %872 = vmatpush.msra.mxu0 %v508
      %873 = vmatmul.f32.gmra.mxu0 %v236
      %v874 = vpop.f32.mrf.mxu0
      %v875 = vadd.f32 %v810, %v874
      %876 = vmatmul.f32.gmra.mxu0 %v241
      %v877 = vpop.f32.mrf.mxu0
      %v878 = vadd.f32 %v813, %v877
      %879 = vmatmul.f32.gmra.mxu0 %v246
      %v880 = vpop.f32.mrf.mxu0
      %v881 = vadd.f32 %v816, %v880
      %882 = vmatmul.f32.gmra.mxu0 %v251
      %v883 = vpop.f32.mrf.mxu0
      %v884 = vadd.f32 %v819, %v883
      %885 = vmatmul.f32.gmra.mxu0 %v256
      %v886 = vpop.f32.mrf.mxu0
      %v887 = vadd.f32 %v822, %v886
      %888 = vmatmul.f32.gmra.mxu0 %v261
      %v889 = vpop.f32.mrf.mxu0
      %v890 = vadd.f32 %v825, %v889
      %891 = vmatmul.f32.gmra.mxu0 %v266
      %v892 = vpop.f32.mrf.mxu0
      %v893 = vadd.f32 %v828, %v892
      %894 = vmatmul.f32.gmra.mxu0 %v271
      %v895 = vpop.f32.mrf.mxu0
      %v896 = vadd.f32 %v831, %v895
      %897 = vmatmul.f32.gmra.mxu0 %v276
      %v898 = vpop.f32.mrf.mxu0
      %v899 = vadd.f32 %v834, %v898
      %900 = vmatmul.f32.gmra.mxu0 %v281
      %v901 = vpop.f32.mrf.mxu0
      %v902 = vadd.f32 %v837, %v901
      %903 = vmatmul.f32.gmra.mxu0 %v286
      %v904 = vpop.f32.mrf.mxu0
      %v905 = vadd.f32 %v840, %v904
      %906 = vmatmul.f32.gmra.mxu0 %v291
      %v907 = vpop.f32.mrf.mxu0
      %v908 = vadd.f32 %v843, %v907
      %909 = vmatmul.f32.gmra.mxu0 %v296
      %v910 = vpop.f32.mrf.mxu0
      %v911 = vadd.f32 %v846, %v910
      %912 = vmatmul.f32.gmra.mxu0 %v301
      %v913 = vpop.f32.mrf.mxu0
      %v914 = vadd.f32 %v849, %v913
      %915 = vmatmul.f32.gmra.mxu0 %v306
      %v916 = vpop.f32.mrf.mxu0
      %v917 = vadd.f32 %v852, %v916
      %918 = vmatmul.f32.gmra.mxu0 %v311
      %v919 = vpop.f32.mrf.mxu0
      %v920 = vadd.f32 %v855, %v919
      %921 = vdwg.mxu0
      %922 = vmatpush.msra.mxu0 0.0
      %923 = vmatpush.msra.mxu0 0.0
      %924 = vmatpush.msra.mxu0 0.0
      %925 = vmatpush.msra.mxu0 0.0
      %926 = vmatpush.msra.mxu0 0.0
      %927 = vmatpush.msra.mxu0 0.0
      %928 = vmatpush.msra.mxu0 0.0
      %929 = vmatpush.msra.mxu0 0.0
      %930 = vmatpush.msra.mxu0 %v532
      %931 = vmatpush.msra.mxu0 %v531
      %932 = vmatpush.msra.mxu0 %v530
      %933 = vmatpush.msra.mxu0 %v529
      %934 = vmatpush.msra.mxu0 %v528
      %935 = vmatpush.msra.mxu0 %v527
      %936 = vmatpush.msra.mxu0 %v526
      %937 = vmatpush.msra.mxu0 %v525
      %938 = vmatmul.f32.gmra.mxu0 %v615
      %v939 = vpop.f32.mrf.mxu0
      %v940 = vadd.f32 %v875, %v939
      %941 = vmatmul.f32.gmra.mxu0 %v618
      %v942 = vpop.f32.mrf.mxu0
      %v943 = vadd.f32 %v878, %v942
      %944 = vmatmul.f32.gmra.mxu0 %v621
      %v945 = vpop.f32.mrf.mxu0
      %v946 = vadd.f32 %v881, %v945
      %947 = vmatmul.f32.gmra.mxu0 %v624
      %v948 = vpop.f32.mrf.mxu0
      %v949 = vadd.f32 %v884, %v948
      %950 = vmatmul.f32.gmra.mxu0 %v627
      %v951 = vpop.f32.mrf.mxu0
      %v952 = vadd.f32 %v887, %v951
      %953 = vmatmul.f32.gmra.mxu0 %v630
      %v954 = vpop.f32.mrf.mxu0
      %v955 = vadd.f32 %v890, %v954
      %956 = vmatmul.f32.gmra.mxu0 %v633
      %v957 = vpop.f32.mrf.mxu0
      %v958 = vadd.f32 %v893, %v957
      %959 = vmatmul.f32.gmra.mxu0 %v636
      %v960 = vpop.f32.mrf.mxu0
      %v961 = vadd.f32 %v896, %v960
      %962 = vmatmul.f32.gmra.mxu0 %v639
      %v963 = vpop.f32.mrf.mxu0
      %v964 = vadd.f32 %v899, %v963
      %965 = vmatmul.f32.gmra.mxu0 %v642
      %v966 = vpop.f32.mrf.mxu0
      %v967 = vadd.f32 %v902, %v966
      %968 = vmatmul.f32.gmra.mxu0 %v645
      %v969 = vpop.f32.mrf.mxu0
      %v970 = vadd.f32 %v905, %v969
      %971 = vmatmul.f32.gmra.mxu0 %v648
      %v972 = vpop.f32.mrf.mxu0
      %v973 = vadd.f32 %v908, %v972
      %974 = vmatmul.f32.gmra.mxu0 %v651
      %v975 = vpop.f32.mrf.mxu0
      %v976 = vadd.f32 %v911, %v975
      %977 = vmatmul.f32.gmra.mxu0 %v654
      %v978 = vpop.f32.mrf.mxu0
      %v979 = vadd.f32 %v914, %v978
      %980 = vmatmul.f32.gmra.mxu0 %v657
      %v981 = vpop.f32.mrf.mxu0
      %v982 = vadd.f32 %v917, %v981
      %983 = vmatmul.f32.gmra.mxu0 %v660
      %v984 = vpop.f32.mrf.mxu0
      %v985 = vadd.f32 %v920, %v984
      %986 = vdwg.mxu0
      %v987 = vmax.f32 %v940, 0.0
      %v988 = vmax.f32 %v943, 0.0
      %v989 = vmax.f32 %v946, 0.0
      %v990 = vmax.f32 %v949, 0.0
      %v991 = vmax.f32 %v952, 0.0
      %v992 = vmax.f32 %v955, 0.0
      %v993 = vmax.f32 %v958, 0.0
      %v994 = vmax.f32 %v961, 0.0
      %v995 = vmax.f32 %v964, 0.0
      %v996 = vmax.f32 %v967, 0.0
      %v997 = vmax.f32 %v970, 0.0
      %v998 = vmax.f32 %v973, 0.0
      %v999 = vmax.f32 %v976, 0.0
      %v1000 = vmax.f32 %v979, 0.0
      %v1001 = vmax.f32 %v982, 0.0
      %v1002 = vmax.f32 %v985, 0.0
      %v1003 = vld [vmem:[%s3] sm:$0xff]
      %v1004 = vld [vmem:[%s3 + $0x8] sm:$0xff]
      %v1005 = vld [vmem:[%s3 + $0x10] sm:$0xff]
      %v1006 = vld [vmem:[%s3 + $0x18] sm:$0xff]
      %v1007 = vld [vmem:[%s3 + $0x20] sm:$0xff]
      %v1008 = vld [vmem:[%s3 + $0x28] sm:$0xff]
      %v1009 = vld [vmem:[%s3 + $0x30] sm:$0xff]
      %v1010 = vld [vmem:[%s3 + $0x38] sm:$0xff]
      %v1011 = vld [vmem:[%s3 + $0x40] sm:$0xff]
      %v1012 = vld [vmem:[%s3 + $0x48] sm:$0xff]
      %v1013 = vld [vmem:[%s3 + $0x50] sm:$0xff]
      %v1014 = vld [vmem:[%s3 + $0x58] sm:$0xff]
      %v1015 = vld [vmem:[%s3 + $0x60] sm:$0xff]
      %v1016 = vld [vmem:[%s3 + $0x68] sm:$0xff]
      %v1017 = vld [vmem:[%s3 + $0x70] sm:$0xff]
      %v1018 = vld [vmem:[%s3 + $0x78] sm:$0xff]
      %v1019 = vld [vmem:[%s3 + $0x80] sm:$0xff]
      %v1020 = vld [vmem:[%s3 + $0x88] sm:$0xff]
      %v1021 = vld [vmem:[%s3 + $0x90] sm:$0xff]
      %v1022 = vld [vmem:[%s3 + $0x98] sm:$0xff]
      %v1023 = vld [vmem:[%s3 + $0xa0] sm:$0xff]
      %v1024 = vld [vmem:[%s3 + $0xa8] sm:$0xff]
      %v1025 = vld [vmem:[%s3 + $0xb0] sm:$0xff]
      %v1026 = vld [vmem:[%s3 + $0xb8] sm:$0xff]
      %v1027 = vld [vmem:[%s3 + $0xc0] sm:$0xff]
      %v1028 = vld [vmem:[%s3 + $0xc8] sm:$0xff]
      %v1029 = vld [vmem:[%s3 + $0xd0] sm:$0xff]
      %v1030 = vld [vmem:[%s3 + $0xd8] sm:$0xff]
      %v1031 = vld [vmem:[%s3 + $0xe0] sm:$0xff]
      %v1032 = vld [vmem:[%s3 + $0xe8] sm:$0xff]
      %v1033 = vld [vmem:[%s3 + $0xf0] sm:$0xff]
      %v1034 = vld [vmem:[%s3 + $0xf8] sm:$0xff]
      %v1035 = vld [vmem:[%s3 + $0x100] sm:$0xff]
      %v1036 = vld [vmem:[%s3 + $0x108] sm:$0xff]
      %v1037 = vld [vmem:[%s3 + $0x110] sm:$0xff]
      %v1038 = vld [vmem:[%s3 + $0x118] sm:$0xff]
      %v1039 = vld [vmem:[%s3 + $0x120] sm:$0xff]
      %v1040 = vld [vmem:[%s3 + $0x128] sm:$0xff]
      %v1041 = vld [vmem:[%s3 + $0x130] sm:$0xff]
      %v1042 = vld [vmem:[%s3 + $0x138] sm:$0xff]
      %v1043 = vld [vmem:[%s3 + $0x140] sm:$0xff]
      %v1044 = vld [vmem:[%s3 + $0x148] sm:$0xff]
      %v1045 = vld [vmem:[%s3 + $0x150] sm:$0xff]
      %v1046 = vld [vmem:[%s3 + $0x158] sm:$0xff]
      %v1047 = vld [vmem:[%s3 + $0x160] sm:$0xff]
      %v1048 = vld [vmem:[%s3 + $0x168] sm:$0xff]
      %v1049 = vld [vmem:[%s3 + $0x170] sm:$0xff]
      %v1050 = vld [vmem:[%s3 + $0x178] sm:$0xff]
      %v1051 = vld [vmem:[%s3 + $0x180] sm:$0xff]
      %v1052 = vld [vmem:[%s3 + $0x188] sm:$0xff]
      %v1053 = vld [vmem:[%s3 + $0x190] sm:$0xff]
      %v1054 = vld [vmem:[%s3 + $0x198] sm:$0xff]
      %v1055 = vld [vmem:[%s3 + $0x1a0] sm:$0xff]
      %v1056 = vld [vmem:[%s3 + $0x1a8] sm:$0xff]
      %v1057 = vld [vmem:[%s3 + $0x1b0] sm:$0xff]
      %v1058 = vld [vmem:[%s3 + $0x1b8] sm:$0xff]
      %v1059 = vld [vmem:[%s3 + $0x1c0] sm:$0xff]
      %v1060 = vld [vmem:[%s3 + $0x1c8] sm:$0xff]
      %v1061 = vld [vmem:[%s3 + $0x1d0] sm:$0xff]
      %v1062 = vld [vmem:[%s3 + $0x1d8] sm:$0xff]
      %v1063 = vld [vmem:[%s3 + $0x1e0] sm:$0xff]
      %v1064 = vld [vmem:[%s3 + $0x1e8] sm:$0xff]
      %v1065 = vld [vmem:[%s3 + $0x1f0] sm:$0xff]
      %v1066 = vld [vmem:[%s3 + $0x1f8] sm:$0xff]
      %v1067 = vld [vmem:[%s3 + $0x200] sm:$0xff]
      %v1068 = vld [vmem:[%s3 + $0x208] sm:$0xff]
      %v1069 = vld [vmem:[%s3 + $0x210] sm:$0xff]
      %v1070 = vld [vmem:[%s3 + $0x218] sm:$0xff]
      %v1071 = vld [vmem:[%s3 + $0x220] sm:$0xff]
      %v1072 = vld [vmem:[%s3 + $0x228] sm:$0xff]
      %v1073 = vld [vmem:[%s3 + $0x230] sm:$0xff]
      %v1074 = vld [vmem:[%s3 + $0x238] sm:$0xff]
      %v1075 = vld [vmem:[%s3 + $0x240] sm:$0xff]
      %v1076 = vld [vmem:[%s3 + $0x248] sm:$0xff]
      %v1077 = vld [vmem:[%s3 + $0x250] sm:$0xff]
      %v1078 = vld [vmem:[%s3 + $0x258] sm:$0xff]
      %v1079 = vld [vmem:[%s3 + $0x260] sm:$0xff]
      %v1080 = vld [vmem:[%s3 + $0x268] sm:$0xff]
      %v1081 = vld [vmem:[%s3 + $0x270] sm:$0xff]
      %v1082 = vld [vmem:[%s3 + $0x278] sm:$0xff]
      %v1083 = vld [vmem:[%s3 + $0x280] sm:$0xff]
      %v1084 = vld [vmem:[%s3 + $0x288] sm:$0xff]
      %v1085 = vld [vmem:[%s3 + $0x290] sm:$0xff]
      %v1086 = vld [vmem:[%s3 + $0x298] sm:$0xff]
      %v1087 = vld [vmem:[%s3 + $0x2a0] sm:$0xff]
      %v1088 = vld [vmem:[%s3 + $0x2a8] sm:$0xff]
      %v1089 = vld [vmem:[%s3 + $0x2b0] sm:$0xff]
      %v1090 = vld [vmem:[%s3 + $0x2b8] sm:$0xff]
      %v1091 = vld [vmem:[%s3 + $0x2c0] sm:$0xff]
      %v1092 = vld [vmem:[%s3 + $0x2c8] sm:$0xff]
      %v1093 = vld [vmem:[%s3 + $0x2d0] sm:$0xff]
      %v1094 = vld [vmem:[%s3 + $0x2d8] sm:$0xff]
      %v1095 = vld [vmem:[%s3 + $0x2e0] sm:$0xff]
      %v1096 = vld [vmem:[%s3 + $0x2e8] sm:$0xff]
      %v1097 = vld [vmem:[%s3 + $0x2f0] sm:$0xff]
      %v1098 = vld [vmem:[%s3 + $0x2f8] sm:$0xff]
      %v1099 = vld [vmem:[%s3 + $0x300] sm:$0xff]
      %v1100 = vld [vmem:[%s3 + $0x308] sm:$0xff]
      %v1101 = vld [vmem:[%s3 + $0x310] sm:$0xff]
      %v1102 = vld [vmem:[%s3 + $0x318] sm:$0xff]
      %v1103 = vld [vmem:[%s3 + $0x320] sm:$0xff]
      %v1104 = vld [vmem:[%s3 + $0x328] sm:$0xff]
      %v1105 = vld [vmem:[%s3 + $0x330] sm:$0xff]
      %v1106 = vld [vmem:[%s3 + $0x338] sm:$0xff]
      %v1107 = vld [vmem:[%s3 + $0x340] sm:$0xff]
      %v1108 = vld [vmem:[%s3 + $0x348] sm:$0xff]
      %v1109 = vld [vmem:[%s3 + $0x350] sm:$0xff]
      %v1110 = vld [vmem:[%s3 + $0x358] sm:$0xff]
      %v1111 = vld [vmem:[%s3 + $0x360] sm:$0xff]
      %v1112 = vld [vmem:[%s3 + $0x368] sm:$0xff]
      %v1113 = vld [vmem:[%s3 + $0x370] sm:$0xff]
      %v1114 = vld [vmem:[%s3 + $0x378] sm:$0xff]
      %v1115 = vld [vmem:[%s3 + $0x380] sm:$0xff]
      %v1116 = vld [vmem:[%s3 + $0x388] sm:$0xff]
      %v1117 = vld [vmem:[%s3 + $0x390] sm:$0xff]
      %v1118 = vld [vmem:[%s3 + $0x398] sm:$0xff]
      %v1119 = vld [vmem:[%s3 + $0x3a0] sm:$0xff]
      %v1120 = vld [vmem:[%s3 + $0x3a8] sm:$0xff]
      %v1121 = vld [vmem:[%s3 + $0x3b0] sm:$0xff]
      %v1122 = vld [vmem:[%s3 + $0x3b8] sm:$0xff]
      %v1123 = vld [vmem:[%s3 + $0x3c0] sm:$0xff]
      %v1124 = vld [vmem:[%s3 + $0x3c8] sm:$0xff]
      %v1125 = vld [vmem:[%s3 + $0x3d0] sm:$0xff]
      %v1126 = vld [vmem:[%s3 + $0x3d8] sm:$0xff]
      %v1127 = vld [vmem:[%s3 + $0x3e0] sm:$0xff]
      %v1128 = vld [vmem:[%s3 + $0x3e8] sm:$0xff]
      %v1129 = vld [vmem:[%s3 + $0x3f0] sm:$0xff]
      %v1130 = vld [vmem:[%s3 + $0x3f8] sm:$0xff]
      %v1131 = vld [vmem:[%s3 + $0x400] sm:$0xff]
      %v1132 = vld [vmem:[%s3 + $0x408] sm:$0xff]
      %v1133 = vld [vmem:[%s3 + $0x410] sm:$0xff]
      %v1134 = vld [vmem:[%s3 + $0x418] sm:$0xff]
      %v1135 = vld [vmem:[%s3 + $0x420] sm:$0xff]
      %v1136 = vld [vmem:[%s3 + $0x428] sm:$0xff]
      %v1137 = vld [vmem:[%s3 + $0x430] sm:$0xff]
      %v1138 = vld [vmem:[%s3 + $0x438] sm:$0xff]
      %v1139 = vld [vmem:[%s3 + $0x440] sm:$0xff]
      %v1140 = vld [vmem:[%s3 + $0x448] sm:$0xff]
      %v1141 = vld [vmem:[%s3 + $0x450] sm:$0xff]
      %v1142 = vld [vmem:[%s3 + $0x458] sm:$0xff]
      %v1143 = vld [vmem:[%s3 + $0x460] sm:$0xff]
      %v1144 = vld [vmem:[%s3 + $0x468] sm:$0xff]
      %v1145 = vld [vmem:[%s3 + $0x470] sm:$0xff]
      %v1146 = vld [vmem:[%s3 + $0x478] sm:$0xff]
      %v1147 = vld [vmem:[%s4] sm:$0xff]
      %v1148 = vld [vmem:[%s4 + $0x8] sm:$0xff]
      %v1149 = vld [vmem:[%s4 + $0x10] sm:$0xff]
      %v1150 = vld [vmem:[%s4 + $0x18] sm:$0xff]
      %v1151 = vld [vmem:[%s4 + $0x20] sm:$0xff]
      %v1152 = vld [vmem:[%s4 + $0x28] sm:$0xff]
      %v1153 = vld [vmem:[%s4 + $0x30] sm:$0xff]
      %v1154 = vld [vmem:[%s4 + $0x38] sm:$0xff]
      %v1155 = vld [vmem:[%s4 + $0x40] sm:$0xff]
      %v1156 = vld [vmem:[%s4 + $0x48] sm:$0xff]
      %v1157 = vld [vmem:[%s4 + $0x50] sm:$0xff]
      %v1158 = vld [vmem:[%s4 + $0x58] sm:$0xff]
      %v1159 = vld [vmem:[%s4 + $0x60] sm:$0xff]
      %v1160 = vld [vmem:[%s4 + $0x68] sm:$0xff]
      %v1161 = vld [vmem:[%s4 + $0x70] sm:$0xff]
      %v1162 = vld [vmem:[%s4 + $0x78] sm:$0xff]
      %1163 = vrot.lane.b32.xlu0 %v987, 4
      %v1164 = vpop.permute.xlu0 %1163
      %v1165 = vsel %vm332, %v1164, %v987
      %1166 = vrot.lane.b32.xlu0 %v988, 4
      %v1167 = vpop.permute.xlu0 %1166
      %v1168 = vsel %vm332, %v1167, %v988
      %1169 = vrot.lane.b32.xlu0 %v989, 4
      %v1170 = vpop.permute.xlu0 %1169
      %v1171 = vsel %vm332, %v1170, %v989
      %1172 = vrot.lane.b32.xlu0 %v990, 4
      %v1173 = vpop.permute.xlu0 %1172
      %v1174 = vsel %vm332, %v1173, %v990
      %1175 = vrot.lane.b32.xlu0 %v991, 4
      %v1176 = vpop.permute.xlu0 %1175
      %v1177 = vsel %vm332, %v1176, %v991
      %1178 = vrot.lane.b32.xlu0 %v992, 4
      %v1179 = vpop.permute.xlu0 %1178
      %v1180 = vsel %vm332, %v1179, %v992
      %1181 = vrot.lane.b32.xlu0 %v993, 4
      %v1182 = vpop.permute.xlu0 %1181
      %v1183 = vsel %vm332, %v1182, %v993
      %1184 = vrot.lane.b32.xlu0 %v994, 4
      %v1185 = vpop.permute.xlu0 %1184
      %v1186 = vsel %vm332, %v1185, %v994
      %1187 = vrot.lane.b32.xlu0 %v995, 4
      %v1188 = vpop.permute.xlu0 %1187
      %v1189 = vsel %vm332, %v1188, %v995
      %1190 = vrot.lane.b32.xlu0 %v996, 4
      %v1191 = vpop.permute.xlu0 %1190
      %v1192 = vsel %vm332, %v1191, %v996
      %1193 = vrot.lane.b32.xlu0 %v997, 4
      %v1194 = vpop.permute.xlu0 %1193
      %v1195 = vsel %vm332, %v1194, %v997
      %1196 = vrot.lane.b32.xlu0 %v998, 4
      %v1197 = vpop.permute.xlu0 %1196
      %v1198 = vsel %vm332, %v1197, %v998
      %1199 = vrot.lane.b32.xlu0 %v999, 4
      %v1200 = vpop.permute.xlu0 %1199
      %v1201 = vsel %vm332, %v1200, %v999
      %1202 = vrot.lane.b32.xlu0 %v1000, 4
      %v1203 = vpop.permute.xlu0 %1202
      %v1204 = vsel %vm332, %v1203, %v1000
      %1205 = vrot.lane.b32.xlu0 %v1001, 4
      %v1206 = vpop.permute.xlu0 %1205
      %v1207 = vsel %vm332, %v1206, %v1001
      %1208 = vrot.lane.b32.xlu0 %v1002, 4
      %v1209 = vpop.permute.xlu0 %1208
      %v1210 = vsel %vm332, %v1209, %v1002
      %1211 = vrot.lane.b32.xlu0 %v1165, 4
      %v1212 = vpop.permute.xlu0 %1211
      %1213 = vrot.lane.b32.xlu0 %v1168, 4
      %v1214 = vpop.permute.xlu0 %1213
      %1215 = vrot.lane.b32.xlu0 %v1171, 4
      %v1216 = vpop.permute.xlu0 %1215
      %1217 = vrot.lane.b32.xlu0 %v1174, 4
      %v1218 = vpop.permute.xlu0 %1217
      %1219 = vrot.lane.b32.xlu0 %v1177, 4
      %v1220 = vpop.permute.xlu0 %1219
      %1221 = vrot.lane.b32.xlu0 %v1180, 4
      %v1222 = vpop.permute.xlu0 %1221
      %1223 = vrot.lane.b32.xlu0 %v1183, 4
      %v1224 = vpop.permute.xlu0 %1223
      %1225 = vrot.lane.b32.xlu0 %v1186, 4
      %v1226 = vpop.permute.xlu0 %1225
      %1227 = vrot.lane.b32.xlu0 %v1189, 4
      %v1228 = vpop.permute.xlu0 %1227
      %1229 = vrot.lane.b32.xlu0 %v1192, 4
      %v1230 = vpop.permute.xlu0 %1229
      %1231 = vrot.lane.b32.xlu0 %v1195, 4
      %v1232 = vpop.permute.xlu0 %1231
      %1233 = vrot.lane.b32.xlu0 %v1198, 4
      %v1234 = vpop.permute.xlu0 %1233
      %1235 = vrot.lane.b32.xlu0 %v1201, 4
      %v1236 = vpop.permute.xlu0 %1235
      %1237 = vrot.lane.b32.xlu0 %v1204, 4
      %v1238 = vpop.permute.xlu0 %1237
      %1239 = vrot.lane.b32.xlu0 %v1207, 4
      %v1240 = vpop.permute.xlu0 %1239
      %1241 = vrot.lane.b32.xlu0 %v1210, 4
      %v1242 = vpop.permute.xlu0 %1241
      %v1243 = vsel %vm332, %v1212, %v987
      %v1244 = vsel %vm332, %v1214, %v988
      %v1245 = vsel %vm332, %v1216, %v989
      %v1246 = vsel %vm332, %v1218, %v990
      %v1247 = vsel %vm332, %v1220, %v991
      %v1248 = vsel %vm332, %v1222, %v992
      %v1249 = vsel %vm332, %v1224, %v993
      %v1250 = vsel %vm332, %v1226, %v994
      %v1251 = vsel %vm332, %v1228, %v995
      %v1252 = vsel %vm332, %v1230, %v996
      %v1253 = vsel %vm332, %v1232, %v997
      %v1254 = vsel %vm332, %v1234, %v998
      %v1255 = vsel %vm332, %v1236, %v999
      %v1256 = vsel %vm332, %v1238, %v1000
      %v1257 = vsel %vm332, %v1240, %v1001
      %v1258 = vsel %vm332, %v1242, %v1002
      %1275 = vrot.lane.b32.xlu0 %v1243, 127
      %v1276 = vpop.permute.xlu0 %1275
      %1277 = vrot.lane.b32.xlu0 %v1244, 127
      %v1278 = vpop.permute.xlu0 %1277
      %1279 = vrot.lane.b32.xlu0 %v1245, 127
      %v1280 = vpop.permute.xlu0 %1279
      %1281 = vrot.lane.b32.xlu0 %v1246, 127
      %v1282 = vpop.permute.xlu0 %1281
      %1283 = vrot.lane.b32.xlu0 %v1247, 127
      %v1284 = vpop.permute.xlu0 %1283
      %1285 = vrot.lane.b32.xlu0 %v1248, 127
      %v1286 = vpop.permute.xlu0 %1285
      %1287 = vrot.lane.b32.xlu0 %v1249, 127
      %v1288 = vpop.permute.xlu0 %1287
      %1289 = vrot.lane.b32.xlu0 %v1250, 127
      %v1290 = vpop.permute.xlu0 %1289
      %1291 = vrot.lane.b32.xlu0 %v1251, 127
      %v1292 = vpop.permute.xlu0 %1291
      %1293 = vrot.lane.b32.xlu0 %v1252, 127
      %v1294 = vpop.permute.xlu0 %1293
      %1295 = vrot.lane.b32.xlu0 %v1253, 127
      %v1296 = vpop.permute.xlu0 %1295
      %1297 = vrot.lane.b32.xlu0 %v1254, 127
      %v1298 = vpop.permute.xlu0 %1297
      %1299 = vrot.lane.b32.xlu0 %v1255, 127
      %v1300 = vpop.permute.xlu0 %1299
      %1301 = vrot.lane.b32.xlu0 %v1256, 127
      %v1302 = vpop.permute.xlu0 %1301
      %1303 = vrot.lane.b32.xlu0 %v1257, 127
      %v1304 = vpop.permute.xlu0 %1303
      %1305 = vrot.lane.b32.xlu0 %v1258, 127
      %v1306 = vpop.permute.xlu0 %1305
      %v1323 = vsel %vm383, %v1276, 0.0
      %v1324 = vsel %vm383, %v1278, 0.0
      %v1325 = vsel %vm383, %v1280, 0.0
      %v1326 = vsel %vm383, %v1282, 0.0
      %v1327 = vsel %vm383, %v1284, 0.0
      %v1328 = vsel %vm383, %v1286, 0.0
      %v1329 = vsel %vm383, %v1288, 0.0
      %v1330 = vsel %vm383, %v1290, 0.0
      %v1331 = vsel %vm383, %v1292, 0.0
      %v1332 = vsel %vm383, %v1294, 0.0
      %v1333 = vsel %vm383, %v1296, 0.0
      %v1334 = vsel %vm383, %v1298, 0.0
      %v1335 = vsel %vm383, %v1300, 0.0
      %v1336 = vsel %vm383, %v1302, 0.0
      %v1337 = vsel %vm383, %v1304, 0.0
      %v1338 = vsel %vm383, %v1306, 0.0
      %1339 = vrot.lane.b32.xlu0 %v1243, 126
      %v1340 = vpop.permute.xlu0 %1339
      %1341 = vrot.lane.b32.xlu0 %v1244, 126
      %v1342 = vpop.permute.xlu0 %1341
      %1343 = vrot.lane.b32.xlu0 %v1245, 126
      %v1344 = vpop.permute.xlu0 %1343
      %1345 = vrot.lane.b32.xlu0 %v1246, 126
      %v1346 = vpop.permute.xlu0 %1345
      %1347 = vrot.lane.b32.xlu0 %v1247, 126
      %v1348 = vpop.permute.xlu0 %1347
      %1349 = vrot.lane.b32.xlu0 %v1248, 126
      %v1350 = vpop.permute.xlu0 %1349
      %1351 = vrot.lane.b32.xlu0 %v1249, 126
      %v1352 = vpop.permute.xlu0 %1351
      %1353 = vrot.lane.b32.xlu0 %v1250, 126
      %v1354 = vpop.permute.xlu0 %1353
      %1355 = vrot.lane.b32.xlu0 %v1251, 126
      %v1356 = vpop.permute.xlu0 %1355
      %1357 = vrot.lane.b32.xlu0 %v1252, 126
      %v1358 = vpop.permute.xlu0 %1357
      %1359 = vrot.lane.b32.xlu0 %v1253, 126
      %v1360 = vpop.permute.xlu0 %1359
      %1361 = vrot.lane.b32.xlu0 %v1254, 126
      %v1362 = vpop.permute.xlu0 %1361
      %1363 = vrot.lane.b32.xlu0 %v1255, 126
      %v1364 = vpop.permute.xlu0 %1363
      %1365 = vrot.lane.b32.xlu0 %v1256, 126
      %v1366 = vpop.permute.xlu0 %1365
      %1367 = vrot.lane.b32.xlu0 %v1257, 126
      %v1368 = vpop.permute.xlu0 %1367
      %1369 = vrot.lane.b32.xlu0 %v1258, 126
      %v1370 = vpop.permute.xlu0 %1369
      %v1387 = vsel %vm381, %v1340, 0.0
      %v1388 = vsel %vm381, %v1342, 0.0
      %v1389 = vsel %vm381, %v1344, 0.0
      %v1390 = vsel %vm381, %v1346, 0.0
      %v1391 = vsel %vm381, %v1348, 0.0
      %v1392 = vsel %vm381, %v1350, 0.0
      %v1393 = vsel %vm381, %v1352, 0.0
      %v1394 = vsel %vm381, %v1354, 0.0
      %v1395 = vsel %vm381, %v1356, 0.0
      %v1396 = vsel %vm381, %v1358, 0.0
      %v1397 = vsel %vm381, %v1360, 0.0
      %v1398 = vsel %vm381, %v1362, 0.0
      %v1399 = vsel %vm381, %v1364, 0.0
      %v1400 = vsel %vm381, %v1366, 0.0
      %v1401 = vsel %vm381, %v1368, 0.0
      %v1402 = vsel %vm381, %v1370, 0.0
      %1403 = vrot.lane.b32.xlu0 %v1243, 125
      %v1404 = vpop.permute.xlu0 %1403
      %1405 = vrot.lane.b32.xlu0 %v1244, 125
      %v1406 = vpop.permute.xlu0 %1405
      %1407 = vrot.lane.b32.xlu0 %v1245, 125
      %v1408 = vpop.permute.xlu0 %1407
      %1409 = vrot.lane.b32.xlu0 %v1246, 125
      %v1410 = vpop.permute.xlu0 %1409
      %1411 = vrot.lane.b32.xlu0 %v1247, 125
      %v1412 = vpop.permute.xlu0 %1411
      %1413 = vrot.lane.b32.xlu0 %v1248, 125
      %v1414 = vpop.permute.xlu0 %1413
      %1415 = vrot.lane.b32.xlu0 %v1249, 125
      %v1416 = vpop.permute.xlu0 %1415
      %1417 = vrot.lane.b32.xlu0 %v1250, 125
      %v1418 = vpop.permute.xlu0 %1417
      %1419 = vrot.lane.b32.xlu0 %v1251, 125
      %v1420 = vpop.permute.xlu0 %1419
      %1421 = vrot.lane.b32.xlu0 %v1252, 125
      %v1422 = vpop.permute.xlu0 %1421
      %1423 = vrot.lane.b32.xlu0 %v1253, 125
      %v1424 = vpop.permute.xlu0 %1423
      %1425 = vrot.lane.b32.xlu0 %v1254, 125
      %v1426 = vpop.permute.xlu0 %1425
      %1427 = vrot.lane.b32.xlu0 %v1255, 125
      %v1428 = vpop.permute.xlu0 %1427
      %1429 = vrot.lane.b32.xlu0 %v1256, 125
      %v1430 = vpop.permute.xlu0 %1429
      %1431 = vrot.lane.b32.xlu0 %v1257, 125
      %v1432 = vpop.permute.xlu0 %1431
      %1433 = vrot.lane.b32.xlu0 %v1258, 125
      %v1434 = vpop.permute.xlu0 %1433
      %v1451 = vsel %vm457, %v1404, 0.0
      %v1452 = vsel %vm457, %v1406, 0.0
      %v1453 = vsel %vm457, %v1408, 0.0
      %v1454 = vsel %vm457, %v1410, 0.0
      %v1455 = vsel %vm457, %v1412, 0.0
      %v1456 = vsel %vm457, %v1414, 0.0
      %v1457 = vsel %vm457, %v1416, 0.0
      %v1458 = vsel %vm457, %v1418, 0.0
      %v1459 = vsel %vm457, %v1420, 0.0
      %v1460 = vsel %vm457, %v1422, 0.0
      %v1461 = vsel %vm457, %v1424, 0.0
      %v1462 = vsel %vm457, %v1426, 0.0
      %v1463 = vsel %vm457, %v1428, 0.0
      %v1464 = vsel %vm457, %v1430, 0.0
      %v1465 = vsel %vm457, %v1432, 0.0
      %v1466 = vsel %vm457, %v1434, 0.0
      %v1467 = vsel %vm382, %v1404, 0.0
      %v1468 = vsel %vm382, %v1406, 0.0
      %v1469 = vsel %vm382, %v1408, 0.0
      %v1470 = vsel %vm382, %v1410, 0.0
      %v1471 = vsel %vm382, %v1412, 0.0
      %v1472 = vsel %vm382, %v1414, 0.0
      %v1473 = vsel %vm382, %v1416, 0.0
      %v1474 = vsel %vm382, %v1418, 0.0
      %v1475 = vsel %vm382, %v1420, 0.0
      %v1476 = vsel %vm382, %v1422, 0.0
      %v1477 = vsel %vm382, %v1424, 0.0
      %v1478 = vsel %vm382, %v1426, 0.0
      %v1479 = vsel %vm382, %v1428, 0.0
      %v1480 = vsel %vm382, %v1430, 0.0
      %v1481 = vsel %vm382, %v1432, 0.0
      %v1482 = vsel %vm382, %v1434, 0.0
      %v1483 = vsel %vm456, %v1276, 0.0
      %v1484 = vsel %vm456, %v1278, 0.0
      %v1485 = vsel %vm456, %v1280, 0.0
      %v1486 = vsel %vm456, %v1282, 0.0
      %v1487 = vsel %vm456, %v1284, 0.0
      %v1488 = vsel %vm456, %v1286, 0.0
      %v1489 = vsel %vm456, %v1288, 0.0
      %v1490 = vsel %vm456, %v1290, 0.0
      %v1491 = vsel %vm456, %v1292, 0.0
      %v1492 = vsel %vm456, %v1294, 0.0
      %v1493 = vsel %vm456, %v1296, 0.0
      %v1494 = vsel %vm456, %v1298, 0.0
      %v1495 = vsel %vm456, %v1300, 0.0
      %v1496 = vsel %vm456, %v1302, 0.0
      %v1497 = vsel %vm456, %v1304, 0.0
      %v1498 = vsel %vm456, %v1306, 0.0
      %v1499 = vsel %vm507, %v1276, 0.0
      %v1500 = vsel %vm507, %v1278, 0.0
      %v1501 = vsel %vm507, %v1280, 0.0
      %v1502 = vsel %vm507, %v1282, 0.0
      %v1503 = vsel %vm507, %v1284, 0.0
      %v1504 = vsel %vm507, %v1286, 0.0
      %v1505 = vsel %vm507, %v1288, 0.0
      %v1506 = vsel %vm507, %v1290, 0.0
      %v1507 = vsel %vm507, %v1292, 0.0
      %v1508 = vsel %vm507, %v1294, 0.0
      %v1509 = vsel %vm507, %v1296, 0.0
      %v1510 = vsel %vm507, %v1298, 0.0
      %v1511 = vsel %vm507, %v1300, 0.0
      %v1512 = vsel %vm507, %v1302, 0.0
      %v1513 = vsel %vm507, %v1304, 0.0
      %v1514 = vsel %vm507, %v1306, 0.0
      %v1515 = vsel %vm506, %v1340, 0.0
      %v1516 = vsel %vm506, %v1342, 0.0
      %v1517 = vsel %vm506, %v1344, 0.0
      %v1518 = vsel %vm506, %v1346, 0.0
      %v1519 = vsel %vm506, %v1348, 0.0
      %v1520 = vsel %vm506, %v1350, 0.0
      %v1521 = vsel %vm506, %v1352, 0.0
      %v1522 = vsel %vm506, %v1354, 0.0
      %v1523 = vsel %vm506, %v1356, 0.0
      %v1524 = vsel %vm506, %v1358, 0.0
      %v1525 = vsel %vm506, %v1360, 0.0
      %v1526 = vsel %vm506, %v1362, 0.0
      %v1527 = vsel %vm506, %v1364, 0.0
      %v1528 = vsel %vm506, %v1366, 0.0
      %v1529 = vsel %vm506, %v1368, 0.0
      %v1530 = vsel %vm506, %v1370, 0.0
      %v1531 = vsel %vm524, %v1404, 0.0
      %v1532 = vsel %vm524, %v1406, 0.0
      %v1533 = vsel %vm524, %v1408, 0.0
      %v1534 = vsel %vm524, %v1410, 0.0
      %v1535 = vsel %vm524, %v1412, 0.0
      %v1536 = vsel %vm524, %v1414, 0.0
      %v1537 = vsel %vm524, %v1416, 0.0
      %v1538 = vsel %vm524, %v1418, 0.0
      %v1539 = vsel %vm524, %v1420, 0.0
      %v1540 = vsel %vm524, %v1422, 0.0
      %v1541 = vsel %vm524, %v1424, 0.0
      %v1542 = vsel %vm524, %v1426, 0.0
      %v1543 = vsel %vm524, %v1428, 0.0
      %v1544 = vsel %vm524, %v1430, 0.0
      %v1545 = vsel %vm524, %v1432, 0.0
      %v1546 = vsel %vm524, %v1434, 0.0
      %1548 = vset.pattern.permute.xlu0 0
      %1549 = vperm.xlu0 %1548, %v1147
      %v1550 = vpop.permute.xlu0 %1549
      %1553 = vset.pattern.permute.xlu0 0
      %1554 = vperm.xlu0 %1553, %v1148
      %v1555 = vpop.permute.xlu0 %1554
      %1558 = vset.pattern.permute.xlu0 0
      %1559 = vperm.xlu0 %1558, %v1149
      %v1560 = vpop.permute.xlu0 %1559
      %1563 = vset.pattern.permute.xlu0 0
      %1564 = vperm.xlu0 %1563, %v1150
      %v1565 = vpop.permute.xlu0 %1564
      %1568 = vset.pattern.permute.xlu0 0
      %1569 = vperm.xlu0 %1568, %v1151
      %v1570 = vpop.permute.xlu0 %1569
      %1573 = vset.pattern.permute.xlu0 0
      %1574 = vperm.xlu0 %1573, %v1152
      %v1575 = vpop.permute.xlu0 %1574
      %1578 = vset.pattern.permute.xlu0 0
      %1579 = vperm.xlu0 %1578, %v1153
      %v1580 = vpop.permute.xlu0 %1579
      %1583 = vset.pattern.permute.xlu0 0
      %1584 = vperm.xlu0 %1583, %v1154
      %v1585 = vpop.permute.xlu0 %1584
      %1588 = vset.pattern.permute.xlu0 0
      %1589 = vperm.xlu0 %1588, %v1155
      %v1590 = vpop.permute.xlu0 %1589
      %1593 = vset.pattern.permute.xlu0 0
      %1594 = vperm.xlu0 %1593, %v1156
      %v1595 = vpop.permute.xlu0 %1594
      %1598 = vset.pattern.permute.xlu0 0
      %1599 = vperm.xlu0 %1598, %v1157
      %v1600 = vpop.permute.xlu0 %1599
      %1603 = vset.pattern.permute.xlu0 0
      %1604 = vperm.xlu0 %1603, %v1158
      %v1605 = vpop.permute.xlu0 %1604
      %1608 = vset.pattern.permute.xlu0 0
      %1609 = vperm.xlu0 %1608, %v1159
      %v1610 = vpop.permute.xlu0 %1609
      %1613 = vset.pattern.permute.xlu0 0
      %1614 = vperm.xlu0 %1613, %v1160
      %v1615 = vpop.permute.xlu0 %1614
      %1618 = vset.pattern.permute.xlu0 0
      %1619 = vperm.xlu0 %1618, %v1161
      %v1620 = vpop.permute.xlu0 %1619
      %1623 = vset.pattern.permute.xlu0 0
      %1624 = vperm.xlu0 %1623, %v1162
      %v1625 = vpop.permute.xlu0 %1624
      %1627 = vmatpush.msra.mxu0 %v1338
      %1628 = vmatpush.msra.mxu0 %v1337
      %1629 = vmatpush.msra.mxu0 %v1336
      %1630 = vmatpush.msra.mxu0 %v1335
      %1631 = vmatpush.msra.mxu0 %v1334
      %1632 = vmatpush.msra.mxu0 %v1333
      %1633 = vmatpush.msra.mxu0 %v1332
      %1634 = vmatpush.msra.mxu0 %v1331
      %1635 = vmatpush.msra.mxu0 %v1330
      %1636 = vmatpush.msra.mxu0 %v1329
      %1637 = vmatpush.msra.mxu0 %v1328
      %1638 = vmatpush.msra.mxu0 %v1327
      %1639 = vmatpush.msra.mxu0 %v1326
      %1640 = vmatpush.msra.mxu0 %v1325
      %1641 = vmatpush.msra.mxu0 %v1324
      %1642 = vmatpush.msra.mxu0 %v1323
      %1643 = vmatmul.f32.gmra.mxu0 %v1003
      %v1644 = vpop.f32.mrf.mxu0
      %v1645 = vadd.f32 %v1550, %v1644
      %1646 = vmatmul.f32.gmra.mxu0 %v1012
      %v1647 = vpop.f32.mrf.mxu0
      %v1648 = vadd.f32 %v1555, %v1647
      %1649 = vmatmul.f32.gmra.mxu0 %v1021
      %v1650 = vpop.f32.mrf.mxu0
      %v1651 = vadd.f32 %v1560, %v1650
      %1652 = vmatmul.f32.gmra.mxu0 %v1030
      %v1653 = vpop.f32.mrf.mxu0
      %v1654 = vadd.f32 %v1565, %v1653
      %1655 = vmatmul.f32.gmra.mxu0 %v1039
      %v1656 = vpop.f32.mrf.mxu0
      %v1657 = vadd.f32 %v1570, %v1656
      %1658 = vmatmul.f32.gmra.mxu0 %v1048
      %v1659 = vpop.f32.mrf.mxu0
      %v1660 = vadd.f32 %v1575, %v1659
      %1661 = vmatmul.f32.gmra.mxu0 %v1057
      %v1662 = vpop.f32.mrf.mxu0
      %v1663 = vadd.f32 %v1580, %v1662
      %1664 = vmatmul.f32.gmra.mxu0 %v1066
      %v1665 = vpop.f32.mrf.mxu0
      %v1666 = vadd.f32 %v1585, %v1665
      %1667 = vmatmul.f32.gmra.mxu0 %v1075
      %v1668 = vpop.f32.mrf.mxu0
      %v1669 = vadd.f32 %v1590, %v1668
      %1670 = vmatmul.f32.gmra.mxu0 %v1084
      %v1671 = vpop.f32.mrf.mxu0
      %v1672 = vadd.f32 %v1595, %v1671
      %1673 = vmatmul.f32.gmra.mxu0 %v1093
      %v1674 = vpop.f32.mrf.mxu0
      %v1675 = vadd.f32 %v1600, %v1674
      %1676 = vmatmul.f32.gmra.mxu0 %v1102
      %v1677 = vpop.f32.mrf.mxu0
      %v1678 = vadd.f32 %v1605, %v1677
      %1679 = vmatmul.f32.gmra.mxu0 %v1111
      %v1680 = vpop.f32.mrf.mxu0
      %v1681 = vadd.f32 %v1610, %v1680
      %1682 = vmatmul.f32.gmra.mxu0 %v1120
      %v1683 = vpop.f32.mrf.mxu0
      %v1684 = vadd.f32 %v1615, %v1683
      %1685 = vmatmul.f32.gmra.mxu0 %v1129
      %v1686 = vpop.f32.mrf.mxu0
      %v1687 = vadd.f32 %v1620, %v1686
      %1688 = vmatmul.f32.gmra.mxu0 %v1138
      %v1689 = vpop.f32.mrf.mxu0
      %v1690 = vadd.f32 %v1625, %v1689
      %1691 = vdwg.mxu0
      %1692 = vmatpush.msra.mxu0 %v1402
      %1693 = vmatpush.msra.mxu0 %v1401
      %1694 = vmatpush.msra.mxu0 %v1400
      %1695 = vmatpush.msra.mxu0 %v1399
      %1696 = vmatpush.msra.mxu0 %v1398
      %1697 = vmatpush.msra.mxu0 %v1397
      %1698 = vmatpush.msra.mxu0 %v1396
      %1699 = vmatpush.msra.mxu0 %v1395
      %1700 = vmatpush.msra.mxu0 %v1394
      %1701 = vmatpush.msra.mxu0 %v1393
      %1702 = vmatpush.msra.mxu0 %v1392
      %1703 = vmatpush.msra.mxu0 %v1391
      %1704 = vmatpush.msra.mxu0 %v1390
      %1705 = vmatpush.msra.mxu0 %v1389
      %1706 = vmatpush.msra.mxu0 %v1388
      %1707 = vmatpush.msra.mxu0 %v1387
      %1708 = vmatmul.f32.gmra.mxu0 %v1004
      %v1709 = vpop.f32.mrf.mxu0
      %v1710 = vadd.f32 %v1645, %v1709
      %1711 = vmatmul.f32.gmra.mxu0 %v1013
      %v1712 = vpop.f32.mrf.mxu0
      %v1713 = vadd.f32 %v1648, %v1712
      %1714 = vmatmul.f32.gmra.mxu0 %v1022
      %v1715 = vpop.f32.mrf.mxu0
      %v1716 = vadd.f32 %v1651, %v1715
      %1717 = vmatmul.f32.gmra.mxu0 %v1031
      %v1718 = vpop.f32.mrf.mxu0
      %v1719 = vadd.f32 %v1654, %v1718
      %1720 = vmatmul.f32.gmra.mxu0 %v1040
      %v1721 = vpop.f32.mrf.mxu0
      %v1722 = vadd.f32 %v1657, %v1721
      %1723 = vmatmul.f32.gmra.mxu0 %v1049
      %v1724 = vpop.f32.mrf.mxu0
      %v1725 = vadd.f32 %v1660, %v1724
      %1726 = vmatmul.f32.gmra.mxu0 %v1058
      %v1727 = vpop.f32.mrf.mxu0
      %v1728 = vadd.f32 %v1663, %v1727
      %1729 = vmatmul.f32.gmra.mxu0 %v1067
      %v1730 = vpop.f32.mrf.mxu0
      %v1731 = vadd.f32 %v1666, %v1730
      %1732 = vmatmul.f32.gmra.mxu0 %v1076
      %v1733 = vpop.f32.mrf.mxu0
      %v1734 = vadd.f32 %v1669, %v1733
      %1735 = vmatmul.f32.gmra.mxu0 %v1085
      %v1736 = vpop.f32.mrf.mxu0
      %v1737 = vadd.f32 %v1672, %v1736
      %1738 = vmatmul.f32.gmra.mxu0 %v1094
      %v1739 = vpop.f32.mrf.mxu0
      %v1740 = vadd.f32 %v1675, %v1739
      %1741 = vmatmul.f32.gmra.mxu0 %v1103
      %v1742 = vpop.f32.mrf.mxu0
      %v1743 = vadd.f32 %v1678, %v1742
      %1744 = vmatmul.f32.gmra.mxu0 %v1112
      %v1745 = vpop.f32.mrf.mxu0
      %v1746 = vadd.f32 %v1681, %v1745
      %1747 = vmatmul.f32.gmra.mxu0 %v1121
      %v1748 = vpop.f32.mrf.mxu0
      %v1749 = vadd.f32 %v1684, %v1748
      %1750 = vmatmul.f32.gmra.mxu0 %v1130
      %v1751 = vpop.f32.mrf.mxu0
      %v1752 = vadd.f32 %v1687, %v1751
      %1753 = vmatmul.f32.gmra.mxu0 %v1139
      %v1754 = vpop.f32.mrf.mxu0
      %v1755 = vadd.f32 %v1690, %v1754
      %1756 = vdwg.mxu0
      %1757 = vmatpush.msra.mxu0 %v1466
      %1758 = vmatpush.msra.mxu0 %v1465
      %1759 = vmatpush.msra.mxu0 %v1464
      %1760 = vmatpush.msra.mxu0 %v1463
      %1761 = vmatpush.msra.mxu0 %v1462
      %1762 = vmatpush.msra.mxu0 %v1461
      %1763 = vmatpush.msra.mxu0 %v1460
      %1764 = vmatpush.msra.mxu0 %v1459
      %1765 = vmatpush.msra.mxu0 %v1458
      %1766 = vmatpush.msra.mxu0 %v1457
      %1767 = vmatpush.msra.mxu0 %v1456
      %1768 = vmatpush.msra.mxu0 %v1455
      %1769 = vmatpush.msra.mxu0 %v1454
      %1770 = vmatpush.msra.mxu0 %v1453
      %1771 = vmatpush.msra.mxu0 %v1452
      %1772 = vmatpush.msra.mxu0 %v1451
      %1773 = vmatmul.f32.gmra.mxu0 %v1005
      %v1774 = vpop.f32.mrf.mxu0
      %v1775 = vadd.f32 %v1710, %v1774
      %1776 = vmatmul.f32.gmra.mxu0 %v1014
      %v1777 = vpop.f32.mrf.mxu0
      %v1778 = vadd.f32 %v1713, %v1777
      %1779 = vmatmul.f32.gmra.mxu0 %v1023
      %v1780 = vpop.f32.mrf.mxu0
      %v1781 = vadd.f32 %v1716, %v1780
      %1782 = vmatmul.f32.gmra.mxu0 %v1032
      %v1783 = vpop.f32.mrf.mxu0
      %v1784 = vadd.f32 %v1719, %v1783
      %1785 = vmatmul.f32.gmra.mxu0 %v1041
      %v1786 = vpop.f32.mrf.mxu0
      %v1787 = vadd.f32 %v1722, %v1786
      %1788 = vmatmul.f32.gmra.mxu0 %v1050
      %v1789 = vpop.f32.mrf.mxu0
      %v1790 = vadd.f32 %v1725, %v1789
      %1791 = vmatmul.f32.gmra.mxu0 %v1059
      %v1792 = vpop.f32.mrf.mxu0
      %v1793 = vadd.f32 %v1728, %v1792
      %1794 = vmatmul.f32.gmra.mxu0 %v1068
      %v1795 = vpop.f32.mrf.mxu0
      %v1796 = vadd.f32 %v1731, %v1795
      %1797 = vmatmul.f32.gmra.mxu0 %v1077
      %v1798 = vpop.f32.mrf.mxu0
      %v1799 = vadd.f32 %v1734, %v1798
      %1800 = vmatmul.f32.gmra.mxu0 %v1086
      %v1801 = vpop.f32.mrf.mxu0
      %v1802 = vadd.f32 %v1737, %v1801
      %1803 = vmatmul.f32.gmra.mxu0 %v1095
      %v1804 = vpop.f32.mrf.mxu0
      %v1805 = vadd.f32 %v1740, %v1804
      %1806 = vmatmul.f32.gmra.mxu0 %v1104
      %v1807 = vpop.f32.mrf.mxu0
      %v1808 = vadd.f32 %v1743, %v1807
      %1809 = vmatmul.f32.gmra.mxu0 %v1113
      %v1810 = vpop.f32.mrf.mxu0
      %v1811 = vadd.f32 %v1746, %v1810
      %1812 = vmatmul.f32.gmra.mxu0 %v1122
      %v1813 = vpop.f32.mrf.mxu0
      %v1814 = vadd.f32 %v1749, %v1813
      %1815 = vmatmul.f32.gmra.mxu0 %v1131
      %v1816 = vpop.f32.mrf.mxu0
      %v1817 = vadd.f32 %v1752, %v1816
      %1818 = vmatmul.f32.gmra.mxu0 %v1140
      %v1819 = vpop.f32.mrf.mxu0
      %v1820 = vadd.f32 %v1755, %v1819
      %1821 = vdwg.mxu0
      %1822 = vmatpush.msra.mxu0 %v1482
      %1823 = vmatpush.msra.mxu0 %v1481
      %1824 = vmatpush.msra.mxu0 %v1480
      %1825 = vmatpush.msra.mxu0 %v1479
      %1826 = vmatpush.msra.mxu0 %v1478
      %1827 = vmatpush.msra.mxu0 %v1477
      %1828 = vmatpush.msra.mxu0 %v1476
      %1829 = vmatpush.msra.mxu0 %v1475
      %1830 = vmatpush.msra.mxu0 %v1474
      %1831 = vmatpush.msra.mxu0 %v1473
      %1832 = vmatpush.msra.mxu0 %v1472
      %1833 = vmatpush.msra.mxu0 %v1471
      %1834 = vmatpush.msra.mxu0 %v1470
      %1835 = vmatpush.msra.mxu0 %v1469
      %1836 = vmatpush.msra.mxu0 %v1468
      %1837 = vmatpush.msra.mxu0 %v1467
      %1838 = vmatmul.f32.gmra.mxu0 %v1006
      %v1839 = vpop.f32.mrf.mxu0
      %v1840 = vadd.f32 %v1775, %v1839
      %1841 = vmatmul.f32.gmra.mxu0 %v1015
      %v1842 = vpop.f32.mrf.mxu0
      %v1843 = vadd.f32 %v1778, %v1842
      %1844 = vmatmul.f32.gmra.mxu0 %v1024
      %v1845 = vpop.f32.mrf.mxu0
      %v1846 = vadd.f32 %v1781, %v1845
      %1847 = vmatmul.f32.gmra.mxu0 %v1033
      %v1848 = vpop.f32.mrf.mxu0
      %v1849 = vadd.f32 %v1784, %v1848
      %1850 = vmatmul.f32.gmra.mxu0 %v1042
      %v1851 = vpop.f32.mrf.mxu0
      %v1852 = vadd.f32 %v1787, %v1851
      %1853 = vmatmul.f32.gmra.mxu0 %v1051
      %v1854 = vpop.f32.mrf.mxu0
      %v1855 = vadd.f32 %v1790, %v1854
      %1856 = vmatmul.f32.gmra.mxu0 %v1060
      %v1857 = vpop.f32.mrf.mxu0
      %v1858 = vadd.f32 %v1793, %v1857
      %1859 = vmatmul.f32.gmra.mxu0 %v1069
      %v1860 = vpop.f32.mrf.mxu0
      %v1861 = vadd.f32 %v1796, %v1860
      %1862 = vmatmul.f32.gmra.mxu0 %v1078
      %v1863 = vpop.f32.mrf.mxu0
      %v1864 = vadd.f32 %v1799, %v1863
      %1865 = vmatmul.f32.gmra.mxu0 %v1087
      %v1866 = vpop.f32.mrf.mxu0
      %v1867 = vadd.f32 %v1802, %v1866
      %1868 = vmatmul.f32.gmra.mxu0 %v1096
      %v1869 = vpop.f32.mrf.mxu0
      %v1870 = vadd.f32 %v1805, %v1869
      %1871 = vmatmul.f32.gmra.mxu0 %v1105
      %v1872 = vpop.f32.mrf.mxu0
      %v1873 = vadd.f32 %v1808, %v1872
      %1874 = vmatmul.f32.gmra.mxu0 %v1114
      %v1875 = vpop.f32.mrf.mxu0
      %v1876 = vadd.f32 %v1811, %v1875
      %1877 = vmatmul.f32.gmra.mxu0 %v1123
      %v1878 = vpop.f32.mrf.mxu0
      %v1879 = vadd.f32 %v1814, %v1878
      %1880 = vmatmul.f32.gmra.mxu0 %v1132
      %v1881 = vpop.f32.mrf.mxu0
      %v1882 = vadd.f32 %v1817, %v1881
      %1883 = vmatmul.f32.gmra.mxu0 %v1141
      %v1884 = vpop.f32.mrf.mxu0
      %v1885 = vadd.f32 %v1820, %v1884
      %1886 = vdwg.mxu0
      %1887 = vmatpush.msra.mxu0 %v1002
      %1888 = vmatpush.msra.mxu0 %v1001
      %1889 = vmatpush.msra.mxu0 %v1000
      %1890 = vmatpush.msra.mxu0 %v999
      %1891 = vmatpush.msra.mxu0 %v998
      %1892 = vmatpush.msra.mxu0 %v997
      %1893 = vmatpush.msra.mxu0 %v996
      %1894 = vmatpush.msra.mxu0 %v995
      %1895 = vmatpush.msra.mxu0 %v994
      %1896 = vmatpush.msra.mxu0 %v993
      %1897 = vmatpush.msra.mxu0 %v992
      %1898 = vmatpush.msra.mxu0 %v991
      %1899 = vmatpush.msra.mxu0 %v990
      %1900 = vmatpush.msra.mxu0 %v989
      %1901 = vmatpush.msra.mxu0 %v988
      %1902 = vmatpush.msra.mxu0 %v987
      %1903 = vmatmul.f32.gmra.mxu0 %v1007
      %v1904 = vpop.f32.mrf.mxu0
      %v1905 = vadd.f32 %v1840, %v1904
      %1906 = vmatmul.f32.gmra.mxu0 %v1016
      %v1907 = vpop.f32.mrf.mxu0
      %v1908 = vadd.f32 %v1843, %v1907
      %1909 = vmatmul.f32.gmra.mxu0 %v1025
      %v1910 = vpop.f32.mrf.mxu0
      %v1911 = vadd.f32 %v1846, %v1910
      %1912 = vmatmul.f32.gmra.mxu0 %v1034
      %v1913 = vpop.f32.mrf.mxu0
      %v1914 = vadd.f32 %v1849, %v1913
      %1915 = vmatmul.f32.gmra.mxu0 %v1043
      %v1916 = vpop.f32.mrf.mxu0
      %v1917 = vadd.f32 %v1852, %v1916
      %1918 = vmatmul.f32.gmra.mxu0 %v1052
      %v1919 = vpop.f32.mrf.mxu0
      %v1920 = vadd.f32 %v1855, %v1919
      %1921 = vmatmul.f32.gmra.mxu0 %v1061
      %v1922 = vpop.f32.mrf.mxu0
      %v1923 = vadd.f32 %v1858, %v1922
      %1924 = vmatmul.f32.gmra.mxu0 %v1070
      %v1925 = vpop.f32.mrf.mxu0
      %v1926 = vadd.f32 %v1861, %v1925
      %1927 = vmatmul.f32.gmra.mxu0 %v1079
      %v1928 = vpop.f32.mrf.mxu0
      %v1929 = vadd.f32 %v1864, %v1928
      %1930 = vmatmul.f32.gmra.mxu0 %v1088
      %v1931 = vpop.f32.mrf.mxu0
      %v1932 = vadd.f32 %v1867, %v1931
      %1933 = vmatmul.f32.gmra.mxu0 %v1097
      %v1934 = vpop.f32.mrf.mxu0
      %v1935 = vadd.f32 %v1870, %v1934
      %1936 = vmatmul.f32.gmra.mxu0 %v1106
      %v1937 = vpop.f32.mrf.mxu0
      %v1938 = vadd.f32 %v1873, %v1937
      %1939 = vmatmul.f32.gmra.mxu0 %v1115
      %v1940 = vpop.f32.mrf.mxu0
      %v1941 = vadd.f32 %v1876, %v1940
      %1942 = vmatmul.f32.gmra.mxu0 %v1124
      %v1943 = vpop.f32.mrf.mxu0
      %v1944 = vadd.f32 %v1879, %v1943
      %1945 = vmatmul.f32.gmra.mxu0 %v1133
      %v1946 = vpop.f32.mrf.mxu0
      %v1947 = vadd.f32 %v1882, %v1946
      %1948 = vmatmul.f32.gmra.mxu0 %v1142
      %v1949 = vpop.f32.mrf.mxu0
      %v1950 = vadd.f32 %v1885, %v1949
      %1951 = vdwg.mxu0
      %1952 = vmatpush.msra.mxu0 %v1498
      %1953 = vmatpush.msra.mxu0 %v1497
      %1954 = vmatpush.msra.mxu0 %v1496
      %1955 = vmatpush.msra.mxu0 %v1495
      %1956 = vmatpush.msra.mxu0 %v1494
      %1957 = vmatpush.msra.mxu0 %v1493
      %1958 = vmatpush.msra.mxu0 %v1492
      %1959 = vmatpush.msra.mxu0 %v1491
      %1960 = vmatpush.msra.mxu0 %v1490
      %1961 = vmatpush.msra.mxu0 %v1489
      %1962 = vmatpush.msra.mxu0 %v1488
      %1963 = vmatpush.msra.mxu0 %v1487
      %1964 = vmatpush.msra.mxu0 %v1486
      %1965 = vmatpush.msra.mxu0 %v1485
      %1966 = vmatpush.msra.mxu0 %v1484
      %1967 = vmatpush.msra.mxu0 %v1483
      %1968 = vmatmul.f32.gmra.mxu0 %v1008
      %v1969 = vpop.f32.mrf.mxu0
      %v1970 = vadd.f32 %v1905, %v1969
      %1971 = vmatmul.f32.gmra.mxu0 %v1017
      %v1972 = vpop.f32.mrf.mxu0
      %v1973 = vadd.f32 %v1908, %v1972
      %1974 = vmatmul.f32.gmra.mxu0 %v1026
      %v1975 = vpop.f32.mrf.mxu0
      %v1976 = vadd.f32 %v1911, %v1975
      %1977 = vmatmul.f32.gmra.mxu0 %v1035
      %v1978 = vpop.f32.mrf.mxu0
      %v1979 = vadd.f32 %v1914, %v1978
      %1980 = vmatmul.f32.gmra.mxu0 %v1044
      %v1981 = vpop.f32.mrf.mxu0
      %v1982 = vadd.f32 %v1917, %v1981
      %1983 = vmatmul.f32.gmra.mxu0 %v1053
      %v1984 = vpop.f32.mrf.mxu0
      %v1985 = vadd.f32 %v1920, %v1984
      %1986 = vmatmul.f32.gmra.mxu0 %v1062
      %v1987 = vpop.f32.mrf.mxu0
      %v1988 = vadd.f32 %v1923, %v1987
      %1989 = vmatmul.f32.gmra.mxu0 %v1071
      %v1990 = vpop.f32.mrf.mxu0
      %v1991 = vadd.f32 %v1926, %v1990
      %1992 = vmatmul.f32.gmra.mxu0 %v1080
      %v1993 = vpop.f32.mrf.mxu0
      %v1994 = vadd.f32 %v1929, %v1993
      %1995 = vmatmul.f32.gmra.mxu0 %v1089
      %v1996 = vpop.f32.mrf.mxu0
      %v1997 = vadd.f32 %v1932, %v1996
      %1998 = vmatmul.f32.gmra.mxu0 %v1098
      %v1999 = vpop.f32.mrf.mxu0
      %v2000 = vadd.f32 %v1935, %v1999
      %2001 = vmatmul.f32.gmra.mxu0 %v1107
      %v2002 = vpop.f32.mrf.mxu0
      %v2003 = vadd.f32 %v1938, %v2002
      %2004 = vmatmul.f32.gmra.mxu0 %v1116
      %v2005 = vpop.f32.mrf.mxu0
      %v2006 = vadd.f32 %v1941, %v2005
      %2007 = vmatmul.f32.gmra.mxu0 %v1125
      %v2008 = vpop.f32.mrf.mxu0
      %v2009 = vadd.f32 %v1944, %v2008
      %2010 = vmatmul.f32.gmra.mxu0 %v1134
      %v2011 = vpop.f32.mrf.mxu0
      %v2012 = vadd.f32 %v1947, %v2011
      %2013 = vmatmul.f32.gmra.mxu0 %v1143
      %v2014 = vpop.f32.mrf.mxu0
      %v2015 = vadd.f32 %v1950, %v2014
      %2016 = vdwg.mxu0
      %2017 = vmatpush.msra.mxu0 %v1514
      %2018 = vmatpush.msra.mxu0 %v1513
      %2019 = vmatpush.msra.mxu0 %v1512
      %2020 = vmatpush.msra.mxu0 %v1511
      %2021 = vmatpush.msra.mxu0 %v1510
      %2022 = vmatpush.msra.mxu0 %v1509
      %2023 = vmatpush.msra.mxu0 %v1508
      %2024 = vmatpush.msra.mxu0 %v1507
      %2025 = vmatpush.msra.mxu0 %v1506
      %2026 = vmatpush.msra.mxu0 %v1505
      %2027 = vmatpush.msra.mxu0 %v1504
      %2028 = vmatpush.msra.mxu0 %v1503
      %2029 = vmatpush.msra.mxu0 %v1502
      %2030 = vmatpush.msra.mxu0 %v1501
      %2031 = vmatpush.msra.mxu0 %v1500
      %2032 = vmatpush.msra.mxu0 %v1499
      %2033 = vmatmul.f32.gmra.mxu0 %v1009
      %v2034 = vpop.f32.mrf.mxu0
      %v2035 = vadd.f32 %v1970, %v2034
      %2036 = vmatmul.f32.gmra.mxu0 %v1018
      %v2037 = vpop.f32.mrf.mxu0
      %v2038 = vadd.f32 %v1973, %v2037
      %2039 = vmatmul.f32.gmra.mxu0 %v1027
      %v2040 = vpop.f32.mrf.mxu0
      %v2041 = vadd.f32 %v1976, %v2040
      %2042 = vmatmul.f32.gmra.mxu0 %v1036
      %v2043 = vpop.f32.mrf.mxu0
      %v2044 = vadd.f32 %v1979, %v2043
      %2045 = vmatmul.f32.gmra.mxu0 %v1045
      %v2046 = vpop.f32.mrf.mxu0
      %v2047 = vadd.f32 %v1982, %v2046
      %2048 = vmatmul.f32.gmra.mxu0 %v1054
      %v2049 = vpop.f32.mrf.mxu0
      %v2050 = vadd.f32 %v1985, %v2049
      %2051 = vmatmul.f32.gmra.mxu0 %v1063
      %v2052 = vpop.f32.mrf.mxu0
      %v2053 = vadd.f32 %v1988, %v2052
      %2054 = vmatmul.f32.gmra.mxu0 %v1072
      %v2055 = vpop.f32.mrf.mxu0
      %v2056 = vadd.f32 %v1991, %v2055
      %2057 = vmatmul.f32.gmra.mxu0 %v1081
      %v2058 = vpop.f32.mrf.mxu0
      %v2059 = vadd.f32 %v1994, %v2058
      %2060 = vmatmul.f32.gmra.mxu0 %v1090
      %v2061 = vpop.f32.mrf.mxu0
      %v2062 = vadd.f32 %v1997, %v2061
      %2063 = vmatmul.f32.gmra.mxu0 %v1099
      %v2064 = vpop.f32.mrf.mxu0
      %v2065 = vadd.f32 %v2000, %v2064
      %2066 = vmatmul.f32.gmra.mxu0 %v1108
      %v2067 = vpop.f32.mrf.mxu0
      %v2068 = vadd.f32 %v2003, %v2067
      %2069 = vmatmul.f32.gmra.mxu0 %v1117
      %v2070 = vpop.f32.mrf.mxu0
      %v2071 = vadd.f32 %v2006, %v2070
      %2072 = vmatmul.f32.gmra.mxu0 %v1126
      %v2073 = vpop.f32.mrf.mxu0
      %v2074 = vadd.f32 %v2009, %v2073
      %2075 = vmatmul.f32.gmra.mxu0 %v1135
      %v2076 = vpop.f32.mrf.mxu0
      %v2077 = vadd.f32 %v2012, %v2076
      %2078 = vmatmul.f32.gmra.mxu0 %v1144
      %v2079 = vpop.f32.mrf.mxu0
      %v2080 = vadd.f32 %v2015, %v2079
      %2081 = vdwg.mxu0
      %2082 = vmatpush.msra.mxu0 %v1530
      %2083 = vmatpush.msra.mxu0 %v1529
      %2084 = vmatpush.msra.mxu0 %v1528
      %2085 = vmatpush.msra.mxu0 %v1527
      %2086 = vmatpush.msra.mxu0 %v1526
      %2087 = vmatpush.msra.mxu0 %v1525
      %2088 = vmatpush.msra.mxu0 %v1524
      %2089 = vmatpush.msra.mxu0 %v1523
      %2090 = vmatpush.msra.mxu0 %v1522
      %2091 = vmatpush.msra.mxu0 %v1521
      %2092 = vmatpush.msra.mxu0 %v1520
      %2093 = vmatpush.msra.mxu0 %v1519
      %2094 = vmatpush.msra.mxu0 %v1518
      %2095 = vmatpush.msra.mxu0 %v1517
      %2096 = vmatpush.msra.mxu0 %v1516
      %2097 = vmatpush.msra.mxu0 %v1515
      %2098 = vmatmul.f32.gmra.mxu0 %v1010
      %v2099 = vpop.f32.mrf.mxu0
      %v2100 = vadd.f32 %v2035, %v2099
      %2101 = vmatmul.f32.gmra.mxu0 %v1019
      %v2102 = vpop.f32.mrf.mxu0
      %v2103 = vadd.f32 %v2038, %v2102
      %2104 = vmatmul.f32.gmra.mxu0 %v1028
      %v2105 = vpop.f32.mrf.mxu0
      %v2106 = vadd.f32 %v2041, %v2105
      %2107 = vmatmul.f32.gmra.mxu0 %v1037
      %v2108 = vpop.f32.mrf.mxu0
      %v2109 = vadd.f32 %v2044, %v2108
      %2110 = vmatmul.f32.gmra.mxu0 %v1046
      %v2111 = vpop.f32.mrf.mxu0
      %v2112 = vadd.f32 %v2047, %v2111
      %2113 = vmatmul.f32.gmra.mxu0 %v1055
      %v2114 = vpop.f32.mrf.mxu0
      %v2115 = vadd.f32 %v2050, %v2114
      %2116 = vmatmul.f32.gmra.mxu0 %v1064
      %v2117 = vpop.f32.mrf.mxu0
      %v2118 = vadd.f32 %v2053, %v2117
      %2119 = vmatmul.f32.gmra.mxu0 %v1073
      %v2120 = vpop.f32.mrf.mxu0
      %v2121 = vadd.f32 %v2056, %v2120
      %2122 = vmatmul.f32.gmra.mxu0 %v1082
      %v2123 = vpop.f32.mrf.mxu0
      %v2124 = vadd.f32 %v2059, %v2123
      %2125 = vmatmul.f32.gmra.mxu0 %v1091
      %v2126 = vpop.f32.mrf.mxu0
      %v2127 = vadd.f32 %v2062, %v2126
      %2128 = vmatmul.f32.gmra.mxu0 %v1100
      %v2129 = vpop.f32.mrf.mxu0
      %v2130 = vadd.f32 %v2065, %v2129
      %2131 = vmatmul.f32.gmra.mxu0 %v1109
      %v2132 = vpop.f32.mrf.mxu0
      %v2133 = vadd.f32 %v2068, %v2132
      %2134 = vmatmul.f32.gmra.mxu0 %v1118
      %v2135 = vpop.f32.mrf.mxu0
      %v2136 = vadd.f32 %v2071, %v2135
      %2137 = vmatmul.f32.gmra.mxu0 %v1127
      %v2138 = vpop.f32.mrf.mxu0
      %v2139 = vadd.f32 %v2074, %v2138
      %2140 = vmatmul.f32.gmra.mxu0 %v1136
      %v2141 = vpop.f32.mrf.mxu0
      %v2142 = vadd.f32 %v2077, %v2141
      %2143 = vmatmul.f32.gmra.mxu0 %v1145
      %v2144 = vpop.f32.mrf.mxu0
      %v2145 = vadd.f32 %v2080, %v2144
      %2146 = vdwg.mxu0
      %2147 = vmatpush.msra.mxu0 %v1546
      %2148 = vmatpush.msra.mxu0 %v1545
      %2149 = vmatpush.msra.mxu0 %v1544
      %2150 = vmatpush.msra.mxu0 %v1543
      %2151 = vmatpush.msra.mxu0 %v1542
      %2152 = vmatpush.msra.mxu0 %v1541
      %2153 = vmatpush.msra.mxu0 %v1540
      %2154 = vmatpush.msra.mxu0 %v1539
      %2155 = vmatpush.msra.mxu0 %v1538
      %2156 = vmatpush.msra.mxu0 %v1537
      %2157 = vmatpush.msra.mxu0 %v1536
      %2158 = vmatpush.msra.mxu0 %v1535
      %2159 = vmatpush.msra.mxu0 %v1534
      %2160 = vmatpush.msra.mxu0 %v1533
      %2161 = vmatpush.msra.mxu0 %v1532
      %2162 = vmatpush.msra.mxu0 %v1531
      %2163 = vmatmul.f32.gmra.mxu0 %v1011
      %v2164 = vpop.f32.mrf.mxu0
      %v2165 = vadd.f32 %v2100, %v2164
      %2166 = vmatmul.f32.gmra.mxu0 %v1020
      %v2167 = vpop.f32.mrf.mxu0
      %v2168 = vadd.f32 %v2103, %v2167
      %2169 = vmatmul.f32.gmra.mxu0 %v1029
      %v2170 = vpop.f32.mrf.mxu0
      %v2171 = vadd.f32 %v2106, %v2170
      %2172 = vmatmul.f32.gmra.mxu0 %v1038
      %v2173 = vpop.f32.mrf.mxu0
      %v2174 = vadd.f32 %v2109, %v2173
      %2175 = vmatmul.f32.gmra.mxu0 %v1047
      %v2176 = vpop.f32.mrf.mxu0
      %v2177 = vadd.f32 %v2112, %v2176
      %2178 = vmatmul.f32.gmra.mxu0 %v1056
      %v2179 = vpop.f32.mrf.mxu0
      %v2180 = vadd.f32 %v2115, %v2179
      %2181 = vmatmul.f32.gmra.mxu0 %v1065
      %v2182 = vpop.f32.mrf.mxu0
      %v2183 = vadd.f32 %v2118, %v2182
      %2184 = vmatmul.f32.gmra.mxu0 %v1074
      %v2185 = vpop.f32.mrf.mxu0
      %v2186 = vadd.f32 %v2121, %v2185
      %2187 = vmatmul.f32.gmra.mxu0 %v1083
      %v2188 = vpop.f32.mrf.mxu0
      %v2189 = vadd.f32 %v2124, %v2188
      %2190 = vmatmul.f32.gmra.mxu0 %v1092
      %v2191 = vpop.f32.mrf.mxu0
      %v2192 = vadd.f32 %v2127, %v2191
      %2193 = vmatmul.f32.gmra.mxu0 %v1101
      %v2194 = vpop.f32.mrf.mxu0
      %v2195 = vadd.f32 %v2130, %v2194
      %2196 = vmatmul.f32.gmra.mxu0 %v1110
      %v2197 = vpop.f32.mrf.mxu0
      %v2198 = vadd.f32 %v2133, %v2197
      %2199 = vmatmul.f32.gmra.mxu0 %v1119
      %v2200 = vpop.f32.mrf.mxu0
      %v2201 = vadd.f32 %v2136, %v2200
      %2202 = vmatmul.f32.gmra.mxu0 %v1128
      %v2203 = vpop.f32.mrf.mxu0
      %v2204 = vadd.f32 %v2139, %v2203
      %2205 = vmatmul.f32.gmra.mxu0 %v1137
      %v2206 = vpop.f32.mrf.mxu0
      %v2207 = vadd.f32 %v2142, %v2206
      %2208 = vmatmul.f32.gmra.mxu0 %v1146
      %v2209 = vpop.f32.mrf.mxu0
      %v2210 = vadd.f32 %v2145, %v2209
      %2211 = vdwg.mxu0
      %v2212 = vmax.f32 %v2165, 0.0
      %v2213 = vmax.f32 %v2168, 0.0
      %v2214 = vmax.f32 %v2171, 0.0
      %v2215 = vmax.f32 %v2174, 0.0
      %v2216 = vmax.f32 %v2177, 0.0
      %v2217 = vmax.f32 %v2180, 0.0
      %v2218 = vmax.f32 %v2183, 0.0
      %v2219 = vmax.f32 %v2186, 0.0
      %v2220 = vmax.f32 %v2189, 0.0
      %v2221 = vmax.f32 %v2192, 0.0
      %v2222 = vmax.f32 %v2195, 0.0
      %v2223 = vmax.f32 %v2198, 0.0
      %v2224 = vmax.f32 %v2201, 0.0
      %v2225 = vmax.f32 %v2204, 0.0
      %v2226 = vmax.f32 %v2207, 0.0
      %v2227 = vmax.f32 %v2210, 0.0
      %vm2228 = vcmask 31744
      %2229 = vst.msk [vmem:[%s224] sm:$0xff] %vm2228, %v2212
      %2230 = vst.msk [vmem:[%s224 + $0x8] sm:$0xff] %vm2228, %v2213
      %2231 = vst.msk [vmem:[%s224 + $0x10] sm:$0xff] %vm2228, %v2214
      %2232 = vst.msk [vmem:[%s224 + $0x18] sm:$0xff] %vm2228, %v2215
      %2233 = vst.msk [vmem:[%s224 + $0x20] sm:$0xff] %vm2228, %v2216
      %2234 = vst.msk [vmem:[%s224 + $0x28] sm:$0xff] %vm2228, %v2217
      %2235 = vst.msk [vmem:[%s224 + $0x30] sm:$0xff] %vm2228, %v2218
      %2236 = vst.msk [vmem:[%s224 + $0x38] sm:$0xff] %vm2228, %v2219
      %2237 = vst.msk [vmem:[%s224 + $0x40] sm:$0xff] %vm2228, %v2220
      %2238 = vst.msk [vmem:[%s224 + $0x48] sm:$0xff] %vm2228, %v2221
      %2239 = vst.msk [vmem:[%s224 + $0x50] sm:$0xff] %vm2228, %v2222
      %2240 = vst.msk [vmem:[%s224 + $0x58] sm:$0xff] %vm2228, %v2223
      %2241 = vst.msk [vmem:[%s224 + $0x60] sm:$0xff] %vm2228, %v2224
      %2242 = vst.msk [vmem:[%s224 + $0x68] sm:$0xff] %vm2228, %v2225
      %2243 = vst.msk [vmem:[%s224 + $0x70] sm:$0xff] %vm2228, %v2226
      %2244 = vst.msk [vmem:[%s224 + $0x78] sm:$0xff] %vm2228, %v2227
      %p2245 = scmp.lt.s32.totalorder %s16, 1
      %s2246 = scalar_select %p2245, %s16, 1
      %s2247 = smul.addr %s2246, 16
      %s2248 = smul.addr %s2247, 8
      %s2249 = scalar_lea.vmem %s5, %s2248
      // Predicated region
      $region41: #{encoder_forward.9} parent=39 // pred_check
        %p2250 = pneg %p144
      $region42: #{encoder_forward.9} parent=39 // pred_check_branch
        %2252 = sbr.rel (%p2250) target = $region44
      $region43: #{encoder_forward.9} parent=39 // pred_region
        _
      $region44: #{encoder_forward.9} parent=39 // pred_fallthru
        _
    $region40: #{encoder_forward.9} parent=5 // pred_fallthru
      _
    %p2253 = scmp.le.s32.totalorder 2, %s11
    // Predicated region
    $region45: #{encoder_forward.9} parent=5 // pred_check
      %p2254 = pneg %p2253
    $region46: #{encoder_forward.9} parent=5 // pred_check_branch
      %2256 = sbr.rel (%p2254) target = $region48
    $region47: #{encoder_forward.9} parent=5 // pred_region
      %s2257 = ssub.s32 %s11, 2
      // Predicated region
      $region49: #{encoder_forward.9} parent=47 // pred_check
        %p2258 = pneg %p150
      $region50: #{encoder_forward.9} parent=47 // pred_check_branch
        %2260 = sbr.rel (%p2258) target = $region52
      $region51: #{encoder_forward.9} parent=47 // pred_region
        %p2261 = scmp.lt.s32.totalorder %s17, 1
        %s2262 = scalar_select %p2261, %s17, 1
        %s2263 = smul.addr %s2262, 16
        %s2264 = smul.addr %s2263, 8
        %s2265 = scalar_lea.vmem %s5, %s2264
      $region52: #{encoder_forward.9} parent=47 // pred_fallthru
        _
    $region48: #{encoder_forward.9} parent=5 // pred_fallthru
      _
  $region6: #{encoder_forward.9} parent=0 // loop_footer
    %s15 = sadd.s32 1, %s11
  $region7: #{encoder_forward.9} parent=0 // loop_footer_branch
    %10 = sbr.rel target = $region3
  $region8: #{encoder_forward.9} parent=0 // loop_exit
    _

</llo_original>
